<compile_context>
chip_gen: v6e
topology: v6e:2x2x1
jax: 0.10.0
libtpu: 0.0.40
codegen_flags: <defaults>
</compile_context>

<pallas_src>
import jax
import jax.numpy as jnp
from jax.experimental import pallas as pl
from jax.experimental.pallas import tpu as pltpu


# ------------------------------ helpers (host) --------------------------------
def _round_up(x, m):
    return (x + m - 1) // m * m


# PyTorch packs gates as [i, f, g, o] along the 4H axis.  We re-pack into
# 128-aligned column blocks in order [i, f, o, g] so the kernel applies one
# sigmoid over the first contiguous 3*Hp block and one tanh over the last.
_GATE_PERM = (0, 1, 3, 2)  # dest block k takes PyTorch gate _GATE_PERM[k]


def _pad_gate_cols(w_t, H, Hp):
    """(rows, 4H) -> (rows, 4Hp); dest block k holds gate _GATE_PERM[k], rest 0."""
    rows = w_t.shape[0]
    out = jnp.zeros((rows, 4 * Hp), w_t.dtype)
    for dst, src in enumerate(_GATE_PERM):
        out = out.at[:, dst * Hp:dst * Hp + H].set(w_t[:, src * H:(src + 1) * H])
    return out


def _pad_rows(w, rows_p):
    rows = w.shape[0]
    if rows == rows_p:
        return w
    pad = jnp.zeros((rows_p - rows,) + w.shape[1:], w.dtype)
    return jnp.concatenate([w, pad], axis=0)


# ------------------------------ parameter init --------------------------------
def init_raw_params(key, input_dim, hidden_dim, num_layers, output_dim):
    """PyTorch-layout params, U(-1/sqrt(H), 1/sqrt(H)) like nn.LSTM/nn.Linear."""
    bound = 1.0 / jnp.sqrt(hidden_dim)
    layers = []
    for layer in range(num_layers):
        d_in = input_dim if layer == 0 else hidden_dim
        key, k1, k2, k3, k4 = jax.random.split(key, 5)
        layers.append({
            "w_ih": jax.random.uniform(k1, (4 * hidden_dim, d_in),
                                       minval=-bound, maxval=bound, dtype=jnp.float32),
            "w_hh": jax.random.uniform(k2, (4 * hidden_dim, hidden_dim),
                                       minval=-bound, maxval=bound, dtype=jnp.float32),
            "b_ih": jax.random.uniform(k3, (4 * hidden_dim,),
                                       minval=-bound, maxval=bound, dtype=jnp.float32),
            "b_hh": jax.random.uniform(k4, (4 * hidden_dim,),
                                       minval=-bound, maxval=bound, dtype=jnp.float32),
        })
    key, k1, k2 = jax.random.split(key, 3)
    dec = {
        "w": jax.random.uniform(k1, (output_dim, hidden_dim),
                                minval=-bound, maxval=bound, dtype=jnp.float32),
        "b": jax.random.uniform(k2, (output_dim,),
                                minval=-bound, maxval=bound, dtype=jnp.float32),
    }
    return {"lstm": layers, "dec": dec, "hidden_dim": hidden_dim}


def pack_params(raw, lane=128):
    """Transpose + lane-align raw params for the fused kernel.

    Hidden dim is padded to Hp (multiple of 128); each gate gets a 128-aligned
    column block (order i, f, o, g).  Padded rows/cols/bias are zero, so padded
    hidden units stay exactly zero through the recurrence -> numerics unchanged.
    """
    H = raw["hidden_dim"]
    Hp = _round_up(max(H, lane), lane)
    packed = {"lstm": [], "dec": None}
    for idx, lp in enumerate(raw["lstm"]):
        w_ih_t = _pad_gate_cols(lp["w_ih"].T, H, Hp)                   # (d_in, 4Hp)
        if idx > 0:
            w_ih_t = _pad_rows(w_ih_t, Hp)                             # deeper layers eat padded h
        w_hh_t = _pad_rows(_pad_gate_cols(lp["w_hh"].T, H, Hp), Hp)    # (Hp, 4Hp)
        bias = _pad_gate_cols((lp["b_ih"] + lp["b_hh"])[None, :], H, Hp)  # (1, 4Hp)
        packed["lstm"].append({"w_ih_t": w_ih_t, "w_hh_t": w_hh_t, "bias": bias})
    packed["dec"] = {"w_t": _pad_rows(raw["dec"]["w"].T, Hp),          # (Hp, O)
                     "b": raw["dec"]["b"][None, :]}                    # (1, O)
    return packed


# ------------------------------ fused kernel ----------------------------------
def _make_fused_kernel(num_layers, B, T, D, Hp, O):
    """args = (x, [w_ih_t, w_hh_t, bias] * L, w_dec, b_dec, out, gx_sc, seq_sc)."""
    BT = B * T

    def kernel(*args):
        x_ref = args[0]                                   # (B, T, D) batch_first
        w_refs = args[1:1 + 3 * num_layers]
        wdec_ref = args[1 + 3 * num_layers]               # (Hp, O)
        bdec_ref = args[2 + 3 * num_layers]               # (1, O)
        out_ref = args[3 + 3 * num_layers]                # (B, T, O)
        gx_sc, seq_sc = args[4 + 3 * num_layers:]         # (B,T,4Hp), (B,T,Hp)

        for layer in range(num_layers):
            wih_ref, whh_ref, b_ref = w_refs[3 * layer:3 * layer + 3]

            # ---- hoisted input projection: ONE (B*T, d_in) @ (d_in, 4Hp) matmul,
            # bias added once, dense (B,T,4Hp) store into the gx cache.
            if layer == 0:
                lhs = x_ref[...].reshape(BT, D)
            else:
                lhs = seq_sc[...].reshape(BT, Hp)          # dense read, before overwrite
            gx = jnp.dot(lhs, wih_ref[...],
                         preferred_element_type=jnp.float32) + b_ref[...]
            gx_sc[...] = gx.reshape(B, T, 4 * Hp)

            # ---- sequential recurrence; h/c stay in vregs (loop-carried values).
            # T is a small compile-time constant -> static unroll, static indices.
            h = jnp.zeros((B, Hp), jnp.float32)
            c = jnp.zeros((B, Hp), jnp.float32)
            for t in range(T):
                gates = gx_sc[:, t, :] + jnp.dot(h, whh_ref[...],
                                                 preferred_element_type=jnp.float32)
                # Gate blocks (128-aligned): [i, f, o] sigmoid-contiguous, then g.
                sig = jax.nn.sigmoid(gates[:, 0:3 * Hp])
                i_g = sig[:, 0 * Hp:1 * Hp]
                f_g = sig[:, 1 * Hp:2 * Hp]
                o_g = sig[:, 2 * Hp:3 * Hp]
                g_g = jnp.tanh(gates[:, 3 * Hp:4 * Hp])
                c = f_g * c + i_g * g_g
                h = o_g * jnp.tanh(c)
                seq_sc[:, t, :] = h                        # tiny per-step (B,Hp) store

        # ---- decoder epilogue: ONE (B*T, Hp) @ (Hp, O) matmul + Sigmoid.
        # Dropout(0.9) = identity in eval mode.  Padded w_dec rows are zero.
        logits = jnp.dot(seq_sc[...].reshape(BT, Hp), wdec_ref[...],
                         preferred_element_type=jnp.float32) + bdec_ref[...]
        out_ref[...] = jax.nn.sigmoid(logits).reshape(B, T, O)

    return kernel


@jax.jit
def lstm_model_forward(packed, x_btd):
    """x_btd: (B, T, D) batch_first. Returns (B, T, output_dim)."""
    B, T, D = x_btd.shape
    num_layers = len(packed["lstm"])
    Hp = packed["lstm"][0]["w_hh_t"].shape[0]
    O = packed["dec"]["w_t"].shape[1]

    inputs = [x_btd]
    for lp in packed["lstm"]:
        inputs += [lp["w_ih_t"], lp["w_hh_t"], lp["bias"]]
    inputs += [packed["dec"]["w_t"], packed["dec"]["b"]]

    kernel = _make_fused_kernel(num_layers, B, T, D, Hp, O)
    vmem = pl.BlockSpec(memory_space=pltpu.MemorySpace.VMEM)
    return pl.pallas_call(
        kernel,
        out_shape=jax.ShapeDtypeStruct((B, T, O), jnp.float32),
        in_specs=[vmem] * len(inputs),
        out_specs=vmem,
        scratch_shapes=[
            pltpu.VMEM((B, T, 4 * Hp), jnp.float32),   # hoisted input-gate cache
            pltpu.VMEM((B, T, Hp), jnp.float32),       # hidden sequence (reused per layer)
        ],
        compiler_params=pltpu.CompilerParams(vmem_limit_bytes=32 * 1024 * 1024),
    )(*inputs)


# ------------------------------ pure-JAX reference -----------------------------
def _reference_forward(raw, x_btd):
    H = raw["hidden_dim"]
    h_seq = jnp.transpose(x_btd, (1, 0, 2))             # (T, B, D)
    for lp in raw["lstm"]:
        w_ih_t = lp["w_ih"].T
        w_hh_t = lp["w_hh"].T
        bias = (lp["b_ih"] + lp["b_hh"])[None, :]
        B = h_seq.shape[1]

        def step(carry, x_t, w_ih_t=w_ih_t, w_hh_t=w_hh_t, bias=bias):
            h_prev, c_prev = carry
            gates = x_t @ w_ih_t + h_prev @ w_hh_t + bias
            i = jax.nn.sigmoid(gates[:, 0 * H:1 * H])
            f = jax.nn.sigmoid(gates[:, 1 * H:2 * H])
            g = jnp.tanh(gates[:, 2 * H:3 * H])
            o = jax.nn.sigmoid(gates[:, 3 * H:4 * H])
            c = f * c_prev + i * g
            h = o * jnp.tanh(c)
            return (h, c), h

        init = (jnp.zeros((B, H), jnp.float32), jnp.zeros((B, H), jnp.float32))
        _, h_seq = jax.lax.scan(step, init, h_seq)
    out = jnp.transpose(h_seq, (1, 0, 2))                # (B, T, H)
    return jax.nn.sigmoid(out @ raw["dec"]["w"].T + raw["dec"]["b"][None, :])


# ----------------------------------- main --------------------------------------
if __name__ == "__main__":
    batch = 2
    seq_len = 8
    input_dim = 128
    hidden_dim = 64
    num_layers = 2
    output_dim = 8

    key = jax.random.PRNGKey(0)
    key, kp, kx = jax.random.split(key, 3)
    raw = init_raw_params(kp, input_dim, hidden_dim, num_layers, output_dim)
    packed = pack_params(raw)
    x = jax.random.normal(kx, (batch, seq_len, input_dim), dtype=jnp.float32)

    out = lstm_model_forward(packed, x)
    out = jax.block_until_ready(out)

    ref = _reference_forward(raw, x)
    assert out.shape == (batch, seq_len, output_dim), out.shape
    err = float(jnp.max(jnp.abs(out - ref)))
    assert err < 5e-5, err

    print("KERNEL_OK")
</pallas_src>

<mosaic_0001>
module attributes {stable_mosaic.version = 11 : i64} {
  func.func @kernel(%arg0: memref<2x8x128xf32, #tpu.memory_space<vmem>>, %arg1: memref<128x512xf32, #tpu.memory_space<vmem>>, %arg2: memref<128x512xf32, #tpu.memory_space<vmem>>, %arg3: memref<1x512xf32, #tpu.memory_space<vmem>>, %arg4: memref<128x512xf32, #tpu.memory_space<vmem>>, %arg5: memref<128x512xf32, #tpu.memory_space<vmem>>, %arg6: memref<1x512xf32, #tpu.memory_space<vmem>>, %arg7: memref<128x8xf32, #tpu.memory_space<vmem>>, %arg8: memref<1x8xf32, #tpu.memory_space<vmem>>, %arg9: memref<2x8x8xf32, #tpu.memory_space<vmem>>, %arg10: memref<2x8x512xf32, #tpu.memory_space<vmem>>, %arg11: memref<2x8x128xf32, #tpu.memory_space<vmem>>) attributes {dimension_semantics = [], scalar_prefetch = 0 : i64, scratch_operands = 2 : i64, tpu.core_type = #tpu.core_type<tc>} {
    %c0 = arith.constant 0 : index
    %c0_0 = arith.constant 0 : index
    %c0_1 = arith.constant 0 : index
    %0 = vector.load %arg0[%c0, %c0_0, %c0_1] : memref<2x8x128xf32, #tpu.memory_space<vmem>>, vector<2x8x128xf32>
    %1 = vector.shape_cast %0 : vector<2x8x128xf32> to vector<16x128xf32>
    %c0_2 = arith.constant 0 : index
    %c0_3 = arith.constant 0 : index
    %2 = vector.load %arg1[%c0_2, %c0_3] : memref<128x512xf32, #tpu.memory_space<vmem>>, vector<128x512xf32>
    %cst = arith.constant dense<0.000000e+00> : vector<16x512xf32>
    %3 = tpu.matmul %1, %2, %cst {dimension_numbers = #tpu.dot_dimension_numbers<[1], [0], [0], [1], [0, 0, 1, 1], [], []>} : vector<16x128xf32>, vector<128x512xf32>, vector<16x512xf32> -> vector<16x512xf32>
    %c0_4 = arith.constant 0 : index
    %c0_5 = arith.constant 0 : index
    %4 = vector.load %arg3[%c0_4, %c0_5] : memref<1x512xf32, #tpu.memory_space<vmem>>, vector<1x512xf32>
    %5 = vector.broadcast %4 : vector<1x512xf32> to vector<16x512xf32>
    %6 = arith.addf %3, %5 : vector<16x512xf32>
    %7 = vector.shape_cast %6 : vector<16x512xf32> to vector<2x8x512xf32>
    %c0_6 = arith.constant 0 : index
    %c0_7 = arith.constant 0 : index
    %c0_8 = arith.constant 0 : index
    %8 = vector.load %arg10[%c0_6, %c0_7, %c0_8] : memref<2x8x512xf32, #tpu.memory_space<vmem>>, vector<2x8x512xf32>
    tpu.vector_store %arg10[%c0_6, %c0_7, %c0_8], %7 {strides = array<i32>} : memref<2x8x512xf32, #tpu.memory_space<vmem>>, vector<2x8x512xf32>,
    %cst_9 = arith.constant 0.000000e+00 : f32
    %9 = vector.broadcast %cst_9 : f32 to vector<2x128xf32>
    %cst_10 = arith.constant 0.000000e+00 : f32
    %10 = vector.broadcast %cst_10 : f32 to vector<2x128xf32>
    %c0_11 = arith.constant 0 : index
    %c0_12 = arith.constant 0 : index
    %c0_13 = arith.constant 0 : index
    %11 = vector.load %arg10[%c0_11, %c0_12, %c0_13] : memref<2x8x512xf32, #tpu.memory_space<vmem>>, vector<2x1x512xf32>
    %12 = vector.shape_cast %11 : vector<2x1x512xf32> to vector<2x512xf32>
    %c0_14 = arith.constant 0 : index
    %c0_15 = arith.constant 0 : index
    %13 = vector.load %arg2[%c0_14, %c0_15] : memref<128x512xf32, #tpu.memory_space<vmem>>, vector<128x512xf32>
    %cst_16 = arith.constant dense<0.000000e+00> : vector<2x512xf32>
    %14 = tpu.matmul %9, %13, %cst_16 {dimension_numbers = #tpu.dot_dimension_numbers<[1], [0], [0], [1], [0, 0, 1, 1], [], []>} : vector<2x128xf32>, vector<128x512xf32>, vector<2x512xf32> -> vector<2x512xf32>
    %15 = arith.addf %12, %14 : vector<2x512xf32>
    %16 = vector.extract_strided_slice %15 {offsets = [0, 0], sizes = [2, 384], strides = [1, 1]} : vector<2x512xf32> to vector<2x384xf32>
    %17 = arith.negf %16 : vector<2x384xf32>
    %18 = math.exp %17 : vector<2x384xf32>
    %cst_17 = arith.constant 1.000000e+00 : f32
    %19 = vector.broadcast %cst_17 : f32 to vector<2x384xf32>
    %20 = arith.addf %19, %18 : vector<2x384xf32>
    %21 = arith.divf %19, %20 : vector<2x384xf32>
    %22 = vector.extract_strided_slice %21 {offsets = [0, 0], sizes = [2, 128], strides = [1, 1]} : vector<2x384xf32> to vector<2x128xf32>
    %23 = vector.extract_strided_slice %21 {offsets = [0, 128], sizes = [2, 128], strides = [1, 1]} : vector<2x384xf32> to vector<2x128xf32>
    %24 = vector.extract_strided_slice %21 {offsets = [0, 256], sizes = [2, 128], strides = [1, 1]} : vector<2x384xf32> to vector<2x128xf32>
    %25 = vector.extract_strided_slice %15 {offsets = [0, 384], sizes = [2, 128], strides = [1, 1]} : vector<2x512xf32> to vector<2x128xf32>
    %26 = math.tanh %25 : vector<2x128xf32>
    %27 = arith.mulf %23, %10 : vector<2x128xf32>
    %28 = arith.mulf %22, %26 : vector<2x128xf32>
    %29 = arith.addf %27, %28 : vector<2x128xf32>
    %30 = math.tanh %29 : vector<2x128xf32>
    %31 = arith.mulf %24, %30 : vector<2x128xf32>
    %c0_18 = arith.constant 0 : index
    %c0_19 = arith.constant 0 : index
    %c0_20 = arith.constant 0 : index
    %32 = vector.load %arg11[%c0_18, %c0_19, %c0_20] : memref<2x8x128xf32, #tpu.memory_space<vmem>>, vector<2x1x128xf32>
    %33 = vector.shape_cast %32 : vector<2x1x128xf32> to vector<2x128xf32>
    %34 = vector.shape_cast %31 : vector<2x128xf32> to vector<2x1x128xf32>
    tpu.vector_store %arg11[%c0_18, %c0_19, %c0_20], %34 {strides = array<i32>} : memref<2x8x128xf32, #tpu.memory_space<vmem>>, vector<2x1x128xf32>,
    %c0_21 = arith.constant 0 : index
    %c1 = arith.constant 1 : index
    %c0_22 = arith.constant 0 : index
    %35 = vector.load %arg10[%c0_21, %c1, %c0_22] : memref<2x8x512xf32, #tpu.memory_space<vmem>>, vector<2x1x512xf32>
    %36 = vector.shape_cast %35 : vector<2x1x512xf32> to vector<2x512xf32>
    %c0_23 = arith.constant 0 : index
    %c0_24 = arith.constant 0 : index
    %37 = vector.load %arg2[%c0_23, %c0_24] : memref<128x512xf32, #tpu.memory_space<vmem>>, vector<128x512xf32>
    %cst_25 = arith.constant dense<0.000000e+00> : vector<2x512xf32>
    %38 = tpu.matmul %31, %37, %cst_25 {dimension_numbers = #tpu.dot_dimension_numbers<[1], [0], [0], [1], [0, 0, 1, 1], [], []>} : vector<2x128xf32>, vector<128x512xf32>, vector<2x512xf32> -> vector<2x512xf32>
    %39 = arith.addf %36, %38 : vector<2x512xf32>
    %40 = vector.extract_strided_slice %39 {offsets = [0, 0], sizes = [2, 384], strides = [1, 1]} : vector<2x512xf32> to vector<2x384xf32>
    %41 = arith.negf %40 : vector<2x384xf32>
    %42 = math.exp %41 : vector<2x384xf32>
    %cst_26 = arith.constant 1.000000e+00 : f32
    %43 = vector.broadcast %cst_26 : f32 to vector<2x384xf32>
    %44 = arith.addf %43, %42 : vector<2x384xf32>
    %45 = arith.divf %43, %44 : vector<2x384xf32>
    %46 = vector.extract_strided_slice %45 {offsets = [0, 0], sizes = [2, 128], strides = [1, 1]} : vector<2x384xf32> to vector<2x128xf32>
    %47 = vector.extract_strided_slice %45 {offsets = [0, 128], sizes = [2, 128], strides = [1, 1]} : vector<2x384xf32> to vector<2x128xf32>
    %48 = vector.extract_strided_slice %45 {offsets = [0, 256], sizes = [2, 128], strides = [1, 1]} : vector<2x384xf32> to vector<2x128xf32>
    %49 = vector.extract_strided_slice %39 {offsets = [0, 384], sizes = [2, 128], strides = [1, 1]} : vector<2x512xf32> to vector<2x128xf32>
    %50 = math.tanh %49 : vector<2x128xf32>
    %51 = arith.mulf %47, %29 : vector<2x128xf32>
    %52 = arith.mulf %46, %50 : vector<2x128xf32>
    %53 = arith.addf %51, %52 : vector<2x128xf32>
    %54 = math.tanh %53 : vector<2x128xf32>
    %55 = arith.mulf %48, %54 : vector<2x128xf32>
    %c0_27 = arith.constant 0 : index
    %c1_28 = arith.constant 1 : index
    %c0_29 = arith.constant 0 : index
    %56 = vector.load %arg11[%c0_27, %c1_28, %c0_29] : memref<2x8x128xf32, #tpu.memory_space<vmem>>, vector<2x1x128xf32>
    %57 = vector.shape_cast %56 : vector<2x1x128xf32> to vector<2x128xf32>
    %58 = vector.shape_cast %55 : vector<2x128xf32> to vector<2x1x128xf32>
    tpu.vector_store %arg11[%c0_27, %c1_28, %c0_29], %58 {strides = array<i32>} : memref<2x8x128xf32, #tpu.memory_space<vmem>>, vector<2x1x128xf32>,
    %c0_30 = arith.constant 0 : index
    %c2 = arith.constant 2 : index
    %c0_31 = arith.constant 0 : index
    %59 = vector.load %arg10[%c0_30, %c2, %c0_31] : memref<2x8x512xf32, #tpu.memory_space<vmem>>, vector<2x1x512xf32>
    %60 = vector.shape_cast %59 : vector<2x1x512xf32> to vector<2x512xf32>
    %c0_32 = arith.constant 0 : index
    %c0_33 = arith.constant 0 : index
    %61 = vector.load %arg2[%c0_32, %c0_33] : memref<128x512xf32, #tpu.memory_space<vmem>>, vector<128x512xf32>
    %cst_34 = arith.constant dense<0.000000e+00> : vector<2x512xf32>
    %62 = tpu.matmul %55, %61, %cst_34 {dimension_numbers = #tpu.dot_dimension_numbers<[1], [0], [0], [1], [0, 0, 1, 1], [], []>} : vector<2x128xf32>, vector<128x512xf32>, vector<2x512xf32> -> vector<2x512xf32>
    %63 = arith.addf %60, %62 : vector<2x512xf32>
    %64 = vector.extract_strided_slice %63 {offsets = [0, 0], sizes = [2, 384], strides = [1, 1]} : vector<2x512xf32> to vector<2x384xf32>
    %65 = arith.negf %64 : vector<2x384xf32>
    %66 = math.exp %65 : vector<2x384xf32>
    %cst_35 = arith.constant 1.000000e+00 : f32
    %67 = vector.broadcast %cst_35 : f32 to vector<2x384xf32>
    %68 = arith.addf %67, %66 : vector<2x384xf32>
    %69 = arith.divf %67, %68 : vector<2x384xf32>
    %70 = vector.extract_strided_slice %69 {offsets = [0, 0], sizes = [2, 128], strides = [1, 1]} : vector<2x384xf32> to vector<2x128xf32>
    %71 = vector.extract_strided_slice %69 {offsets = [0, 128], sizes = [2, 128], strides = [1, 1]} : vector<2x384xf32> to vector<2x128xf32>
    %72 = vector.extract_strided_slice %69 {offsets = [0, 256], sizes = [2, 128], strides = [1, 1]} : vector<2x384xf32> to vector<2x128xf32>
    %73 = vector.extract_strided_slice %63 {offsets = [0, 384], sizes = [2, 128], strides = [1, 1]} : vector<2x512xf32> to vector<2x128xf32>
    %74 = math.tanh %73 : vector<2x128xf32>
    %75 = arith.mulf %71, %53 : vector<2x128xf32>
    %76 = arith.mulf %70, %74 : vector<2x128xf32>
    %77 = arith.addf %75, %76 : vector<2x128xf32>
    %78 = math.tanh %77 : vector<2x128xf32>
    %79 = arith.mulf %72, %78 : vector<2x128xf32>
    %c0_36 = arith.constant 0 : index
    %c2_37 = arith.constant 2 : index
    %c0_38 = arith.constant 0 : index
    %80 = vector.load %arg11[%c0_36, %c2_37, %c0_38] : memref<2x8x128xf32, #tpu.memory_space<vmem>>, vector<2x1x128xf32>
    %81 = vector.shape_cast %80 : vector<2x1x128xf32> to vector<2x128xf32>
    %82 = vector.shape_cast %79 : vector<2x128xf32> to vector<2x1x128xf32>
    tpu.vector_store %arg11[%c0_36, %c2_37, %c0_38], %82 {strides = array<i32>} : memref<2x8x128xf32, #tpu.memory_space<vmem>>, vector<2x1x128xf32>,
    %c0_39 = arith.constant 0 : index
    %c3 = arith.constant 3 : index
    %c0_40 = arith.constant 0 : index
    %83 = vector.load %arg10[%c0_39, %c3, %c0_40] : memref<2x8x512xf32, #tpu.memory_space<vmem>>, vector<2x1x512xf32>
    %84 = vector.shape_cast %83 : vector<2x1x512xf32> to vector<2x512xf32>
    %c0_41 = arith.constant 0 : index
    %c0_42 = arith.constant 0 : index
    %85 = vector.load %arg2[%c0_41, %c0_42] : memref<128x512xf32, #tpu.memory_space<vmem>>, vector<128x512xf32>
    %cst_43 = arith.constant dense<0.000000e+00> : vector<2x512xf32>
    %86 = tpu.matmul %79, %85, %cst_43 {dimension_numbers = #tpu.dot_dimension_numbers<[1], [0], [0], [1], [0, 0, 1, 1], [], []>} : vector<2x128xf32>, vector<128x512xf32>, vector<2x512xf32> -> vector<2x512xf32>
    %87 = arith.addf %84, %86 : vector<2x512xf32>
    %88 = vector.extract_strided_slice %87 {offsets = [0, 0], sizes = [2, 384], strides = [1, 1]} : vector<2x512xf32> to vector<2x384xf32>
    %89 = arith.negf %88 : vector<2x384xf32>
    %90 = math.exp %89 : vector<2x384xf32>
    %cst_44 = arith.constant 1.000000e+00 : f32
    %91 = vector.broadcast %cst_44 : f32 to vector<2x384xf32>
    %92 = arith.addf %91, %90 : vector<2x384xf32>
    %93 = arith.divf %91, %92 : vector<2x384xf32>
    %94 = vector.extract_strided_slice %93 {offsets = [0, 0], sizes = [2, 128], strides = [1, 1]} : vector<2x384xf32> to vector<2x128xf32>
    %95 = vector.extract_strided_slice %93 {offsets = [0, 128], sizes = [2, 128], strides = [1, 1]} : vector<2x384xf32> to vector<2x128xf32>
    %96 = vector.extract_strided_slice %93 {offsets = [0, 256], sizes = [2, 128], strides = [1, 1]} : vector<2x384xf32> to vector<2x128xf32>
    %97 = vector.extract_strided_slice %87 {offsets = [0, 384], sizes = [2, 128], strides = [1, 1]} : vector<2x512xf32> to vector<2x128xf32>
    %98 = math.tanh %97 : vector<2x128xf32>
    %99 = arith.mulf %95, %77 : vector<2x128xf32>
    %100 = arith.mulf %94, %98 : vector<2x128xf32>
    %101 = arith.addf %99, %100 : vector<2x128xf32>
    %102 = math.tanh %101 : vector<2x128xf32>
    %103 = arith.mulf %96, %102 : vector<2x128xf32>
    %c0_45 = arith.constant 0 : index
    %c3_46 = arith.constant 3 : index
    %c0_47 = arith.constant 0 : index
    %104 = vector.load %arg11[%c0_45, %c3_46, %c0_47] : memref<2x8x128xf32, #tpu.memory_space<vmem>>, vector<2x1x128xf32>
    %105 = vector.shape_cast %104 : vector<2x1x128xf32> to vector<2x128xf32>
    %106 = vector.shape_cast %103 : vector<2x128xf32> to vector<2x1x128xf32>
    tpu.vector_store %arg11[%c0_45, %c3_46, %c0_47], %106 {strides = array<i32>} : memref<2x8x128xf32, #tpu.memory_space<vmem>>, vector<2x1x128xf32>,
    %c0_48 = arith.constant 0 : index
    %c4 = arith.constant 4 : index
    %c0_49 = arith.constant 0 : index
    %107 = vector.load %arg10[%c0_48, %c4, %c0_49] : memref<2x8x512xf32, #tpu.memory_space<vmem>>, vector<2x1x512xf32>
    %108 = vector.shape_cast %107 : vector<2x1x512xf32> to vector<2x512xf32>
    %c0_50 = arith.constant 0 : index
    %c0_51 = arith.constant 0 : index
    %109 = vector.load %arg2[%c0_50, %c0_51] : memref<128x512xf32, #tpu.memory_space<vmem>>, vector<128x512xf32>
    %cst_52 = arith.constant dense<0.000000e+00> : vector<2x512xf32>
    %110 = tpu.matmul %103, %109, %cst_52 {dimension_numbers = #tpu.dot_dimension_numbers<[1], [0], [0], [1], [0, 0, 1, 1], [], []>} : vector<2x128xf32>, vector<128x512xf32>, vector<2x512xf32> -> vector<2x512xf32>
    %111 = arith.addf %108, %110 : vector<2x512xf32>
    %112 = vector.extract_strided_slice %111 {offsets = [0, 0], sizes = [2, 384], strides = [1, 1]} : vector<2x512xf32> to vector<2x384xf32>
    %113 = arith.negf %112 : vector<2x384xf32>
    %114 = math.exp %113 : vector<2x384xf32>
    %cst_53 = arith.constant 1.000000e+00 : f32
    %115 = vector.broadcast %cst_53 : f32 to vector<2x384xf32>
    %116 = arith.addf %115, %114 : vector<2x384xf32>
    %117 = arith.divf %115, %116 : vector<2x384xf32>
    %118 = vector.extract_strided_slice %117 {offsets = [0, 0], sizes = [2, 128], strides = [1, 1]} : vector<2x384xf32> to vector<2x128xf32>
    %119 = vector.extract_strided_slice %117 {offsets = [0, 128], sizes = [2, 128], strides = [1, 1]} : vector<2x384xf32> to vector<2x128xf32>
    %120 = vector.extract_strided_slice %117 {offsets = [0, 256], sizes = [2, 128], strides = [1, 1]} : vector<2x384xf32> to vector<2x128xf32>
    %121 = vector.extract_strided_slice %111 {offsets = [0, 384], sizes = [2, 128], strides = [1, 1]} : vector<2x512xf32> to vector<2x128xf32>
    %122 = math.tanh %121 : vector<2x128xf32>
    %123 = arith.mulf %119, %101 : vector<2x128xf32>
    %124 = arith.mulf %118, %122 : vector<2x128xf32>
    %125 = arith.addf %123, %124 : vector<2x128xf32>
    %126 = math.tanh %125 : vector<2x128xf32>
    %127 = arith.mulf %120, %126 : vector<2x128xf32>
    %c0_54 = arith.constant 0 : index
    %c4_55 = arith.constant 4 : index
    %c0_56 = arith.constant 0 : index
    %128 = vector.load %arg11[%c0_54, %c4_55, %c0_56] : memref<2x8x128xf32, #tpu.memory_space<vmem>>, vector<2x1x128xf32>
    %129 = vector.shape_cast %128 : vector<2x1x128xf32> to vector<2x128xf32>
    %130 = vector.shape_cast %127 : vector<2x128xf32> to vector<2x1x128xf32>
    tpu.vector_store %arg11[%c0_54, %c4_55, %c0_56], %130 {strides = array<i32>} : memref<2x8x128xf32, #tpu.memory_space<vmem>>, vector<2x1x128xf32>,
    %c0_57 = arith.constant 0 : index
    %c5 = arith.constant 5 : index
    %c0_58 = arith.constant 0 : index
    %131 = vector.load %arg10[%c0_57, %c5, %c0_58] : memref<2x8x512xf32, #tpu.memory_space<vmem>>, vector<2x1x512xf32>
    %132 = vector.shape_cast %131 : vector<2x1x512xf32> to vector<2x512xf32>
    %c0_59 = arith.constant 0 : index
    %c0_60 = arith.constant 0 : index
    %133 = vector.load %arg2[%c0_59, %c0_60] : memref<128x512xf32, #tpu.memory_space<vmem>>, vector<128x512xf32>
    %cst_61 = arith.constant dense<0.000000e+00> : vector<2x512xf32>
    %134 = tpu.matmul %127, %133, %cst_61 {dimension_numbers = #tpu.dot_dimension_numbers<[1], [0], [0], [1], [0, 0, 1, 1], [], []>} : vector<2x128xf32>, vector<128x512xf32>, vector<2x512xf32> -> vector<2x512xf32>
    %135 = arith.addf %132, %134 : vector<2x512xf32>
    %136 = vector.extract_strided_slice %135 {offsets = [0, 0], sizes = [2, 384], strides = [1, 1]} : vector<2x512xf32> to vector<2x384xf32>
    %137 = arith.negf %136 : vector<2x384xf32>
    %138 = math.exp %137 : vector<2x384xf32>
    %cst_62 = arith.constant 1.000000e+00 : f32
    %139 = vector.broadcast %cst_62 : f32 to vector<2x384xf32>
    %140 = arith.addf %139, %138 : vector<2x384xf32>
    %141 = arith.divf %139, %140 : vector<2x384xf32>
    %142 = vector.extract_strided_slice %141 {offsets = [0, 0], sizes = [2, 128], strides = [1, 1]} : vector<2x384xf32> to vector<2x128xf32>
    %143 = vector.extract_strided_slice %141 {offsets = [0, 128], sizes = [2, 128], strides = [1, 1]} : vector<2x384xf32> to vector<2x128xf32>
    %144 = vector.extract_strided_slice %141 {offsets = [0, 256], sizes = [2, 128], strides = [1, 1]} : vector<2x384xf32> to vector<2x128xf32>
    %145 = vector.extract_strided_slice %135 {offsets = [0, 384], sizes = [2, 128], strides = [1, 1]} : vector<2x512xf32> to vector<2x128xf32>
    %146 = math.tanh %145 : vector<2x128xf32>
    %147 = arith.mulf %143, %125 : vector<2x128xf32>
    %148 = arith.mulf %142, %146 : vector<2x128xf32>
    %149 = arith.addf %147, %148 : vector<2x128xf32>
    %150 = math.tanh %149 : vector<2x128xf32>
    %151 = arith.mulf %144, %150 : vector<2x128xf32>
    %c0_63 = arith.constant 0 : index
    %c5_64 = arith.constant 5 : index
    %c0_65 = arith.constant 0 : index
    %152 = vector.load %arg11[%c0_63, %c5_64, %c0_65] : memref<2x8x128xf32, #tpu.memory_space<vmem>>, vector<2x1x128xf32>
    %153 = vector.shape_cast %152 : vector<2x1x128xf32> to vector<2x128xf32>
    %154 = vector.shape_cast %151 : vector<2x128xf32> to vector<2x1x128xf32>
    tpu.vector_store %arg11[%c0_63, %c5_64, %c0_65], %154 {strides = array<i32>} : memref<2x8x128xf32, #tpu.memory_space<vmem>>, vector<2x1x128xf32>,
    %c0_66 = arith.constant 0 : index
    %c6 = arith.constant 6 : index
    %c0_67 = arith.constant 0 : index
    %155 = vector.load %arg10[%c0_66, %c6, %c0_67] : memref<2x8x512xf32, #tpu.memory_space<vmem>>, vector<2x1x512xf32>
    %156 = vector.shape_cast %155 : vector<2x1x512xf32> to vector<2x512xf32>
    %c0_68 = arith.constant 0 : index
    %c0_69 = arith.constant 0 : index
    %157 = vector.load %arg2[%c0_68, %c0_69] : memref<128x512xf32, #tpu.memory_space<vmem>>, vector<128x512xf32>
    %cst_70 = arith.constant dense<0.000000e+00> : vector<2x512xf32>
    %158 = tpu.matmul %151, %157, %cst_70 {dimension_numbers = #tpu.dot_dimension_numbers<[1], [0], [0], [1], [0, 0, 1, 1], [], []>} : vector<2x128xf32>, vector<128x512xf32>, vector<2x512xf32> -> vector<2x512xf32>
    %159 = arith.addf %156, %158 : vector<2x512xf32>
    %160 = vector.extract_strided_slice %159 {offsets = [0, 0], sizes = [2, 384], strides = [1, 1]} : vector<2x512xf32> to vector<2x384xf32>
    %161 = arith.negf %160 : vector<2x384xf32>
    %162 = math.exp %161 : vector<2x384xf32>
    %cst_71 = arith.constant 1.000000e+00 : f32
    %163 = vector.broadcast %cst_71 : f32 to vector<2x384xf32>
    %164 = arith.addf %163, %162 : vector<2x384xf32>
    %165 = arith.divf %163, %164 : vector<2x384xf32>
    %166 = vector.extract_strided_slice %165 {offsets = [0, 0], sizes = [2, 128], strides = [1, 1]} : vector<2x384xf32> to vector<2x128xf32>
    %167 = vector.extract_strided_slice %165 {offsets = [0, 128], sizes = [2, 128], strides = [1, 1]} : vector<2x384xf32> to vector<2x128xf32>
    %168 = vector.extract_strided_slice %165 {offsets = [0, 256], sizes = [2, 128], strides = [1, 1]} : vector<2x384xf32> to vector<2x128xf32>
    %169 = vector.extract_strided_slice %159 {offsets = [0, 384], sizes = [2, 128], strides = [1, 1]} : vector<2x512xf32> to vector<2x128xf32>
    %170 = math.tanh %169 : vector<2x128xf32>
    %171 = arith.mulf %167, %149 : vector<2x128xf32>
    %172 = arith.mulf %166, %170 : vector<2x128xf32>
    %173 = arith.addf %171, %172 : vector<2x128xf32>
    %174 = math.tanh %173 : vector<2x128xf32>
    %175 = arith.mulf %168, %174 : vector<2x128xf32>
    %c0_72 = arith.constant 0 : index
    %c6_73 = arith.constant 6 : index
    %c0_74 = arith.constant 0 : index
    %176 = vector.load %arg11[%c0_72, %c6_73, %c0_74] : memref<2x8x128xf32, #tpu.memory_space<vmem>>, vector<2x1x128xf32>
    %177 = vector.shape_cast %176 : vector<2x1x128xf32> to vector<2x128xf32>
    %178 = vector.shape_cast %175 : vector<2x128xf32> to vector<2x1x128xf32>
    tpu.vector_store %arg11[%c0_72, %c6_73, %c0_74], %178 {strides = array<i32>} : memref<2x8x128xf32, #tpu.memory_space<vmem>>, vector<2x1x128xf32>,
    %c0_75 = arith.constant 0 : index
    %c7 = arith.constant 7 : index
    %c0_76 = arith.constant 0 : index
    %179 = vector.load %arg10[%c0_75, %c7, %c0_76] : memref<2x8x512xf32, #tpu.memory_space<vmem>>, vector<2x1x512xf32>
    %180 = vector.shape_cast %179 : vector<2x1x512xf32> to vector<2x512xf32>
    %c0_77 = arith.constant 0 : index
    %c0_78 = arith.constant 0 : index
    %181 = vector.load %arg2[%c0_77, %c0_78] : memref<128x512xf32, #tpu.memory_space<vmem>>, vector<128x512xf32>
    %cst_79 = arith.constant dense<0.000000e+00> : vector<2x512xf32>
    %182 = tpu.matmul %175, %181, %cst_79 {dimension_numbers = #tpu.dot_dimension_numbers<[1], [0], [0], [1], [0, 0, 1, 1], [], []>} : vector<2x128xf32>, vector<128x512xf32>, vector<2x512xf32> -> vector<2x512xf32>
    %183 = arith.addf %180, %182 : vector<2x512xf32>
    %184 = vector.extract_strided_slice %183 {offsets = [0, 0], sizes = [2, 384], strides = [1, 1]} : vector<2x512xf32> to vector<2x384xf32>
    %185 = arith.negf %184 : vector<2x384xf32>
    %186 = math.exp %185 : vector<2x384xf32>
    %cst_80 = arith.constant 1.000000e+00 : f32
    %187 = vector.broadcast %cst_80 : f32 to vector<2x384xf32>
    %188 = arith.addf %187, %186 : vector<2x384xf32>
    %189 = arith.divf %187, %188 : vector<2x384xf32>
    %190 = vector.extract_strided_slice %189 {offsets = [0, 0], sizes = [2, 128], strides = [1, 1]} : vector<2x384xf32> to vector<2x128xf32>
    %191 = vector.extract_strided_slice %189 {offsets = [0, 128], sizes = [2, 128], strides = [1, 1]} : vector<2x384xf32> to vector<2x128xf32>
    %192 = vector.extract_strided_slice %189 {offsets = [0, 256], sizes = [2, 128], strides = [1, 1]} : vector<2x384xf32> to vector<2x128xf32>
    %193 = vector.extract_strided_slice %183 {offsets = [0, 384], sizes = [2, 128], strides = [1, 1]} : vector<2x512xf32> to vector<2x128xf32>
    %194 = math.tanh %193 : vector<2x128xf32>
    %195 = arith.mulf %191, %173 : vector<2x128xf32>
    %196 = arith.mulf %190, %194 : vector<2x128xf32>
    %197 = arith.addf %195, %196 : vector<2x128xf32>
    %198 = math.tanh %197 : vector<2x128xf32>
    %199 = arith.mulf %192, %198 : vector<2x128xf32>
    %c0_81 = arith.constant 0 : index
    %c7_82 = arith.constant 7 : index
    %c0_83 = arith.constant 0 : index
    %200 = vector.load %arg11[%c0_81, %c7_82, %c0_83] : memref<2x8x128xf32, #tpu.memory_space<vmem>>, vector<2x1x128xf32>
    %201 = vector.shape_cast %200 : vector<2x1x128xf32> to vector<2x128xf32>
    %202 = vector.shape_cast %199 : vector<2x128xf32> to vector<2x1x128xf32>
    tpu.vector_store %arg11[%c0_81, %c7_82, %c0_83], %202 {strides = array<i32>} : memref<2x8x128xf32, #tpu.memory_space<vmem>>, vector<2x1x128xf32>,
    %c0_84 = arith.constant 0 : index
    %c0_85 = arith.constant 0 : index
    %c0_86 = arith.constant 0 : index
    %203 = vector.load %arg11[%c0_84, %c0_85, %c0_86] : memref<2x8x128xf32, #tpu.memory_space<vmem>>, vector<2x8x128xf32>
    %204 = vector.shape_cast %203 : vector<2x8x128xf32> to vector<16x128xf32>
    %c0_87 = arith.constant 0 : index
    %c0_88 = arith.constant 0 : index
    %205 = vector.load %arg4[%c0_87, %c0_88] : memref<128x512xf32, #tpu.memory_space<vmem>>, vector<128x512xf32>
    %cst_89 = arith.constant dense<0.000000e+00> : vector<16x512xf32>
    %206 = tpu.matmul %204, %205, %cst_89 {dimension_numbers = #tpu.dot_dimension_numbers<[1], [0], [0], [1], [0, 0, 1, 1], [], []>} : vector<16x128xf32>, vector<128x512xf32>, vector<16x512xf32> -> vector<16x512xf32>
    %c0_90 = arith.constant 0 : index
    %c0_91 = arith.constant 0 : index
    %207 = vector.load %arg6[%c0_90, %c0_91] : memref<1x512xf32, #tpu.memory_space<vmem>>, vector<1x512xf32>
    %208 = vector.broadcast %207 : vector<1x512xf32> to vector<16x512xf32>
    %209 = arith.addf %206, %208 : vector<16x512xf32>
    %210 = vector.shape_cast %209 : vector<16x512xf32> to vector<2x8x512xf32>
    %c0_92 = arith.constant 0 : index
    %c0_93 = arith.constant 0 : index
    %c0_94 = arith.constant 0 : index
    %211 = vector.load %arg10[%c0_92, %c0_93, %c0_94] : memref<2x8x512xf32, #tpu.memory_space<vmem>>, vector<2x8x512xf32>
    tpu.vector_store %arg10[%c0_92, %c0_93, %c0_94], %210 {strides = array<i32>} : memref<2x8x512xf32, #tpu.memory_space<vmem>>, vector<2x8x512xf32>,
    %cst_95 = arith.constant 0.000000e+00 : f32
    %212 = vector.broadcast %cst_95 : f32 to vector<2x128xf32>
    %cst_96 = arith.constant 0.000000e+00 : f32
    %213 = vector.broadcast %cst_96 : f32 to vector<2x128xf32>
    %c0_97 = arith.constant 0 : index
    %c0_98 = arith.constant 0 : index
    %c0_99 = arith.constant 0 : index
    %214 = vector.load %arg10[%c0_97, %c0_98, %c0_99] : memref<2x8x512xf32, #tpu.memory_space<vmem>>, vector<2x1x512xf32>
    %215 = vector.shape_cast %214 : vector<2x1x512xf32> to vector<2x512xf32>
    %c0_100 = arith.constant 0 : index
    %c0_101 = arith.constant 0 : index
    %216 = vector.load %arg5[%c0_100, %c0_101] : memref<128x512xf32, #tpu.memory_space<vmem>>, vector<128x512xf32>
    %cst_102 = arith.constant dense<0.000000e+00> : vector<2x512xf32>
    %217 = tpu.matmul %212, %216, %cst_102 {dimension_numbers = #tpu.dot_dimension_numbers<[1], [0], [0], [1], [0, 0, 1, 1], [], []>} : vector<2x128xf32>, vector<128x512xf32>, vector<2x512xf32> -> vector<2x512xf32>
    %218 = arith.addf %215, %217 : vector<2x512xf32>
    %219 = vector.extract_strided_slice %218 {offsets = [0, 0], sizes = [2, 384], strides = [1, 1]} : vector<2x512xf32> to vector<2x384xf32>
    %220 = arith.negf %219 : vector<2x384xf32>
    %221 = math.exp %220 : vector<2x384xf32>
    %cst_103 = arith.constant 1.000000e+00 : f32
    %222 = vector.broadcast %cst_103 : f32 to vector<2x384xf32>
    %223 = arith.addf %222, %221 : vector<2x384xf32>
    %224 = arith.divf %222, %223 : vector<2x384xf32>
    %225 = vector.extract_strided_slice %224 {offsets = [0, 0], sizes = [2, 128], strides = [1, 1]} : vector<2x384xf32> to vector<2x128xf32>
    %226 = vector.extract_strided_slice %224 {offsets = [0, 128], sizes = [2, 128], strides = [1, 1]} : vector<2x384xf32> to vector<2x128xf32>
    %227 = vector.extract_strided_slice %224 {offsets = [0, 256], sizes = [2, 128], strides = [1, 1]} : vector<2x384xf32> to vector<2x128xf32>
    %228 = vector.extract_strided_slice %218 {offsets = [0, 384], sizes = [2, 128], strides = [1, 1]} : vector<2x512xf32> to vector<2x128xf32>
    %229 = math.tanh %228 : vector<2x128xf32>
    %230 = arith.mulf %226, %213 : vector<2x128xf32>
    %231 = arith.mulf %225, %229 : vector<2x128xf32>
    %232 = arith.addf %230, %231 : vector<2x128xf32>
    %233 = math.tanh %232 : vector<2x128xf32>
    %234 = arith.mulf %227, %233 : vector<2x128xf32>
    %c0_104 = arith.constant 0 : index
    %c0_105 = arith.constant 0 : index
    %c0_106 = arith.constant 0 : index
    %235 = vector.load %arg11[%c0_104, %c0_105, %c0_106] : memref<2x8x128xf32, #tpu.memory_space<vmem>>, vector<2x1x128xf32>
    %236 = vector.shape_cast %235 : vector<2x1x128xf32> to vector<2x128xf32>
    %237 = vector.shape_cast %234 : vector<2x128xf32> to vector<2x1x128xf32>
    tpu.vector_store %arg11[%c0_104, %c0_105, %c0_106], %237 {strides = array<i32>} : memref<2x8x128xf32, #tpu.memory_space<vmem>>, vector<2x1x128xf32>,
    %c0_107 = arith.constant 0 : index
    %c1_108 = arith.constant 1 : index
    %c0_109 = arith.constant 0 : index
    %238 = vector.load %arg10[%c0_107, %c1_108, %c0_109] : memref<2x8x512xf32, #tpu.memory_space<vmem>>, vector<2x1x512xf32>
    %239 = vector.shape_cast %238 : vector<2x1x512xf32> to vector<2x512xf32>
    %c0_110 = arith.constant 0 : index
    %c0_111 = arith.constant 0 : index
    %240 = vector.load %arg5[%c0_110, %c0_111] : memref<128x512xf32, #tpu.memory_space<vmem>>, vector<128x512xf32>
    %cst_112 = arith.constant dense<0.000000e+00> : vector<2x512xf32>
    %241 = tpu.matmul %234, %240, %cst_112 {dimension_numbers = #tpu.dot_dimension_numbers<[1], [0], [0], [1], [0, 0, 1, 1], [], []>} : vector<2x128xf32>, vector<128x512xf32>, vector<2x512xf32> -> vector<2x512xf32>
    %242 = arith.addf %239, %241 : vector<2x512xf32>
    %243 = vector.extract_strided_slice %242 {offsets = [0, 0], sizes = [2, 384], strides = [1, 1]} : vector<2x512xf32> to vector<2x384xf32>
    %244 = arith.negf %243 : vector<2x384xf32>
    %245 = math.exp %244 : vector<2x384xf32>
    %cst_113 = arith.constant 1.000000e+00 : f32
    %246 = vector.broadcast %cst_113 : f32 to vector<2x384xf32>
    %247 = arith.addf %246, %245 : vector<2x384xf32>
    %248 = arith.divf %246, %247 : vector<2x384xf32>
    %249 = vector.extract_strided_slice %248 {offsets = [0, 0], sizes = [2, 128], strides = [1, 1]} : vector<2x384xf32> to vector<2x128xf32>
    %250 = vector.extract_strided_slice %248 {offsets = [0, 128], sizes = [2, 128], strides = [1, 1]} : vector<2x384xf32> to vector<2x128xf32>
    %251 = vector.extract_strided_slice %248 {offsets = [0, 256], sizes = [2, 128], strides = [1, 1]} : vector<2x384xf32> to vector<2x128xf32>
    %252 = vector.extract_strided_slice %242 {offsets = [0, 384], sizes = [2, 128], strides = [1, 1]} : vector<2x512xf32> to vector<2x128xf32>
    %253 = math.tanh %252 : vector<2x128xf32>
    %254 = arith.mulf %250, %232 : vector<2x128xf32>
    %255 = arith.mulf %249, %253 : vector<2x128xf32>
    %256 = arith.addf %254, %255 : vector<2x128xf32>
    %257 = math.tanh %256 : vector<2x128xf32>
    %258 = arith.mulf %251, %257 : vector<2x128xf32>
    %c0_114 = arith.constant 0 : index
    %c1_115 = arith.constant 1 : index
    %c0_116 = arith.constant 0 : index
    %259 = vector.load %arg11[%c0_114, %c1_115, %c0_116] : memref<2x8x128xf32, #tpu.memory_space<vmem>>, vector<2x1x128xf32>
    %260 = vector.shape_cast %259 : vector<2x1x128xf32> to vector<2x128xf32>
    %261 = vector.shape_cast %258 : vector<2x128xf32> to vector<2x1x128xf32>
    tpu.vector_store %arg11[%c0_114, %c1_115, %c0_116], %261 {strides = array<i32>} : memref<2x8x128xf32, #tpu.memory_space<vmem>>, vector<2x1x128xf32>,
    %c0_117 = arith.constant 0 : index
    %c2_118 = arith.constant 2 : index
    %c0_119 = arith.constant 0 : index
    %262 = vector.load %arg10[%c0_117, %c2_118, %c0_119] : memref<2x8x512xf32, #tpu.memory_space<vmem>>, vector<2x1x512xf32>
    %263 = vector.shape_cast %262 : vector<2x1x512xf32> to vector<2x512xf32>
    %c0_120 = arith.constant 0 : index
    %c0_121 = arith.constant 0 : index
    %264 = vector.load %arg5[%c0_120, %c0_121] : memref<128x512xf32, #tpu.memory_space<vmem>>, vector<128x512xf32>
    %cst_122 = arith.constant dense<0.000000e+00> : vector<2x512xf32>
    %265 = tpu.matmul %258, %264, %cst_122 {dimension_numbers = #tpu.dot_dimension_numbers<[1], [0], [0], [1], [0, 0, 1, 1], [], []>} : vector<2x128xf32>, vector<128x512xf32>, vector<2x512xf32> -> vector<2x512xf32>
    %266 = arith.addf %263, %265 : vector<2x512xf32>
    %267 = vector.extract_strided_slice %266 {offsets = [0, 0], sizes = [2, 384], strides = [1, 1]} : vector<2x512xf32> to vector<2x384xf32>
    %268 = arith.negf %267 : vector<2x384xf32>
    %269 = math.exp %268 : vector<2x384xf32>
    %cst_123 = arith.constant 1.000000e+00 : f32
    %270 = vector.broadcast %cst_123 : f32 to vector<2x384xf32>
    %271 = arith.addf %270, %269 : vector<2x384xf32>
    %272 = arith.divf %270, %271 : vector<2x384xf32>
    %273 = vector.extract_strided_slice %272 {offsets = [0, 0], sizes = [2, 128], strides = [1, 1]} : vector<2x384xf32> to vector<2x128xf32>
    %274 = vector.extract_strided_slice %272 {offsets = [0, 128], sizes = [2, 128], strides = [1, 1]} : vector<2x384xf32> to vector<2x128xf32>
    %275 = vector.extract_strided_slice %272 {offsets = [0, 256], sizes = [2, 128], strides = [1, 1]} : vector<2x384xf32> to vector<2x128xf32>
    %276 = vector.extract_strided_slice %266 {offsets = [0, 384], sizes = [2, 128], strides = [1, 1]} : vector<2x512xf32> to vector<2x128xf32>
    %277 = math.tanh %276 : vector<2x128xf32>
    %278 = arith.mulf %274, %256 : vector<2x128xf32>
    %279 = arith.mulf %273, %277 : vector<2x128xf32>
    %280 = arith.addf %278, %279 : vector<2x128xf32>
    %281 = math.tanh %280 : vector<2x128xf32>
    %282 = arith.mulf %275, %281 : vector<2x128xf32>
    %c0_124 = arith.constant 0 : index
    %c2_125 = arith.constant 2 : index
    %c0_126 = arith.constant 0 : index
    %283 = vector.load %arg11[%c0_124, %c2_125, %c0_126] : memref<2x8x128xf32, #tpu.memory_space<vmem>>, vector<2x1x128xf32>
    %284 = vector.shape_cast %283 : vector<2x1x128xf32> to vector<2x128xf32>
    %285 = vector.shape_cast %282 : vector<2x128xf32> to vector<2x1x128xf32>
    tpu.vector_store %arg11[%c0_124, %c2_125, %c0_126], %285 {strides = array<i32>} : memref<2x8x128xf32, #tpu.memory_space<vmem>>, vector<2x1x128xf32>,
    %c0_127 = arith.constant 0 : index
    %c3_128 = arith.constant 3 : index
    %c0_129 = arith.constant 0 : index
    %286 = vector.load %arg10[%c0_127, %c3_128, %c0_129] : memref<2x8x512xf32, #tpu.memory_space<vmem>>, vector<2x1x512xf32>
    %287 = vector.shape_cast %286 : vector<2x1x512xf32> to vector<2x512xf32>
    %c0_130 = arith.constant 0 : index
    %c0_131 = arith.constant 0 : index
    %288 = vector.load %arg5[%c0_130, %c0_131] : memref<128x512xf32, #tpu.memory_space<vmem>>, vector<128x512xf32>
    %cst_132 = arith.constant dense<0.000000e+00> : vector<2x512xf32>
    %289 = tpu.matmul %282, %288, %cst_132 {dimension_numbers = #tpu.dot_dimension_numbers<[1], [0], [0], [1], [0, 0, 1, 1], [], []>} : vector<2x128xf32>, vector<128x512xf32>, vector<2x512xf32> -> vector<2x512xf32>
    %290 = arith.addf %287, %289 : vector<2x512xf32>
    %291 = vector.extract_strided_slice %290 {offsets = [0, 0], sizes = [2, 384], strides = [1, 1]} : vector<2x512xf32> to vector<2x384xf32>
    %292 = arith.negf %291 : vector<2x384xf32>
    %293 = math.exp %292 : vector<2x384xf32>
    %cst_133 = arith.constant 1.000000e+00 : f32
    %294 = vector.broadcast %cst_133 : f32 to vector<2x384xf32>
    %295 = arith.addf %294, %293 : vector<2x384xf32>
    %296 = arith.divf %294, %295 : vector<2x384xf32>
    %297 = vector.extract_strided_slice %296 {offsets = [0, 0], sizes = [2, 128], strides = [1, 1]} : vector<2x384xf32> to vector<2x128xf32>
    %298 = vector.extract_strided_slice %296 {offsets = [0, 128], sizes = [2, 128], strides = [1, 1]} : vector<2x384xf32> to vector<2x128xf32>
    %299 = vector.extract_strided_slice %296 {offsets = [0, 256], sizes = [2, 128], strides = [1, 1]} : vector<2x384xf32> to vector<2x128xf32>
    %300 = vector.extract_strided_slice %290 {offsets = [0, 384], sizes = [2, 128], strides = [1, 1]} : vector<2x512xf32> to vector<2x128xf32>
    %301 = math.tanh %300 : vector<2x128xf32>
    %302 = arith.mulf %298, %280 : vector<2x128xf32>
    %303 = arith.mulf %297, %301 : vector<2x128xf32>
    %304 = arith.addf %302, %303 : vector<2x128xf32>
    %305 = math.tanh %304 : vector<2x128xf32>
    %306 = arith.mulf %299, %305 : vector<2x128xf32>
    %c0_134 = arith.constant 0 : index
    %c3_135 = arith.constant 3 : index
    %c0_136 = arith.constant 0 : index
    %307 = vector.load %arg11[%c0_134, %c3_135, %c0_136] : memref<2x8x128xf32, #tpu.memory_space<vmem>>, vector<2x1x128xf32>
    %308 = vector.shape_cast %307 : vector<2x1x128xf32> to vector<2x128xf32>
    %309 = vector.shape_cast %306 : vector<2x128xf32> to vector<2x1x128xf32>
    tpu.vector_store %arg11[%c0_134, %c3_135, %c0_136], %309 {strides = array<i32>} : memref<2x8x128xf32, #tpu.memory_space<vmem>>, vector<2x1x128xf32>,
    %c0_137 = arith.constant 0 : index
    %c4_138 = arith.constant 4 : index
    %c0_139 = arith.constant 0 : index
    %310 = vector.load %arg10[%c0_137, %c4_138, %c0_139] : memref<2x8x512xf32, #tpu.memory_space<vmem>>, vector<2x1x512xf32>
    %311 = vector.shape_cast %310 : vector<2x1x512xf32> to vector<2x512xf32>
    %c0_140 = arith.constant 0 : index
    %c0_141 = arith.constant 0 : index
    %312 = vector.load %arg5[%c0_140, %c0_141] : memref<128x512xf32, #tpu.memory_space<vmem>>, vector<128x512xf32>
    %cst_142 = arith.constant dense<0.000000e+00> : vector<2x512xf32>
    %313 = tpu.matmul %306, %312, %cst_142 {dimension_numbers = #tpu.dot_dimension_numbers<[1], [0], [0], [1], [0, 0, 1, 1], [], []>} : vector<2x128xf32>, vector<128x512xf32>, vector<2x512xf32> -> vector<2x512xf32>
    %314 = arith.addf %311, %313 : vector<2x512xf32>
    %315 = vector.extract_strided_slice %314 {offsets = [0, 0], sizes = [2, 384], strides = [1, 1]} : vector<2x512xf32> to vector<2x384xf32>
    %316 = arith.negf %315 : vector<2x384xf32>
    %317 = math.exp %316 : vector<2x384xf32>
    %cst_143 = arith.constant 1.000000e+00 : f32
    %318 = vector.broadcast %cst_143 : f32 to vector<2x384xf32>
    %319 = arith.addf %318, %317 : vector<2x384xf32>
    %320 = arith.divf %318, %319 : vector<2x384xf32>
    %321 = vector.extract_strided_slice %320 {offsets = [0, 0], sizes = [2, 128], strides = [1, 1]} : vector<2x384xf32> to vector<2x128xf32>
    %322 = vector.extract_strided_slice %320 {offsets = [0, 128], sizes = [2, 128], strides = [1, 1]} : vector<2x384xf32> to vector<2x128xf32>
    %323 = vector.extract_strided_slice %320 {offsets = [0, 256], sizes = [2, 128], strides = [1, 1]} : vector<2x384xf32> to vector<2x128xf32>
    %324 = vector.extract_strided_slice %314 {offsets = [0, 384], sizes = [2, 128], strides = [1, 1]} : vector<2x512xf32> to vector<2x128xf32>
    %325 = math.tanh %324 : vector<2x128xf32>
    %326 = arith.mulf %322, %304 : vector<2x128xf32>
    %327 = arith.mulf %321, %325 : vector<2x128xf32>
    %328 = arith.addf %326, %327 : vector<2x128xf32>
    %329 = math.tanh %328 : vector<2x128xf32>
    %330 = arith.mulf %323, %329 : vector<2x128xf32>
    %c0_144 = arith.constant 0 : index
    %c4_145 = arith.constant 4 : index
    %c0_146 = arith.constant 0 : index
    %331 = vector.load %arg11[%c0_144, %c4_145, %c0_146] : memref<2x8x128xf32, #tpu.memory_space<vmem>>, vector<2x1x128xf32>
    %332 = vector.shape_cast %331 : vector<2x1x128xf32> to vector<2x128xf32>
    %333 = vector.shape_cast %330 : vector<2x128xf32> to vector<2x1x128xf32>
    tpu.vector_store %arg11[%c0_144, %c4_145, %c0_146], %333 {strides = array<i32>} : memref<2x8x128xf32, #tpu.memory_space<vmem>>, vector<2x1x128xf32>,
    %c0_147 = arith.constant 0 : index
    %c5_148 = arith.constant 5 : index
    %c0_149 = arith.constant 0 : index
    %334 = vector.load %arg10[%c0_147, %c5_148, %c0_149] : memref<2x8x512xf32, #tpu.memory_space<vmem>>, vector<2x1x512xf32>
    %335 = vector.shape_cast %334 : vector<2x1x512xf32> to vector<2x512xf32>
    %c0_150 = arith.constant 0 : index
    %c0_151 = arith.constant 0 : index
    %336 = vector.load %arg5[%c0_150, %c0_151] : memref<128x512xf32, #tpu.memory_space<vmem>>, vector<128x512xf32>
    %cst_152 = arith.constant dense<0.000000e+00> : vector<2x512xf32>
    %337 = tpu.matmul %330, %336, %cst_152 {dimension_numbers = #tpu.dot_dimension_numbers<[1], [0], [0], [1], [0, 0, 1, 1], [], []>} : vector<2x128xf32>, vector<128x512xf32>, vector<2x512xf32> -> vector<2x512xf32>
    %338 = arith.addf %335, %337 : vector<2x512xf32>
    %339 = vector.extract_strided_slice %338 {offsets = [0, 0], sizes = [2, 384], strides = [1, 1]} : vector<2x512xf32> to vector<2x384xf32>
    %340 = arith.negf %339 : vector<2x384xf32>
    %341 = math.exp %340 : vector<2x384xf32>
    %cst_153 = arith.constant 1.000000e+00 : f32
    %342 = vector.broadcast %cst_153 : f32 to vector<2x384xf32>
    %343 = arith.addf %342, %341 : vector<2x384xf32>
    %344 = arith.divf %342, %343 : vector<2x384xf32>
    %345 = vector.extract_strided_slice %344 {offsets = [0, 0], sizes = [2, 128], strides = [1, 1]} : vector<2x384xf32> to vector<2x128xf32>
    %346 = vector.extract_strided_slice %344 {offsets = [0, 128], sizes = [2, 128], strides = [1, 1]} : vector<2x384xf32> to vector<2x128xf32>
    %347 = vector.extract_strided_slice %344 {offsets = [0, 256], sizes = [2, 128], strides = [1, 1]} : vector<2x384xf32> to vector<2x128xf32>
    %348 = vector.extract_strided_slice %338 {offsets = [0, 384], sizes = [2, 128], strides = [1, 1]} : vector<2x512xf32> to vector<2x128xf32>
    %349 = math.tanh %348 : vector<2x128xf32>
    %350 = arith.mulf %346, %328 : vector<2x128xf32>
    %351 = arith.mulf %345, %349 : vector<2x128xf32>
    %352 = arith.addf %350, %351 : vector<2x128xf32>
    %353 = math.tanh %352 : vector<2x128xf32>
    %354 = arith.mulf %347, %353 : vector<2x128xf32>
    %c0_154 = arith.constant 0 : index
    %c5_155 = arith.constant 5 : index
    %c0_156 = arith.constant 0 : index
    %355 = vector.load %arg11[%c0_154, %c5_155, %c0_156] : memref<2x8x128xf32, #tpu.memory_space<vmem>>, vector<2x1x128xf32>
    %356 = vector.shape_cast %355 : vector<2x1x128xf32> to vector<2x128xf32>
    %357 = vector.shape_cast %354 : vector<2x128xf32> to vector<2x1x128xf32>
    tpu.vector_store %arg11[%c0_154, %c5_155, %c0_156], %357 {strides = array<i32>} : memref<2x8x128xf32, #tpu.memory_space<vmem>>, vector<2x1x128xf32>,
    %c0_157 = arith.constant 0 : index
    %c6_158 = arith.constant 6 : index
    %c0_159 = arith.constant 0 : index
    %358 = vector.load %arg10[%c0_157, %c6_158, %c0_159] : memref<2x8x512xf32, #tpu.memory_space<vmem>>, vector<2x1x512xf32>
    %359 = vector.shape_cast %358 : vector<2x1x512xf32> to vector<2x512xf32>
    %c0_160 = arith.constant 0 : index
    %c0_161 = arith.constant 0 : index
    %360 = vector.load %arg5[%c0_160, %c0_161] : memref<128x512xf32, #tpu.memory_space<vmem>>, vector<128x512xf32>
    %cst_162 = arith.constant dense<0.000000e+00> : vector<2x512xf32>
    %361 = tpu.matmul %354, %360, %cst_162 {dimension_numbers = #tpu.dot_dimension_numbers<[1], [0], [0], [1], [0, 0, 1, 1], [], []>} : vector<2x128xf32>, vector<128x512xf32>, vector<2x512xf32> -> vector<2x512xf32>
    %362 = arith.addf %359, %361 : vector<2x512xf32>
    %363 = vector.extract_strided_slice %362 {offsets = [0, 0], sizes = [2, 384], strides = [1, 1]} : vector<2x512xf32> to vector<2x384xf32>
    %364 = arith.negf %363 : vector<2x384xf32>
    %365 = math.exp %364 : vector<2x384xf32>
    %cst_163 = arith.constant 1.000000e+00 : f32
    %366 = vector.broadcast %cst_163 : f32 to vector<2x384xf32>
    %367 = arith.addf %366, %365 : vector<2x384xf32>
    %368 = arith.divf %366, %367 : vector<2x384xf32>
    %369 = vector.extract_strided_slice %368 {offsets = [0, 0], sizes = [2, 128], strides = [1, 1]} : vector<2x384xf32> to vector<2x128xf32>
    %370 = vector.extract_strided_slice %368 {offsets = [0, 128], sizes = [2, 128], strides = [1, 1]} : vector<2x384xf32> to vector<2x128xf32>
    %371 = vector.extract_strided_slice %368 {offsets = [0, 256], sizes = [2, 128], strides = [1, 1]} : vector<2x384xf32> to vector<2x128xf32>
    %372 = vector.extract_strided_slice %362 {offsets = [0, 384], sizes = [2, 128], strides = [1, 1]} : vector<2x512xf32> to vector<2x128xf32>
    %373 = math.tanh %372 : vector<2x128xf32>
    %374 = arith.mulf %370, %352 : vector<2x128xf32>
    %375 = arith.mulf %369, %373 : vector<2x128xf32>
    %376 = arith.addf %374, %375 : vector<2x128xf32>
    %377 = math.tanh %376 : vector<2x128xf32>
    %378 = arith.mulf %371, %377 : vector<2x128xf32>
    %c0_164 = arith.constant 0 : index
    %c6_165 = arith.constant 6 : index
    %c0_166 = arith.constant 0 : index
    %379 = vector.load %arg11[%c0_164, %c6_165, %c0_166] : memref<2x8x128xf32, #tpu.memory_space<vmem>>, vector<2x1x128xf32>
    %380 = vector.shape_cast %379 : vector<2x1x128xf32> to vector<2x128xf32>
    %381 = vector.shape_cast %378 : vector<2x128xf32> to vector<2x1x128xf32>
    tpu.vector_store %arg11[%c0_164, %c6_165, %c0_166], %381 {strides = array<i32>} : memref<2x8x128xf32, #tpu.memory_space<vmem>>, vector<2x1x128xf32>,
    %c0_167 = arith.constant 0 : index
    %c7_168 = arith.constant 7 : index
    %c0_169 = arith.constant 0 : index
    %382 = vector.load %arg10[%c0_167, %c7_168, %c0_169] : memref<2x8x512xf32, #tpu.memory_space<vmem>>, vector<2x1x512xf32>
    %383 = vector.shape_cast %382 : vector<2x1x512xf32> to vector<2x512xf32>
    %c0_170 = arith.constant 0 : index
    %c0_171 = arith.constant 0 : index
    %384 = vector.load %arg5[%c0_170, %c0_171] : memref<128x512xf32, #tpu.memory_space<vmem>>, vector<128x512xf32>
    %cst_172 = arith.constant dense<0.000000e+00> : vector<2x512xf32>
    %385 = tpu.matmul %378, %384, %cst_172 {dimension_numbers = #tpu.dot_dimension_numbers<[1], [0], [0], [1], [0, 0, 1, 1], [], []>} : vector<2x128xf32>, vector<128x512xf32>, vector<2x512xf32> -> vector<2x512xf32>
    %386 = arith.addf %383, %385 : vector<2x512xf32>
    %387 = vector.extract_strided_slice %386 {offsets = [0, 0], sizes = [2, 384], strides = [1, 1]} : vector<2x512xf32> to vector<2x384xf32>
    %388 = arith.negf %387 : vector<2x384xf32>
    %389 = math.exp %388 : vector<2x384xf32>
    %cst_173 = arith.constant 1.000000e+00 : f32
    %390 = vector.broadcast %cst_173 : f32 to vector<2x384xf32>
    %391 = arith.addf %390, %389 : vector<2x384xf32>
    %392 = arith.divf %390, %391 : vector<2x384xf32>
    %393 = vector.extract_strided_slice %392 {offsets = [0, 0], sizes = [2, 128], strides = [1, 1]} : vector<2x384xf32> to vector<2x128xf32>
    %394 = vector.extract_strided_slice %392 {offsets = [0, 128], sizes = [2, 128], strides = [1, 1]} : vector<2x384xf32> to vector<2x128xf32>
    %395 = vector.extract_strided_slice %392 {offsets = [0, 256], sizes = [2, 128], strides = [1, 1]} : vector<2x384xf32> to vector<2x128xf32>
    %396 = vector.extract_strided_slice %386 {offsets = [0, 384], sizes = [2, 128], strides = [1, 1]} : vector<2x512xf32> to vector<2x128xf32>
    %397 = math.tanh %396 : vector<2x128xf32>
    %398 = arith.mulf %394, %376 : vector<2x128xf32>
    %399 = arith.mulf %393, %397 : vector<2x128xf32>
    %400 = arith.addf %398, %399 : vector<2x128xf32>
    %401 = math.tanh %400 : vector<2x128xf32>
    %402 = arith.mulf %395, %401 : vector<2x128xf32>
    %c0_174 = arith.constant 0 : index
    %c7_175 = arith.constant 7 : index
    %c0_176 = arith.constant 0 : index
    %403 = vector.load %arg11[%c0_174, %c7_175, %c0_176] : memref<2x8x128xf32, #tpu.memory_space<vmem>>, vector<2x1x128xf32>
    %404 = vector.shape_cast %403 : vector<2x1x128xf32> to vector<2x128xf32>
    %405 = vector.shape_cast %402 : vector<2x128xf32> to vector<2x1x128xf32>
    tpu.vector_store %arg11[%c0_174, %c7_175, %c0_176], %405 {strides = array<i32>} : memref<2x8x128xf32, #tpu.memory_space<vmem>>, vector<2x1x128xf32>,
    %c0_177 = arith.constant 0 : index
    %c0_178 = arith.constant 0 : index
    %c0_179 = arith.constant 0 : index
    %406 = vector.load %arg11[%c0_177, %c0_178, %c0_179] : memref<2x8x128xf32, #tpu.memory_space<vmem>>, vector<2x8x128xf32>
    %407 = vector.shape_cast %406 : vector<2x8x128xf32> to vector<16x128xf32>
    %c0_180 = arith.constant 0 : index
    %c0_181 = arith.constant 0 : index
    %408 = vector.load %arg7[%c0_180, %c0_181] : memref<128x8xf32, #tpu.memory_space<vmem>>, vector<128x8xf32>
    %cst_182 = arith.constant dense<0.000000e+00> : vector<16x8xf32>
    %409 = tpu.matmul %407, %408, %cst_182 {dimension_numbers = #tpu.dot_dimension_numbers<[1], [0], [0], [1], [0, 0, 1, 1], [], []>} : vector<16x128xf32>, vector<128x8xf32>, vector<16x8xf32> -> vector<16x8xf32>
    %c0_183 = arith.constant 0 : index
    %c0_184 = arith.constant 0 : index
    %410 = vector.load %arg8[%c0_183, %c0_184] : memref<1x8xf32, #tpu.memory_space<vmem>>, vector<1x8xf32>
    %411 = vector.broadcast %410 : vector<1x8xf32> to vector<16x8xf32>
    %412 = arith.addf %409, %411 : vector<16x8xf32>
    %413 = arith.negf %412 : vector<16x8xf32>
    %414 = math.exp %413 : vector<16x8xf32>
    %cst_185 = arith.constant 1.000000e+00 : f32
    %415 = vector.broadcast %cst_185 : f32 to vector<16x8xf32>
    %416 = arith.addf %415, %414 : vector<16x8xf32>
    %417 = arith.divf %415, %416 : vector<16x8xf32>
    %418 = vector.shape_cast %417 : vector<16x8xf32> to vector<2x8x8xf32>
    %c0_186 = arith.constant 0 : index
    %c0_187 = arith.constant 0 : index
    %c0_188 = arith.constant 0 : index
    %419 = vector.load %arg9[%c0_186, %c0_187, %c0_188] : memref<2x8x8xf32, #tpu.memory_space<vmem>>, vector<2x8x8xf32>
    tpu.vector_store %arg9[%c0_186, %c0_187, %c0_188], %418 {strides = array<i32>} : memref<2x8x8xf32, #tpu.memory_space<vmem>>, vector<2x8x8xf32>,
    return
  }
}

</mosaic_0001>

<llo_original>
// kernel: lstm_model_forward.1
$region0: #{lstm_model_forward.1}
  #allocation0 [shape = 'u32[]', space=smem, size = 0x4, offset = 0x4, fixed_abs, tag = 'smem constant byte address 0x4 - core index']
  #allocation1 [shape = 'u32[144,128]{1,0:T(1,128)}', space=vmem, size = 0x12000, scoped, tag = 'internal scratch']
  #allocation2 [shape = 'f32[2,8,512]{2,1,0:T(8,128)}', space=vmem, size = 0x8000, scoped, tag = 'scratch operand']
  #allocation3 [shape = 'f32[2,8,128]{2,1,0:T(8,128)}', space=vmem, size = 0x2000, scoped, tag = 'scratch operand']
  %s0 = inlined_call_operand.vmem [shape: f32[2,8,128], index: 0, kind: input, shape index: {}]
  %s1 = inlined_call_operand.hbm [shape: f32[128,512], index: 1, kind: input, shape index: {}]
  %s2 = inlined_call_operand.hbm [shape: f32[128,512], index: 2, kind: input, shape index: {}]
  %s3 = inlined_call_operand.vmem [shape: f32[1,512], index: 3, kind: input, shape index: {}]
  %s4 = inlined_call_operand.hbm [shape: f32[128,512], index: 4, kind: input, shape index: {}]
  %s5 = inlined_call_operand.hbm [shape: f32[128,512], index: 5, kind: input, shape index: {}]
  %s6 = inlined_call_operand.vmem [shape: f32[1,512], index: 6, kind: input, shape index: {}]
  %s7 = inlined_call_operand.vmem [shape: f32[128,8], index: 7, kind: input, shape index: {}]
  %s8 = inlined_call_operand.vmem [shape: f32[1,8], index: 8, kind: input, shape index: {}]
  %s9 = inlined_call_operand.hbm [shape: f32[2,8,8], index: 9, kind: output, shape index: {}]
  %s10 = sld [smem:[#allocation0]]
  $region62: #{lstm_model_forward.1} parent=0
    _
  %s12 = ssub.s32 1, %s10
  %s13 = scalar_select 0, %s12, %s10
  $region1: #{lstm_model_forward.1} parent=0
    #allocation4 [shape = 'u8[262144]{0}', space=vmem, size = 0x40000, scoped, tag = 'input window, operand 1, single buffered']
    #allocation5 [shape = 's32[1]{0}', space=sflag, size = 0x4, scoped, tag = 'scoped memory for lstm_model_forward.1']
    #allocation6 [shape = 's32[1]{0}', space=sflag, size = 0x4, scoped, tag = 'scoped memory for lstm_model_forward.1']
    #allocation7 [shape = 'u8[262144]{0}', space=vmem, size = 0x40000, scoped, tag = 'input window, operand 2, single buffered']
    #allocation8 [shape = 's32[1]{0}', space=sflag, size = 0x4, scoped, tag = 'scoped memory for lstm_model_forward.1']
    #allocation9 [shape = 'u8[262144]{0}', space=vmem, size = 0x40000, scoped, tag = 'input window, operand 4, single buffered']
    #allocation10 [shape = 'u8[262144]{0}', space=vmem, size = 0x40000, scoped, tag = 'input window, operand 5, single buffered']
    #allocation11 [shape = 's32[1]{0}', space=sflag, size = 0x4, scoped, tag = 'scoped memory for lstm_model_forward.1']
    #allocation12 [shape = 'u8[8192]{0}', space=vmem, size = 0x2000, scoped, tag = 'output window, operand 0, single buffered']
    %14 = vsyncpa [#allocation5], 0
    %15 = vsyncpa [#allocation8], 0
    %16 = vsyncpa [#allocation11], 0
    %17 = vsyncpa [#allocation6], 0
    // Predicated region
    $region2: #{lstm_model_forward.1} parent=1 // pred_check
      _
    $region3: #{lstm_model_forward.1} parent=1 // pred_check_branch
      %19 = sbr.rel (0) target = $region5
    $region4: #{lstm_model_forward.1} parent=1 // pred_region
      _
    $region5: #{lstm_model_forward.1} parent=1 // pred_fallthru
      _
    // Predicated region
    $region6: #{lstm_model_forward.1} parent=1 // pred_check
      _
    $region7: #{lstm_model_forward.1} parent=1 // pred_check_branch
      %21 = sbr.rel (0) target = $region9
    $region8: #{lstm_model_forward.1} parent=1 // pred_region
      %s23 = ssub.s32 8192, 8192
      %24 = vsyncadd [#allocation5], %s23
      %s25 = sshll.u32 [#allocation4], 4
      %s26 = int_to_ptr.vmem [resolvable:$true] %s25
      %31 = dma.hbm_to_vmem [thread:$0]  %s1, 8192, %s26, [#allocation5], 512, 512, 32
    $region9: #{lstm_model_forward.1} parent=1 // pred_fallthru
      _
    // Predicated region
    $region10: #{lstm_model_forward.1} parent=1 // pred_check
      _
    $region11: #{lstm_model_forward.1} parent=1 // pred_check_branch
      %33 = sbr.rel (0) target = $region13
    $region12: #{lstm_model_forward.1} parent=1 // pred_region
      %s35 = ssub.s32 8192, 8192
      %36 = vsyncadd [#allocation8], %s35
      %s37 = sshll.u32 [#allocation7], 4
      %s38 = int_to_ptr.vmem [resolvable:$true] %s37
      %43 = dma.hbm_to_vmem [thread:$0]  %s2, 8192, %s38, [#allocation8], 512, 512, 32
    $region13: #{lstm_model_forward.1} parent=1 // pred_fallthru
      _
    // Predicated region
    $region14: #{lstm_model_forward.1} parent=1 // pred_check
      _
    $region15: #{lstm_model_forward.1} parent=1 // pred_check_branch
      %45 = sbr.rel (0) target = $region17
    $region16: #{lstm_model_forward.1} parent=1 // pred_region
      _
    $region17: #{lstm_model_forward.1} parent=1 // pred_fallthru
      _
    // Predicated region
    $region18: #{lstm_model_forward.1} parent=1 // pred_check
      _
    $region19: #{lstm_model_forward.1} parent=1 // pred_check_branch
      %47 = sbr.rel (0) target = $region21
    $region20: #{lstm_model_forward.1} parent=1 // pred_region
      %s49 = ssub.s32 8192, 8192
      %50 = vsyncadd [#allocation8], %s49
      %s51 = sshll.u32 [#allocation9], 4
      %s52 = int_to_ptr.vmem [resolvable:$true] %s51
      %57 = dma.hbm_to_vmem [thread:$0]  %s4, 8192, %s52, [#allocation8], 512, 512, 32
    $region21: #{lstm_model_forward.1} parent=1 // pred_fallthru
      _
    // Predicated region
    $region22: #{lstm_model_forward.1} parent=1 // pred_check
      _
    $region23: #{lstm_model_forward.1} parent=1 // pred_check_branch
      %59 = sbr.rel (0) target = $region25
    $region24: #{lstm_model_forward.1} parent=1 // pred_region
      %s61 = ssub.s32 8192, 8192
      %62 = vsyncadd [#allocation11], %s61
      %s63 = sshll.u32 [#allocation10], 4
      %s64 = int_to_ptr.vmem [resolvable:$true] %s63
      %69 = dma.hbm_to_vmem [thread:$0]  %s5, 8192, %s64, [#allocation11], 512, 512, 32
    $region25: #{lstm_model_forward.1} parent=1 // pred_fallthru
      _
    // Predicated region
    $region26: #{lstm_model_forward.1} parent=1 // pred_check
      _
    $region27: #{lstm_model_forward.1} parent=1 // pred_check_branch
      %71 = sbr.rel (0) target = $region29
    $region28: #{lstm_model_forward.1} parent=1 // pred_region
      _
    $region29: #{lstm_model_forward.1} parent=1 // pred_fallthru
      _
    // Predicated region
    $region30: #{lstm_model_forward.1} parent=1 // pred_check
      _
    $region31: #{lstm_model_forward.1} parent=1 // pred_check_branch
      %73 = sbr.rel (0) target = $region33
    $region32: #{lstm_model_forward.1} parent=1 // pred_region
      _
    $region33: #{lstm_model_forward.1} parent=1 // pred_fallthru
      _
    // Predicated region
    $region34: #{lstm_model_forward.1} parent=1 // pred_check
      _
    $region35: #{lstm_model_forward.1} parent=1 // pred_check_branch
      %75 = sbr.rel (0) target = $region37
    $region36: #{lstm_model_forward.1} parent=1 // pred_region
      _
    $region37: #{lstm_model_forward.1} parent=1 // pred_fallthru
      _
    // Predicated region
    $region38: #{lstm_model_forward.1} parent=1 // pred_check
      _
    $region39: #{lstm_model_forward.1} parent=1 // pred_check_branch
      %77 = sbr.rel (0) target = $region41
    $region40: #{lstm_model_forward.1} parent=1 // pred_region
      %78 = dma.done [#allocation5], 8192
    $region41: #{lstm_model_forward.1} parent=1 // pred_fallthru
      _
    // Predicated region
    $region42: #{lstm_model_forward.1} parent=1 // pred_check
      _
    $region43: #{lstm_model_forward.1} parent=1 // pred_check_branch
      %80 = sbr.rel (0) target = $region45
    $region44: #{lstm_model_forward.1} parent=1 // pred_region
      %81 = dma.done [#allocation8], 8192
    $region45: #{lstm_model_forward.1} parent=1 // pred_fallthru
      _
    // Predicated region
    $region46: #{lstm_model_forward.1} parent=1 // pred_check
      _
    $region47: #{lstm_model_forward.1} parent=1 // pred_check_branch
      %83 = sbr.rel (0) target = $region49
    $region48: #{lstm_model_forward.1} parent=1 // pred_region
      %84 = dma.done [#allocation8], 8192
    $region49: #{lstm_model_forward.1} parent=1 // pred_fallthru
      _
    // Predicated region
    $region50: #{lstm_model_forward.1} parent=1 // pred_check
      _
    $region51: #{lstm_model_forward.1} parent=1 // pred_check_branch
      %86 = sbr.rel (0) target = $region53
    $region52: #{lstm_model_forward.1} parent=1 // pred_region
      %87 = dma.done [#allocation11], 8192
    $region53: #{lstm_model_forward.1} parent=1 // pred_fallthru
      _
    %v88 = vld [vmem:[%s0] sm:$0xff]
    %v89 = vld [vmem:[%s0 + $0x8] sm:$0xff]
    %v90 = vld [vmem:[#allocation4] sm:$0xff]
    %v91 = vld [vmem:[#allocation4 + $0x8] sm:$0xff]
    %v92 = vld [vmem:[#allocation4 + $0x10] sm:$0xff]
    %v93 = vld [vmem:[#allocation4 + $0x18] sm:$0xff]
    %v94 = vld [vmem:[#allocation4 + $0x20] sm:$0xff]
    %v95 = vld [vmem:[#allocation4 + $0x28] sm:$0xff]
    %v96 = vld [vmem:[#allocation4 + $0x30] sm:$0xff]
    %v97 = vld [vmem:[#allocation4 + $0x38] sm:$0xff]
    %v98 = vld [vmem:[#allocation4 + $0x40] sm:$0xff]
    %v99 = vld [vmem:[#allocation4 + $0x48] sm:$0xff]
    %v100 = vld [vmem:[#allocation4 + $0x50] sm:$0xff]
    %v101 = vld [vmem:[#allocation4 + $0x58] sm:$0xff]
    %v102 = vld [vmem:[#allocation4 + $0x60] sm:$0xff]
    %v103 = vld [vmem:[#allocation4 + $0x68] sm:$0xff]
    %v104 = vld [vmem:[#allocation4 + $0x70] sm:$0xff]
    %v105 = vld [vmem:[#allocation4 + $0x78] sm:$0xff]
    %v106 = vld [vmem:[#allocation4 + $0x80] sm:$0xff]
    %v107 = vld [vmem:[#allocation4 + $0x88] sm:$0xff]
    %v108 = vld [vmem:[#allocation4 + $0x90] sm:$0xff]
    %v109 = vld [vmem:[#allocation4 + $0x98] sm:$0xff]
    %v110 = vld [vmem:[#allocation4 + $0xa0] sm:$0xff]
    %v111 = vld [vmem:[#allocation4 + $0xa8] sm:$0xff]
    %v112 = vld [vmem:[#allocation4 + $0xb0] sm:$0xff]
    %v113 = vld [vmem:[#allocation4 + $0xb8] sm:$0xff]
    %v114 = vld [vmem:[#allocation4 + $0xc0] sm:$0xff]
    %v115 = vld [vmem:[#allocation4 + $0xc8] sm:$0xff]
    %v116 = vld [vmem:[#allocation4 + $0xd0] sm:$0xff]
    %v117 = vld [vmem:[#allocation4 + $0xd8] sm:$0xff]
    %v118 = vld [vmem:[#allocation4 + $0xe0] sm:$0xff]
    %v119 = vld [vmem:[#allocation4 + $0xe8] sm:$0xff]
    %v120 = vld [vmem:[#allocation4 + $0xf0] sm:$0xff]
    %v121 = vld [vmem:[#allocation4 + $0xf8] sm:$0xff]
    %v122 = vld [vmem:[#allocation4 + $0x100] sm:$0xff]
    %v123 = vld [vmem:[#allocation4 + $0x108] sm:$0xff]
    %v124 = vld [vmem:[#allocation4 + $0x110] sm:$0xff]
    %v125 = vld [vmem:[#allocation4 + $0x118] sm:$0xff]
    %v126 = vld [vmem:[#allocation4 + $0x120] sm:$0xff]
    %v127 = vld [vmem:[#allocation4 + $0x128] sm:$0xff]
    %v128 = vld [vmem:[#allocation4 + $0x130] sm:$0xff]
    %v129 = vld [vmem:[#allocation4 + $0x138] sm:$0xff]
    %v130 = vld [vmem:[#allocation4 + $0x140] sm:$0xff]
    %v131 = vld [vmem:[#allocation4 + $0x148] sm:$0xff]
    %v132 = vld [vmem:[#allocation4 + $0x150] sm:$0xff]
    %v133 = vld [vmem:[#allocation4 + $0x158] sm:$0xff]
    %v134 = vld [vmem:[#allocation4 + $0x160] sm:$0xff]
    %v135 = vld [vmem:[#allocation4 + $0x168] sm:$0xff]
    %v136 = vld [vmem:[#allocation4 + $0x170] sm:$0xff]
    %v137 = vld [vmem:[#allocation4 + $0x178] sm:$0xff]
    %v138 = vld [vmem:[#allocation4 + $0x180] sm:$0xff]
    %v139 = vld [vmem:[#allocation4 + $0x188] sm:$0xff]
    %v140 = vld [vmem:[#allocation4 + $0x190] sm:$0xff]
    %v141 = vld [vmem:[#allocation4 + $0x198] sm:$0xff]
    %v142 = vld [vmem:[#allocation4 + $0x1a0] sm:$0xff]
    %v143 = vld [vmem:[#allocation4 + $0x1a8] sm:$0xff]
    %v144 = vld [vmem:[#allocation4 + $0x1b0] sm:$0xff]
    %v145 = vld [vmem:[#allocation4 + $0x1b8] sm:$0xff]
    %v146 = vld [vmem:[#allocation4 + $0x1c0] sm:$0xff]
    %v147 = vld [vmem:[#allocation4 + $0x1c8] sm:$0xff]
    %v148 = vld [vmem:[#allocation4 + $0x1d0] sm:$0xff]
    %v149 = vld [vmem:[#allocation4 + $0x1d8] sm:$0xff]
    %v150 = vld [vmem:[#allocation4 + $0x1e0] sm:$0xff]
    %v151 = vld [vmem:[#allocation4 + $0x1e8] sm:$0xff]
    %v152 = vld [vmem:[#allocation4 + $0x1f0] sm:$0xff]
    %v153 = vld [vmem:[#allocation4 + $0x1f8] sm:$0xff]
    %v154 = vld [vmem:[%s3] sm:$0xf]
    %v156 = vlaneseq
    %v157 = vshrl.u32 %v156, 7
    %v158 = vsub.s32 0, %v157
    %v159 = vrot.slane %v154, %v158
    %v160 = vlaneseq
    %v161 = vshrl.u32 %v160, 7
    %v162 = vsub.s32 1, %v161
    %v163 = vrot.slane %v154, %v162
    %v164 = vlaneseq
    %v165 = vshrl.u32 %v164, 7
    %v166 = vsub.s32 2, %v165
    %v167 = vrot.slane %v154, %v166
    %v168 = vlaneseq
    %v169 = vshrl.u32 %v168, 7
    %v170 = vsub.s32 3, %v169
    %v171 = vrot.slane %v154, %v170
    %176 = vmatprep.subr.mxu0 %v151
    %177 = vmatpush1.msra.mxu0 %v150
    %178 = vmatprep.subr.mxu0 %v147
    %179 = vmatpush1.msra.mxu0 %v146
    %180 = vmatprep.subr.mxu0 %v143
    %181 = vmatpush1.msra.mxu0 %v142
    %182 = vmatprep.subr.mxu0 %v139
    %183 = vmatpush1.msra.mxu0 %v138
    %184 = vmatprep.subr.mxu0 %v135
    %185 = vmatpush1.msra.mxu0 %v134
    %186 = vmatprep.subr.mxu0 %v131
    %187 = vmatpush1.msra.mxu0 %v130
    %188 = vmatprep.subr.mxu0 %v127
    %189 = vmatpush1.msra.mxu0 %v126
    %190 = vmatprep.subr.mxu0 %v123
    %191 = vmatpush1.msra.mxu0 %v122
    %192 = vmatprep.subr.mxu0 %v119
    %193 = vmatpush1.msra.mxu0 %v118
    %194 = vmatprep.subr.mxu0 %v115
    %195 = vmatpush1.msra.mxu0 %v114
    %196 = vmatprep.subr.mxu0 %v111
    %197 = vmatpush1.msra.mxu0 %v110
    %198 = vmatprep.subr.mxu0 %v107
    %199 = vmatpush1.msra.mxu0 %v106
    %200 = vmatprep.subr.mxu0 %v103
    %201 = vmatpush1.msra.mxu0 %v102
    %202 = vmatprep.subr.mxu0 %v99
    %203 = vmatpush1.msra.mxu0 %v98
    %204 = vmatprep.subr.mxu0 %v95
    %205 = vmatpush1.msra.mxu0 %v94
    %206 = vmatprep.subr.mxu0 %v91
    %207 = vmatpush1.msra.mxu0 %v90
    %208 = vmatprep.subr.mxu0 0.0
    %209 = vmatpush2.msra.mxu0 0.0
    %210 = vmatprep.subr.mxu0 0.0
    %211 = vmatpush2.msra.mxu0 0.0
    %212 = vmatprep.subr.mxu0 0.0
    %213 = vmatpush2.msra.mxu0 0.0
    %214 = vmatprep.subr.mxu0 0.0
    %215 = vmatpush2.msra.mxu0 0.0
    %216 = vmatprep.subr.mxu0 0.0
    %217 = vmatpush2.msra.mxu0 0.0
    %218 = vmatprep.subr.mxu0 0.0
    %219 = vmatpush2.msra.mxu0 0.0
    %220 = vmatprep.subr.mxu0 0.0
    %221 = vmatpush2.msra.mxu0 0.0
    %222 = vmatprep.subr.mxu0 0.0
    %223 = vmatpush2.msra.mxu0 0.0
    %224 = vmatprep.subr.mxu0 0.0
    %225 = vmatpush2.msra.mxu0 0.0
    %226 = vmatprep.subr.mxu0 0.0
    %227 = vmatpush2.msra.mxu0 0.0
    %228 = vmatprep.subr.mxu0 0.0
    %229 = vmatpush2.msra.mxu0 0.0
    %230 = vmatprep.subr.mxu0 0.0
    %231 = vmatpush2.msra.mxu0 0.0
    %232 = vmatprep.subr.mxu0 0.0
    %233 = vmatpush2.msra.mxu0 0.0
    %234 = vmatprep.subr.mxu0 0.0
    %235 = vmatpush2.msra.mxu0 0.0
    %236 = vmatprep.subr.mxu0 0.0
    %237 = vmatpush2.msra.mxu0 0.0
    %238 = vmatprep.subr.mxu0 0.0
    %239 = vmatpush2.msra.mxu0 0.0
    %240 = vmatprep.mubr.f32.mxu0 0.0
    %241 = vmatmul.mubr.f32.gmra.mxu0 %v88
    %v242 = vpop.f32.mrf.mxu0
    %v243 = vadd.f32 %v159, %v242
    %v244 = vpop.f32.mrf.mxu0
    %v245 = vadd.f32 %v163, %v244
    %246 = vmatprep.mubr.f32.mxu0 0.0
    %247 = vmatmul.mubr.f32.gmra.mxu0 %v89
    %v248 = vpop.f32.mrf.mxu0
    %v249 = vadd.f32 %v159, %v248
    %v250 = vpop.f32.mrf.mxu0
    %v251 = vadd.f32 %v163, %v250
    %252 = vdwg.mxu0
    %253 = vmatprep.subr.mxu0 %v153
    %254 = vmatpush1.msra.mxu0 %v152
    %255 = vmatprep.subr.mxu0 %v149
    %256 = vmatpush1.msra.mxu0 %v148
    %257 = vmatprep.subr.mxu0 %v145
    %258 = vmatpush1.msra.mxu0 %v144
    %259 = vmatprep.subr.mxu0 %v141
    %260 = vmatpush1.msra.mxu0 %v140
    %261 = vmatprep.subr.mxu0 %v137
    %262 = vmatpush1.msra.mxu0 %v136
    %263 = vmatprep.subr.mxu0 %v133
    %264 = vmatpush1.msra.mxu0 %v132
    %265 = vmatprep.subr.mxu0 %v129
    %266 = vmatpush1.msra.mxu0 %v128
    %267 = vmatprep.subr.mxu0 %v125
    %268 = vmatpush1.msra.mxu0 %v124
    %269 = vmatprep.subr.mxu0 %v121
    %270 = vmatpush1.msra.mxu0 %v120
    %271 = vmatprep.subr.mxu0 %v117
    %272 = vmatpush1.msra.mxu0 %v116
    %273 = vmatprep.subr.mxu0 %v113
    %274 = vmatpush1.msra.mxu0 %v112
    %275 = vmatprep.subr.mxu0 %v109
    %276 = vmatpush1.msra.mxu0 %v108
    %277 = vmatprep.subr.mxu0 %v105
    %278 = vmatpush1.msra.mxu0 %v104
    %279 = vmatprep.subr.mxu0 %v101
    %280 = vmatpush1.msra.mxu0 %v100
    %281 = vmatprep.subr.mxu0 %v97
    %282 = vmatpush1.msra.mxu0 %v96
    %283 = vmatprep.subr.mxu0 %v93
    %284 = vmatpush1.msra.mxu0 %v92
    %285 = vmatprep.subr.mxu0 0.0
    %286 = vmatpush2.msra.mxu0 0.0
    %287 = vmatprep.subr.mxu0 0.0
    %288 = vmatpush2.msra.mxu0 0.0
    %289 = vmatprep.subr.mxu0 0.0
    %290 = vmatpush2.msra.mxu0 0.0
    %291 = vmatprep.subr.mxu0 0.0
    %292 = vmatpush2.msra.mxu0 0.0
    %293 = vmatprep.subr.mxu0 0.0
    %294 = vmatpush2.msra.mxu0 0.0
    %295 = vmatprep.subr.mxu0 0.0
    %296 = vmatpush2.msra.mxu0 0.0
    %297 = vmatprep.subr.mxu0 0.0
    %298 = vmatpush2.msra.mxu0 0.0
    %299 = vmatprep.subr.mxu0 0.0
    %300 = vmatpush2.msra.mxu0 0.0
    %301 = vmatprep.subr.mxu0 0.0
    %302 = vmatpush2.msra.mxu0 0.0
    %303 = vmatprep.subr.mxu0 0.0
    %304 = vmatpush2.msra.mxu0 0.0
    %305 = vmatprep.subr.mxu0 0.0
    %306 = vmatpush2.msra.mxu0 0.0
    %307 = vmatprep.subr.mxu0 0.0
    %308 = vmatpush2.msra.mxu0 0.0
    %309 = vmatprep.subr.mxu0 0.0
    %310 = vmatpush2.msra.mxu0 0.0
    %311 = vmatprep.subr.mxu0 0.0
    %312 = vmatpush2.msra.mxu0 0.0
    %313 = vmatprep.subr.mxu0 0.0
    %314 = vmatpush2.msra.mxu0 0.0
    %315 = vmatprep.subr.mxu0 0.0
    %316 = vmatpush2.msra.mxu0 0.0
    %317 = vmatprep.mubr.f32.mxu0 0.0
    %318 = vmatmul.mubr.f32.gmra.mxu0 %v88
    %v319 = vpop.f32.mrf.mxu0
    %v320 = vadd.f32 %v167, %v319
    %v321 = vpop.f32.mrf.mxu0
    %v322 = vadd.f32 %v171, %v321
    %323 = vmatprep.mubr.f32.mxu0 0.0
    %324 = vmatmul.mubr.f32.gmra.mxu0 %v89
    %v325 = vpop.f32.mrf.mxu0
    %v326 = vadd.f32 %v167, %v325
    %v327 = vpop.f32.mrf.mxu0
    %v328 = vadd.f32 %v171, %v327
    %329 = vdwg.mxu0
    %330 = vst [vmem:[#allocation2] sm:$0xff] %v243
    %331 = vst [vmem:[#allocation2 + $0x8] sm:$0xff] %v245
    %332 = vst [vmem:[#allocation2 + $0x10] sm:$0xff] %v320
    %333 = vst [vmem:[#allocation2 + $0x18] sm:$0xff] %v322
    %334 = vst [vmem:[#allocation2 + $0x20] sm:$0xff] %v249
    %335 = vst [vmem:[#allocation2 + $0x28] sm:$0xff] %v251
    %336 = vst [vmem:[#allocation2 + $0x30] sm:$0xff] %v326
    %337 = vst [vmem:[#allocation2 + $0x38] sm:$0xff] %v328
    %v338 = vld [vmem:[#allocation2] ss:$8 sm:$0xf]
    %s339 = scalar_lea.vmem [#allocation2], 32
    %v340 = vld [vmem:[%s339] ss:$8 sm:$0xf]
    %v341 = vld [vmem:[#allocation7] sm:$0xff]
    %v342 = vld [vmem:[#allocation7 + $0x8] sm:$0xff]
    %v343 = vld [vmem:[#allocation7 + $0x10] sm:$0xff]
    %v344 = vld [vmem:[#allocation7 + $0x18] sm:$0xff]
    %v345 = vld [vmem:[#allocation7 + $0x20] sm:$0xff]
    %v346 = vld [vmem:[#allocation7 + $0x28] sm:$0xff]
    %v347 = vld [vmem:[#allocation7 + $0x30] sm:$0xff]
    %v348 = vld [vmem:[#allocation7 + $0x38] sm:$0xff]
    %v349 = vld [vmem:[#allocation7 + $0x40] sm:$0xff]
    %v350 = vld [vmem:[#allocation7 + $0x48] sm:$0xff]
    %v351 = vld [vmem:[#allocation7 + $0x50] sm:$0xff]
    %v352 = vld [vmem:[#allocation7 + $0x58] sm:$0xff]
    %v353 = vld [vmem:[#allocation7 + $0x60] sm:$0xff]
    %v354 = vld [vmem:[#allocation7 + $0x68] sm:$0xff]
    %v355 = vld [vmem:[#allocation7 + $0x70] sm:$0xff]
    %v356 = vld [vmem:[#allocation7 + $0x78] sm:$0xff]
    %v357 = vld [vmem:[#allocation7 + $0x80] sm:$0xff]
    %v358 = vld [vmem:[#allocation7 + $0x88] sm:$0xff]
    %v359 = vld [vmem:[#allocation7 + $0x90] sm:$0xff]
    %v360 = vld [vmem:[#allocation7 + $0x98] sm:$0xff]
    %v361 = vld [vmem:[#allocation7 + $0xa0] sm:$0xff]
    %v362 = vld [vmem:[#allocation7 + $0xa8] sm:$0xff]
    %v363 = vld [vmem:[#allocation7 + $0xb0] sm:$0xff]
    %v364 = vld [vmem:[#allocation7 + $0xb8] sm:$0xff]
    %v365 = vld [vmem:[#allocation7 + $0xc0] sm:$0xff]
    %v366 = vld [vmem:[#allocation7 + $0xc8] sm:$0xff]
    %v367 = vld [vmem:[#allocation7 + $0xd0] sm:$0xff]
    %v368 = vld [vmem:[#allocation7 + $0xd8] sm:$0xff]
    %v369 = vld [vmem:[#allocation7 + $0xe0] sm:$0xff]
    %v370 = vld [vmem:[#allocation7 + $0xe8] sm:$0xff]
    %v371 = vld [vmem:[#allocation7 + $0xf0] sm:$0xff]
    %v372 = vld [vmem:[#allocation7 + $0xf8] sm:$0xff]
    %v373 = vld [vmem:[#allocation7 + $0x100] sm:$0xff]
    %v374 = vld [vmem:[#allocation7 + $0x108] sm:$0xff]
    %v375 = vld [vmem:[#allocation7 + $0x110] sm:$0xff]
    %v376 = vld [vmem:[#allocation7 + $0x118] sm:$0xff]
    %v377 = vld [vmem:[#allocation7 + $0x120] sm:$0xff]
    %v378 = vld [vmem:[#allocation7 + $0x128] sm:$0xff]
    %v379 = vld [vmem:[#allocation7 + $0x130] sm:$0xff]
    %v380 = vld [vmem:[#allocation7 + $0x138] sm:$0xff]
    %v381 = vld [vmem:[#allocation7 + $0x140] sm:$0xff]
    %v382 = vld [vmem:[#allocation7 + $0x148] sm:$0xff]
    %v383 = vld [vmem:[#allocation7 + $0x150] sm:$0xff]
    %v384 = vld [vmem:[#allocation7 + $0x158] sm:$0xff]
    %v385 = vld [vmem:[#allocation7 + $0x160] sm:$0xff]
    %v386 = vld [vmem:[#allocation7 + $0x168] sm:$0xff]
    %v387 = vld [vmem:[#allocation7 + $0x170] sm:$0xff]
    %v388 = vld [vmem:[#allocation7 + $0x178] sm:$0xff]
    %v389 = vld [vmem:[#allocation7 + $0x180] sm:$0xff]
    %v390 = vld [vmem:[#allocation7 + $0x188] sm:$0xff]
    %v391 = vld [vmem:[#allocation7 + $0x190] sm:$0xff]
    %v392 = vld [vmem:[#allocation7 + $0x198] sm:$0xff]
    %v393 = vld [vmem:[#allocation7 + $0x1a0] sm:$0xff]
    %v394 = vld [vmem:[#allocation7 + $0x1a8] sm:$0xff]
    %v395 = vld [vmem:[#allocation7 + $0x1b0] sm:$0xff]
    %v396 = vld [vmem:[#allocation7 + $0x1b8] sm:$0xff]
    %v397 = vld [vmem:[#allocation7 + $0x1c0] sm:$0xff]
    %v398 = vld [vmem:[#allocation7 + $0x1c8] sm:$0xff]
    %v399 = vld [vmem:[#allocation7 + $0x1d0] sm:$0xff]
    %v400 = vld [vmem:[#allocation7 + $0x1d8] sm:$0xff]
    %v401 = vld [vmem:[#allocation7 + $0x1e0] sm:$0xff]
    %v402 = vld [vmem:[#allocation7 + $0x1e8] sm:$0xff]
    %v403 = vld [vmem:[#allocation7 + $0x1f0] sm:$0xff]
    %v404 = vld [vmem:[#allocation7 + $0x1f8] sm:$0xff]
    %405 = vmatprep.subr.mxu0 %v402
    %406 = vmatpush1.msra.mxu0 %v401
    %407 = vmatprep.subr.mxu0 %v398
    %408 = vmatpush1.msra.mxu0 %v397
    %409 = vmatprep.subr.mxu0 %v394
    %410 = vmatpush1.msra.mxu0 %v393
    %411 = vmatprep.subr.mxu0 %v390
    %412 = vmatpush1.msra.mxu0 %v389
    %413 = vmatprep.subr.mxu0 %v386
    %414 = vmatpush1.msra.mxu0 %v385
    %415 = vmatprep.subr.mxu0 %v382
    %416 = vmatpush1.msra.mxu0 %v381
    %417 = vmatprep.subr.mxu0 %v378
    %418 = vmatpush1.msra.mxu0 %v377
    %419 = vmatprep.subr.mxu0 %v374
    %420 = vmatpush1.msra.mxu0 %v373
    %421 = vmatprep.subr.mxu0 %v370
    %422 = vmatpush1.msra.mxu0 %v369
    %423 = vmatprep.subr.mxu0 %v366
    %424 = vmatpush1.msra.mxu0 %v365
    %425 = vmatprep.subr.mxu0 %v362
    %426 = vmatpush1.msra.mxu0 %v361
    %427 = vmatprep.subr.mxu0 %v358
    %428 = vmatpush1.msra.mxu0 %v357
    %429 = vmatprep.subr.mxu0 %v354
    %430 = vmatpush1.msra.mxu0 %v353
    %431 = vmatprep.subr.mxu0 %v350
    %432 = vmatpush1.msra.mxu0 %v349
    %433 = vmatprep.subr.mxu0 %v346
    %434 = vmatpush1.msra.mxu0 %v345
    %435 = vmatprep.subr.mxu0 %v342
    %436 = vmatpush1.msra.mxu0 %v341
    %437 = vmatprep.subr.mxu0 0.0
    %438 = vmatpush2.msra.mxu0 0.0
    %439 = vmatprep.subr.mxu0 0.0
    %440 = vmatpush2.msra.mxu0 0.0
    %441 = vmatprep.subr.mxu0 0.0
    %442 = vmatpush2.msra.mxu0 0.0
    %443 = vmatprep.subr.mxu0 0.0
    %444 = vmatpush2.msra.mxu0 0.0
    %445 = vmatprep.subr.mxu0 0.0
    %446 = vmatpush2.msra.mxu0 0.0
    %447 = vmatprep.subr.mxu0 0.0
    %448 = vmatpush2.msra.mxu0 0.0
    %449 = vmatprep.subr.mxu0 0.0
    %450 = vmatpush2.msra.mxu0 0.0
    %451 = vmatprep.subr.mxu0 0.0
    %452 = vmatpush2.msra.mxu0 0.0
    %453 = vmatprep.subr.mxu0 0.0
    %454 = vmatpush2.msra.mxu0 0.0
    %455 = vmatprep.subr.mxu0 0.0
    %456 = vmatpush2.msra.mxu0 0.0
    %457 = vmatprep.subr.mxu0 0.0
    %458 = vmatpush2.msra.mxu0 0.0
    %459 = vmatprep.subr.mxu0 0.0
    %460 = vmatpush2.msra.mxu0 0.0
    %461 = vmatprep.subr.mxu0 0.0
    %462 = vmatpush2.msra.mxu0 0.0
    %463 = vmatprep.subr.mxu0 0.0
    %464 = vmatpush2.msra.mxu0 0.0
    %465 = vmatprep.subr.mxu0 0.0
    %466 = vmatpush2.msra.mxu0 0.0
    %467 = vmatprep.subr.mxu0 0.0
    %468 = vmatpush2.msra.mxu0 0.0
    %469 = vmatprep.mubr.f32.mxu0 0.0
    %470 = vmatmul.mubr.f32.gmra.mxu0 0.0
    %v471 = vpop.f32.mrf.mxu0
    %v472 = vadd.f32 0.0, %v471
    %v473 = vpop.f32.mrf.mxu0
    %v474 = vadd.f32 0.0, %v473
    %475 = vdwg.mxu0
    %476 = vmatprep.subr.mxu0 %v404
    %477 = vmatpush1.msra.mxu0 %v403
    %478 = vmatprep.subr.mxu0 %v400
    %479 = vmatpush1.msra.mxu0 %v399
    %480 = vmatprep.subr.mxu0 %v396
    %481 = vmatpush1.msra.mxu0 %v395
    %482 = vmatprep.subr.mxu0 %v392
    %483 = vmatpush1.msra.mxu0 %v391
    %484 = vmatprep.subr.mxu0 %v388
    %485 = vmatpush1.msra.mxu0 %v387
    %486 = vmatprep.subr.mxu0 %v384
    %487 = vmatpush1.msra.mxu0 %v383
    %488 = vmatprep.subr.mxu0 %v380
    %489 = vmatpush1.msra.mxu0 %v379
    %490 = vmatprep.subr.mxu0 %v376
    %491 = vmatpush1.msra.mxu0 %v375
    %492 = vmatprep.subr.mxu0 %v372
    %493 = vmatpush1.msra.mxu0 %v371
    %494 = vmatprep.subr.mxu0 %v368
    %495 = vmatpush1.msra.mxu0 %v367
    %496 = vmatprep.subr.mxu0 %v364
    %497 = vmatpush1.msra.mxu0 %v363
    %498 = vmatprep.subr.mxu0 %v360
    %499 = vmatpush1.msra.mxu0 %v359
    %500 = vmatprep.subr.mxu0 %v356
    %501 = vmatpush1.msra.mxu0 %v355
    %502 = vmatprep.subr.mxu0 %v352
    %503 = vmatpush1.msra.mxu0 %v351
    %504 = vmatprep.subr.mxu0 %v348
    %505 = vmatpush1.msra.mxu0 %v347
    %506 = vmatprep.subr.mxu0 %v344
    %507 = vmatpush1.msra.mxu0 %v343
    %508 = vmatprep.subr.mxu0 0.0
    %509 = vmatpush2.msra.mxu0 0.0
    %510 = vmatprep.subr.mxu0 0.0
    %511 = vmatpush2.msra.mxu0 0.0
    %512 = vmatprep.subr.mxu0 0.0
    %513 = vmatpush2.msra.mxu0 0.0
    %514 = vmatprep.subr.mxu0 0.0
    %515 = vmatpush2.msra.mxu0 0.0
    %516 = vmatprep.subr.mxu0 0.0
    %517 = vmatpush2.msra.mxu0 0.0
    %518 = vmatprep.subr.mxu0 0.0
    %519 = vmatpush2.msra.mxu0 0.0
    %520 = vmatprep.subr.mxu0 0.0
    %521 = vmatpush2.msra.mxu0 0.0
    %522 = vmatprep.subr.mxu0 0.0
    %523 = vmatpush2.msra.mxu0 0.0
    %524 = vmatprep.subr.mxu0 0.0
    %525 = vmatpush2.msra.mxu0 0.0
    %526 = vmatprep.subr.mxu0 0.0
    %527 = vmatpush2.msra.mxu0 0.0
    %528 = vmatprep.subr.mxu0 0.0
    %529 = vmatpush2.msra.mxu0 0.0
    %530 = vmatprep.subr.mxu0 0.0
    %531 = vmatpush2.msra.mxu0 0.0
    %532 = vmatprep.subr.mxu0 0.0
    %533 = vmatpush2.msra.mxu0 0.0
    %534 = vmatprep.subr.mxu0 0.0
    %535 = vmatpush2.msra.mxu0 0.0
    %536 = vmatprep.subr.mxu0 0.0
    %537 = vmatpush2.msra.mxu0 0.0
    %538 = vmatprep.subr.mxu0 0.0
    %539 = vmatpush2.msra.mxu0 0.0
    %540 = vmatprep.mubr.f32.mxu0 0.0
    %541 = vmatmul.mubr.f32.gmra.mxu0 0.0
    %v542 = vpop.f32.mrf.mxu0
    %v543 = vadd.f32 0.0, %v542
    %v544 = vpop.f32.mrf.mxu0
    %v545 = vadd.f32 0.0, %v544
    %546 = vdwg.mxu0
    %v551 = vcombine.low %v472, %v474
    %v552 = vcombine.low %v543, %v545
    %v554 = vunpack.c.l.s4 1966171168
    %v555 = vunpack.c.0.s8 %v554
    %v556 = vlaneseq
    %v557 = vshrl.u32 %v556, 7
    %v558 = vsub.s32 %v555, %v557
    %v559 = vrot.slane %v551, %v558
    %v561 = vunpack.c.l.s4 1966171168
    %v562 = vunpack.c.0.s8 %v561
    %v563 = vlaneseq
    %v564 = vshrl.u32 %v563, 7
    %v565 = vsub.s32 %v562, %v564
    %v566 = vrot.slane %v552, %v565
    %v567 = vcombine.low %v559, %v566
    %v568 = vcombine.high %v559, %v566
    %v570 = vunpack.c.l.s4 1966171168
    %v571 = vunpack.c.0.s8 %v570
    %v572 = vlaneseq
    %v573 = vshrl.u32 %v572, 7
    %v574 = vsub.s32 %v571, %v573
    %v575 = vrot.slane %v567, %v574
    %v577 = vunpack.c.l.s4 1966171168
    %v578 = vunpack.c.0.s8 %v577
    %v579 = vlaneseq
    %v580 = vshrl.u32 %v579, 7
    %v581 = vsub.s32 %v578, %v580
    %v582 = vrot.slane %v568, %v581
    %v585 = vadd.f32 %v338, %v575
    %v586 = vadd.f32 %v340, %v582
    %v587 = vxor.u32 %v585, 2147483648
    %v588 = vxor.u32 %v586, 2147483648
    %v589 = vmul.f32 %v587, 1.442695
    %v590 = vpow.pop %v589
    %v591 = vmul.f32 %v588, 1.442695
    %v592 = vpow.pop %v591
    %v593 = vadd.f32 %v590, 1.0
    %v594 = vadd.f32 %v592, 1.0
    %v595 = vrcp.pop %v593
    %v596 = vmul.f32 1.0, %v595
    %v597 = vrcp.pop %v594
    %v598 = vmul.f32 1.0, %v597
    %v601 = vrot.slane %v585, 3
    %v602 = vrot.slane %v586, 3
    %v605 = vtanh.pop %v601
    %v606 = vtanh.pop %v602
    %v609 = vrot.slane %v596, 1
    %v610 = vrot.slane %v598, 1
    %v613 = vmul.f32 %v609, 0.0
    %v614 = vmul.f32 %v610, 0.0
    %v615 = vmul.f32 %v596, %v605
    %v616 = vmul.f32 %v598, %v606
    %v617 = vadd.f32 %v613, %v615
    %v618 = vadd.f32 %v614, %v616
    %v619 = vtanh.pop %v617
    %v620 = vtanh.pop %v618
    %v621 = vrot.slane %v596, 2
    %v622 = vrot.slane %v598, 2
    %v625 = vmul.f32 %v621, %v619
    %v626 = vmul.f32 %v622, %v620
    %627 = vst [vmem:[#allocation3] sm:$0x1] %v625
    %628 = vst [vmem:[#allocation3 + $0x8] sm:$0x1] %v626
    %s629 = scalar_lea.vmem [#allocation2], 1
    %v630 = vld [vmem:[%s629] ss:$8 sm:$0xf]
    %s631 = scalar_lea.vmem [#allocation2], 33
    %v632 = vld [vmem:[%s631] ss:$8 sm:$0xf]
    %v633 = vld [vmem:[#allocation7] sm:$0xff]
    %v634 = vld [vmem:[#allocation7 + $0x8] sm:$0xff]
    %v635 = vld [vmem:[#allocation7 + $0x10] sm:$0xff]
    %v636 = vld [vmem:[#allocation7 + $0x18] sm:$0xff]
    %v637 = vld [vmem:[#allocation7 + $0x20] sm:$0xff]
    %v638 = vld [vmem:[#allocation7 + $0x28] sm:$0xff]
    %v639 = vld [vmem:[#allocation7 + $0x30] sm:$0xff]
    %v640 = vld [vmem:[#allocation7 + $0x38] sm:$0xff]
    %v641 = vld [vmem:[#allocation7 + $0x40] sm:$0xff]
    %v642 = vld [vmem:[#allocation7 + $0x48] sm:$0xff]
    %v643 = vld [vmem:[#allocation7 + $0x50] sm:$0xff]
    %v644 = vld [vmem:[#allocation7 + $0x58] sm:$0xff]
    %v645 = vld [vmem:[#allocation7 + $0x60] sm:$0xff]
    %v646 = vld [vmem:[#allocation7 + $0x68] sm:$0xff]
    %v647 = vld [vmem:[#allocation7 + $0x70] sm:$0xff]
    %v648 = vld [vmem:[#allocation7 + $0x78] sm:$0xff]
    %v649 = vld [vmem:[#allocation7 + $0x80] sm:$0xff]
    %v650 = vld [vmem:[#allocation7 + $0x88] sm:$0xff]
    %v651 = vld [vmem:[#allocation7 + $0x90] sm:$0xff]
    %v652 = vld [vmem:[#allocation7 + $0x98] sm:$0xff]
    %v653 = vld [vmem:[#allocation7 + $0xa0] sm:$0xff]
    %v654 = vld [vmem:[#allocation7 + $0xa8] sm:$0xff]
    %v655 = vld [vmem:[#allocation7 + $0xb0] sm:$0xff]
    %v656 = vld [vmem:[#allocation7 + $0xb8] sm:$0xff]
    %v657 = vld [vmem:[#allocation7 + $0xc0] sm:$0xff]
    %v658 = vld [vmem:[#allocation7 + $0xc8] sm:$0xff]
    %v659 = vld [vmem:[#allocation7 + $0xd0] sm:$0xff]
    %v660 = vld [vmem:[#allocation7 + $0xd8] sm:$0xff]
    %v661 = vld [vmem:[#allocation7 + $0xe0] sm:$0xff]
    %v662 = vld [vmem:[#allocation7 + $0xe8] sm:$0xff]
    %v663 = vld [vmem:[#allocation7 + $0xf0] sm:$0xff]
    %v664 = vld [vmem:[#allocation7 + $0xf8] sm:$0xff]
    %v665 = vld [vmem:[#allocation7 + $0x100] sm:$0xff]
    %v666 = vld [vmem:[#allocation7 + $0x108] sm:$0xff]
    %v667 = vld [vmem:[#allocation7 + $0x110] sm:$0xff]
    %v668 = vld [vmem:[#allocation7 + $0x118] sm:$0xff]
    %v669 = vld [vmem:[#allocation7 + $0x120] sm:$0xff]
    %v670 = vld [vmem:[#allocation7 + $0x128] sm:$0xff]
    %v671 = vld [vmem:[#allocation7 + $0x130] sm:$0xff]
    %v672 = vld [vmem:[#allocation7 + $0x138] sm:$0xff]
    %v673 = vld [vmem:[#allocation7 + $0x140] sm:$0xff]
    %v674 = vld [vmem:[#allocation7 + $0x148] sm:$0xff]
    %v675 = vld [vmem:[#allocation7 + $0x150] sm:$0xff]
    %v676 = vld [vmem:[#allocation7 + $0x158] sm:$0xff]
    %v677 = vld [vmem:[#allocation7 + $0x160] sm:$0xff]
    %v678 = vld [vmem:[#allocation7 + $0x168] sm:$0xff]
    %v679 = vld [vmem:[#allocation7 + $0x170] sm:$0xff]
    %v680 = vld [vmem:[#allocation7 + $0x178] sm:$0xff]
    %v681 = vld [vmem:[#allocation7 + $0x180] sm:$0xff]
    %v682 = vld [vmem:[#allocation7 + $0x188] sm:$0xff]
    %v683 = vld [vmem:[#allocation7 + $0x190] sm:$0xff]
    %v684 = vld [vmem:[#allocation7 + $0x198] sm:$0xff]
    %v685 = vld [vmem:[#allocation7 + $0x1a0] sm:$0xff]
    %v686 = vld [vmem:[#allocation7 + $0x1a8] sm:$0xff]
    %v687 = vld [vmem:[#allocation7 + $0x1b0] sm:$0xff]
    %v688 = vld [vmem:[#allocation7 + $0x1b8] sm:$0xff]
    %v689 = vld [vmem:[#allocation7 + $0x1c0] sm:$0xff]
    %v690 = vld [vmem:[#allocation7 + $0x1c8] sm:$0xff]
    %v691 = vld [vmem:[#allocation7 + $0x1d0] sm:$0xff]
    %v692 = vld [vmem:[#allocation7 + $0x1d8] sm:$0xff]
    %v693 = vld [vmem:[#allocation7 + $0x1e0] sm:$0xff]
    %v694 = vld [vmem:[#allocation7 + $0x1e8] sm:$0xff]
    %v695 = vld [vmem:[#allocation7 + $0x1f0] sm:$0xff]
    %v696 = vld [vmem:[#allocation7 + $0x1f8] sm:$0xff]
    %v699 = vcombine.low %v625, %v626
    %v701 = vunpack.c.l.s4 1966171168
    %v702 = vunpack.c.0.s8 %v701
    %v703 = vlaneseq
    %v704 = vshrl.u32 %v703, 7
    %v705 = vsub.s32 %v702, %v704
    %v706 = vrot.slane %v699, %v705
    %v708 = vunpack.c.l.s4 1966171168
    %v709 = vunpack.c.0.s8 %v708
    %v710 = vlaneseq
    %v711 = vshrl.u32 %v710, 7
    %v712 = vsub.s32 %v709, %v711
    %v713 = vrot.slane %v706, %v712
    %715 = vmatprep.subr.mxu0 %v694
    %716 = vmatpush1.msra.mxu0 %v693
    %717 = vmatprep.subr.mxu0 %v690
    %718 = vmatpush1.msra.mxu0 %v689
    %719 = vmatprep.subr.mxu0 %v686
    %720 = vmatpush1.msra.mxu0 %v685
    %721 = vmatprep.subr.mxu0 %v682
    %722 = vmatpush1.msra.mxu0 %v681
    %723 = vmatprep.subr.mxu0 %v678
    %724 = vmatpush1.msra.mxu0 %v677
    %725 = vmatprep.subr.mxu0 %v674
    %726 = vmatpush1.msra.mxu0 %v673
    %727 = vmatprep.subr.mxu0 %v670
    %728 = vmatpush1.msra.mxu0 %v669
    %729 = vmatprep.subr.mxu0 %v666
    %730 = vmatpush1.msra.mxu0 %v665
    %731 = vmatprep.subr.mxu0 %v662
    %732 = vmatpush1.msra.mxu0 %v661
    %733 = vmatprep.subr.mxu0 %v658
    %734 = vmatpush1.msra.mxu0 %v657
    %735 = vmatprep.subr.mxu0 %v654
    %736 = vmatpush1.msra.mxu0 %v653
    %737 = vmatprep.subr.mxu0 %v650
    %738 = vmatpush1.msra.mxu0 %v649
    %739 = vmatprep.subr.mxu0 %v646
    %740 = vmatpush1.msra.mxu0 %v645
    %741 = vmatprep.subr.mxu0 %v642
    %742 = vmatpush1.msra.mxu0 %v641
    %743 = vmatprep.subr.mxu0 %v638
    %744 = vmatpush1.msra.mxu0 %v637
    %745 = vmatprep.subr.mxu0 %v634
    %746 = vmatpush1.msra.mxu0 %v633
    %747 = vmatprep.subr.mxu0 0.0
    %748 = vmatpush2.msra.mxu0 0.0
    %749 = vmatprep.subr.mxu0 0.0
    %750 = vmatpush2.msra.mxu0 0.0
    %751 = vmatprep.subr.mxu0 0.0
    %752 = vmatpush2.msra.mxu0 0.0
    %753 = vmatprep.subr.mxu0 0.0
    %754 = vmatpush2.msra.mxu0 0.0
    %755 = vmatprep.subr.mxu0 0.0
    %756 = vmatpush2.msra.mxu0 0.0
    %757 = vmatprep.subr.mxu0 0.0
    %758 = vmatpush2.msra.mxu0 0.0
    %759 = vmatprep.subr.mxu0 0.0
    %760 = vmatpush2.msra.mxu0 0.0
    %761 = vmatprep.subr.mxu0 0.0
    %762 = vmatpush2.msra.mxu0 0.0
    %763 = vmatprep.subr.mxu0 0.0
    %764 = vmatpush2.msra.mxu0 0.0
    %765 = vmatprep.subr.mxu0 0.0
    %766 = vmatpush2.msra.mxu0 0.0
    %767 = vmatprep.subr.mxu0 0.0
    %768 = vmatpush2.msra.mxu0 0.0
    %769 = vmatprep.subr.mxu0 0.0
    %770 = vmatpush2.msra.mxu0 0.0
    %771 = vmatprep.subr.mxu0 0.0
    %772 = vmatpush2.msra.mxu0 0.0
    %773 = vmatprep.subr.mxu0 0.0
    %774 = vmatpush2.msra.mxu0 0.0
    %775 = vmatprep.subr.mxu0 0.0
    %776 = vmatpush2.msra.mxu0 0.0
    %777 = vmatprep.subr.mxu0 0.0
    %778 = vmatpush2.msra.mxu0 0.0
    %779 = vmatprep.mubr.f32.mxu0 0.0
    %780 = vmatmul.mubr.f32.gmra.mxu0 %v713
    %v781 = vpop.f32.mrf.mxu0
    %v782 = vadd.f32 0.0, %v781
    %v783 = vpop.f32.mrf.mxu0
    %v784 = vadd.f32 0.0, %v783
    %785 = vdwg.mxu0
    %786 = vmatprep.subr.mxu0 %v696
    %787 = vmatpush1.msra.mxu0 %v695
    %788 = vmatprep.subr.mxu0 %v692
    %789 = vmatpush1.msra.mxu0 %v691
    %790 = vmatprep.subr.mxu0 %v688
    %791 = vmatpush1.msra.mxu0 %v687
    %792 = vmatprep.subr.mxu0 %v684
    %793 = vmatpush1.msra.mxu0 %v683
    %794 = vmatprep.subr.mxu0 %v680
    %795 = vmatpush1.msra.mxu0 %v679
    %796 = vmatprep.subr.mxu0 %v676
    %797 = vmatpush1.msra.mxu0 %v675
    %798 = vmatprep.subr.mxu0 %v672
    %799 = vmatpush1.msra.mxu0 %v671
    %800 = vmatprep.subr.mxu0 %v668
    %801 = vmatpush1.msra.mxu0 %v667
    %802 = vmatprep.subr.mxu0 %v664
    %803 = vmatpush1.msra.mxu0 %v663
    %804 = vmatprep.subr.mxu0 %v660
    %805 = vmatpush1.msra.mxu0 %v659
    %806 = vmatprep.subr.mxu0 %v656
    %807 = vmatpush1.msra.mxu0 %v655
    %808 = vmatprep.subr.mxu0 %v652
    %809 = vmatpush1.msra.mxu0 %v651
    %810 = vmatprep.subr.mxu0 %v648
    %811 = vmatpush1.msra.mxu0 %v647
    %812 = vmatprep.subr.mxu0 %v644
    %813 = vmatpush1.msra.mxu0 %v643
    %814 = vmatprep.subr.mxu0 %v640
    %815 = vmatpush1.msra.mxu0 %v639
    %816 = vmatprep.subr.mxu0 %v636
    %817 = vmatpush1.msra.mxu0 %v635
    %818 = vmatprep.subr.mxu0 0.0
    %819 = vmatpush2.msra.mxu0 0.0
    %820 = vmatprep.subr.mxu0 0.0
    %821 = vmatpush2.msra.mxu0 0.0
    %822 = vmatprep.subr.mxu0 0.0
    %823 = vmatpush2.msra.mxu0 0.0
    %824 = vmatprep.subr.mxu0 0.0
    %825 = vmatpush2.msra.mxu0 0.0
    %826 = vmatprep.subr.mxu0 0.0
    %827 = vmatpush2.msra.mxu0 0.0
    %828 = vmatprep.subr.mxu0 0.0
    %829 = vmatpush2.msra.mxu0 0.0
    %830 = vmatprep.subr.mxu0 0.0
    %831 = vmatpush2.msra.mxu0 0.0
    %832 = vmatprep.subr.mxu0 0.0
    %833 = vmatpush2.msra.mxu0 0.0
    %834 = vmatprep.subr.mxu0 0.0
    %835 = vmatpush2.msra.mxu0 0.0
    %836 = vmatprep.subr.mxu0 0.0
    %837 = vmatpush2.msra.mxu0 0.0
    %838 = vmatprep.subr.mxu0 0.0
    %839 = vmatpush2.msra.mxu0 0.0
    %840 = vmatprep.subr.mxu0 0.0
    %841 = vmatpush2.msra.mxu0 0.0
    %842 = vmatprep.subr.mxu0 0.0
    %843 = vmatpush2.msra.mxu0 0.0
    %844 = vmatprep.subr.mxu0 0.0
    %845 = vmatpush2.msra.mxu0 0.0
    %846 = vmatprep.subr.mxu0 0.0
    %847 = vmatpush2.msra.mxu0 0.0
    %848 = vmatprep.subr.mxu0 0.0
    %849 = vmatpush2.msra.mxu0 0.0
    %850 = vmatprep.mubr.f32.mxu0 0.0
    %851 = vmatmul.mubr.f32.gmra.mxu0 %v713
    %v852 = vpop.f32.mrf.mxu0
    %v853 = vadd.f32 0.0, %v852
    %v854 = vpop.f32.mrf.mxu0
    %v855 = vadd.f32 0.0, %v854
    %856 = vdwg.mxu0
    %v861 = vcombine.low %v782, %v784
    %v862 = vcombine.low %v853, %v855
    %v864 = vunpack.c.l.s4 1966171168
    %v865 = vunpack.c.0.s8 %v864
    %v866 = vlaneseq
    %v867 = vshrl.u32 %v866, 7
    %v868 = vsub.s32 %v865, %v867
    %v869 = vrot.slane %v861, %v868
    %v871 = vunpack.c.l.s4 1966171168
    %v872 = vunpack.c.0.s8 %v871
    %v873 = vlaneseq
    %v874 = vshrl.u32 %v873, 7
    %v875 = vsub.s32 %v872, %v874
    %v876 = vrot.slane %v862, %v875
    %v877 = vcombine.low %v869, %v876
    %v878 = vcombine.high %v869, %v876
    %v880 = vunpack.c.l.s4 1966171168
    %v881 = vunpack.c.0.s8 %v880
    %v882 = vlaneseq
    %v883 = vshrl.u32 %v882, 7
    %v884 = vsub.s32 %v881, %v883
    %v885 = vrot.slane %v877, %v884
    %v887 = vunpack.c.l.s4 1966171168
    %v888 = vunpack.c.0.s8 %v887
    %v889 = vlaneseq
    %v890 = vshrl.u32 %v889, 7
    %v891 = vsub.s32 %v888, %v890
    %v892 = vrot.slane %v878, %v891
    %v895 = vadd.f32 %v630, %v885
    %v896 = vadd.f32 %v632, %v892
    %v897 = vxor.u32 %v895, 2147483648
    %v898 = vxor.u32 %v896, 2147483648
    %v899 = vmul.f32 %v897, 1.442695
    %v900 = vpow.pop %v899
    %v901 = vmul.f32 %v898, 1.442695
    %v902 = vpow.pop %v901
    %v903 = vadd.f32 %v900, 1.0
    %v904 = vadd.f32 %v902, 1.0
    %v905 = vrcp.pop %v903
    %v906 = vmul.f32 1.0, %v905
    %v907 = vrcp.pop %v904
    %v908 = vmul.f32 1.0, %v907
    %v911 = vrot.slane %v895, 3
    %v912 = vrot.slane %v896, 3
    %v915 = vtanh.pop %v911
    %v916 = vtanh.pop %v912
    %v919 = vrot.slane %v906, 1
    %v920 = vrot.slane %v908, 1
    %v923 = vmul.f32 %v919, %v617
    %v924 = vmul.f32 %v920, %v618
    %v925 = vmul.f32 %v906, %v915
    %v926 = vmul.f32 %v908, %v916
    %v927 = vadd.f32 %v923, %v925
    %v928 = vadd.f32 %v924, %v926
    %v929 = vtanh.pop %v927
    %v930 = vtanh.pop %v928
    %v931 = vrot.slane %v906, 2
    %v932 = vrot.slane %v908, 2
    %v935 = vmul.f32 %v931, %v929
    %v936 = vmul.f32 %v932, %v930
    %937 = vst [vmem:[#allocation3 + $0x1] sm:$0x1] %v935
    %938 = vst [vmem:[#allocation3 + $0x9] sm:$0x1] %v936
    %s939 = scalar_lea.vmem [#allocation2], 2
    %v940 = vld [vmem:[%s939] ss:$8 sm:$0xf]
    %s941 = scalar_lea.vmem [#allocation2], 34
    %v942 = vld [vmem:[%s941] ss:$8 sm:$0xf]
    %v943 = vld [vmem:[#allocation7] sm:$0xff]
    %v944 = vld [vmem:[#allocation7 + $0x8] sm:$0xff]
    %v945 = vld [vmem:[#allocation7 + $0x10] sm:$0xff]
    %v946 = vld [vmem:[#allocation7 + $0x18] sm:$0xff]
    %v947 = vld [vmem:[#allocation7 + $0x20] sm:$0xff]
    %v948 = vld [vmem:[#allocation7 + $0x28] sm:$0xff]
    %v949 = vld [vmem:[#allocation7 + $0x30] sm:$0xff]
    %v950 = vld [vmem:[#allocation7 + $0x38] sm:$0xff]
    %v951 = vld [vmem:[#allocation7 + $0x40] sm:$0xff]
    %v952 = vld [vmem:[#allocation7 + $0x48] sm:$0xff]
    %v953 = vld [vmem:[#allocation7 + $0x50] sm:$0xff]
    %v954 = vld [vmem:[#allocation7 + $0x58] sm:$0xff]
    %v955 = vld [vmem:[#allocation7 + $0x60] sm:$0xff]
    %v956 = vld [vmem:[#allocation7 + $0x68] sm:$0xff]
    %v957 = vld [vmem:[#allocation7 + $0x70] sm:$0xff]
    %v958 = vld [vmem:[#allocation7 + $0x78] sm:$0xff]
    %v959 = vld [vmem:[#allocation7 + $0x80] sm:$0xff]
    %v960 = vld [vmem:[#allocation7 + $0x88] sm:$0xff]
    %v961 = vld [vmem:[#allocation7 + $0x90] sm:$0xff]
    %v962 = vld [vmem:[#allocation7 + $0x98] sm:$0xff]
    %v963 = vld [vmem:[#allocation7 + $0xa0] sm:$0xff]
    %v964 = vld [vmem:[#allocation7 + $0xa8] sm:$0xff]
    %v965 = vld [vmem:[#allocation7 + $0xb0] sm:$0xff]
    %v966 = vld [vmem:[#allocation7 + $0xb8] sm:$0xff]
    %v967 = vld [vmem:[#allocation7 + $0xc0] sm:$0xff]
    %v968 = vld [vmem:[#allocation7 + $0xc8] sm:$0xff]
    %v969 = vld [vmem:[#allocation7 + $0xd0] sm:$0xff]
    %v970 = vld [vmem:[#allocation7 + $0xd8] sm:$0xff]
    %v971 = vld [vmem:[#allocation7 + $0xe0] sm:$0xff]
    %v972 = vld [vmem:[#allocation7 + $0xe8] sm:$0xff]
    %v973 = vld [vmem:[#allocation7 + $0xf0] sm:$0xff]
    %v974 = vld [vmem:[#allocation7 + $0xf8] sm:$0xff]
    %v975 = vld [vmem:[#allocation7 + $0x100] sm:$0xff]
    %v976 = vld [vmem:[#allocation7 + $0x108] sm:$0xff]
    %v977 = vld [vmem:[#allocation7 + $0x110] sm:$0xff]
    %v978 = vld [vmem:[#allocation7 + $0x118] sm:$0xff]
    %v979 = vld [vmem:[#allocation7 + $0x120] sm:$0xff]
    %v980 = vld [vmem:[#allocation7 + $0x128] sm:$0xff]
    %v981 = vld [vmem:[#allocation7 + $0x130] sm:$0xff]
    %v982 = vld [vmem:[#allocation7 + $0x138] sm:$0xff]
    %v983 = vld [vmem:[#allocation7 + $0x140] sm:$0xff]
    %v984 = vld [vmem:[#allocation7 + $0x148] sm:$0xff]
    %v985 = vld [vmem:[#allocation7 + $0x150] sm:$0xff]
    %v986 = vld [vmem:[#allocation7 + $0x158] sm:$0xff]
    %v987 = vld [vmem:[#allocation7 + $0x160] sm:$0xff]
    %v988 = vld [vmem:[#allocation7 + $0x168] sm:$0xff]
    %v989 = vld [vmem:[#allocation7 + $0x170] sm:$0xff]
    %v990 = vld [vmem:[#allocation7 + $0x178] sm:$0xff]
    %v991 = vld [vmem:[#allocation7 + $0x180] sm:$0xff]
    %v992 = vld [vmem:[#allocation7 + $0x188] sm:$0xff]
    %v993 = vld [vmem:[#allocation7 + $0x190] sm:$0xff]
    %v994 = vld [vmem:[#allocation7 + $0x198] sm:$0xff]
    %v995 = vld [vmem:[#allocation7 + $0x1a0] sm:$0xff]
    %v996 = vld [vmem:[#allocation7 + $0x1a8] sm:$0xff]
    %v997 = vld [vmem:[#allocation7 + $0x1b0] sm:$0xff]
    %v998 = vld [vmem:[#allocation7 + $0x1b8] sm:$0xff]
    %v999 = vld [vmem:[#allocation7 + $0x1c0] sm:$0xff]
    %v1000 = vld [vmem:[#allocation7 + $0x1c8] sm:$0xff]
    %v1001 = vld [vmem:[#allocation7 + $0x1d0] sm:$0xff]
    %v1002 = vld [vmem:[#allocation7 + $0x1d8] sm:$0xff]
    %v1003 = vld [vmem:[#allocation7 + $0x1e0] sm:$0xff]
    %v1004 = vld [vmem:[#allocation7 + $0x1e8] sm:$0xff]
    %v1005 = vld [vmem:[#allocation7 + $0x1f0] sm:$0xff]
    %v1006 = vld [vmem:[#allocation7 + $0x1f8] sm:$0xff]
    %v1009 = vcombine.low %v935, %v936
    %v1011 = vunpack.c.l.s4 1966171168
    %v1012 = vunpack.c.0.s8 %v1011
    %v1013 = vlaneseq
    %v1014 = vshrl.u32 %v1013, 7
    %v1015 = vsub.s32 %v1012, %v1014
    %v1016 = vrot.slane %v1009, %v1015
    %v1018 = vunpack.c.l.s4 1966171168
    %v1019 = vunpack.c.0.s8 %v1018
    %v1020 = vlaneseq
    %v1021 = vshrl.u32 %v1020, 7
    %v1022 = vsub.s32 %v1019, %v1021
    %v1023 = vrot.slane %v1016, %v1022
    %1025 = vmatprep.subr.mxu0 %v1004
    %1026 = vmatpush1.msra.mxu0 %v1003
    %1027 = vmatprep.subr.mxu0 %v1000
    %1028 = vmatpush1.msra.mxu0 %v999
    %1029 = vmatprep.subr.mxu0 %v996
    %1030 = vmatpush1.msra.mxu0 %v995
    %1031 = vmatprep.subr.mxu0 %v992
    %1032 = vmatpush1.msra.mxu0 %v991
    %1033 = vmatprep.subr.mxu0 %v988
    %1034 = vmatpush1.msra.mxu0 %v987
    %1035 = vmatprep.subr.mxu0 %v984
    %1036 = vmatpush1.msra.mxu0 %v983
    %1037 = vmatprep.subr.mxu0 %v980
    %1038 = vmatpush1.msra.mxu0 %v979
    %1039 = vmatprep.subr.mxu0 %v976
    %1040 = vmatpush1.msra.mxu0 %v975
    %1041 = vmatprep.subr.mxu0 %v972
    %1042 = vmatpush1.msra.mxu0 %v971
    %1043 = vmatprep.subr.mxu0 %v968
    %1044 = vmatpush1.msra.mxu0 %v967
    %1045 = vmatprep.subr.mxu0 %v964
    %1046 = vmatpush1.msra.mxu0 %v963
    %1047 = vmatprep.subr.mxu0 %v960
    %1048 = vmatpush1.msra.mxu0 %v959
    %1049 = vmatprep.subr.mxu0 %v956
    %1050 = vmatpush1.msra.mxu0 %v955
    %1051 = vmatprep.subr.mxu0 %v952
    %1052 = vmatpush1.msra.mxu0 %v951
    %1053 = vmatprep.subr.mxu0 %v948
    %1054 = vmatpush1.msra.mxu0 %v947
    %1055 = vmatprep.subr.mxu0 %v944
    %1056 = vmatpush1.msra.mxu0 %v943
    %1057 = vmatprep.subr.mxu0 0.0
    %1058 = vmatpush2.msra.mxu0 0.0
    %1059 = vmatprep.subr.mxu0 0.0
    %1060 = vmatpush2.msra.mxu0 0.0
    %1061 = vmatprep.subr.mxu0 0.0
    %1062 = vmatpush2.msra.mxu0 0.0
    %1063 = vmatprep.subr.mxu0 0.0
    %1064 = vmatpush2.msra.mxu0 0.0
    %1065 = vmatprep.subr.mxu0 0.0
    %1066 = vmatpush2.msra.mxu0 0.0
    %1067 = vmatprep.subr.mxu0 0.0
    %1068 = vmatpush2.msra.mxu0 0.0
    %1069 = vmatprep.subr.mxu0 0.0
    %1070 = vmatpush2.msra.mxu0 0.0
    %1071 = vmatprep.subr.mxu0 0.0
    %1072 = vmatpush2.msra.mxu0 0.0
    %1073 = vmatprep.subr.mxu0 0.0
    %1074 = vmatpush2.msra.mxu0 0.0
    %1075 = vmatprep.subr.mxu0 0.0
    %1076 = vmatpush2.msra.mxu0 0.0
    %1077 = vmatprep.subr.mxu0 0.0
    %1078 = vmatpush2.msra.mxu0 0.0
    %1079 = vmatprep.subr.mxu0 0.0
    %1080 = vmatpush2.msra.mxu0 0.0
    %1081 = vmatprep.subr.mxu0 0.0
    %1082 = vmatpush2.msra.mxu0 0.0
    %1083 = vmatprep.subr.mxu0 0.0
    %1084 = vmatpush2.msra.mxu0 0.0
    %1085 = vmatprep.subr.mxu0 0.0
    %1086 = vmatpush2.msra.mxu0 0.0
    %1087 = vmatprep.subr.mxu0 0.0
    %1088 = vmatpush2.msra.mxu0 0.0
    %1089 = vmatprep.mubr.f32.mxu0 0.0
    %1090 = vmatmul.mubr.f32.gmra.mxu0 %v1023
    %v1091 = vpop.f32.mrf.mxu0
    %v1092 = vadd.f32 0.0, %v1091
    %v1093 = vpop.f32.mrf.mxu0
    %v1094 = vadd.f32 0.0, %v1093
    %1095 = vdwg.mxu0
    %1096 = vmatprep.subr.mxu0 %v1006
    %1097 = vmatpush1.msra.mxu0 %v1005
    %1098 = vmatprep.subr.mxu0 %v1002
    %1099 = vmatpush1.msra.mxu0 %v1001
    %1100 = vmatprep.subr.mxu0 %v998
    %1101 = vmatpush1.msra.mxu0 %v997
    %1102 = vmatprep.subr.mxu0 %v994
    %1103 = vmatpush1.msra.mxu0 %v993
    %1104 = vmatprep.subr.mxu0 %v990
    %1105 = vmatpush1.msra.mxu0 %v989
    %1106 = vmatprep.subr.mxu0 %v986
    %1107 = vmatpush1.msra.mxu0 %v985
    %1108 = vmatprep.subr.mxu0 %v982
    %1109 = vmatpush1.msra.mxu0 %v981
    %1110 = vmatprep.subr.mxu0 %v978
    %1111 = vmatpush1.msra.mxu0 %v977
    %1112 = vmatprep.subr.mxu0 %v974
    %1113 = vmatpush1.msra.mxu0 %v973
    %1114 = vmatprep.subr.mxu0 %v970
    %1115 = vmatpush1.msra.mxu0 %v969
    %1116 = vmatprep.subr.mxu0 %v966
    %1117 = vmatpush1.msra.mxu0 %v965
    %1118 = vmatprep.subr.mxu0 %v962
    %1119 = vmatpush1.msra.mxu0 %v961
    %1120 = vmatprep.subr.mxu0 %v958
    %1121 = vmatpush1.msra.mxu0 %v957
    %1122 = vmatprep.subr.mxu0 %v954
    %1123 = vmatpush1.msra.mxu0 %v953
    %1124 = vmatprep.subr.mxu0 %v950
    %1125 = vmatpush1.msra.mxu0 %v949
    %1126 = vmatprep.subr.mxu0 %v946
    %1127 = vmatpush1.msra.mxu0 %v945
    %1128 = vmatprep.subr.mxu0 0.0
    %1129 = vmatpush2.msra.mxu0 0.0
    %1130 = vmatprep.subr.mxu0 0.0
    %1131 = vmatpush2.msra.mxu0 0.0
    %1132 = vmatprep.subr.mxu0 0.0
    %1133 = vmatpush2.msra.mxu0 0.0
    %1134 = vmatprep.subr.mxu0 0.0
    %1135 = vmatpush2.msra.mxu0 0.0
    %1136 = vmatprep.subr.mxu0 0.0
    %1137 = vmatpush2.msra.mxu0 0.0
    %1138 = vmatprep.subr.mxu0 0.0
    %1139 = vmatpush2.msra.mxu0 0.0
    %1140 = vmatprep.subr.mxu0 0.0
    %1141 = vmatpush2.msra.mxu0 0.0
    %1142 = vmatprep.subr.mxu0 0.0
    %1143 = vmatpush2.msra.mxu0 0.0
    %1144 = vmatprep.subr.mxu0 0.0
    %1145 = vmatpush2.msra.mxu0 0.0
    %1146 = vmatprep.subr.mxu0 0.0
    %1147 = vmatpush2.msra.mxu0 0.0
    %1148 = vmatprep.subr.mxu0 0.0
    %1149 = vmatpush2.msra.mxu0 0.0
    %1150 = vmatprep.subr.mxu0 0.0
    %1151 = vmatpush2.msra.mxu0 0.0
    %1152 = vmatprep.subr.mxu0 0.0
    %1153 = vmatpush2.msra.mxu0 0.0
    %1154 = vmatprep.subr.mxu0 0.0
    %1155 = vmatpush2.msra.mxu0 0.0
    %1156 = vmatprep.subr.mxu0 0.0
    %1157 = vmatpush2.msra.mxu0 0.0
    %1158 = vmatprep.subr.mxu0 0.0
    %1159 = vmatpush2.msra.mxu0 0.0
    %1160 = vmatprep.mubr.f32.mxu0 0.0
    %1161 = vmatmul.mubr.f32.gmra.mxu0 %v1023
    %v1162 = vpop.f32.mrf.mxu0
    %v1163 = vadd.f32 0.0, %v1162
    %v1164 = vpop.f32.mrf.mxu0
    %v1165 = vadd.f32 0.0, %v1164
    %1166 = vdwg.mxu0
    %v1171 = vcombine.low %v1092, %v1094
    %v1172 = vcombine.low %v1163, %v1165
    %v1174 = vunpack.c.l.s4 1966171168
    %v1175 = vunpack.c.0.s8 %v1174
    %v1176 = vlaneseq
    %v1177 = vshrl.u32 %v1176, 7
    %v1178 = vsub.s32 %v1175, %v1177
    %v1179 = vrot.slane %v1171, %v1178
    %v1181 = vunpack.c.l.s4 1966171168
    %v1182 = vunpack.c.0.s8 %v1181
    %v1183 = vlaneseq
    %v1184 = vshrl.u32 %v1183, 7
    %v1185 = vsub.s32 %v1182, %v1184
    %v1186 = vrot.slane %v1172, %v1185
    %v1187 = vcombine.low %v1179, %v1186
    %v1188 = vcombine.high %v1179, %v1186
    %v1190 = vunpack.c.l.s4 1966171168
    %v1191 = vunpack.c.0.s8 %v1190
    %v1192 = vlaneseq
    %v1193 = vshrl.u32 %v1192, 7
    %v1194 = vsub.s32 %v1191, %v1193
    %v1195 = vrot.slane %v1187, %v1194
    %v1197 = vunpack.c.l.s4 1966171168
    %v1198 = vunpack.c.0.s8 %v1197
    %v1199 = vlaneseq
    %v1200 = vshrl.u32 %v1199, 7
    %v1201 = vsub.s32 %v1198, %v1200
    %v1202 = vrot.slane %v1188, %v1201
    %v1205 = vadd.f32 %v940, %v1195
    %v1206 = vadd.f32 %v942, %v1202
    %v1207 = vxor.u32 %v1205, 2147483648
    %v1208 = vxor.u32 %v1206, 2147483648
    %v1209 = vmul.f32 %v1207, 1.442695
    %v1210 = vpow.pop %v1209
    %v1211 = vmul.f32 %v1208, 1.442695
    %v1212 = vpow.pop %v1211
    %v1213 = vadd.f32 %v1210, 1.0
    %v1214 = vadd.f32 %v1212, 1.0
    %v1215 = vrcp.pop %v1213
    %v1216 = vmul.f32 1.0, %v1215
    %v1217 = vrcp.pop %v1214
    %v1218 = vmul.f32 1.0, %v1217
    %v1221 = vrot.slane %v1205, 3
    %v1222 = vrot.slane %v1206, 3
    %v1225 = vtanh.pop %v1221
    %v1226 = vtanh.pop %v1222
    %v1229 = vrot.slane %v1216, 1
    %v1230 = vrot.slane %v1218, 1
    %v1233 = vmul.f32 %v1229, %v927
    %v1234 = vmul.f32 %v1230, %v928
    %v1235 = vmul.f32 %v1216, %v1225
    %v1236 = vmul.f32 %v1218, %v1226
    %v1237 = vadd.f32 %v1233, %v1235
    %v1238 = vadd.f32 %v1234, %v1236
    %v1239 = vtanh.pop %v1237
    %v1240 = vtanh.pop %v1238
    %v1241 = vrot.slane %v1216, 2
    %v1242 = vrot.slane %v1218, 2
    %v1245 = vmul.f32 %v1241, %v1239
    %v1246 = vmul.f32 %v1242, %v1240
    %1247 = vst [vmem:[#allocation3 + $0x2] sm:$0x1] %v1245
    %1248 = vst [vmem:[#allocation3 + $0xa] sm:$0x1] %v1246
    %s1249 = scalar_lea.vmem [#allocation2], 3
    %v1250 = vld [vmem:[%s1249] ss:$8 sm:$0xf]
    %s1251 = scalar_lea.vmem [#allocation2], 35
    %v1252 = vld [vmem:[%s1251] ss:$8 sm:$0xf]
    %v1253 = vld [vmem:[#allocation7] sm:$0xff]
    %v1254 = vld [vmem:[#allocation7 + $0x8] sm:$0xff]
    %v1255 = vld [vmem:[#allocation7 + $0x10] sm:$0xff]
    %v1256 = vld [vmem:[#allocation7 + $0x18] sm:$0xff]
    %v1257 = vld [vmem:[#allocation7 + $0x20] sm:$0xff]
    %v1258 = vld [vmem:[#allocation7 + $0x28] sm:$0xff]
    %v1259 = vld [vmem:[#allocation7 + $0x30] sm:$0xff]
    %v1260 = vld [vmem:[#allocation7 + $0x38] sm:$0xff]
    %v1261 = vld [vmem:[#allocation7 + $0x40] sm:$0xff]
    %v1262 = vld [vmem:[#allocation7 + $0x48] sm:$0xff]
    %v1263 = vld [vmem:[#allocation7 + $0x50] sm:$0xff]
    %v1264 = vld [vmem:[#allocation7 + $0x58] sm:$0xff]
    %v1265 = vld [vmem:[#allocation7 + $0x60] sm:$0xff]
    %v1266 = vld [vmem:[#allocation7 + $0x68] sm:$0xff]
    %v1267 = vld [vmem:[#allocation7 + $0x70] sm:$0xff]
    %v1268 = vld [vmem:[#allocation7 + $0x78] sm:$0xff]
    %v1269 = vld [vmem:[#allocation7 + $0x80] sm:$0xff]
    %v1270 = vld [vmem:[#allocation7 + $0x88] sm:$0xff]
    %v1271 = vld [vmem:[#allocation7 + $0x90] sm:$0xff]
    %v1272 = vld [vmem:[#allocation7 + $0x98] sm:$0xff]
    %v1273 = vld [vmem:[#allocation7 + $0xa0] sm:$0xff]
    %v1274 = vld [vmem:[#allocation7 + $0xa8] sm:$0xff]
    %v1275 = vld [vmem:[#allocation7 + $0xb0] sm:$0xff]
    %v1276 = vld [vmem:[#allocation7 + $0xb8] sm:$0xff]
    %v1277 = vld [vmem:[#allocation7 + $0xc0] sm:$0xff]
    %v1278 = vld [vmem:[#allocation7 + $0xc8] sm:$0xff]
    %v1279 = vld [vmem:[#allocation7 + $0xd0] sm:$0xff]
    %v1280 = vld [vmem:[#allocation7 + $0xd8] sm:$0xff]
    %v1281 = vld [vmem:[#allocation7 + $0xe0] sm:$0xff]
    %v1282 = vld [vmem:[#allocation7 + $0xe8] sm:$0xff]
    %v1283 = vld [vmem:[#allocation7 + $0xf0] sm:$0xff]
    %v1284 = vld [vmem:[#allocation7 + $0xf8] sm:$0xff]
    %v1285 = vld [vmem:[#allocation7 + $0x100] sm:$0xff]
    %v1286 = vld [vmem:[#allocation7 + $0x108] sm:$0xff]
    %v1287 = vld [vmem:[#allocation7 + $0x110] sm:$0xff]
    %v1288 = vld [vmem:[#allocation7 + $0x118] sm:$0xff]
    %v1289 = vld [vmem:[#allocation7 + $0x120] sm:$0xff]
    %v1290 = vld [vmem:[#allocation7 + $0x128] sm:$0xff]
    %v1291 = vld [vmem:[#allocation7 + $0x130] sm:$0xff]
    %v1292 = vld [vmem:[#allocation7 + $0x138] sm:$0xff]
    %v1293 = vld [vmem:[#allocation7 + $0x140] sm:$0xff]
    %v1294 = vld [vmem:[#allocation7 + $0x148] sm:$0xff]
    %v1295 = vld [vmem:[#allocation7 + $0x150] sm:$0xff]
    %v1296 = vld [vmem:[#allocation7 + $0x158] sm:$0xff]
    %v1297 = vld [vmem:[#allocation7 + $0x160] sm:$0xff]
    %v1298 = vld [vmem:[#allocation7 + $0x168] sm:$0xff]
    %v1299 = vld [vmem:[#allocation7 + $0x170] sm:$0xff]
    %v1300 = vld [vmem:[#allocation7 + $0x178] sm:$0xff]
    %v1301 = vld [vmem:[#allocation7 + $0x180] sm:$0xff]
    %v1302 = vld [vmem:[#allocation7 + $0x188] sm:$0xff]
    %v1303 = vld [vmem:[#allocation7 + $0x190] sm:$0xff]
    %v1304 = vld [vmem:[#allocation7 + $0x198] sm:$0xff]
    %v1305 = vld [vmem:[#allocation7 + $0x1a0] sm:$0xff]
    %v1306 = vld [vmem:[#allocation7 + $0x1a8] sm:$0xff]
    %v1307 = vld [vmem:[#allocation7 + $0x1b0] sm:$0xff]
    %v1308 = vld [vmem:[#allocation7 + $0x1b8] sm:$0xff]
    %v1309 = vld [vmem:[#allocation7 + $0x1c0] sm:$0xff]
    %v1310 = vld [vmem:[#allocation7 + $0x1c8] sm:$0xff]
    %v1311 = vld [vmem:[#allocation7 + $0x1d0] sm:$0xff]
    %v1312 = vld [vmem:[#allocation7 + $0x1d8] sm:$0xff]
    %v1313 = vld [vmem:[#allocation7 + $0x1e0] sm:$0xff]
    %v1314 = vld [vmem:[#allocation7 + $0x1e8] sm:$0xff]
    %v1315 = vld [vmem:[#allocation7 + $0x1f0] sm:$0xff]
    %v1316 = vld [vmem:[#allocation7 + $0x1f8] sm:$0xff]
    %v1319 = vcombine.low %v1245, %v1246
    %v1321 = vunpack.c.l.s4 1966171168
    %v1322 = vunpack.c.0.s8 %v1321
    %v1323 = vlaneseq
    %v1324 = vshrl.u32 %v1323, 7
    %v1325 = vsub.s32 %v1322, %v1324
    %v1326 = vrot.slane %v1319, %v1325
    %v1328 = vunpack.c.l.s4 1966171168
    %v1329 = vunpack.c.0.s8 %v1328
    %v1330 = vlaneseq
    %v1331 = vshrl.u32 %v1330, 7
    %v1332 = vsub.s32 %v1329, %v1331
    %v1333 = vrot.slane %v1326, %v1332
    %1335 = vmatprep.subr.mxu0 %v1314
    %1336 = vmatpush1.msra.mxu0 %v1313
    %1337 = vmatprep.subr.mxu0 %v1310
    %1338 = vmatpush1.msra.mxu0 %v1309
    %1339 = vmatprep.subr.mxu0 %v1306
    %1340 = vmatpush1.msra.mxu0 %v1305
    %1341 = vmatprep.subr.mxu0 %v1302
    %1342 = vmatpush1.msra.mxu0 %v1301
    %1343 = vmatprep.subr.mxu0 %v1298
    %1344 = vmatpush1.msra.mxu0 %v1297
    %1345 = vmatprep.subr.mxu0 %v1294
    %1346 = vmatpush1.msra.mxu0 %v1293
    %1347 = vmatprep.subr.mxu0 %v1290
    %1348 = vmatpush1.msra.mxu0 %v1289
    %1349 = vmatprep.subr.mxu0 %v1286
    %1350 = vmatpush1.msra.mxu0 %v1285
    %1351 = vmatprep.subr.mxu0 %v1282
    %1352 = vmatpush1.msra.mxu0 %v1281
    %1353 = vmatprep.subr.mxu0 %v1278
    %1354 = vmatpush1.msra.mxu0 %v1277
    %1355 = vmatprep.subr.mxu0 %v1274
    %1356 = vmatpush1.msra.mxu0 %v1273
    %1357 = vmatprep.subr.mxu0 %v1270
    %1358 = vmatpush1.msra.mxu0 %v1269
    %1359 = vmatprep.subr.mxu0 %v1266
    %1360 = vmatpush1.msra.mxu0 %v1265
    %1361 = vmatprep.subr.mxu0 %v1262
    %1362 = vmatpush1.msra.mxu0 %v1261
    %1363 = vmatprep.subr.mxu0 %v1258
    %1364 = vmatpush1.msra.mxu0 %v1257
    %1365 = vmatprep.subr.mxu0 %v1254
    %1366 = vmatpush1.msra.mxu0 %v1253
    %1367 = vmatprep.subr.mxu0 0.0
    %1368 = vmatpush2.msra.mxu0 0.0
    %1369 = vmatprep.subr.mxu0 0.0
    %1370 = vmatpush2.msra.mxu0 0.0
    %1371 = vmatprep.subr.mxu0 0.0
    %1372 = vmatpush2.msra.mxu0 0.0
    %1373 = vmatprep.subr.mxu0 0.0
    %1374 = vmatpush2.msra.mxu0 0.0
    %1375 = vmatprep.subr.mxu0 0.0
    %1376 = vmatpush2.msra.mxu0 0.0
    %1377 = vmatprep.subr.mxu0 0.0
    %1378 = vmatpush2.msra.mxu0 0.0
    %1379 = vmatprep.subr.mxu0 0.0
    %1380 = vmatpush2.msra.mxu0 0.0
    %1381 = vmatprep.subr.mxu0 0.0
    %1382 = vmatpush2.msra.mxu0 0.0
    %1383 = vmatprep.subr.mxu0 0.0
    %1384 = vmatpush2.msra.mxu0 0.0
    %1385 = vmatprep.subr.mxu0 0.0
    %1386 = vmatpush2.msra.mxu0 0.0
    %1387 = vmatprep.subr.mxu0 0.0
    %1388 = vmatpush2.msra.mxu0 0.0
    %1389 = vmatprep.subr.mxu0 0.0
    %1390 = vmatpush2.msra.mxu0 0.0
    %1391 = vmatprep.subr.mxu0 0.0
    %1392 = vmatpush2.msra.mxu0 0.0
    %1393 = vmatprep.subr.mxu0 0.0
    %1394 = vmatpush2.msra.mxu0 0.0
    %1395 = vmatprep.subr.mxu0 0.0
    %1396 = vmatpush2.msra.mxu0 0.0
    %1397 = vmatprep.subr.mxu0 0.0
    %1398 = vmatpush2.msra.mxu0 0.0
    %1399 = vmatprep.mubr.f32.mxu0 0.0
    %1400 = vmatmul.mubr.f32.gmra.mxu0 %v1333
    %v1401 = vpop.f32.mrf.mxu0
    %v1402 = vadd.f32 0.0, %v1401
    %v1403 = vpop.f32.mrf.mxu0
    %v1404 = vadd.f32 0.0, %v1403
    %1405 = vdwg.mxu0
    %1406 = vmatprep.subr.mxu0 %v1316
    %1407 = vmatpush1.msra.mxu0 %v1315
    %1408 = vmatprep.subr.mxu0 %v1312
    %1409 = vmatpush1.msra.mxu0 %v1311
    %1410 = vmatprep.subr.mxu0 %v1308
    %1411 = vmatpush1.msra.mxu0 %v1307
    %1412 = vmatprep.subr.mxu0 %v1304
    %1413 = vmatpush1.msra.mxu0 %v1303
    %1414 = vmatprep.subr.mxu0 %v1300
    %1415 = vmatpush1.msra.mxu0 %v1299
    %1416 = vmatprep.subr.mxu0 %v1296
    %1417 = vmatpush1.msra.mxu0 %v1295
    %1418 = vmatprep.subr.mxu0 %v1292
    %1419 = vmatpush1.msra.mxu0 %v1291
    %1420 = vmatprep.subr.mxu0 %v1288
    %1421 = vmatpush1.msra.mxu0 %v1287
    %1422 = vmatprep.subr.mxu0 %v1284
    %1423 = vmatpush1.msra.mxu0 %v1283
    %1424 = vmatprep.subr.mxu0 %v1280
    %1425 = vmatpush1.msra.mxu0 %v1279
    %1426 = vmatprep.subr.mxu0 %v1276
    %1427 = vmatpush1.msra.mxu0 %v1275
    %1428 = vmatprep.subr.mxu0 %v1272
    %1429 = vmatpush1.msra.mxu0 %v1271
    %1430 = vmatprep.subr.mxu0 %v1268
    %1431 = vmatpush1.msra.mxu0 %v1267
    %1432 = vmatprep.subr.mxu0 %v1264
    %1433 = vmatpush1.msra.mxu0 %v1263
    %1434 = vmatprep.subr.mxu0 %v1260
    %1435 = vmatpush1.msra.mxu0 %v1259
    %1436 = vmatprep.subr.mxu0 %v1256
    %1437 = vmatpush1.msra.mxu0 %v1255
    %1438 = vmatprep.subr.mxu0 0.0
    %1439 = vmatpush2.msra.mxu0 0.0
    %1440 = vmatprep.subr.mxu0 0.0
    %1441 = vmatpush2.msra.mxu0 0.0
    %1442 = vmatprep.subr.mxu0 0.0
    %1443 = vmatpush2.msra.mxu0 0.0
    %1444 = vmatprep.subr.mxu0 0.0
    %1445 = vmatpush2.msra.mxu0 0.0
    %1446 = vmatprep.subr.mxu0 0.0
    %1447 = vmatpush2.msra.mxu0 0.0
    %1448 = vmatprep.subr.mxu0 0.0
    %1449 = vmatpush2.msra.mxu0 0.0
    %1450 = vmatprep.subr.mxu0 0.0
    %1451 = vmatpush2.msra.mxu0 0.0
    %1452 = vmatprep.subr.mxu0 0.0
    %1453 = vmatpush2.msra.mxu0 0.0
    %1454 = vmatprep.subr.mxu0 0.0
    %1455 = vmatpush2.msra.mxu0 0.0
    %1456 = vmatprep.subr.mxu0 0.0
    %1457 = vmatpush2.msra.mxu0 0.0
    %1458 = vmatprep.subr.mxu0 0.0
    %1459 = vmatpush2.msra.mxu0 0.0
    %1460 = vmatprep.subr.mxu0 0.0
    %1461 = vmatpush2.msra.mxu0 0.0
    %1462 = vmatprep.subr.mxu0 0.0
    %1463 = vmatpush2.msra.mxu0 0.0
    %1464 = vmatprep.subr.mxu0 0.0
    %1465 = vmatpush2.msra.mxu0 0.0
    %1466 = vmatprep.subr.mxu0 0.0
    %1467 = vmatpush2.msra.mxu0 0.0
    %1468 = vmatprep.subr.mxu0 0.0
    %1469 = vmatpush2.msra.mxu0 0.0
    %1470 = vmatprep.mubr.f32.mxu0 0.0
    %1471 = vmatmul.mubr.f32.gmra.mxu0 %v1333
    %v1472 = vpop.f32.mrf.mxu0
    %v1473 = vadd.f32 0.0, %v1472
    %v1474 = vpop.f32.mrf.mxu0
    %v1475 = vadd.f32 0.0, %v1474
    %1476 = vdwg.mxu0
    %v1481 = vcombine.low %v1402, %v1404
    %v1482 = vcombine.low %v1473, %v1475
    %v1484 = vunpack.c.l.s4 1966171168
    %v1485 = vunpack.c.0.s8 %v1484
    %v1486 = vlaneseq
    %v1487 = vshrl.u32 %v1486, 7
    %v1488 = vsub.s32 %v1485, %v1487
    %v1489 = vrot.slane %v1481, %v1488
    %v1491 = vunpack.c.l.s4 1966171168
    %v1492 = vunpack.c.0.s8 %v1491
    %v1493 = vlaneseq
    %v1494 = vshrl.u32 %v1493, 7
    %v1495 = vsub.s32 %v1492, %v1494
    %v1496 = vrot.slane %v1482, %v1495
    %v1497 = vcombine.low %v1489, %v1496
    %v1498 = vcombine.high %v1489, %v1496
    %v1500 = vunpack.c.l.s4 1966171168
    %v1501 = vunpack.c.0.s8 %v1500
    %v1502 = vlaneseq
    %v1503 = vshrl.u32 %v1502, 7
    %v1504 = vsub.s32 %v1501, %v1503
    %v1505 = vrot.slane %v1497, %v1504
    %v1507 = vunpack.c.l.s4 1966171168
    %v1508 = vunpack.c.0.s8 %v1507
    %v1509 = vlaneseq
    %v1510 = vshrl.u32 %v1509, 7
    %v1511 = vsub.s32 %v1508, %v1510
    %v1512 = vrot.slane %v1498, %v1511
    %v1515 = vadd.f32 %v1250, %v1505
    %v1516 = vadd.f32 %v1252, %v1512
    %v1517 = vxor.u32 %v1515, 2147483648
    %v1518 = vxor.u32 %v1516, 2147483648
    %v1519 = vmul.f32 %v1517, 1.442695
    %v1520 = vpow.pop %v1519
    %v1521 = vmul.f32 %v1518, 1.442695
    %v1522 = vpow.pop %v1521
    %v1523 = vadd.f32 %v1520, 1.0
    %v1524 = vadd.f32 %v1522, 1.0
    %v1525 = vrcp.pop %v1523
    %v1526 = vmul.f32 1.0, %v1525
    %v1527 = vrcp.pop %v1524
    %v1528 = vmul.f32 1.0, %v1527
    %v1531 = vrot.slane %v1515, 3
    %v1532 = vrot.slane %v1516, 3
    %v1535 = vtanh.pop %v1531
    %v1536 = vtanh.pop %v1532
    %v1539 = vrot.slane %v1526, 1
    %v1540 = vrot.slane %v1528, 1
    %v1543 = vmul.f32 %v1539, %v1237
    %v1544 = vmul.f32 %v1540, %v1238
    %v1545 = vmul.f32 %v1526, %v1535
    %v1546 = vmul.f32 %v1528, %v1536
    %v1547 = vadd.f32 %v1543, %v1545
    %v1548 = vadd.f32 %v1544, %v1546
    %v1549 = vtanh.pop %v1547
    %v1550 = vtanh.pop %v1548
    %v1551 = vrot.slane %v1526, 2
    %v1552 = vrot.slane %v1528, 2
    %v1555 = vmul.f32 %v1551, %v1549
    %v1556 = vmul.f32 %v1552, %v1550
    %1557 = vst [vmem:[#allocation3 + $0x3] sm:$0x1] %v1555
    %1558 = vst [vmem:[#allocation3 + $0xb] sm:$0x1] %v1556
    %s1559 = scalar_lea.vmem [#allocation2], 4
    %v1560 = vld [vmem:[%s1559] ss:$8 sm:$0xf]
    %s1561 = scalar_lea.vmem [#allocation2], 36
    %v1562 = vld [vmem:[%s1561] ss:$8 sm:$0xf]
    %v1563 = vld [vmem:[#allocation7] sm:$0xff]
    %v1564 = vld [vmem:[#allocation7 + $0x8] sm:$0xff]
    %v1565 = vld [vmem:[#allocation7 + $0x10] sm:$0xff]
    %v1566 = vld [vmem:[#allocation7 + $0x18] sm:$0xff]
    %v1567 = vld [vmem:[#allocation7 + $0x20] sm:$0xff]
    %v1568 = vld [vmem:[#allocation7 + $0x28] sm:$0xff]
    %v1569 = vld [vmem:[#allocation7 + $0x30] sm:$0xff]
    %v1570 = vld [vmem:[#allocation7 + $0x38] sm:$0xff]
    %v1571 = vld [vmem:[#allocation7 + $0x40] sm:$0xff]
    %v1572 = vld [vmem:[#allocation7 + $0x48] sm:$0xff]
    %v1573 = vld [vmem:[#allocation7 + $0x50] sm:$0xff]
    %v1574 = vld [vmem:[#allocation7 + $0x58] sm:$0xff]
    %v1575 = vld [vmem:[#allocation7 + $0x60] sm:$0xff]
    %v1576 = vld [vmem:[#allocation7 + $0x68] sm:$0xff]
    %v1577 = vld [vmem:[#allocation7 + $0x70] sm:$0xff]
    %v1578 = vld [vmem:[#allocation7 + $0x78] sm:$0xff]
    %v1579 = vld [vmem:[#allocation7 + $0x80] sm:$0xff]
    %v1580 = vld [vmem:[#allocation7 + $0x88] sm:$0xff]
    %v1581 = vld [vmem:[#allocation7 + $0x90] sm:$0xff]
    %v1582 = vld [vmem:[#allocation7 + $0x98] sm:$0xff]
    %v1583 = vld [vmem:[#allocation7 + $0xa0] sm:$0xff]
    %v1584 = vld [vmem:[#allocation7 + $0xa8] sm:$0xff]
    %v1585 = vld [vmem:[#allocation7 + $0xb0] sm:$0xff]
    %v1586 = vld [vmem:[#allocation7 + $0xb8] sm:$0xff]
    %v1587 = vld [vmem:[#allocation7 + $0xc0] sm:$0xff]
    %v1588 = vld [vmem:[#allocation7 + $0xc8] sm:$0xff]
    %v1589 = vld [vmem:[#allocation7 + $0xd0] sm:$0xff]
    %v1590 = vld [vmem:[#allocation7 + $0xd8] sm:$0xff]
    %v1591 = vld [vmem:[#allocation7 + $0xe0] sm:$0xff]
    %v1592 = vld [vmem:[#allocation7 + $0xe8] sm:$0xff]
    %v1593 = vld [vmem:[#allocation7 + $0xf0] sm:$0xff]
    %v1594 = vld [vmem:[#allocation7 + $0xf8] sm:$0xff]
    %v1595 = vld [vmem:[#allocation7 + $0x100] sm:$0xff]
    %v1596 = vld [vmem:[#allocation7 + $0x108] sm:$0xff]
    %v1597 = vld [vmem:[#allocation7 + $0x110] sm:$0xff]
    %v1598 = vld [vmem:[#allocation7 + $0x118] sm:$0xff]
    %v1599 = vld [vmem:[#allocation7 + $0x120] sm:$0xff]
    %v1600 = vld [vmem:[#allocation7 + $0x128] sm:$0xff]
    %v1601 = vld [vmem:[#allocation7 + $0x130] sm:$0xff]
    %v1602 = vld [vmem:[#allocation7 + $0x138] sm:$0xff]
    %v1603 = vld [vmem:[#allocation7 + $0x140] sm:$0xff]
    %v1604 = vld [vmem:[#allocation7 + $0x148] sm:$0xff]
    %v1605 = vld [vmem:[#allocation7 + $0x150] sm:$0xff]
    %v1606 = vld [vmem:[#allocation7 + $0x158] sm:$0xff]
    %v1607 = vld [vmem:[#allocation7 + $0x160] sm:$0xff]
    %v1608 = vld [vmem:[#allocation7 + $0x168] sm:$0xff]
    %v1609 = vld [vmem:[#allocation7 + $0x170] sm:$0xff]
    %v1610 = vld [vmem:[#allocation7 + $0x178] sm:$0xff]
    %v1611 = vld [vmem:[#allocation7 + $0x180] sm:$0xff]
    %v1612 = vld [vmem:[#allocation7 + $0x188] sm:$0xff]
    %v1613 = vld [vmem:[#allocation7 + $0x190] sm:$0xff]
    %v1614 = vld [vmem:[#allocation7 + $0x198] sm:$0xff]
    %v1615 = vld [vmem:[#allocation7 + $0x1a0] sm:$0xff]
    %v1616 = vld [vmem:[#allocation7 + $0x1a8] sm:$0xff]
    %v1617 = vld [vmem:[#allocation7 + $0x1b0] sm:$0xff]
    %v1618 = vld [vmem:[#allocation7 + $0x1b8] sm:$0xff]
    %v1619 = vld [vmem:[#allocation7 + $0x1c0] sm:$0xff]
    %v1620 = vld [vmem:[#allocation7 + $0x1c8] sm:$0xff]
    %v1621 = vld [vmem:[#allocation7 + $0x1d0] sm:$0xff]
    %v1622 = vld [vmem:[#allocation7 + $0x1d8] sm:$0xff]
    %v1623 = vld [vmem:[#allocation7 + $0x1e0] sm:$0xff]
    %v1624 = vld [vmem:[#allocation7 + $0x1e8] sm:$0xff]
    %v1625 = vld [vmem:[#allocation7 + $0x1f0] sm:$0xff]
    %v1626 = vld [vmem:[#allocation7 + $0x1f8] sm:$0xff]
    %v1629 = vcombine.low %v1555, %v1556
    %v1631 = vunpack.c.l.s4 1966171168
    %v1632 = vunpack.c.0.s8 %v1631
    %v1633 = vlaneseq
    %v1634 = vshrl.u32 %v1633, 7
    %v1635 = vsub.s32 %v1632, %v1634
    %v1636 = vrot.slane %v1629, %v1635
    %v1638 = vunpack.c.l.s4 1966171168
    %v1639 = vunpack.c.0.s8 %v1638
    %v1640 = vlaneseq
    %v1641 = vshrl.u32 %v1640, 7
    %v1642 = vsub.s32 %v1639, %v1641
    %v1643 = vrot.slane %v1636, %v1642
    %1645 = vmatprep.subr.mxu0 %v1624
    %1646 = vmatpush1.msra.mxu0 %v1623
    %1647 = vmatprep.subr.mxu0 %v1620
    %1648 = vmatpush1.msra.mxu0 %v1619
    %1649 = vmatprep.subr.mxu0 %v1616
    %1650 = vmatpush1.msra.mxu0 %v1615
    %1651 = vmatprep.subr.mxu0 %v1612
    %1652 = vmatpush1.msra.mxu0 %v1611
    %1653 = vmatprep.subr.mxu0 %v1608
    %1654 = vmatpush1.msra.mxu0 %v1607
    %1655 = vmatprep.subr.mxu0 %v1604
    %1656 = vmatpush1.msra.mxu0 %v1603
    %1657 = vmatprep.subr.mxu0 %v1600
    %1658 = vmatpush1.msra.mxu0 %v1599
    %1659 = vmatprep.subr.mxu0 %v1596
    %1660 = vmatpush1.msra.mxu0 %v1595
    %1661 = vmatprep.subr.mxu0 %v1592
    %1662 = vmatpush1.msra.mxu0 %v1591
    %1663 = vmatprep.subr.mxu0 %v1588
    %1664 = vmatpush1.msra.mxu0 %v1587
    %1665 = vmatprep.subr.mxu0 %v1584
    %1666 = vmatpush1.msra.mxu0 %v1583
    %1667 = vmatprep.subr.mxu0 %v1580
    %1668 = vmatpush1.msra.mxu0 %v1579
    %1669 = vmatprep.subr.mxu0 %v1576
    %1670 = vmatpush1.msra.mxu0 %v1575
    %1671 = vmatprep.subr.mxu0 %v1572
    %1672 = vmatpush1.msra.mxu0 %v1571
    %1673 = vmatprep.subr.mxu0 %v1568
    %1674 = vmatpush1.msra.mxu0 %v1567
    %1675 = vmatprep.subr.mxu0 %v1564
    %1676 = vmatpush1.msra.mxu0 %v1563
    %1677 = vmatprep.subr.mxu0 0.0
    %1678 = vmatpush2.msra.mxu0 0.0
    %1679 = vmatprep.subr.mxu0 0.0
    %1680 = vmatpush2.msra.mxu0 0.0
    %1681 = vmatprep.subr.mxu0 0.0
    %1682 = vmatpush2.msra.mxu0 0.0
    %1683 = vmatprep.subr.mxu0 0.0
    %1684 = vmatpush2.msra.mxu0 0.0
    %1685 = vmatprep.subr.mxu0 0.0
    %1686 = vmatpush2.msra.mxu0 0.0
    %1687 = vmatprep.subr.mxu0 0.0
    %1688 = vmatpush2.msra.mxu0 0.0
    %1689 = vmatprep.subr.mxu0 0.0
    %1690 = vmatpush2.msra.mxu0 0.0
    %1691 = vmatprep.subr.mxu0 0.0
    %1692 = vmatpush2.msra.mxu0 0.0
    %1693 = vmatprep.subr.mxu0 0.0
    %1694 = vmatpush2.msra.mxu0 0.0
    %1695 = vmatprep.subr.mxu0 0.0
    %1696 = vmatpush2.msra.mxu0 0.0
    %1697 = vmatprep.subr.mxu0 0.0
    %1698 = vmatpush2.msra.mxu0 0.0
    %1699 = vmatprep.subr.mxu0 0.0
    %1700 = vmatpush2.msra.mxu0 0.0
    %1701 = vmatprep.subr.mxu0 0.0
    %1702 = vmatpush2.msra.mxu0 0.0
    %1703 = vmatprep.subr.mxu0 0.0
    %1704 = vmatpush2.msra.mxu0 0.0
    %1705 = vmatprep.subr.mxu0 0.0
    %1706 = vmatpush2.msra.mxu0 0.0
    %1707 = vmatprep.subr.mxu0 0.0
    %1708 = vmatpush2.msra.mxu0 0.0
    %1709 = vmatprep.mubr.f32.mxu0 0.0
    %1710 = vmatmul.mubr.f32.gmra.mxu0 %v1643
    %v1711 = vpop.f32.mrf.mxu0
    %v1712 = vadd.f32 0.0, %v1711
    %v1713 = vpop.f32.mrf.mxu0
    %v1714 = vadd.f32 0.0, %v1713
    %1715 = vdwg.mxu0
    %1716 = vmatprep.subr.mxu0 %v1626
    %1717 = vmatpush1.msra.mxu0 %v1625
    %1718 = vmatprep.subr.mxu0 %v1622
    %1719 = vmatpush1.msra.mxu0 %v1621
    %1720 = vmatprep.subr.mxu0 %v1618
    %1721 = vmatpush1.msra.mxu0 %v1617
    %1722 = vmatprep.subr.mxu0 %v1614
    %1723 = vmatpush1.msra.mxu0 %v1613
    %1724 = vmatprep.subr.mxu0 %v1610
    %1725 = vmatpush1.msra.mxu0 %v1609
    %1726 = vmatprep.subr.mxu0 %v1606
    %1727 = vmatpush1.msra.mxu0 %v1605
    %1728 = vmatprep.subr.mxu0 %v1602
    %1729 = vmatpush1.msra.mxu0 %v1601
    %1730 = vmatprep.subr.mxu0 %v1598
    %1731 = vmatpush1.msra.mxu0 %v1597
    %1732 = vmatprep.subr.mxu0 %v1594
    %1733 = vmatpush1.msra.mxu0 %v1593
    %1734 = vmatprep.subr.mxu0 %v1590
    %1735 = vmatpush1.msra.mxu0 %v1589
    %1736 = vmatprep.subr.mxu0 %v1586
    %1737 = vmatpush1.msra.mxu0 %v1585
    %1738 = vmatprep.subr.mxu0 %v1582
    %1739 = vmatpush1.msra.mxu0 %v1581
    %1740 = vmatprep.subr.mxu0 %v1578
    %1741 = vmatpush1.msra.mxu0 %v1577
    %1742 = vmatprep.subr.mxu0 %v1574
    %1743 = vmatpush1.msra.mxu0 %v1573
    %1744 = vmatprep.subr.mxu0 %v1570
    %1745 = vmatpush1.msra.mxu0 %v1569
    %1746 = vmatprep.subr.mxu0 %v1566
    %1747 = vmatpush1.msra.mxu0 %v1565
    %1748 = vmatprep.subr.mxu0 0.0
    %1749 = vmatpush2.msra.mxu0 0.0
    %1750 = vmatprep.subr.mxu0 0.0
    %1751 = vmatpush2.msra.mxu0 0.0
    %1752 = vmatprep.subr.mxu0 0.0
    %1753 = vmatpush2.msra.mxu0 0.0
    %1754 = vmatprep.subr.mxu0 0.0
    %1755 = vmatpush2.msra.mxu0 0.0
    %1756 = vmatprep.subr.mxu0 0.0
    %1757 = vmatpush2.msra.mxu0 0.0
    %1758 = vmatprep.subr.mxu0 0.0
    %1759 = vmatpush2.msra.mxu0 0.0
    %1760 = vmatprep.subr.mxu0 0.0
    %1761 = vmatpush2.msra.mxu0 0.0
    %1762 = vmatprep.subr.mxu0 0.0
    %1763 = vmatpush2.msra.mxu0 0.0
    %1764 = vmatprep.subr.mxu0 0.0
    %1765 = vmatpush2.msra.mxu0 0.0
    %1766 = vmatprep.subr.mxu0 0.0
    %1767 = vmatpush2.msra.mxu0 0.0
    %1768 = vmatprep.subr.mxu0 0.0
    %1769 = vmatpush2.msra.mxu0 0.0
    %1770 = vmatprep.subr.mxu0 0.0
    %1771 = vmatpush2.msra.mxu0 0.0
    %1772 = vmatprep.subr.mxu0 0.0
    %1773 = vmatpush2.msra.mxu0 0.0
    %1774 = vmatprep.subr.mxu0 0.0
    %1775 = vmatpush2.msra.mxu0 0.0
    %1776 = vmatprep.subr.mxu0 0.0
    %1777 = vmatpush2.msra.mxu0 0.0
    %1778 = vmatprep.subr.mxu0 0.0
    %1779 = vmatpush2.msra.mxu0 0.0
    %1780 = vmatprep.mubr.f32.mxu0 0.0
    %1781 = vmatmul.mubr.f32.gmra.mxu0 %v1643
    %v1782 = vpop.f32.mrf.mxu0
    %v1783 = vadd.f32 0.0, %v1782
    %v1784 = vpop.f32.mrf.mxu0
    %v1785 = vadd.f32 0.0, %v1784
    %1786 = vdwg.mxu0
    %v1791 = vcombine.low %v1712, %v1714
    %v1792 = vcombine.low %v1783, %v1785
    %v1794 = vunpack.c.l.s4 1966171168
    %v1795 = vunpack.c.0.s8 %v1794
    %v1796 = vlaneseq
    %v1797 = vshrl.u32 %v1796, 7
    %v1798 = vsub.s32 %v1795, %v1797
    %v1799 = vrot.slane %v1791, %v1798
    %v1801 = vunpack.c.l.s4 1966171168
    %v1802 = vunpack.c.0.s8 %v1801
    %v1803 = vlaneseq
    %v1804 = vshrl.u32 %v1803, 7
    %v1805 = vsub.s32 %v1802, %v1804
    %v1806 = vrot.slane %v1792, %v1805
    %v1807 = vcombine.low %v1799, %v1806
    %v1808 = vcombine.high %v1799, %v1806
    %v1810 = vunpack.c.l.s4 1966171168
    %v1811 = vunpack.c.0.s8 %v1810
    %v1812 = vlaneseq
    %v1813 = vshrl.u32 %v1812, 7
    %v1814 = vsub.s32 %v1811, %v1813
    %v1815 = vrot.slane %v1807, %v1814
    %v1817 = vunpack.c.l.s4 1966171168
    %v1818 = vunpack.c.0.s8 %v1817
    %v1819 = vlaneseq
    %v1820 = vshrl.u32 %v1819, 7
    %v1821 = vsub.s32 %v1818, %v1820
    %v1822 = vrot.slane %v1808, %v1821
    %v1825 = vadd.f32 %v1560, %v1815
    %v1826 = vadd.f32 %v1562, %v1822
    %v1827 = vxor.u32 %v1825, 2147483648
    %v1828 = vxor.u32 %v1826, 2147483648
    %v1829 = vmul.f32 %v1827, 1.442695
    %v1830 = vpow.pop %v1829
    %v1831 = vmul.f32 %v1828, 1.442695
    %v1832 = vpow.pop %v1831
    %v1833 = vadd.f32 %v1830, 1.0
    %v1834 = vadd.f32 %v1832, 1.0
    %v1835 = vrcp.pop %v1833
    %v1836 = vmul.f32 1.0, %v1835
    %v1837 = vrcp.pop %v1834
    %v1838 = vmul.f32 1.0, %v1837
    %v1841 = vrot.slane %v1825, 3
    %v1842 = vrot.slane %v1826, 3
    %v1845 = vtanh.pop %v1841
    %v1846 = vtanh.pop %v1842
    %v1849 = vrot.slane %v1836, 1
    %v1850 = vrot.slane %v1838, 1
    %v1853 = vmul.f32 %v1849, %v1547
    %v1854 = vmul.f32 %v1850, %v1548
    %v1855 = vmul.f32 %v1836, %v1845
    %v1856 = vmul.f32 %v1838, %v1846
    %v1857 = vadd.f32 %v1853, %v1855
    %v1858 = vadd.f32 %v1854, %v1856
    %v1859 = vtanh.pop %v1857
    %v1860 = vtanh.pop %v1858
    %v1861 = vrot.slane %v1836, 2
    %v1862 = vrot.slane %v1838, 2
    %v1865 = vmul.f32 %v1861, %v1859
    %v1866 = vmul.f32 %v1862, %v1860
    %1867 = vst [vmem:[#allocation3 + $0x4] sm:$0x1] %v1865
    %1868 = vst [vmem:[#allocation3 + $0xc] sm:$0x1] %v1866
    %s1869 = scalar_lea.vmem [#allocation2], 5
    %v1870 = vld [vmem:[%s1869] ss:$8 sm:$0xf]
    %s1871 = scalar_lea.vmem [#allocation2], 37
    %v1872 = vld [vmem:[%s1871] ss:$8 sm:$0xf]
    %v1873 = vld [vmem:[#allocation7] sm:$0xff]
    %v1874 = vld [vmem:[#allocation7 + $0x8] sm:$0xff]
    %v1875 = vld [vmem:[#allocation7 + $0x10] sm:$0xff]
    %v1876 = vld [vmem:[#allocation7 + $0x18] sm:$0xff]
    %v1877 = vld [vmem:[#allocation7 + $0x20] sm:$0xff]
    %v1878 = vld [vmem:[#allocation7 + $0x28] sm:$0xff]
    %v1879 = vld [vmem:[#allocation7 + $0x30] sm:$0xff]
    %v1880 = vld [vmem:[#allocation7 + $0x38] sm:$0xff]
    %v1881 = vld [vmem:[#allocation7 + $0x40] sm:$0xff]
    %v1882 = vld [vmem:[#allocation7 + $0x48] sm:$0xff]
    %v1883 = vld [vmem:[#allocation7 + $0x50] sm:$0xff]
    %v1884 = vld [vmem:[#allocation7 + $0x58] sm:$0xff]
    %v1885 = vld [vmem:[#allocation7 + $0x60] sm:$0xff]
    %v1886 = vld [vmem:[#allocation7 + $0x68] sm:$0xff]
    %v1887 = vld [vmem:[#allocation7 + $0x70] sm:$0xff]
    %v1888 = vld [vmem:[#allocation7 + $0x78] sm:$0xff]
    %v1889 = vld [vmem:[#allocation7 + $0x80] sm:$0xff]
    %v1890 = vld [vmem:[#allocation7 + $0x88] sm:$0xff]
    %v1891 = vld [vmem:[#allocation7 + $0x90] sm:$0xff]
    %v1892 = vld [vmem:[#allocation7 + $0x98] sm:$0xff]
    %v1893 = vld [vmem:[#allocation7 + $0xa0] sm:$0xff]
    %v1894 = vld [vmem:[#allocation7 + $0xa8] sm:$0xff]
    %v1895 = vld [vmem:[#allocation7 + $0xb0] sm:$0xff]
    %v1896 = vld [vmem:[#allocation7 + $0xb8] sm:$0xff]
    %v1897 = vld [vmem:[#allocation7 + $0xc0] sm:$0xff]
    %v1898 = vld [vmem:[#allocation7 + $0xc8] sm:$0xff]
    %v1899 = vld [vmem:[#allocation7 + $0xd0] sm:$0xff]
    %v1900 = vld [vmem:[#allocation7 + $0xd8] sm:$0xff]
    %v1901 = vld [vmem:[#allocation7 + $0xe0] sm:$0xff]
    %v1902 = vld [vmem:[#allocation7 + $0xe8] sm:$0xff]
    %v1903 = vld [vmem:[#allocation7 + $0xf0] sm:$0xff]
    %v1904 = vld [vmem:[#allocation7 + $0xf8] sm:$0xff]
    %v1905 = vld [vmem:[#allocation7 + $0x100] sm:$0xff]
    %v1906 = vld [vmem:[#allocation7 + $0x108] sm:$0xff]
    %v1907 = vld [vmem:[#allocation7 + $0x110] sm:$0xff]
    %v1908 = vld [vmem:[#allocation7 + $0x118] sm:$0xff]
    %v1909 = vld [vmem:[#allocation7 + $0x120] sm:$0xff]
    %v1910 = vld [vmem:[#allocation7 + $0x128] sm:$0xff]
    %v1911 = vld [vmem:[#allocation7 + $0x130] sm:$0xff]
    %v1912 = vld [vmem:[#allocation7 + $0x138] sm:$0xff]
    %v1913 = vld [vmem:[#allocation7 + $0x140] sm:$0xff]
    %v1914 = vld [vmem:[#allocation7 + $0x148] sm:$0xff]
    %v1915 = vld [vmem:[#allocation7 + $0x150] sm:$0xff]
    %v1916 = vld [vmem:[#allocation7 + $0x158] sm:$0xff]
    %v1917 = vld [vmem:[#allocation7 + $0x160] sm:$0xff]
    %v1918 = vld [vmem:[#allocation7 + $0x168] sm:$0xff]
    %v1919 = vld [vmem:[#allocation7 + $0x170] sm:$0xff]
    %v1920 = vld [vmem:[#allocation7 + $0x178] sm:$0xff]
    %v1921 = vld [vmem:[#allocation7 + $0x180] sm:$0xff]
    %v1922 = vld [vmem:[#allocation7 + $0x188] sm:$0xff]
    %v1923 = vld [vmem:[#allocation7 + $0x190] sm:$0xff]
    %v1924 = vld [vmem:[#allocation7 + $0x198] sm:$0xff]
    %v1925 = vld [vmem:[#allocation7 + $0x1a0] sm:$0xff]
    %v1926 = vld [vmem:[#allocation7 + $0x1a8] sm:$0xff]
    %v1927 = vld [vmem:[#allocation7 + $0x1b0] sm:$0xff]
    %v1928 = vld [vmem:[#allocation7 + $0x1b8] sm:$0xff]
    %v1929 = vld [vmem:[#allocation7 + $0x1c0] sm:$0xff]
    %v1930 = vld [vmem:[#allocation7 + $0x1c8] sm:$0xff]
    %v1931 = vld [vmem:[#allocation7 + $0x1d0] sm:$0xff]
    %v1932 = vld [vmem:[#allocation7 + $0x1d8] sm:$0xff]
    %v1933 = vld [vmem:[#allocation7 + $0x1e0] sm:$0xff]
    %v1934 = vld [vmem:[#allocation7 + $0x1e8] sm:$0xff]
    %v1935 = vld [vmem:[#allocation7 + $0x1f0] sm:$0xff]
    %v1936 = vld [vmem:[#allocation7 + $0x1f8] sm:$0xff]
    %v1939 = vcombine.low %v1865, %v1866
    %v1941 = vunpack.c.l.s4 1966171168
    %v1942 = vunpack.c.0.s8 %v1941
    %v1943 = vlaneseq
    %v1944 = vshrl.u32 %v1943, 7
    %v1945 = vsub.s32 %v1942, %v1944
    %v1946 = vrot.slane %v1939, %v1945
    %v1948 = vunpack.c.l.s4 1966171168
    %v1949 = vunpack.c.0.s8 %v1948
    %v1950 = vlaneseq
    %v1951 = vshrl.u32 %v1950, 7
    %v1952 = vsub.s32 %v1949, %v1951
    %v1953 = vrot.slane %v1946, %v1952
    %1955 = vmatprep.subr.mxu0 %v1934
    %1956 = vmatpush1.msra.mxu0 %v1933
    %1957 = vmatprep.subr.mxu0 %v1930
    %1958 = vmatpush1.msra.mxu0 %v1929
    %1959 = vmatprep.subr.mxu0 %v1926
    %1960 = vmatpush1.msra.mxu0 %v1925
    %1961 = vmatprep.subr.mxu0 %v1922
    %1962 = vmatpush1.msra.mxu0 %v1921
    %1963 = vmatprep.subr.mxu0 %v1918
    %1964 = vmatpush1.msra.mxu0 %v1917
    %1965 = vmatprep.subr.mxu0 %v1914
    %1966 = vmatpush1.msra.mxu0 %v1913
    %1967 = vmatprep.subr.mxu0 %v1910
    %1968 = vmatpush1.msra.mxu0 %v1909
    %1969 = vmatprep.subr.mxu0 %v1906
    %1970 = vmatpush1.msra.mxu0 %v1905
    %1971 = vmatprep.subr.mxu0 %v1902
    %1972 = vmatpush1.msra.mxu0 %v1901
    %1973 = vmatprep.subr.mxu0 %v1898
    %1974 = vmatpush1.msra.mxu0 %v1897
    %1975 = vmatprep.subr.mxu0 %v1894
    %1976 = vmatpush1.msra.mxu0 %v1893
    %1977 = vmatprep.subr.mxu0 %v1890
    %1978 = vmatpush1.msra.mxu0 %v1889
    %1979 = vmatprep.subr.mxu0 %v1886
    %1980 = vmatpush1.msra.mxu0 %v1885
    %1981 = vmatprep.subr.mxu0 %v1882
    %1982 = vmatpush1.msra.mxu0 %v1881
    %1983 = vmatprep.subr.mxu0 %v1878
    %1984 = vmatpush1.msra.mxu0 %v1877
    %1985 = vmatprep.subr.mxu0 %v1874
    %1986 = vmatpush1.msra.mxu0 %v1873
    %1987 = vmatprep.subr.mxu0 0.0
    %1988 = vmatpush2.msra.mxu0 0.0
    %1989 = vmatprep.subr.mxu0 0.0
    %1990 = vmatpush2.msra.mxu0 0.0
    %1991 = vmatprep.subr.mxu0 0.0
    %1992 = vmatpush2.msra.mxu0 0.0
    %1993 = vmatprep.subr.mxu0 0.0
    %1994 = vmatpush2.msra.mxu0 0.0
    %1995 = vmatprep.subr.mxu0 0.0
    %1996 = vmatpush2.msra.mxu0 0.0
    %1997 = vmatprep.subr.mxu0 0.0
    %1998 = vmatpush2.msra.mxu0 0.0
    %1999 = vmatprep.subr.mxu0 0.0
    %2000 = vmatpush2.msra.mxu0 0.0
    %2001 = vmatprep.subr.mxu0 0.0
    %2002 = vmatpush2.msra.mxu0 0.0
    %2003 = vmatprep.subr.mxu0 0.0
    %2004 = vmatpush2.msra.mxu0 0.0
    %2005 = vmatprep.subr.mxu0 0.0
    %2006 = vmatpush2.msra.mxu0 0.0
    %2007 = vmatprep.subr.mxu0 0.0
    %2008 = vmatpush2.msra.mxu0 0.0
    %2009 = vmatprep.subr.mxu0 0.0
    %2010 = vmatpush2.msra.mxu0 0.0
    %2011 = vmatprep.subr.mxu0 0.0
    %2012 = vmatpush2.msra.mxu0 0.0
    %2013 = vmatprep.subr.mxu0 0.0
    %2014 = vmatpush2.msra.mxu0 0.0
    %2015 = vmatprep.subr.mxu0 0.0
    %2016 = vmatpush2.msra.mxu0 0.0
    %2017 = vmatprep.subr.mxu0 0.0
    %2018 = vmatpush2.msra.mxu0 0.0
    %2019 = vmatprep.mubr.f32.mxu0 0.0
    %2020 = vmatmul.mubr.f32.gmra.mxu0 %v1953
    %v2021 = vpop.f32.mrf.mxu0
    %v2022 = vadd.f32 0.0, %v2021
    %v2023 = vpop.f32.mrf.mxu0
    %v2024 = vadd.f32 0.0, %v2023
    %2025 = vdwg.mxu0
    %2026 = vmatprep.subr.mxu0 %v1936
    %2027 = vmatpush1.msra.mxu0 %v1935
    %2028 = vmatprep.subr.mxu0 %v1932
    %2029 = vmatpush1.msra.mxu0 %v1931
    %2030 = vmatprep.subr.mxu0 %v1928
    %2031 = vmatpush1.msra.mxu0 %v1927
    %2032 = vmatprep.subr.mxu0 %v1924
    %2033 = vmatpush1.msra.mxu0 %v1923
    %2034 = vmatprep.subr.mxu0 %v1920
    %2035 = vmatpush1.msra.mxu0 %v1919
    %2036 = vmatprep.subr.mxu0 %v1916
    %2037 = vmatpush1.msra.mxu0 %v1915
    %2038 = vmatprep.subr.mxu0 %v1912
    %2039 = vmatpush1.msra.mxu0 %v1911
    %2040 = vmatprep.subr.mxu0 %v1908
    %2041 = vmatpush1.msra.mxu0 %v1907
    %2042 = vmatprep.subr.mxu0 %v1904
    %2043 = vmatpush1.msra.mxu0 %v1903
    %2044 = vmatprep.subr.mxu0 %v1900
    %2045 = vmatpush1.msra.mxu0 %v1899
    %2046 = vmatprep.subr.mxu0 %v1896
    %2047 = vmatpush1.msra.mxu0 %v1895
    %2048 = vmatprep.subr.mxu0 %v1892
    %2049 = vmatpush1.msra.mxu0 %v1891
    %2050 = vmatprep.subr.mxu0 %v1888
    %2051 = vmatpush1.msra.mxu0 %v1887
    %2052 = vmatprep.subr.mxu0 %v1884
    %2053 = vmatpush1.msra.mxu0 %v1883
    %2054 = vmatprep.subr.mxu0 %v1880
    %2055 = vmatpush1.msra.mxu0 %v1879
    %2056 = vmatprep.subr.mxu0 %v1876
    %2057 = vmatpush1.msra.mxu0 %v1875
    %2058 = vmatprep.subr.mxu0 0.0
    %2059 = vmatpush2.msra.mxu0 0.0
    %2060 = vmatprep.subr.mxu0 0.0
    %2061 = vmatpush2.msra.mxu0 0.0
    %2062 = vmatprep.subr.mxu0 0.0
    %2063 = vmatpush2.msra.mxu0 0.0
    %2064 = vmatprep.subr.mxu0 0.0
    %2065 = vmatpush2.msra.mxu0 0.0
    %2066 = vmatprep.subr.mxu0 0.0
    %2067 = vmatpush2.msra.mxu0 0.0
    %2068 = vmatprep.subr.mxu0 0.0
    %2069 = vmatpush2.msra.mxu0 0.0
    %2070 = vmatprep.subr.mxu0 0.0
    %2071 = vmatpush2.msra.mxu0 0.0
    %2072 = vmatprep.subr.mxu0 0.0
    %2073 = vmatpush2.msra.mxu0 0.0
    %2074 = vmatprep.subr.mxu0 0.0
    %2075 = vmatpush2.msra.mxu0 0.0
    %2076 = vmatprep.subr.mxu0 0.0
    %2077 = vmatpush2.msra.mxu0 0.0
    %2078 = vmatprep.subr.mxu0 0.0
    %2079 = vmatpush2.msra.mxu0 0.0
    %2080 = vmatprep.subr.mxu0 0.0
    %2081 = vmatpush2.msra.mxu0 0.0
    %2082 = vmatprep.subr.mxu0 0.0
    %2083 = vmatpush2.msra.mxu0 0.0
    %2084 = vmatprep.subr.mxu0 0.0
    %2085 = vmatpush2.msra.mxu0 0.0
    %2086 = vmatprep.subr.mxu0 0.0
    %2087 = vmatpush2.msra.mxu0 0.0
    %2088 = vmatprep.subr.mxu0 0.0
    %2089 = vmatpush2.msra.mxu0 0.0
    %2090 = vmatprep.mubr.f32.mxu0 0.0
    %2091 = vmatmul.mubr.f32.gmra.mxu0 %v1953
    %v2092 = vpop.f32.mrf.mxu0
    %v2093 = vadd.f32 0.0, %v2092
    %v2094 = vpop.f32.mrf.mxu0
    %v2095 = vadd.f32 0.0, %v2094
    %2096 = vdwg.mxu0
    %v2101 = vcombine.low %v2022, %v2024
    %v2102 = vcombine.low %v2093, %v2095
    %v2104 = vunpack.c.l.s4 1966171168
    %v2105 = vunpack.c.0.s8 %v2104
    %v2106 = vlaneseq
    %v2107 = vshrl.u32 %v2106, 7
    %v2108 = vsub.s32 %v2105, %v2107
    %v2109 = vrot.slane %v2101, %v2108
    %v2111 = vunpack.c.l.s4 1966171168
    %v2112 = vunpack.c.0.s8 %v2111
    %v2113 = vlaneseq
    %v2114 = vshrl.u32 %v2113, 7
    %v2115 = vsub.s32 %v2112, %v2114
    %v2116 = vrot.slane %v2102, %v2115
    %v2117 = vcombine.low %v2109, %v2116
    %v2118 = vcombine.high %v2109, %v2116
    %v2120 = vunpack.c.l.s4 1966171168
    %v2121 = vunpack.c.0.s8 %v2120
    %v2122 = vlaneseq
    %v2123 = vshrl.u32 %v2122, 7
    %v2124 = vsub.s32 %v2121, %v2123
    %v2125 = vrot.slane %v2117, %v2124
    %v2127 = vunpack.c.l.s4 1966171168
    %v2128 = vunpack.c.0.s8 %v2127
    %v2129 = vlaneseq
    %v2130 = vshrl.u32 %v2129, 7
    %v2131 = vsub.s32 %v2128, %v2130
    %v2132 = vrot.slane %v2118, %v2131
    %v2135 = vadd.f32 %v1870, %v2125
    %v2136 = vadd.f32 %v1872, %v2132
    %v2137 = vxor.u32 %v2135, 2147483648
    %v2138 = vxor.u32 %v2136, 2147483648
    %v2139 = vmul.f32 %v2137, 1.442695
    %v2140 = vpow.pop %v2139
    %v2141 = vmul.f32 %v2138, 1.442695
    %v2142 = vpow.pop %v2141
    %v2143 = vadd.f32 %v2140, 1.0
    %v2144 = vadd.f32 %v2142, 1.0
    %v2145 = vrcp.pop %v2143
    %v2146 = vmul.f32 1.0, %v2145
    %v2147 = vrcp.pop %v2144
    %v2148 = vmul.f32 1.0, %v2147
    %v2151 = vrot.slane %v2135, 3
    %v2152 = vrot.slane %v2136, 3
    %v2155 = vtanh.pop %v2151
    %v2156 = vtanh.pop %v2152
    %v2159 = vrot.slane %v2146, 1
    %v2160 = vrot.slane %v2148, 1
    %v2163 = vmul.f32 %v2159, %v1857
    %v2164 = vmul.f32 %v2160, %v1858
    %v2165 = vmul.f32 %v2146, %v2155
    %v2166 = vmul.f32 %v2148, %v2156
    %v2167 = vadd.f32 %v2163, %v2165
    %v2168 = vadd.f32 %v2164, %v2166
    %v2169 = vtanh.pop %v2167
    %v2170 = vtanh.pop %v2168
    %v2171 = vrot.slane %v2146, 2
    %v2172 = vrot.slane %v2148, 2
    %v2175 = vmul.f32 %v2171, %v2169
    %v2176 = vmul.f32 %v2172, %v2170
    %2177 = vst [vmem:[#allocation3 + $0x5] sm:$0x1] %v2175
    %2178 = vst [vmem:[#allocation3 + $0xd] sm:$0x1] %v2176
    %s2179 = scalar_lea.vmem [#allocation2], 6
    %v2180 = vld [vmem:[%s2179] ss:$8 sm:$0xf]
    %s2181 = scalar_lea.vmem [#allocation2], 38
    %v2182 = vld [vmem:[%s2181] ss:$8 sm:$0xf]
    %v2183 = vld [vmem:[#allocation7] sm:$0xff]
    %v2184 = vld [vmem:[#allocation7 + $0x8] sm:$0xff]
    %v2185 = vld [vmem:[#allocation7 + $0x10] sm:$0xff]
    %v2186 = vld [vmem:[#allocation7 + $0x18] sm:$0xff]
    %v2187 = vld [vmem:[#allocation7 + $0x20] sm:$0xff]
    %v2188 = vld [vmem:[#allocation7 + $0x28] sm:$0xff]
    %v2189 = vld [vmem:[#allocation7 + $0x30] sm:$0xff]
    %v2190 = vld [vmem:[#allocation7 + $0x38] sm:$0xff]
    %v2191 = vld [vmem:[#allocation7 + $0x40] sm:$0xff]
    %v2192 = vld [vmem:[#allocation7 + $0x48] sm:$0xff]
    %v2193 = vld [vmem:[#allocation7 + $0x50] sm:$0xff]
    %v2194 = vld [vmem:[#allocation7 + $0x58] sm:$0xff]
    %v2195 = vld [vmem:[#allocation7 + $0x60] sm:$0xff]
    %v2196 = vld [vmem:[#allocation7 + $0x68] sm:$0xff]
    %v2197 = vld [vmem:[#allocation7 + $0x70] sm:$0xff]
    %v2198 = vld [vmem:[#allocation7 + $0x78] sm:$0xff]
    %v2199 = vld [vmem:[#allocation7 + $0x80] sm:$0xff]
    %v2200 = vld [vmem:[#allocation7 + $0x88] sm:$0xff]
    %v2201 = vld [vmem:[#allocation7 + $0x90] sm:$0xff]
    %v2202 = vld [vmem:[#allocation7 + $0x98] sm:$0xff]
    %v2203 = vld [vmem:[#allocation7 + $0xa0] sm:$0xff]
    %v2204 = vld [vmem:[#allocation7 + $0xa8] sm:$0xff]
    %v2205 = vld [vmem:[#allocation7 + $0xb0] sm:$0xff]
    %v2206 = vld [vmem:[#allocation7 + $0xb8] sm:$0xff]
    %v2207 = vld [vmem:[#allocation7 + $0xc0] sm:$0xff]
    %v2208 = vld [vmem:[#allocation7 + $0xc8] sm:$0xff]
    %v2209 = vld [vmem:[#allocation7 + $0xd0] sm:$0xff]
    %v2210 = vld [vmem:[#allocation7 + $0xd8] sm:$0xff]
    %v2211 = vld [vmem:[#allocation7 + $0xe0] sm:$0xff]
    %v2212 = vld [vmem:[#allocation7 + $0xe8] sm:$0xff]
    %v2213 = vld [vmem:[#allocation7 + $0xf0] sm:$0xff]
    %v2214 = vld [vmem:[#allocation7 + $0xf8] sm:$0xff]
    %v2215 = vld [vmem:[#allocation7 + $0x100] sm:$0xff]
    %v2216 = vld [vmem:[#allocation7 + $0x108] sm:$0xff]
    %v2217 = vld [vmem:[#allocation7 + $0x110] sm:$0xff]
    %v2218 = vld [vmem:[#allocation7 + $0x118] sm:$0xff]
    %v2219 = vld [vmem:[#allocation7 + $0x120] sm:$0xff]
    %v2220 = vld [vmem:[#allocation7 + $0x128] sm:$0xff]
    %v2221 = vld [vmem:[#allocation7 + $0x130] sm:$0xff]
    %v2222 = vld [vmem:[#allocation7 + $0x138] sm:$0xff]
    %v2223 = vld [vmem:[#allocation7 + $0x140] sm:$0xff]
    %v2224 = vld [vmem:[#allocation7 + $0x148] sm:$0xff]
    %v2225 = vld [vmem:[#allocation7 + $0x150] sm:$0xff]
    %v2226 = vld [vmem:[#allocation7 + $0x158] sm:$0xff]
    %v2227 = vld [vmem:[#allocation7 + $0x160] sm:$0xff]
    %v2228 = vld [vmem:[#allocation7 + $0x168] sm:$0xff]
    %v2229 = vld [vmem:[#allocation7 + $0x170] sm:$0xff]
    %v2230 = vld [vmem:[#allocation7 + $0x178] sm:$0xff]
    %v2231 = vld [vmem:[#allocation7 + $0x180] sm:$0xff]
    %v2232 = vld [vmem:[#allocation7 + $0x188] sm:$0xff]
    %v2233 = vld [vmem:[#allocation7 + $0x190] sm:$0xff]
    %v2234 = vld [vmem:[#allocation7 + $0x198] sm:$0xff]
    %v2235 = vld [vmem:[#allocation7 + $0x1a0] sm:$0xff]
    %v2236 = vld [vmem:[#allocation7 + $0x1a8] sm:$0xff]
    %v2237 = vld [vmem:[#allocation7 + $0x1b0] sm:$0xff]
    %v2238 = vld [vmem:[#allocation7 + $0x1b8] sm:$0xff]
    %v2239 = vld [vmem:[#allocation7 + $0x1c0] sm:$0xff]
    %v2240 = vld [vmem:[#allocation7 + $0x1c8] sm:$0xff]
    %v2241 = vld [vmem:[#allocation7 + $0x1d0] sm:$0xff]
    %v2242 = vld [vmem:[#allocation7 + $0x1d8] sm:$0xff]
    %v2243 = vld [vmem:[#allocation7 + $0x1e0] sm:$0xff]
    %v2244 = vld [vmem:[#allocation7 + $0x1e8] sm:$0xff]
    %v2245 = vld [vmem:[#allocation7 + $0x1f0] sm:$0xff]
    %v2246 = vld [vmem:[#allocation7 + $0x1f8] sm:$0xff]
    %v2249 = vcombine.low %v2175, %v2176
    %v2251 = vunpack.c.l.s4 1966171168
    %v2252 = vunpack.c.0.s8 %v2251
    %v2253 = vlaneseq
    %v2254 = vshrl.u32 %v2253, 7
    %v2255 = vsub.s32 %v2252, %v2254
    %v2256 = vrot.slane %v2249, %v2255
    %v2258 = vunpack.c.l.s4 1966171168
    %v2259 = vunpack.c.0.s8 %v2258
    %v2260 = vlaneseq
    %v2261 = vshrl.u32 %v2260, 7
    %v2262 = vsub.s32 %v2259, %v2261
    %v2263 = vrot.slane %v2256, %v2262
    %2265 = vmatprep.subr.mxu0 %v2244
    %2266 = vmatpush1.msra.mxu0 %v2243
    %2267 = vmatprep.subr.mxu0 %v2240
    %2268 = vmatpush1.msra.mxu0 %v2239
    %2269 = vmatprep.subr.mxu0 %v2236
    %2270 = vmatpush1.msra.mxu0 %v2235
    %2271 = vmatprep.subr.mxu0 %v2232
    %2272 = vmatpush1.msra.mxu0 %v2231
    %2273 = vmatprep.subr.mxu0 %v2228
    %2274 = vmatpush1.msra.mxu0 %v2227
    %2275 = vmatprep.subr.mxu0 %v2224
    %2276 = vmatpush1.msra.mxu0 %v2223
    %2277 = vmatprep.subr.mxu0 %v2220
    %2278 = vmatpush1.msra.mxu0 %v2219
    %2279 = vmatprep.subr.mxu0 %v2216
    %2280 = vmatpush1.msra.mxu0 %v2215
    %2281 = vmatprep.subr.mxu0 %v2212
    %2282 = vmatpush1.msra.mxu0 %v2211
    %2283 = vmatprep.subr.mxu0 %v2208
    %2284 = vmatpush1.msra.mxu0 %v2207
    %2285 = vmatprep.subr.mxu0 %v2204
    %2286 = vmatpush1.msra.mxu0 %v2203
    %2287 = vmatprep.subr.mxu0 %v2200
    %2288 = vmatpush1.msra.mxu0 %v2199
    %2289 = vmatprep.subr.mxu0 %v2196
    %2290 = vmatpush1.msra.mxu0 %v2195
    %2291 = vmatprep.subr.mxu0 %v2192
    %2292 = vmatpush1.msra.mxu0 %v2191
    %2293 = vmatprep.subr.mxu0 %v2188
    %2294 = vmatpush1.msra.mxu0 %v2187
    %2295 = vmatprep.subr.mxu0 %v2184
    %2296 = vmatpush1.msra.mxu0 %v2183
    %2297 = vmatprep.subr.mxu0 0.0
    %2298 = vmatpush2.msra.mxu0 0.0
    %2299 = vmatprep.subr.mxu0 0.0
    %2300 = vmatpush2.msra.mxu0 0.0
    %2301 = vmatprep.subr.mxu0 0.0
    %2302 = vmatpush2.msra.mxu0 0.0
    %2303 = vmatprep.subr.mxu0 0.0
    %2304 = vmatpush2.msra.mxu0 0.0
    %2305 = vmatprep.subr.mxu0 0.0
    %2306 = vmatpush2.msra.mxu0 0.0
    %2307 = vmatprep.subr.mxu0 0.0
    %2308 = vmatpush2.msra.mxu0 0.0
    %2309 = vmatprep.subr.mxu0 0.0
    %2310 = vmatpush2.msra.mxu0 0.0
    %2311 = vmatprep.subr.mxu0 0.0
    %2312 = vmatpush2.msra.mxu0 0.0
    %2313 = vmatprep.subr.mxu0 0.0
    %2314 = vmatpush2.msra.mxu0 0.0
    %2315 = vmatprep.subr.mxu0 0.0
    %2316 = vmatpush2.msra.mxu0 0.0
    %2317 = vmatprep.subr.mxu0 0.0
    %2318 = vmatpush2.msra.mxu0 0.0
    %2319 = vmatprep.subr.mxu0 0.0
    %2320 = vmatpush2.msra.mxu0 0.0
    %2321 = vmatprep.subr.mxu0 0.0
    %2322 = vmatpush2.msra.mxu0 0.0
    %2323 = vmatprep.subr.mxu0 0.0
    %2324 = vmatpush2.msra.mxu0 0.0
    %2325 = vmatprep.subr.mxu0 0.0
    %2326 = vmatpush2.msra.mxu0 0.0
    %2327 = vmatprep.subr.mxu0 0.0
    %2328 = vmatpush2.msra.mxu0 0.0
    %2329 = vmatprep.mubr.f32.mxu0 0.0
    %2330 = vmatmul.mubr.f32.gmra.mxu0 %v2263
    %v2331 = vpop.f32.mrf.mxu0
    %v2332 = vadd.f32 0.0, %v2331
    %v2333 = vpop.f32.mrf.mxu0
    %v2334 = vadd.f32 0.0, %v2333
    %2335 = vdwg.mxu0
    %2336 = vmatprep.subr.mxu0 %v2246
    %2337 = vmatpush1.msra.mxu0 %v2245
    %2338 = vmatprep.subr.mxu0 %v2242
    %2339 = vmatpush1.msra.mxu0 %v2241
    %2340 = vmatprep.subr.mxu0 %v2238
    %2341 = vmatpush1.msra.mxu0 %v2237
    %2342 = vmatprep.subr.mxu0 %v2234
    %2343 = vmatpush1.msra.mxu0 %v2233
    %2344 = vmatprep.subr.mxu0 %v2230
    %2345 = vmatpush1.msra.mxu0 %v2229
    %2346 = vmatprep.subr.mxu0 %v2226
    %2347 = vmatpush1.msra.mxu0 %v2225
    %2348 = vmatprep.subr.mxu0 %v2222
    %2349 = vmatpush1.msra.mxu0 %v2221
    %2350 = vmatprep.subr.mxu0 %v2218
    %2351 = vmatpush1.msra.mxu0 %v2217
    %2352 = vmatprep.subr.mxu0 %v2214
    %2353 = vmatpush1.msra.mxu0 %v2213
    %2354 = vmatprep.subr.mxu0 %v2210
    %2355 = vmatpush1.msra.mxu0 %v2209
    %2356 = vmatprep.subr.mxu0 %v2206
    %2357 = vmatpush1.msra.mxu0 %v2205
    %2358 = vmatprep.subr.mxu0 %v2202
    %2359 = vmatpush1.msra.mxu0 %v2201
    %2360 = vmatprep.subr.mxu0 %v2198
    %2361 = vmatpush1.msra.mxu0 %v2197
    %2362 = vmatprep.subr.mxu0 %v2194
    %2363 = vmatpush1.msra.mxu0 %v2193
    %2364 = vmatprep.subr.mxu0 %v2190
    %2365 = vmatpush1.msra.mxu0 %v2189
    %2366 = vmatprep.subr.mxu0 %v2186
    %2367 = vmatpush1.msra.mxu0 %v2185
    %2368 = vmatprep.subr.mxu0 0.0
    %2369 = vmatpush2.msra.mxu0 0.0
    %2370 = vmatprep.subr.mxu0 0.0
    %2371 = vmatpush2.msra.mxu0 0.0
    %2372 = vmatprep.subr.mxu0 0.0
    %2373 = vmatpush2.msra.mxu0 0.0
    %2374 = vmatprep.subr.mxu0 0.0
    %2375 = vmatpush2.msra.mxu0 0.0
    %2376 = vmatprep.subr.mxu0 0.0
    %2377 = vmatpush2.msra.mxu0 0.0
    %2378 = vmatprep.subr.mxu0 0.0
    %2379 = vmatpush2.msra.mxu0 0.0
    %2380 = vmatprep.subr.mxu0 0.0
    %2381 = vmatpush2.msra.mxu0 0.0
    %2382 = vmatprep.subr.mxu0 0.0
    %2383 = vmatpush2.msra.mxu0 0.0
    %2384 = vmatprep.subr.mxu0 0.0
    %2385 = vmatpush2.msra.mxu0 0.0
    %2386 = vmatprep.subr.mxu0 0.0
    %2387 = vmatpush2.msra.mxu0 0.0
    %2388 = vmatprep.subr.mxu0 0.0
    %2389 = vmatpush2.msra.mxu0 0.0
    %2390 = vmatprep.subr.mxu0 0.0
    %2391 = vmatpush2.msra.mxu0 0.0
    %2392 = vmatprep.subr.mxu0 0.0
    %2393 = vmatpush2.msra.mxu0 0.0
    %2394 = vmatprep.subr.mxu0 0.0
    %2395 = vmatpush2.msra.mxu0 0.0
    %2396 = vmatprep.subr.mxu0 0.0
    %2397 = vmatpush2.msra.mxu0 0.0
    %2398 = vmatprep.subr.mxu0 0.0
    %2399 = vmatpush2.msra.mxu0 0.0
    %2400 = vmatprep.mubr.f32.mxu0 0.0
    %2401 = vmatmul.mubr.f32.gmra.mxu0 %v2263
    %v2402 = vpop.f32.mrf.mxu0
    %v2403 = vadd.f32 0.0, %v2402
    %v2404 = vpop.f32.mrf.mxu0
    %v2405 = vadd.f32 0.0, %v2404
    %2406 = vdwg.mxu0
    %v2411 = vcombine.low %v2332, %v2334
    %v2412 = vcombine.low %v2403, %v2405
    %v2414 = vunpack.c.l.s4 1966171168
    %v2415 = vunpack.c.0.s8 %v2414
    %v2416 = vlaneseq
    %v2417 = vshrl.u32 %v2416, 7
    %v2418 = vsub.s32 %v2415, %v2417
    %v2419 = vrot.slane %v2411, %v2418
    %v2421 = vunpack.c.l.s4 1966171168
    %v2422 = vunpack.c.0.s8 %v2421
    %v2423 = vlaneseq
    %v2424 = vshrl.u32 %v2423, 7
    %v2425 = vsub.s32 %v2422, %v2424
    %v2426 = vrot.slane %v2412, %v2425
    %v2427 = vcombine.low %v2419, %v2426
    %v2428 = vcombine.high %v2419, %v2426
    %v2430 = vunpack.c.l.s4 1966171168
    %v2431 = vunpack.c.0.s8 %v2430
    %v2432 = vlaneseq
    %v2433 = vshrl.u32 %v2432, 7
    %v2434 = vsub.s32 %v2431, %v2433
    %v2435 = vrot.slane %v2427, %v2434
    %v2437 = vunpack.c.l.s4 1966171168
    %v2438 = vunpack.c.0.s8 %v2437
    %v2439 = vlaneseq
    %v2440 = vshrl.u32 %v2439, 7
    %v2441 = vsub.s32 %v2438, %v2440
    %v2442 = vrot.slane %v2428, %v2441
    %v2445 = vadd.f32 %v2180, %v2435
    %v2446 = vadd.f32 %v2182, %v2442
    %v2447 = vxor.u32 %v2445, 2147483648
    %v2448 = vxor.u32 %v2446, 2147483648
    %v2449 = vmul.f32 %v2447, 1.442695
    %v2450 = vpow.pop %v2449
    %v2451 = vmul.f32 %v2448, 1.442695
    %v2452 = vpow.pop %v2451
    %v2453 = vadd.f32 %v2450, 1.0
    %v2454 = vadd.f32 %v2452, 1.0
    %v2455 = vrcp.pop %v2453
    %v2456 = vmul.f32 1.0, %v2455
    %v2457 = vrcp.pop %v2454
    %v2458 = vmul.f32 1.0, %v2457
    %v2461 = vrot.slane %v2445, 3
    %v2462 = vrot.slane %v2446, 3
    %v2465 = vtanh.pop %v2461
    %v2466 = vtanh.pop %v2462
    %v2469 = vrot.slane %v2456, 1
    %v2470 = vrot.slane %v2458, 1
    %v2473 = vmul.f32 %v2469, %v2167
    %v2474 = vmul.f32 %v2470, %v2168
    %v2475 = vmul.f32 %v2456, %v2465
    %v2476 = vmul.f32 %v2458, %v2466
    %v2477 = vadd.f32 %v2473, %v2475
    %v2478 = vadd.f32 %v2474, %v2476
    %v2479 = vtanh.pop %v2477
    %v2480 = vtanh.pop %v2478
    %v2481 = vrot.slane %v2456, 2
    %v2482 = vrot.slane %v2458, 2
    %v2485 = vmul.f32 %v2481, %v2479
    %v2486 = vmul.f32 %v2482, %v2480
    %2487 = vst [vmem:[#allocation3 + $0x6] sm:$0x1] %v2485
    %2488 = vst [vmem:[#allocation3 + $0xe] sm:$0x1] %v2486
    %s2489 = scalar_lea.vmem [#allocation2], 7
    %v2490 = vld [vmem:[%s2489] ss:$8 sm:$0xf]
    %s2491 = scalar_lea.vmem [#allocation2], 39
    %v2492 = vld [vmem:[%s2491] ss:$8 sm:$0xf]
    %v2493 = vld [vmem:[#allocation7] sm:$0xff]
    %v2494 = vld [vmem:[#allocation7 + $0x8] sm:$0xff]
    %v2495 = vld [vmem:[#allocation7 + $0x10] sm:$0xff]
    %v2496 = vld [vmem:[#allocation7 + $0x18] sm:$0xff]
    %v2497 = vld [vmem:[#allocation7 + $0x20] sm:$0xff]
    %v2498 = vld [vmem:[#allocation7 + $0x28] sm:$0xff]
    %v2499 = vld [vmem:[#allocation7 + $0x30] sm:$0xff]
    %v2500 = vld [vmem:[#allocation7 + $0x38] sm:$0xff]
    %v2501 = vld [vmem:[#allocation7 + $0x40] sm:$0xff]
    %v2502 = vld [vmem:[#allocation7 + $0x48] sm:$0xff]
    %v2503 = vld [vmem:[#allocation7 + $0x50] sm:$0xff]
    %v2504 = vld [vmem:[#allocation7 + $0x58] sm:$0xff]
    %v2505 = vld [vmem:[#allocation7 + $0x60] sm:$0xff]
    %v2506 = vld [vmem:[#allocation7 + $0x68] sm:$0xff]
    %v2507 = vld [vmem:[#allocation7 + $0x70] sm:$0xff]
    %v2508 = vld [vmem:[#allocation7 + $0x78] sm:$0xff]
    %v2509 = vld [vmem:[#allocation7 + $0x80] sm:$0xff]
    %v2510 = vld [vmem:[#allocation7 + $0x88] sm:$0xff]
    %v2511 = vld [vmem:[#allocation7 + $0x90] sm:$0xff]
    %v2512 = vld [vmem:[#allocation7 + $0x98] sm:$0xff]
    %v2513 = vld [vmem:[#allocation7 + $0xa0] sm:$0xff]
    %v2514 = vld [vmem:[#allocation7 + $0xa8] sm:$0xff]
    %v2515 = vld [vmem:[#allocation7 + $0xb0] sm:$0xff]
    %v2516 = vld [vmem:[#allocation7 + $0xb8] sm:$0xff]
    %v2517 = vld [vmem:[#allocation7 + $0xc0] sm:$0xff]
    %v2518 = vld [vmem:[#allocation7 + $0xc8] sm:$0xff]
    %v2519 = vld [vmem:[#allocation7 + $0xd0] sm:$0xff]
    %v2520 = vld [vmem:[#allocation7 + $0xd8] sm:$0xff]
    %v2521 = vld [vmem:[#allocation7 + $0xe0] sm:$0xff]
    %v2522 = vld [vmem:[#allocation7 + $0xe8] sm:$0xff]
    %v2523 = vld [vmem:[#allocation7 + $0xf0] sm:$0xff]
    %v2524 = vld [vmem:[#allocation7 + $0xf8] sm:$0xff]
    %v2525 = vld [vmem:[#allocation7 + $0x100] sm:$0xff]
    %v2526 = vld [vmem:[#allocation7 + $0x108] sm:$0xff]
    %v2527 = vld [vmem:[#allocation7 + $0x110] sm:$0xff]
    %v2528 = vld [vmem:[#allocation7 + $0x118] sm:$0xff]
    %v2529 = vld [vmem:[#allocation7 + $0x120] sm:$0xff]
    %v2530 = vld [vmem:[#allocation7 + $0x128] sm:$0xff]
    %v2531 = vld [vmem:[#allocation7 + $0x130] sm:$0xff]
    %v2532 = vld [vmem:[#allocation7 + $0x138] sm:$0xff]
    %v2533 = vld [vmem:[#allocation7 + $0x140] sm:$0xff]
    %v2534 = vld [vmem:[#allocation7 + $0x148] sm:$0xff]
    %v2535 = vld [vmem:[#allocation7 + $0x150] sm:$0xff]
    %v2536 = vld [vmem:[#allocation7 + $0x158] sm:$0xff]
    %v2537 = vld [vmem:[#allocation7 + $0x160] sm:$0xff]
    %v2538 = vld [vmem:[#allocation7 + $0x168] sm:$0xff]
    %v2539 = vld [vmem:[#allocation7 + $0x170] sm:$0xff]
    %v2540 = vld [vmem:[#allocation7 + $0x178] sm:$0xff]
    %v2541 = vld [vmem:[#allocation7 + $0x180] sm:$0xff]
    %v2542 = vld [vmem:[#allocation7 + $0x188] sm:$0xff]
    %v2543 = vld [vmem:[#allocation7 + $0x190] sm:$0xff]
    %v2544 = vld [vmem:[#allocation7 + $0x198] sm:$0xff]
    %v2545 = vld [vmem:[#allocation7 + $0x1a0] sm:$0xff]
    %v2546 = vld [vmem:[#allocation7 + $0x1a8] sm:$0xff]
    %v2547 = vld [vmem:[#allocation7 + $0x1b0] sm:$0xff]
    %v2548 = vld [vmem:[#allocation7 + $0x1b8] sm:$0xff]
    %v2549 = vld [vmem:[#allocation7 + $0x1c0] sm:$0xff]
    %v2550 = vld [vmem:[#allocation7 + $0x1c8] sm:$0xff]
    %v2551 = vld [vmem:[#allocation7 + $0x1d0] sm:$0xff]
    %v2552 = vld [vmem:[#allocation7 + $0x1d8] sm:$0xff]
    %v2553 = vld [vmem:[#allocation7 + $0x1e0] sm:$0xff]
    %v2554 = vld [vmem:[#allocation7 + $0x1e8] sm:$0xff]
    %v2555 = vld [vmem:[#allocation7 + $0x1f0] sm:$0xff]
    %v2556 = vld [vmem:[#allocation7 + $0x1f8] sm:$0xff]
    %v2559 = vcombine.low %v2485, %v2486
    %v2561 = vunpack.c.l.s4 1966171168
    %v2562 = vunpack.c.0.s8 %v2561
    %v2563 = vlaneseq
    %v2564 = vshrl.u32 %v2563, 7
    %v2565 = vsub.s32 %v2562, %v2564
    %v2566 = vrot.slane %v2559, %v2565
    %v2568 = vunpack.c.l.s4 1966171168
    %v2569 = vunpack.c.0.s8 %v2568
    %v2570 = vlaneseq
    %v2571 = vshrl.u32 %v2570, 7
    %v2572 = vsub.s32 %v2569, %v2571
    %v2573 = vrot.slane %v2566, %v2572
    %2575 = vmatprep.subr.mxu0 %v2554
    %2576 = vmatpush1.msra.mxu0 %v2553
    %2577 = vmatprep.subr.mxu0 %v2550
    %2578 = vmatpush1.msra.mxu0 %v2549
    %2579 = vmatprep.subr.mxu0 %v2546
    %2580 = vmatpush1.msra.mxu0 %v2545
    %2581 = vmatprep.subr.mxu0 %v2542
    %2582 = vmatpush1.msra.mxu0 %v2541
    %2583 = vmatprep.subr.mxu0 %v2538
    %2584 = vmatpush1.msra.mxu0 %v2537
    %2585 = vmatprep.subr.mxu0 %v2534
    %2586 = vmatpush1.msra.mxu0 %v2533
    %2587 = vmatprep.subr.mxu0 %v2530
    %2588 = vmatpush1.msra.mxu0 %v2529
    %2589 = vmatprep.subr.mxu0 %v2526
    %2590 = vmatpush1.msra.mxu0 %v2525
    %2591 = vmatprep.subr.mxu0 %v2522
    %2592 = vmatpush1.msra.mxu0 %v2521
    %2593 = vmatprep.subr.mxu0 %v2518
    %2594 = vmatpush1.msra.mxu0 %v2517
    %2595 = vmatprep.subr.mxu0 %v2514
    %2596 = vmatpush1.msra.mxu0 %v2513
    %2597 = vmatprep.subr.mxu0 %v2510
    %2598 = vmatpush1.msra.mxu0 %v2509
    %2599 = vmatprep.subr.mxu0 %v2506
    %2600 = vmatpush1.msra.mxu0 %v2505
    %2601 = vmatprep.subr.mxu0 %v2502
    %2602 = vmatpush1.msra.mxu0 %v2501
    %2603 = vmatprep.subr.mxu0 %v2498
    %2604 = vmatpush1.msra.mxu0 %v2497
    %2605 = vmatprep.subr.mxu0 %v2494
    %2606 = vmatpush1.msra.mxu0 %v2493
    %2607 = vmatprep.subr.mxu0 0.0
    %2608 = vmatpush2.msra.mxu0 0.0
    %2609 = vmatprep.subr.mxu0 0.0
    %2610 = vmatpush2.msra.mxu0 0.0
    %2611 = vmatprep.subr.mxu0 0.0
    %2612 = vmatpush2.msra.mxu0 0.0
    %2613 = vmatprep.subr.mxu0 0.0
    %2614 = vmatpush2.msra.mxu0 0.0
    %2615 = vmatprep.subr.mxu0 0.0
    %2616 = vmatpush2.msra.mxu0 0.0
    %2617 = vmatprep.subr.mxu0 0.0
    %2618 = vmatpush2.msra.mxu0 0.0
    %2619 = vmatprep.subr.mxu0 0.0
    %2620 = vmatpush2.msra.mxu0 0.0
    %2621 = vmatprep.subr.mxu0 0.0
    %2622 = vmatpush2.msra.mxu0 0.0
    %2623 = vmatprep.subr.mxu0 0.0
    %2624 = vmatpush2.msra.mxu0 0.0
    %2625 = vmatprep.subr.mxu0 0.0
    %2626 = vmatpush2.msra.mxu0 0.0
    %2627 = vmatprep.subr.mxu0 0.0
    %2628 = vmatpush2.msra.mxu0 0.0
    %2629 = vmatprep.subr.mxu0 0.0
    %2630 = vmatpush2.msra.mxu0 0.0
    %2631 = vmatprep.subr.mxu0 0.0
    %2632 = vmatpush2.msra.mxu0 0.0
    %2633 = vmatprep.subr.mxu0 0.0
    %2634 = vmatpush2.msra.mxu0 0.0
    %2635 = vmatprep.subr.mxu0 0.0
    %2636 = vmatpush2.msra.mxu0 0.0
    %2637 = vmatprep.subr.mxu0 0.0
    %2638 = vmatpush2.msra.mxu0 0.0
    %2639 = vmatprep.mubr.f32.mxu0 0.0
    %2640 = vmatmul.mubr.f32.gmra.mxu0 %v2573
    %v2641 = vpop.f32.mrf.mxu0
    %v2642 = vadd.f32 0.0, %v2641
    %v2643 = vpop.f32.mrf.mxu0
    %v2644 = vadd.f32 0.0, %v2643
    %2645 = vdwg.mxu0
    %2646 = vmatprep.subr.mxu0 %v2556
    %2647 = vmatpush1.msra.mxu0 %v2555
    %2648 = vmatprep.subr.mxu0 %v2552
    %2649 = vmatpush1.msra.mxu0 %v2551
    %2650 = vmatprep.subr.mxu0 %v2548
    %2651 = vmatpush1.msra.mxu0 %v2547
    %2652 = vmatprep.subr.mxu0 %v2544
    %2653 = vmatpush1.msra.mxu0 %v2543
    %2654 = vmatprep.subr.mxu0 %v2540
    %2655 = vmatpush1.msra.mxu0 %v2539
    %2656 = vmatprep.subr.mxu0 %v2536
    %2657 = vmatpush1.msra.mxu0 %v2535
    %2658 = vmatprep.subr.mxu0 %v2532
    %2659 = vmatpush1.msra.mxu0 %v2531
    %2660 = vmatprep.subr.mxu0 %v2528
    %2661 = vmatpush1.msra.mxu0 %v2527
    %2662 = vmatprep.subr.mxu0 %v2524
    %2663 = vmatpush1.msra.mxu0 %v2523
    %2664 = vmatprep.subr.mxu0 %v2520
    %2665 = vmatpush1.msra.mxu0 %v2519
    %2666 = vmatprep.subr.mxu0 %v2516
    %2667 = vmatpush1.msra.mxu0 %v2515
    %2668 = vmatprep.subr.mxu0 %v2512
    %2669 = vmatpush1.msra.mxu0 %v2511
    %2670 = vmatprep.subr.mxu0 %v2508
    %2671 = vmatpush1.msra.mxu0 %v2507
    %2672 = vmatprep.subr.mxu0 %v2504
    %2673 = vmatpush1.msra.mxu0 %v2503
    %2674 = vmatprep.subr.mxu0 %v2500
    %2675 = vmatpush1.msra.mxu0 %v2499
    %2676 = vmatprep.subr.mxu0 %v2496
    %2677 = vmatpush1.msra.mxu0 %v2495
    %2678 = vmatprep.subr.mxu0 0.0
    %2679 = vmatpush2.msra.mxu0 0.0
    %2680 = vmatprep.subr.mxu0 0.0
    %2681 = vmatpush2.msra.mxu0 0.0
    %2682 = vmatprep.subr.mxu0 0.0
    %2683 = vmatpush2.msra.mxu0 0.0
    %2684 = vmatprep.subr.mxu0 0.0
    %2685 = vmatpush2.msra.mxu0 0.0
    %2686 = vmatprep.subr.mxu0 0.0
    %2687 = vmatpush2.msra.mxu0 0.0
    %2688 = vmatprep.subr.mxu0 0.0
    %2689 = vmatpush2.msra.mxu0 0.0
    %2690 = vmatprep.subr.mxu0 0.0
    %2691 = vmatpush2.msra.mxu0 0.0
    %2692 = vmatprep.subr.mxu0 0.0
    %2693 = vmatpush2.msra.mxu0 0.0
    %2694 = vmatprep.subr.mxu0 0.0
    %2695 = vmatpush2.msra.mxu0 0.0
    %2696 = vmatprep.subr.mxu0 0.0
    %2697 = vmatpush2.msra.mxu0 0.0
    %2698 = vmatprep.subr.mxu0 0.0
    %2699 = vmatpush2.msra.mxu0 0.0
    %2700 = vmatprep.subr.mxu0 0.0
    %2701 = vmatpush2.msra.mxu0 0.0
    %2702 = vmatprep.subr.mxu0 0.0
    %2703 = vmatpush2.msra.mxu0 0.0
    %2704 = vmatprep.subr.mxu0 0.0
    %2705 = vmatpush2.msra.mxu0 0.0
    %2706 = vmatprep.subr.mxu0 0.0
    %2707 = vmatpush2.msra.mxu0 0.0
    %2708 = vmatprep.subr.mxu0 0.0
    %2709 = vmatpush2.msra.mxu0 0.0
    %2710 = vmatprep.mubr.f32.mxu0 0.0
    %2711 = vmatmul.mubr.f32.gmra.mxu0 %v2573
    %v2712 = vpop.f32.mrf.mxu0
    %v2713 = vadd.f32 0.0, %v2712
    %v2714 = vpop.f32.mrf.mxu0
    %v2715 = vadd.f32 0.0, %v2714
    %2716 = vdwg.mxu0
    %v2721 = vcombine.low %v2642, %v2644
    %v2722 = vcombine.low %v2713, %v2715
    %v2724 = vunpack.c.l.s4 1966171168
    %v2725 = vunpack.c.0.s8 %v2724
    %v2726 = vlaneseq
    %v2727 = vshrl.u32 %v2726, 7
    %v2728 = vsub.s32 %v2725, %v2727
    %v2729 = vrot.slane %v2721, %v2728
    %v2731 = vunpack.c.l.s4 1966171168
    %v2732 = vunpack.c.0.s8 %v2731
    %v2733 = vlaneseq
    %v2734 = vshrl.u32 %v2733, 7
    %v2735 = vsub.s32 %v2732, %v2734
    %v2736 = vrot.slane %v2722, %v2735
    %v2737 = vcombine.low %v2729, %v2736
    %v2738 = vcombine.high %v2729, %v2736
    %v2740 = vunpack.c.l.s4 1966171168
    %v2741 = vunpack.c.0.s8 %v2740
    %v2742 = vlaneseq
    %v2743 = vshrl.u32 %v2742, 7
    %v2744 = vsub.s32 %v2741, %v2743
    %v2745 = vrot.slane %v2737, %v2744
    %v2747 = vunpack.c.l.s4 1966171168
    %v2748 = vunpack.c.0.s8 %v2747
    %v2749 = vlaneseq
    %v2750 = vshrl.u32 %v2749, 7
    %v2751 = vsub.s32 %v2748, %v2750
    %v2752 = vrot.slane %v2738, %v2751
    %v2755 = vadd.f32 %v2490, %v2745
    %v2756 = vadd.f32 %v2492, %v2752
    %v2757 = vxor.u32 %v2755, 2147483648
    %v2758 = vxor.u32 %v2756, 2147483648
    %v2759 = vmul.f32 %v2757, 1.442695
    %v2760 = vpow.pop %v2759
    %v2761 = vmul.f32 %v2758, 1.442695
    %v2762 = vpow.pop %v2761
    %v2763 = vadd.f32 %v2760, 1.0
    %v2764 = vadd.f32 %v2762, 1.0
    %v2765 = vrcp.pop %v2763
    %v2766 = vmul.f32 1.0, %v2765
    %v2767 = vrcp.pop %v2764
    %v2768 = vmul.f32 1.0, %v2767
    %v2771 = vrot.slane %v2755, 3
    %v2772 = vrot.slane %v2756, 3
    %v2775 = vtanh.pop %v2771
    %v2776 = vtanh.pop %v2772
    %v2779 = vrot.slane %v2766, 1
    %v2780 = vrot.slane %v2768, 1
    %v2783 = vmul.f32 %v2779, %v2477
    %v2784 = vmul.f32 %v2780, %v2478
    %v2785 = vmul.f32 %v2766, %v2775
    %v2786 = vmul.f32 %v2768, %v2776
    %v2787 = vadd.f32 %v2783, %v2785
    %v2788 = vadd.f32 %v2784, %v2786
    %v2789 = vtanh.pop %v2787
    %v2790 = vtanh.pop %v2788
    %v2791 = vrot.slane %v2766, 2
    %v2792 = vrot.slane %v2768, 2
    %v2795 = vmul.f32 %v2791, %v2789
    %v2796 = vmul.f32 %v2792, %v2790
    %2797 = vst [vmem:[#allocation3 + $0x7] sm:$0x1] %v2795
    %2798 = vst [vmem:[#allocation3 + $0xf] sm:$0x1] %v2796
    %v2799 = vld [vmem:[#allocation3] sm:$0xff]
    %v2800 = vld [vmem:[#allocation3 + $0x8] sm:$0xff]
    %v2801 = vld [vmem:[#allocation9] sm:$0xff]
    %v2802 = vld [vmem:[#allocation9 + $0x8] sm:$0xff]
    %v2803 = vld [vmem:[#allocation9 + $0x10] sm:$0xff]
    %v2804 = vld [vmem:[#allocation9 + $0x18] sm:$0xff]
    %v2805 = vld [vmem:[#allocation9 + $0x20] sm:$0xff]
    %v2806 = vld [vmem:[#allocation9 + $0x28] sm:$0xff]
    %v2807 = vld [vmem:[#allocation9 + $0x30] sm:$0xff]
    %v2808 = vld [vmem:[#allocation9 + $0x38] sm:$0xff]
    %v2809 = vld [vmem:[#allocation9 + $0x40] sm:$0xff]
    %v2810 = vld [vmem:[#allocation9 + $0x48] sm:$0xff]
    %v2811 = vld [vmem:[#allocation9 + $0x50] sm:$0xff]
    %v2812 = vld [vmem:[#allocation9 + $0x58] sm:$0xff]
    %v2813 = vld [vmem:[#allocation9 + $0x60] sm:$0xff]
    %v2814 = vld [vmem:[#allocation9 + $0x68] sm:$0xff]
    %v2815 = vld [vmem:[#allocation9 + $0x70] sm:$0xff]
    %v2816 = vld [vmem:[#allocation9 + $0x78] sm:$0xff]
    %v2817 = vld [vmem:[#allocation9 + $0x80] sm:$0xff]
    %v2818 = vld [vmem:[#allocation9 + $0x88] sm:$0xff]
    %v2819 = vld [vmem:[#allocation9 + $0x90] sm:$0xff]
    %v2820 = vld [vmem:[#allocation9 + $0x98] sm:$0xff]
    %v2821 = vld [vmem:[#allocation9 + $0xa0] sm:$0xff]
    %v2822 = vld [vmem:[#allocation9 + $0xa8] sm:$0xff]
    %v2823 = vld [vmem:[#allocation9 + $0xb0] sm:$0xff]
    %v2824 = vld [vmem:[#allocation9 + $0xb8] sm:$0xff]
    %v2825 = vld [vmem:[#allocation9 + $0xc0] sm:$0xff]
    %v2826 = vld [vmem:[#allocation9 + $0xc8] sm:$0xff]
    %v2827 = vld [vmem:[#allocation9 + $0xd0] sm:$0xff]
    %v2828 = vld [vmem:[#allocation9 + $0xd8] sm:$0xff]
    %v2829 = vld [vmem:[#allocation9 + $0xe0] sm:$0xff]
    %v2830 = vld [vmem:[#allocation9 + $0xe8] sm:$0xff]
    %v2831 = vld [vmem:[#allocation9 + $0xf0] sm:$0xff]
    %v2832 = vld [vmem:[#allocation9 + $0xf8] sm:$0xff]
    %v2833 = vld [vmem:[#allocation9 + $0x100] sm:$0xff]
    %v2834 = vld [vmem:[#allocation9 + $0x108] sm:$0xff]
    %v2835 = vld [vmem:[#allocation9 + $0x110] sm:$0xff]
    %v2836 = vld [vmem:[#allocation9 + $0x118] sm:$0xff]
    %v2837 = vld [vmem:[#allocation9 + $0x120] sm:$0xff]
    %v2838 = vld [vmem:[#allocation9 + $0x128] sm:$0xff]
    %v2839 = vld [vmem:[#allocation9 + $0x130] sm:$0xff]
    %v2840 = vld [vmem:[#allocation9 + $0x138] sm:$0xff]
    %v2841 = vld [vmem:[#allocation9 + $0x140] sm:$0xff]
    %v2842 = vld [vmem:[#allocation9 + $0x148] sm:$0xff]
    %v2843 = vld [vmem:[#allocation9 + $0x150] sm:$0xff]
    %v2844 = vld [vmem:[#allocation9 + $0x158] sm:$0xff]
    %v2845 = vld [vmem:[#allocation9 + $0x160] sm:$0xff]
    %v2846 = vld [vmem:[#allocation9 + $0x168] sm:$0xff]
    %v2847 = vld [vmem:[#allocation9 + $0x170] sm:$0xff]
    %v2848 = vld [vmem:[#allocation9 + $0x178] sm:$0xff]
    %v2849 = vld [vmem:[#allocation9 + $0x180] sm:$0xff]
    %v2850 = vld [vmem:[#allocation9 + $0x188] sm:$0xff]
    %v2851 = vld [vmem:[#allocation9 + $0x190] sm:$0xff]
    %v2852 = vld [vmem:[#allocation9 + $0x198] sm:$0xff]
    %v2853 = vld [vmem:[#allocation9 + $0x1a0] sm:$0xff]
    %v2854 = vld [vmem:[#allocation9 + $0x1a8] sm:$0xff]
    %v2855 = vld [vmem:[#allocation9 + $0x1b0] sm:$0xff]
    %v2856 = vld [vmem:[#allocation9 + $0x1b8] sm:$0xff]
    %v2857 = vld [vmem:[#allocation9 + $0x1c0] sm:$0xff]
    %v2858 = vld [vmem:[#allocation9 + $0x1c8] sm:$0xff]
    %v2859 = vld [vmem:[#allocation9 + $0x1d0] sm:$0xff]
    %v2860 = vld [vmem:[#allocation9 + $0x1d8] sm:$0xff]
    %v2861 = vld [vmem:[#allocation9 + $0x1e0] sm:$0xff]
    %v2862 = vld [vmem:[#allocation9 + $0x1e8] sm:$0xff]
    %v2863 = vld [vmem:[#allocation9 + $0x1f0] sm:$0xff]
    %v2864 = vld [vmem:[#allocation9 + $0x1f8] sm:$0xff]
    %v2865 = vld [vmem:[%s6] sm:$0xf]
    %v2867 = vlaneseq
    %v2868 = vshrl.u32 %v2867, 7
    %v2869 = vsub.s32 0, %v2868
    %v2870 = vrot.slane %v2865, %v2869
    %v2871 = vlaneseq
    %v2872 = vshrl.u32 %v2871, 7
    %v2873 = vsub.s32 1, %v2872
    %v2874 = vrot.slane %v2865, %v2873
    %v2875 = vlaneseq
    %v2876 = vshrl.u32 %v2875, 7
    %v2877 = vsub.s32 2, %v2876
    %v2878 = vrot.slane %v2865, %v2877
    %v2879 = vlaneseq
    %v2880 = vshrl.u32 %v2879, 7
    %v2881 = vsub.s32 3, %v2880
    %v2882 = vrot.slane %v2865, %v2881
    %2887 = vmatprep.subr.mxu0 %v2862
    %2888 = vmatpush1.msra.mxu0 %v2861
    %2889 = vmatprep.subr.mxu0 %v2858
    %2890 = vmatpush1.msra.mxu0 %v2857
    %2891 = vmatprep.subr.mxu0 %v2854
    %2892 = vmatpush1.msra.mxu0 %v2853
    %2893 = vmatprep.subr.mxu0 %v2850
    %2894 = vmatpush1.msra.mxu0 %v2849
    %2895 = vmatprep.subr.mxu0 %v2846
    %2896 = vmatpush1.msra.mxu0 %v2845
    %2897 = vmatprep.subr.mxu0 %v2842
    %2898 = vmatpush1.msra.mxu0 %v2841
    %2899 = vmatprep.subr.mxu0 %v2838
    %2900 = vmatpush1.msra.mxu0 %v2837
    %2901 = vmatprep.subr.mxu0 %v2834
    %2902 = vmatpush1.msra.mxu0 %v2833
    %2903 = vmatprep.subr.mxu0 %v2830
    %2904 = vmatpush1.msra.mxu0 %v2829
    %2905 = vmatprep.subr.mxu0 %v2826
    %2906 = vmatpush1.msra.mxu0 %v2825
    %2907 = vmatprep.subr.mxu0 %v2822
    %2908 = vmatpush1.msra.mxu0 %v2821
    %2909 = vmatprep.subr.mxu0 %v2818
    %2910 = vmatpush1.msra.mxu0 %v2817
    %2911 = vmatprep.subr.mxu0 %v2814
    %2912 = vmatpush1.msra.mxu0 %v2813
    %2913 = vmatprep.subr.mxu0 %v2810
    %2914 = vmatpush1.msra.mxu0 %v2809
    %2915 = vmatprep.subr.mxu0 %v2806
    %2916 = vmatpush1.msra.mxu0 %v2805
    %2917 = vmatprep.subr.mxu0 %v2802
    %2918 = vmatpush1.msra.mxu0 %v2801
    %2919 = vmatprep.subr.mxu0 0.0
    %2920 = vmatpush2.msra.mxu0 0.0
    %2921 = vmatprep.subr.mxu0 0.0
    %2922 = vmatpush2.msra.mxu0 0.0
    %2923 = vmatprep.subr.mxu0 0.0
    %2924 = vmatpush2.msra.mxu0 0.0
    %2925 = vmatprep.subr.mxu0 0.0
    %2926 = vmatpush2.msra.mxu0 0.0
    %2927 = vmatprep.subr.mxu0 0.0
    %2928 = vmatpush2.msra.mxu0 0.0
    %2929 = vmatprep.subr.mxu0 0.0
    %2930 = vmatpush2.msra.mxu0 0.0
    %2931 = vmatprep.subr.mxu0 0.0
    %2932 = vmatpush2.msra.mxu0 0.0
    %2933 = vmatprep.subr.mxu0 0.0
    %2934 = vmatpush2.msra.mxu0 0.0
    %2935 = vmatprep.subr.mxu0 0.0
    %2936 = vmatpush2.msra.mxu0 0.0
    %2937 = vmatprep.subr.mxu0 0.0
    %2938 = vmatpush2.msra.mxu0 0.0
    %2939 = vmatprep.subr.mxu0 0.0
    %2940 = vmatpush2.msra.mxu0 0.0
    %2941 = vmatprep.subr.mxu0 0.0
    %2942 = vmatpush2.msra.mxu0 0.0
    %2943 = vmatprep.subr.mxu0 0.0
    %2944 = vmatpush2.msra.mxu0 0.0
    %2945 = vmatprep.subr.mxu0 0.0
    %2946 = vmatpush2.msra.mxu0 0.0
    %2947 = vmatprep.subr.mxu0 0.0
    %2948 = vmatpush2.msra.mxu0 0.0
    %2949 = vmatprep.subr.mxu0 0.0
    %2950 = vmatpush2.msra.mxu0 0.0
    %2951 = vmatprep.mubr.f32.mxu0 0.0
    %2952 = vmatmul.mubr.f32.gmra.mxu0 %v2799
    %v2953 = vpop.f32.mrf.mxu0
    %v2954 = vadd.f32 %v2870, %v2953
    %v2955 = vpop.f32.mrf.mxu0
    %v2956 = vadd.f32 %v2874, %v2955
    %2957 = vmatprep.mubr.f32.mxu0 0.0
    %2958 = vmatmul.mubr.f32.gmra.mxu0 %v2800
    %v2959 = vpop.f32.mrf.mxu0
    %v2960 = vadd.f32 %v2870, %v2959
    %v2961 = vpop.f32.mrf.mxu0
    %v2962 = vadd.f32 %v2874, %v2961
    %2963 = vdwg.mxu0
    %2964 = vmatprep.subr.mxu0 %v2864
    %2965 = vmatpush1.msra.mxu0 %v2863
    %2966 = vmatprep.subr.mxu0 %v2860
    %2967 = vmatpush1.msra.mxu0 %v2859
    %2968 = vmatprep.subr.mxu0 %v2856
    %2969 = vmatpush1.msra.mxu0 %v2855
    %2970 = vmatprep.subr.mxu0 %v2852
    %2971 = vmatpush1.msra.mxu0 %v2851
    %2972 = vmatprep.subr.mxu0 %v2848
    %2973 = vmatpush1.msra.mxu0 %v2847
    %2974 = vmatprep.subr.mxu0 %v2844
    %2975 = vmatpush1.msra.mxu0 %v2843
    %2976 = vmatprep.subr.mxu0 %v2840
    %2977 = vmatpush1.msra.mxu0 %v2839
    %2978 = vmatprep.subr.mxu0 %v2836
    %2979 = vmatpush1.msra.mxu0 %v2835
    %2980 = vmatprep.subr.mxu0 %v2832
    %2981 = vmatpush1.msra.mxu0 %v2831
    %2982 = vmatprep.subr.mxu0 %v2828
    %2983 = vmatpush1.msra.mxu0 %v2827
    %2984 = vmatprep.subr.mxu0 %v2824
    %2985 = vmatpush1.msra.mxu0 %v2823
    %2986 = vmatprep.subr.mxu0 %v2820
    %2987 = vmatpush1.msra.mxu0 %v2819
    %2988 = vmatprep.subr.mxu0 %v2816
    %2989 = vmatpush1.msra.mxu0 %v2815
    %2990 = vmatprep.subr.mxu0 %v2812
    %2991 = vmatpush1.msra.mxu0 %v2811
    %2992 = vmatprep.subr.mxu0 %v2808
    %2993 = vmatpush1.msra.mxu0 %v2807
    %2994 = vmatprep.subr.mxu0 %v2804
    %2995 = vmatpush1.msra.mxu0 %v2803
    %2996 = vmatprep.subr.mxu0 0.0
    %2997 = vmatpush2.msra.mxu0 0.0
    %2998 = vmatprep.subr.mxu0 0.0
    %2999 = vmatpush2.msra.mxu0 0.0
    %3000 = vmatprep.subr.mxu0 0.0
    %3001 = vmatpush2.msra.mxu0 0.0
    %3002 = vmatprep.subr.mxu0 0.0
    %3003 = vmatpush2.msra.mxu0 0.0
    %3004 = vmatprep.subr.mxu0 0.0
    %3005 = vmatpush2.msra.mxu0 0.0
    %3006 = vmatprep.subr.mxu0 0.0
    %3007 = vmatpush2.msra.mxu0 0.0
    %3008 = vmatprep.subr.mxu0 0.0
    %3009 = vmatpush2.msra.mxu0 0.0
    %3010 = vmatprep.subr.mxu0 0.0
    %3011 = vmatpush2.msra.mxu0 0.0
    %3012 = vmatprep.subr.mxu0 0.0
    %3013 = vmatpush2.msra.mxu0 0.0
    %3014 = vmatprep.subr.mxu0 0.0
    %3015 = vmatpush2.msra.mxu0 0.0
    %3016 = vmatprep.subr.mxu0 0.0
    %3017 = vmatpush2.msra.mxu0 0.0
    %3018 = vmatprep.subr.mxu0 0.0
    %3019 = vmatpush2.msra.mxu0 0.0
    %3020 = vmatprep.subr.mxu0 0.0
    %3021 = vmatpush2.msra.mxu0 0.0
    %3022 = vmatprep.subr.mxu0 0.0
    %3023 = vmatpush2.msra.mxu0 0.0
    %3024 = vmatprep.subr.mxu0 0.0
    %3025 = vmatpush2.msra.mxu0 0.0
    %3026 = vmatprep.subr.mxu0 0.0
    %3027 = vmatpush2.msra.mxu0 0.0
    %3028 = vmatprep.mubr.f32.mxu0 0.0
    %3029 = vmatmul.mubr.f32.gmra.mxu0 %v2799
    %v3030 = vpop.f32.mrf.mxu0
    %v3031 = vadd.f32 %v2878, %v3030
    %v3032 = vpop.f32.mrf.mxu0
    %v3033 = vadd.f32 %v2882, %v3032
    %3034 = vmatprep.mubr.f32.mxu0 0.0
    %3035 = vmatmul.mubr.f32.gmra.mxu0 %v2800
    %v3036 = vpop.f32.mrf.mxu0
    %v3037 = vadd.f32 %v2878, %v3036
    %v3038 = vpop.f32.mrf.mxu0
    %v3039 = vadd.f32 %v2882, %v3038
    %3040 = vdwg.mxu0
    %3041 = vst [vmem:[#allocation2] sm:$0xff] %v2954
    %3042 = vst [vmem:[#allocation2 + $0x8] sm:$0xff] %v2956
    %3043 = vst [vmem:[#allocation2 + $0x10] sm:$0xff] %v3031
    %3044 = vst [vmem:[#allocation2 + $0x18] sm:$0xff] %v3033
    %3045 = vst [vmem:[#allocation2 + $0x20] sm:$0xff] %v2960
    %3046 = vst [vmem:[#allocation2 + $0x28] sm:$0xff] %v2962
    %3047 = vst [vmem:[#allocation2 + $0x30] sm:$0xff] %v3037
    %3048 = vst [vmem:[#allocation2 + $0x38] sm:$0xff] %v3039
    %v3049 = vld [vmem:[#allocation2] ss:$8 sm:$0xf]
    %v3050 = vld [vmem:[%s339] ss:$8 sm:$0xf]
    %v3051 = vld [vmem:[#allocation10] sm:$0xff]
    %v3052 = vld [vmem:[#allocation10 + $0x8] sm:$0xff]
    %v3053 = vld [vmem:[#allocation10 + $0x10] sm:$0xff]
    %v3054 = vld [vmem:[#allocation10 + $0x18] sm:$0xff]
    %v3055 = vld [vmem:[#allocation10 + $0x20] sm:$0xff]
    %v3056 = vld [vmem:[#allocation10 + $0x28] sm:$0xff]
    %v3057 = vld [vmem:[#allocation10 + $0x30] sm:$0xff]
    %v3058 = vld [vmem:[#allocation10 + $0x38] sm:$0xff]
    %v3059 = vld [vmem:[#allocation10 + $0x40] sm:$0xff]
    %v3060 = vld [vmem:[#allocation10 + $0x48] sm:$0xff]
    %v3061 = vld [vmem:[#allocation10 + $0x50] sm:$0xff]
    %v3062 = vld [vmem:[#allocation10 + $0x58] sm:$0xff]
    %v3063 = vld [vmem:[#allocation10 + $0x60] sm:$0xff]
    %v3064 = vld [vmem:[#allocation10 + $0x68] sm:$0xff]
    %v3065 = vld [vmem:[#allocation10 + $0x70] sm:$0xff]
    %v3066 = vld [vmem:[#allocation10 + $0x78] sm:$0xff]
    %v3067 = vld [vmem:[#allocation10 + $0x80] sm:$0xff]
    %v3068 = vld [vmem:[#allocation10 + $0x88] sm:$0xff]
    %v3069 = vld [vmem:[#allocation10 + $0x90] sm:$0xff]
    %v3070 = vld [vmem:[#allocation10 + $0x98] sm:$0xff]
    %v3071 = vld [vmem:[#allocation10 + $0xa0] sm:$0xff]
    %v3072 = vld [vmem:[#allocation10 + $0xa8] sm:$0xff]
    %v3073 = vld [vmem:[#allocation10 + $0xb0] sm:$0xff]
    %v3074 = vld [vmem:[#allocation10 + $0xb8] sm:$0xff]
    %v3075 = vld [vmem:[#allocation10 + $0xc0] sm:$0xff]
    %v3076 = vld [vmem:[#allocation10 + $0xc8] sm:$0xff]
    %v3077 = vld [vmem:[#allocation10 + $0xd0] sm:$0xff]
    %v3078 = vld [vmem:[#allocation10 + $0xd8] sm:$0xff]
    %v3079 = vld [vmem:[#allocation10 + $0xe0] sm:$0xff]
    %v3080 = vld [vmem:[#allocation10 + $0xe8] sm:$0xff]
    %v3081 = vld [vmem:[#allocation10 + $0xf0] sm:$0xff]
    %v3082 = vld [vmem:[#allocation10 + $0xf8] sm:$0xff]
    %v3083 = vld [vmem:[#allocation10 + $0x100] sm:$0xff]
    %v3084 = vld [vmem:[#allocation10 + $0x108] sm:$0xff]
    %v3085 = vld [vmem:[#allocation10 + $0x110] sm:$0xff]
    %v3086 = vld [vmem:[#allocation10 + $0x118] sm:$0xff]
    %v3087 = vld [vmem:[#allocation10 + $0x120] sm:$0xff]
    %v3088 = vld [vmem:[#allocation10 + $0x128] sm:$0xff]
    %v3089 = vld [vmem:[#allocation10 + $0x130] sm:$0xff]
    %v3090 = vld [vmem:[#allocation10 + $0x138] sm:$0xff]
    %v3091 = vld [vmem:[#allocation10 + $0x140] sm:$0xff]
    %v3092 = vld [vmem:[#allocation10 + $0x148] sm:$0xff]
    %v3093 = vld [vmem:[#allocation10 + $0x150] sm:$0xff]
    %v3094 = vld [vmem:[#allocation10 + $0x158] sm:$0xff]
    %v3095 = vld [vmem:[#allocation10 + $0x160] sm:$0xff]
    %v3096 = vld [vmem:[#allocation10 + $0x168] sm:$0xff]
    %v3097 = vld [vmem:[#allocation10 + $0x170] sm:$0xff]
    %v3098 = vld [vmem:[#allocation10 + $0x178] sm:$0xff]
    %v3099 = vld [vmem:[#allocation10 + $0x180] sm:$0xff]
    %v3100 = vld [vmem:[#allocation10 + $0x188] sm:$0xff]
    %v3101 = vld [vmem:[#allocation10 + $0x190] sm:$0xff]
    %v3102 = vld [vmem:[#allocation10 + $0x198] sm:$0xff]
    %v3103 = vld [vmem:[#allocation10 + $0x1a0] sm:$0xff]
    %v3104 = vld [vmem:[#allocation10 + $0x1a8] sm:$0xff]
    %v3105 = vld [vmem:[#allocation10 + $0x1b0] sm:$0xff]
    %v3106 = vld [vmem:[#allocation10 + $0x1b8] sm:$0xff]
    %v3107 = vld [vmem:[#allocation10 + $0x1c0] sm:$0xff]
    %v3108 = vld [vmem:[#allocation10 + $0x1c8] sm:$0xff]
    %v3109 = vld [vmem:[#allocation10 + $0x1d0] sm:$0xff]
    %v3110 = vld [vmem:[#allocation10 + $0x1d8] sm:$0xff]
    %v3111 = vld [vmem:[#allocation10 + $0x1e0] sm:$0xff]
    %v3112 = vld [vmem:[#allocation10 + $0x1e8] sm:$0xff]
    %v3113 = vld [vmem:[#allocation10 + $0x1f0] sm:$0xff]
    %v3114 = vld [vmem:[#allocation10 + $0x1f8] sm:$0xff]
    %3115 = vmatprep.subr.mxu0 %v3112
    %3116 = vmatpush1.msra.mxu0 %v3111
    %3117 = vmatprep.subr.mxu0 %v3108
    %3118 = vmatpush1.msra.mxu0 %v3107
    %3119 = vmatprep.subr.mxu0 %v3104
    %3120 = vmatpush1.msra.mxu0 %v3103
    %3121 = vmatprep.subr.mxu0 %v3100
    %3122 = vmatpush1.msra.mxu0 %v3099
    %3123 = vmatprep.subr.mxu0 %v3096
    %3124 = vmatpush1.msra.mxu0 %v3095
    %3125 = vmatprep.subr.mxu0 %v3092
    %3126 = vmatpush1.msra.mxu0 %v3091
    %3127 = vmatprep.subr.mxu0 %v3088
    %3128 = vmatpush1.msra.mxu0 %v3087
    %3129 = vmatprep.subr.mxu0 %v3084
    %3130 = vmatpush1.msra.mxu0 %v3083
    %3131 = vmatprep.subr.mxu0 %v3080
    %3132 = vmatpush1.msra.mxu0 %v3079
    %3133 = vmatprep.subr.mxu0 %v3076
    %3134 = vmatpush1.msra.mxu0 %v3075
    %3135 = vmatprep.subr.mxu0 %v3072
    %3136 = vmatpush1.msra.mxu0 %v3071
    %3137 = vmatprep.subr.mxu0 %v3068
    %3138 = vmatpush1.msra.mxu0 %v3067
    %3139 = vmatprep.subr.mxu0 %v3064
    %3140 = vmatpush1.msra.mxu0 %v3063
    %3141 = vmatprep.subr.mxu0 %v3060
    %3142 = vmatpush1.msra.mxu0 %v3059
    %3143 = vmatprep.subr.mxu0 %v3056
    %3144 = vmatpush1.msra.mxu0 %v3055
    %3145 = vmatprep.subr.mxu0 %v3052
    %3146 = vmatpush1.msra.mxu0 %v3051
    %3147 = vmatprep.subr.mxu0 0.0
    %3148 = vmatpush2.msra.mxu0 0.0
    %3149 = vmatprep.subr.mxu0 0.0
    %3150 = vmatpush2.msra.mxu0 0.0
    %3151 = vmatprep.subr.mxu0 0.0
    %3152 = vmatpush2.msra.mxu0 0.0
    %3153 = vmatprep.subr.mxu0 0.0
    %3154 = vmatpush2.msra.mxu0 0.0
    %3155 = vmatprep.subr.mxu0 0.0
    %3156 = vmatpush2.msra.mxu0 0.0
    %3157 = vmatprep.subr.mxu0 0.0
    %3158 = vmatpush2.msra.mxu0 0.0
    %3159 = vmatprep.subr.mxu0 0.0
    %3160 = vmatpush2.msra.mxu0 0.0
    %3161 = vmatprep.subr.mxu0 0.0
    %3162 = vmatpush2.msra.mxu0 0.0
    %3163 = vmatprep.subr.mxu0 0.0
    %3164 = vmatpush2.msra.mxu0 0.0
    %3165 = vmatprep.subr.mxu0 0.0
    %3166 = vmatpush2.msra.mxu0 0.0
    %3167 = vmatprep.subr.mxu0 0.0
    %3168 = vmatpush2.msra.mxu0 0.0
    %3169 = vmatprep.subr.mxu0 0.0
    %3170 = vmatpush2.msra.mxu0 0.0
    %3171 = vmatprep.subr.mxu0 0.0
    %3172 = vmatpush2.msra.mxu0 0.0
    %3173 = vmatprep.subr.mxu0 0.0
    %3174 = vmatpush2.msra.mxu0 0.0
    %3175 = vmatprep.subr.mxu0 0.0
    %3176 = vmatpush2.msra.mxu0 0.0
    %3177 = vmatprep.subr.mxu0 0.0
    %3178 = vmatpush2.msra.mxu0 0.0
    %3179 = vmatprep.mubr.f32.mxu0 0.0
    %3180 = vmatmul.mubr.f32.gmra.mxu0 0.0
    %v3181 = vpop.f32.mrf.mxu0
    %v3182 = vadd.f32 0.0, %v3181
    %v3183 = vpop.f32.mrf.mxu0
    %v3184 = vadd.f32 0.0, %v3183
    %3185 = vdwg.mxu0
    %3186 = vmatprep.subr.mxu0 %v3114
    %3187 = vmatpush1.msra.mxu0 %v3113
    %3188 = vmatprep.subr.mxu0 %v3110
    %3189 = vmatpush1.msra.mxu0 %v3109
    %3190 = vmatprep.subr.mxu0 %v3106
    %3191 = vmatpush1.msra.mxu0 %v3105
    %3192 = vmatprep.subr.mxu0 %v3102
    %3193 = vmatpush1.msra.mxu0 %v3101
    %3194 = vmatprep.subr.mxu0 %v3098
    %3195 = vmatpush1.msra.mxu0 %v3097
    %3196 = vmatprep.subr.mxu0 %v3094
    %3197 = vmatpush1.msra.mxu0 %v3093
    %3198 = vmatprep.subr.mxu0 %v3090
    %3199 = vmatpush1.msra.mxu0 %v3089
    %3200 = vmatprep.subr.mxu0 %v3086
    %3201 = vmatpush1.msra.mxu0 %v3085
    %3202 = vmatprep.subr.mxu0 %v3082
    %3203 = vmatpush1.msra.mxu0 %v3081
    %3204 = vmatprep.subr.mxu0 %v3078
    %3205 = vmatpush1.msra.mxu0 %v3077
    %3206 = vmatprep.subr.mxu0 %v3074
    %3207 = vmatpush1.msra.mxu0 %v3073
    %3208 = vmatprep.subr.mxu0 %v3070
    %3209 = vmatpush1.msra.mxu0 %v3069
    %3210 = vmatprep.subr.mxu0 %v3066
    %3211 = vmatpush1.msra.mxu0 %v3065
    %3212 = vmatprep.subr.mxu0 %v3062
    %3213 = vmatpush1.msra.mxu0 %v3061
    %3214 = vmatprep.subr.mxu0 %v3058
    %3215 = vmatpush1.msra.mxu0 %v3057
    %3216 = vmatprep.subr.mxu0 %v3054
    %3217 = vmatpush1.msra.mxu0 %v3053
    %3218 = vmatprep.subr.mxu0 0.0
    %3219 = vmatpush2.msra.mxu0 0.0
    %3220 = vmatprep.subr.mxu0 0.0
    %3221 = vmatpush2.msra.mxu0 0.0
    %3222 = vmatprep.subr.mxu0 0.0
    %3223 = vmatpush2.msra.mxu0 0.0
    %3224 = vmatprep.subr.mxu0 0.0
    %3225 = vmatpush2.msra.mxu0 0.0
    %3226 = vmatprep.subr.mxu0 0.0
    %3227 = vmatpush2.msra.mxu0 0.0
    %3228 = vmatprep.subr.mxu0 0.0
    %3229 = vmatpush2.msra.mxu0 0.0
    %3230 = vmatprep.subr.mxu0 0.0
    %3231 = vmatpush2.msra.mxu0 0.0
    %3232 = vmatprep.subr.mxu0 0.0
    %3233 = vmatpush2.msra.mxu0 0.0
    %3234 = vmatprep.subr.mxu0 0.0
    %3235 = vmatpush2.msra.mxu0 0.0
    %3236 = vmatprep.subr.mxu0 0.0
    %3237 = vmatpush2.msra.mxu0 0.0
    %3238 = vmatprep.subr.mxu0 0.0
    %3239 = vmatpush2.msra.mxu0 0.0
    %3240 = vmatprep.subr.mxu0 0.0
    %3241 = vmatpush2.msra.mxu0 0.0
    %3242 = vmatprep.subr.mxu0 0.0
    %3243 = vmatpush2.msra.mxu0 0.0
    %3244 = vmatprep.subr.mxu0 0.0
    %3245 = vmatpush2.msra.mxu0 0.0
    %3246 = vmatprep.subr.mxu0 0.0
    %3247 = vmatpush2.msra.mxu0 0.0
    %3248 = vmatprep.subr.mxu0 0.0
    %3249 = vmatpush2.msra.mxu0 0.0
    %3250 = vmatprep.mubr.f32.mxu0 0.0
    %3251 = vmatmul.mubr.f32.gmra.mxu0 0.0
    %v3252 = vpop.f32.mrf.mxu0
    %v3253 = vadd.f32 0.0, %v3252
    %v3254 = vpop.f32.mrf.mxu0
    %v3255 = vadd.f32 0.0, %v3254
    %3256 = vdwg.mxu0
    %v3261 = vcombine.low %v3182, %v3184
    %v3262 = vcombine.low %v3253, %v3255
    %v3264 = vunpack.c.l.s4 1966171168
    %v3265 = vunpack.c.0.s8 %v3264
    %v3266 = vlaneseq
    %v3267 = vshrl.u32 %v3266, 7
    %v3268 = vsub.s32 %v3265, %v3267
    %v3269 = vrot.slane %v3261, %v3268
    %v3271 = vunpack.c.l.s4 1966171168
    %v3272 = vunpack.c.0.s8 %v3271
    %v3273 = vlaneseq
    %v3274 = vshrl.u32 %v3273, 7
    %v3275 = vsub.s32 %v3272, %v3274
    %v3276 = vrot.slane %v3262, %v3275
    %v3277 = vcombine.low %v3269, %v3276
    %v3278 = vcombine.high %v3269, %v3276
    %v3280 = vunpack.c.l.s4 1966171168
    %v3281 = vunpack.c.0.s8 %v3280
    %v3282 = vlaneseq
    %v3283 = vshrl.u32 %v3282, 7
    %v3284 = vsub.s32 %v3281, %v3283
    %v3285 = vrot.slane %v3277, %v3284
    %v3287 = vunpack.c.l.s4 1966171168
    %v3288 = vunpack.c.0.s8 %v3287
    %v3289 = vlaneseq
    %v3290 = vshrl.u32 %v3289, 7
    %v3291 = vsub.s32 %v3288, %v3290
    %v3292 = vrot.slane %v3278, %v3291
    %v3295 = vadd.f32 %v3049, %v3285
    %v3296 = vadd.f32 %v3050, %v3292
    %v3297 = vxor.u32 %v3295, 2147483648
    %v3298 = vxor.u32 %v3296, 2147483648
    %v3299 = vmul.f32 %v3297, 1.442695
    %v3300 = vpow.pop %v3299
    %v3301 = vmul.f32 %v3298, 1.442695
    %v3302 = vpow.pop %v3301
    %v3303 = vadd.f32 %v3300, 1.0
    %v3304 = vadd.f32 %v3302, 1.0
    %v3305 = vrcp.pop %v3303
    %v3306 = vmul.f32 1.0, %v3305
    %v3307 = vrcp.pop %v3304
    %v3308 = vmul.f32 1.0, %v3307
    %v3311 = vrot.slane %v3295, 3
    %v3312 = vrot.slane %v3296, 3
    %v3315 = vtanh.pop %v3311
    %v3316 = vtanh.pop %v3312
    %v3319 = vrot.slane %v3306, 1
    %v3320 = vrot.slane %v3308, 1
    %v3323 = vmul.f32 %v3319, 0.0
    %v3324 = vmul.f32 %v3320, 0.0
    %v3325 = vmul.f32 %v3306, %v3315
    %v3326 = vmul.f32 %v3308, %v3316
    %v3327 = vadd.f32 %v3323, %v3325
    %v3328 = vadd.f32 %v3324, %v3326
    %v3329 = vtanh.pop %v3327
    %v3330 = vtanh.pop %v3328
    %v3331 = vrot.slane %v3306, 2
    %v3332 = vrot.slane %v3308, 2
    %v3335 = vmul.f32 %v3331, %v3329
    %v3336 = vmul.f32 %v3332, %v3330
    %3337 = vst [vmem:[#allocation3] sm:$0x1] %v3335
    %3338 = vst [vmem:[#allocation3 + $0x8] sm:$0x1] %v3336
    %v3339 = vld [vmem:[%s629] ss:$8 sm:$0xf]
    %v3340 = vld [vmem:[%s631] ss:$8 sm:$0xf]
    %v3341 = vld [vmem:[#allocation10] sm:$0xff]
    %v3342 = vld [vmem:[#allocation10 + $0x8] sm:$0xff]
    %v3343 = vld [vmem:[#allocation10 + $0x10] sm:$0xff]
    %v3344 = vld [vmem:[#allocation10 + $0x18] sm:$0xff]
    %v3345 = vld [vmem:[#allocation10 + $0x20] sm:$0xff]
    %v3346 = vld [vmem:[#allocation10 + $0x28] sm:$0xff]
    %v3347 = vld [vmem:[#allocation10 + $0x30] sm:$0xff]
    %v3348 = vld [vmem:[#allocation10 + $0x38] sm:$0xff]
    %v3349 = vld [vmem:[#allocation10 + $0x40] sm:$0xff]
    %v3350 = vld [vmem:[#allocation10 + $0x48] sm:$0xff]
    %v3351 = vld [vmem:[#allocation10 + $0x50] sm:$0xff]
    %v3352 = vld [vmem:[#allocation10 + $0x58] sm:$0xff]
    %v3353 = vld [vmem:[#allocation10 + $0x60] sm:$0xff]
    %v3354 = vld [vmem:[#allocation10 + $0x68] sm:$0xff]
    %v3355 = vld [vmem:[#allocation10 + $0x70] sm:$0xff]
    %v3356 = vld [vmem:[#allocation10 + $0x78] sm:$0xff]
    %v3357 = vld [vmem:[#allocation10 + $0x80] sm:$0xff]
    %v3358 = vld [vmem:[#allocation10 + $0x88] sm:$0xff]
    %v3359 = vld [vmem:[#allocation10 + $0x90] sm:$0xff]
    %v3360 = vld [vmem:[#allocation10 + $0x98] sm:$0xff]
    %v3361 = vld [vmem:[#allocation10 + $0xa0] sm:$0xff]
    %v3362 = vld [vmem:[#allocation10 + $0xa8] sm:$0xff]
    %v3363 = vld [vmem:[#allocation10 + $0xb0] sm:$0xff]
    %v3364 = vld [vmem:[#allocation10 + $0xb8] sm:$0xff]
    %v3365 = vld [vmem:[#allocation10 + $0xc0] sm:$0xff]
    %v3366 = vld [vmem:[#allocation10 + $0xc8] sm:$0xff]
    %v3367 = vld [vmem:[#allocation10 + $0xd0] sm:$0xff]
    %v3368 = vld [vmem:[#allocation10 + $0xd8] sm:$0xff]
    %v3369 = vld [vmem:[#allocation10 + $0xe0] sm:$0xff]
    %v3370 = vld [vmem:[#allocation10 + $0xe8] sm:$0xff]
    %v3371 = vld [vmem:[#allocation10 + $0xf0] sm:$0xff]
    %v3372 = vld [vmem:[#allocation10 + $0xf8] sm:$0xff]
    %v3373 = vld [vmem:[#allocation10 + $0x100] sm:$0xff]
    %v3374 = vld [vmem:[#allocation10 + $0x108] sm:$0xff]
    %v3375 = vld [vmem:[#allocation10 + $0x110] sm:$0xff]
    %v3376 = vld [vmem:[#allocation10 + $0x118] sm:$0xff]
    %v3377 = vld [vmem:[#allocation10 + $0x120] sm:$0xff]
    %v3378 = vld [vmem:[#allocation10 + $0x128] sm:$0xff]
    %v3379 = vld [vmem:[#allocation10 + $0x130] sm:$0xff]
    %v3380 = vld [vmem:[#allocation10 + $0x138] sm:$0xff]
    %v3381 = vld [vmem:[#allocation10 + $0x140] sm:$0xff]
    %v3382 = vld [vmem:[#allocation10 + $0x148] sm:$0xff]
    %v3383 = vld [vmem:[#allocation10 + $0x150] sm:$0xff]
    %v3384 = vld [vmem:[#allocation10 + $0x158] sm:$0xff]
    %v3385 = vld [vmem:[#allocation10 + $0x160] sm:$0xff]
    %v3386 = vld [vmem:[#allocation10 + $0x168] sm:$0xff]
    %v3387 = vld [vmem:[#allocation10 + $0x170] sm:$0xff]
    %v3388 = vld [vmem:[#allocation10 + $0x178] sm:$0xff]
    %v3389 = vld [vmem:[#allocation10 + $0x180] sm:$0xff]
    %v3390 = vld [vmem:[#allocation10 + $0x188] sm:$0xff]
    %v3391 = vld [vmem:[#allocation10 + $0x190] sm:$0xff]
    %v3392 = vld [vmem:[#allocation10 + $0x198] sm:$0xff]
    %v3393 = vld [vmem:[#allocation10 + $0x1a0] sm:$0xff]
    %v3394 = vld [vmem:[#allocation10 + $0x1a8] sm:$0xff]
    %v3395 = vld [vmem:[#allocation10 + $0x1b0] sm:$0xff]
    %v3396 = vld [vmem:[#allocation10 + $0x1b8] sm:$0xff]
    %v3397 = vld [vmem:[#allocation10 + $0x1c0] sm:$0xff]
    %v3398 = vld [vmem:[#allocation10 + $0x1c8] sm:$0xff]
    %v3399 = vld [vmem:[#allocation10 + $0x1d0] sm:$0xff]
    %v3400 = vld [vmem:[#allocation10 + $0x1d8] sm:$0xff]
    %v3401 = vld [vmem:[#allocation10 + $0x1e0] sm:$0xff]
    %v3402 = vld [vmem:[#allocation10 + $0x1e8] sm:$0xff]
    %v3403 = vld [vmem:[#allocation10 + $0x1f0] sm:$0xff]
    %v3404 = vld [vmem:[#allocation10 + $0x1f8] sm:$0xff]
    %v3407 = vcombine.low %v3335, %v3336
    %v3409 = vunpack.c.l.s4 1966171168
    %v3410 = vunpack.c.0.s8 %v3409
    %v3411 = vlaneseq
    %v3412 = vshrl.u32 %v3411, 7
    %v3413 = vsub.s32 %v3410, %v3412
    %v3414 = vrot.slane %v3407, %v3413
    %v3416 = vunpack.c.l.s4 1966171168
    %v3417 = vunpack.c.0.s8 %v3416
    %v3418 = vlaneseq
    %v3419 = vshrl.u32 %v3418, 7
    %v3420 = vsub.s32 %v3417, %v3419
    %v3421 = vrot.slane %v3414, %v3420
    %3423 = vmatprep.subr.mxu0 %v3402
    %3424 = vmatpush1.msra.mxu0 %v3401
    %3425 = vmatprep.subr.mxu0 %v3398
    %3426 = vmatpush1.msra.mxu0 %v3397
    %3427 = vmatprep.subr.mxu0 %v3394
    %3428 = vmatpush1.msra.mxu0 %v3393
    %3429 = vmatprep.subr.mxu0 %v3390
    %3430 = vmatpush1.msra.mxu0 %v3389
    %3431 = vmatprep.subr.mxu0 %v3386
    %3432 = vmatpush1.msra.mxu0 %v3385
    %3433 = vmatprep.subr.mxu0 %v3382
    %3434 = vmatpush1.msra.mxu0 %v3381
    %3435 = vmatprep.subr.mxu0 %v3378
    %3436 = vmatpush1.msra.mxu0 %v3377
    %3437 = vmatprep.subr.mxu0 %v3374
    %3438 = vmatpush1.msra.mxu0 %v3373
    %3439 = vmatprep.subr.mxu0 %v3370
    %3440 = vmatpush1.msra.mxu0 %v3369
    %3441 = vmatprep.subr.mxu0 %v3366
    %3442 = vmatpush1.msra.mxu0 %v3365
    %3443 = vmatprep.subr.mxu0 %v3362
    %3444 = vmatpush1.msra.mxu0 %v3361
    %3445 = vmatprep.subr.mxu0 %v3358
    %3446 = vmatpush1.msra.mxu0 %v3357
    %3447 = vmatprep.subr.mxu0 %v3354
    %3448 = vmatpush1.msra.mxu0 %v3353
    %3449 = vmatprep.subr.mxu0 %v3350
    %3450 = vmatpush1.msra.mxu0 %v3349
    %3451 = vmatprep.subr.mxu0 %v3346
    %3452 = vmatpush1.msra.mxu0 %v3345
    %3453 = vmatprep.subr.mxu0 %v3342
    %3454 = vmatpush1.msra.mxu0 %v3341
    %3455 = vmatprep.subr.mxu0 0.0
    %3456 = vmatpush2.msra.mxu0 0.0
    %3457 = vmatprep.subr.mxu0 0.0
    %3458 = vmatpush2.msra.mxu0 0.0
    %3459 = vmatprep.subr.mxu0 0.0
    %3460 = vmatpush2.msra.mxu0 0.0
    %3461 = vmatprep.subr.mxu0 0.0
    %3462 = vmatpush2.msra.mxu0 0.0
    %3463 = vmatprep.subr.mxu0 0.0
    %3464 = vmatpush2.msra.mxu0 0.0
    %3465 = vmatprep.subr.mxu0 0.0
    %3466 = vmatpush2.msra.mxu0 0.0
    %3467 = vmatprep.subr.mxu0 0.0
    %3468 = vmatpush2.msra.mxu0 0.0
    %3469 = vmatprep.subr.mxu0 0.0
    %3470 = vmatpush2.msra.mxu0 0.0
    %3471 = vmatprep.subr.mxu0 0.0
    %3472 = vmatpush2.msra.mxu0 0.0
    %3473 = vmatprep.subr.mxu0 0.0
    %3474 = vmatpush2.msra.mxu0 0.0
    %3475 = vmatprep.subr.mxu0 0.0
    %3476 = vmatpush2.msra.mxu0 0.0
    %3477 = vmatprep.subr.mxu0 0.0
    %3478 = vmatpush2.msra.mxu0 0.0
    %3479 = vmatprep.subr.mxu0 0.0
    %3480 = vmatpush2.msra.mxu0 0.0
    %3481 = vmatprep.subr.mxu0 0.0
    %3482 = vmatpush2.msra.mxu0 0.0
    %3483 = vmatprep.subr.mxu0 0.0
    %3484 = vmatpush2.msra.mxu0 0.0
    %3485 = vmatprep.subr.mxu0 0.0
    %3486 = vmatpush2.msra.mxu0 0.0
    %3487 = vmatprep.mubr.f32.mxu0 0.0
    %3488 = vmatmul.mubr.f32.gmra.mxu0 %v3421
    %v3489 = vpop.f32.mrf.mxu0
    %v3490 = vadd.f32 0.0, %v3489
    %v3491 = vpop.f32.mrf.mxu0
    %v3492 = vadd.f32 0.0, %v3491
    %3493 = vdwg.mxu0
    %3494 = vmatprep.subr.mxu0 %v3404
    %3495 = vmatpush1.msra.mxu0 %v3403
    %3496 = vmatprep.subr.mxu0 %v3400
    %3497 = vmatpush1.msra.mxu0 %v3399
    %3498 = vmatprep.subr.mxu0 %v3396
    %3499 = vmatpush1.msra.mxu0 %v3395
    %3500 = vmatprep.subr.mxu0 %v3392
    %3501 = vmatpush1.msra.mxu0 %v3391
    %3502 = vmatprep.subr.mxu0 %v3388
    %3503 = vmatpush1.msra.mxu0 %v3387
    %3504 = vmatprep.subr.mxu0 %v3384
    %3505 = vmatpush1.msra.mxu0 %v3383
    %3506 = vmatprep.subr.mxu0 %v3380
    %3507 = vmatpush1.msra.mxu0 %v3379
    %3508 = vmatprep.subr.mxu0 %v3376
    %3509 = vmatpush1.msra.mxu0 %v3375
    %3510 = vmatprep.subr.mxu0 %v3372
    %3511 = vmatpush1.msra.mxu0 %v3371
    %3512 = vmatprep.subr.mxu0 %v3368
    %3513 = vmatpush1.msra.mxu0 %v3367
    %3514 = vmatprep.subr.mxu0 %v3364
    %3515 = vmatpush1.msra.mxu0 %v3363
    %3516 = vmatprep.subr.mxu0 %v3360
    %3517 = vmatpush1.msra.mxu0 %v3359
    %3518 = vmatprep.subr.mxu0 %v3356
    %3519 = vmatpush1.msra.mxu0 %v3355
    %3520 = vmatprep.subr.mxu0 %v3352
    %3521 = vmatpush1.msra.mxu0 %v3351
    %3522 = vmatprep.subr.mxu0 %v3348
    %3523 = vmatpush1.msra.mxu0 %v3347
    %3524 = vmatprep.subr.mxu0 %v3344
    %3525 = vmatpush1.msra.mxu0 %v3343
    %3526 = vmatprep.subr.mxu0 0.0
    %3527 = vmatpush2.msra.mxu0 0.0
    %3528 = vmatprep.subr.mxu0 0.0
    %3529 = vmatpush2.msra.mxu0 0.0
    %3530 = vmatprep.subr.mxu0 0.0
    %3531 = vmatpush2.msra.mxu0 0.0
    %3532 = vmatprep.subr.mxu0 0.0
    %3533 = vmatpush2.msra.mxu0 0.0
    %3534 = vmatprep.subr.mxu0 0.0
    %3535 = vmatpush2.msra.mxu0 0.0
    %3536 = vmatprep.subr.mxu0 0.0
    %3537 = vmatpush2.msra.mxu0 0.0
    %3538 = vmatprep.subr.mxu0 0.0
    %3539 = vmatpush2.msra.mxu0 0.0
    %3540 = vmatprep.subr.mxu0 0.0
    %3541 = vmatpush2.msra.mxu0 0.0
    %3542 = vmatprep.subr.mxu0 0.0
    %3543 = vmatpush2.msra.mxu0 0.0
    %3544 = vmatprep.subr.mxu0 0.0
    %3545 = vmatpush2.msra.mxu0 0.0
    %3546 = vmatprep.subr.mxu0 0.0
    %3547 = vmatpush2.msra.mxu0 0.0
    %3548 = vmatprep.subr.mxu0 0.0
    %3549 = vmatpush2.msra.mxu0 0.0
    %3550 = vmatprep.subr.mxu0 0.0
    %3551 = vmatpush2.msra.mxu0 0.0
    %3552 = vmatprep.subr.mxu0 0.0
    %3553 = vmatpush2.msra.mxu0 0.0
    %3554 = vmatprep.subr.mxu0 0.0
    %3555 = vmatpush2.msra.mxu0 0.0
    %3556 = vmatprep.subr.mxu0 0.0
    %3557 = vmatpush2.msra.mxu0 0.0
    %3558 = vmatprep.mubr.f32.mxu0 0.0
    %3559 = vmatmul.mubr.f32.gmra.mxu0 %v3421
    %v3560 = vpop.f32.mrf.mxu0
    %v3561 = vadd.f32 0.0, %v3560
    %v3562 = vpop.f32.mrf.mxu0
    %v3563 = vadd.f32 0.0, %v3562
    %3564 = vdwg.mxu0
    %v3569 = vcombine.low %v3490, %v3492
    %v3570 = vcombine.low %v3561, %v3563
    %v3572 = vunpack.c.l.s4 1966171168
    %v3573 = vunpack.c.0.s8 %v3572
    %v3574 = vlaneseq
    %v3575 = vshrl.u32 %v3574, 7
    %v3576 = vsub.s32 %v3573, %v3575
    %v3577 = vrot.slane %v3569, %v3576
    %v3579 = vunpack.c.l.s4 1966171168
    %v3580 = vunpack.c.0.s8 %v3579
    %v3581 = vlaneseq
    %v3582 = vshrl.u32 %v3581, 7
    %v3583 = vsub.s32 %v3580, %v3582
    %v3584 = vrot.slane %v3570, %v3583
    %v3585 = vcombine.low %v3577, %v3584
    %v3586 = vcombine.high %v3577, %v3584
    %v3588 = vunpack.c.l.s4 1966171168
    %v3589 = vunpack.c.0.s8 %v3588
    %v3590 = vlaneseq
    %v3591 = vshrl.u32 %v3590, 7
    %v3592 = vsub.s32 %v3589, %v3591
    %v3593 = vrot.slane %v3585, %v3592
    %v3595 = vunpack.c.l.s4 1966171168
    %v3596 = vunpack.c.0.s8 %v3595
    %v3597 = vlaneseq
    %v3598 = vshrl.u32 %v3597, 7
    %v3599 = vsub.s32 %v3596, %v3598
    %v3600 = vrot.slane %v3586, %v3599
    %v3603 = vadd.f32 %v3339, %v3593
    %v3604 = vadd.f32 %v3340, %v3600
    %v3605 = vxor.u32 %v3603, 2147483648
    %v3606 = vxor.u32 %v3604, 2147483648
    %v3607 = vmul.f32 %v3605, 1.442695
    %v3608 = vpow.pop %v3607
    %v3609 = vmul.f32 %v3606, 1.442695
    %v3610 = vpow.pop %v3609
    %v3611 = vadd.f32 %v3608, 1.0
    %v3612 = vadd.f32 %v3610, 1.0
    %v3613 = vrcp.pop %v3611
    %v3614 = vmul.f32 1.0, %v3613
    %v3615 = vrcp.pop %v3612
    %v3616 = vmul.f32 1.0, %v3615
    %v3619 = vrot.slane %v3603, 3
    %v3620 = vrot.slane %v3604, 3
    %v3623 = vtanh.pop %v3619
    %v3624 = vtanh.pop %v3620
    %v3627 = vrot.slane %v3614, 1
    %v3628 = vrot.slane %v3616, 1
    %v3631 = vmul.f32 %v3627, %v3327
    %v3632 = vmul.f32 %v3628, %v3328
    %v3633 = vmul.f32 %v3614, %v3623
    %v3634 = vmul.f32 %v3616, %v3624
    %v3635 = vadd.f32 %v3631, %v3633
    %v3636 = vadd.f32 %v3632, %v3634
    %v3637 = vtanh.pop %v3635
    %v3638 = vtanh.pop %v3636
    %v3639 = vrot.slane %v3614, 2
    %v3640 = vrot.slane %v3616, 2
    %v3643 = vmul.f32 %v3639, %v3637
    %v3644 = vmul.f32 %v3640, %v3638
    %3645 = vst [vmem:[#allocation3 + $0x1] sm:$0x1] %v3643
    %3646 = vst [vmem:[#allocation3 + $0x9] sm:$0x1] %v3644
    %v3647 = vld [vmem:[%s939] ss:$8 sm:$0xf]
    %v3648 = vld [vmem:[%s941] ss:$8 sm:$0xf]
    %v3649 = vld [vmem:[#allocation10] sm:$0xff]
    %v3650 = vld [vmem:[#allocation10 + $0x8] sm:$0xff]
    %v3651 = vld [vmem:[#allocation10 + $0x10] sm:$0xff]
    %v3652 = vld [vmem:[#allocation10 + $0x18] sm:$0xff]
    %v3653 = vld [vmem:[#allocation10 + $0x20] sm:$0xff]
    %v3654 = vld [vmem:[#allocation10 + $0x28] sm:$0xff]
    %v3655 = vld [vmem:[#allocation10 + $0x30] sm:$0xff]
    %v3656 = vld [vmem:[#allocation10 + $0x38] sm:$0xff]
    %v3657 = vld [vmem:[#allocation10 + $0x40] sm:$0xff]
    %v3658 = vld [vmem:[#allocation10 + $0x48] sm:$0xff]
    %v3659 = vld [vmem:[#allocation10 + $0x50] sm:$0xff]
    %v3660 = vld [vmem:[#allocation10 + $0x58] sm:$0xff]
    %v3661 = vld [vmem:[#allocation10 + $0x60] sm:$0xff]
    %v3662 = vld [vmem:[#allocation10 + $0x68] sm:$0xff]
    %v3663 = vld [vmem:[#allocation10 + $0x70] sm:$0xff]
    %v3664 = vld [vmem:[#allocation10 + $0x78] sm:$0xff]
    %v3665 = vld [vmem:[#allocation10 + $0x80] sm:$0xff]
    %v3666 = vld [vmem:[#allocation10 + $0x88] sm:$0xff]
    %v3667 = vld [vmem:[#allocation10 + $0x90] sm:$0xff]
    %v3668 = vld [vmem:[#allocation10 + $0x98] sm:$0xff]
    %v3669 = vld [vmem:[#allocation10 + $0xa0] sm:$0xff]
    %v3670 = vld [vmem:[#allocation10 + $0xa8] sm:$0xff]
    %v3671 = vld [vmem:[#allocation10 + $0xb0] sm:$0xff]
    %v3672 = vld [vmem:[#allocation10 + $0xb8] sm:$0xff]
    %v3673 = vld [vmem:[#allocation10 + $0xc0] sm:$0xff]
    %v3674 = vld [vmem:[#allocation10 + $0xc8] sm:$0xff]
    %v3675 = vld [vmem:[#allocation10 + $0xd0] sm:$0xff]
    %v3676 = vld [vmem:[#allocation10 + $0xd8] sm:$0xff]
    %v3677 = vld [vmem:[#allocation10 + $0xe0] sm:$0xff]
    %v3678 = vld [vmem:[#allocation10 + $0xe8] sm:$0xff]
    %v3679 = vld [vmem:[#allocation10 + $0xf0] sm:$0xff]
    %v3680 = vld [vmem:[#allocation10 + $0xf8] sm:$0xff]
    %v3681 = vld [vmem:[#allocation10 + $0x100] sm:$0xff]
    %v3682 = vld [vmem:[#allocation10 + $0x108] sm:$0xff]
    %v3683 = vld [vmem:[#allocation10 + $0x110] sm:$0xff]
    %v3684 = vld [vmem:[#allocation10 + $0x118] sm:$0xff]
    %v3685 = vld [vmem:[#allocation10 + $0x120] sm:$0xff]
    %v3686 = vld [vmem:[#allocation10 + $0x128] sm:$0xff]
    %v3687 = vld [vmem:[#allocation10 + $0x130] sm:$0xff]
    %v3688 = vld [vmem:[#allocation10 + $0x138] sm:$0xff]
    %v3689 = vld [vmem:[#allocation10 + $0x140] sm:$0xff]
    %v3690 = vld [vmem:[#allocation10 + $0x148] sm:$0xff]
    %v3691 = vld [vmem:[#allocation10 + $0x150] sm:$0xff]
    %v3692 = vld [vmem:[#allocation10 + $0x158] sm:$0xff]
    %v3693 = vld [vmem:[#allocation10 + $0x160] sm:$0xff]
    %v3694 = vld [vmem:[#allocation10 + $0x168] sm:$0xff]
    %v3695 = vld [vmem:[#allocation10 + $0x170] sm:$0xff]
    %v3696 = vld [vmem:[#allocation10 + $0x178] sm:$0xff]
    %v3697 = vld [vmem:[#allocation10 + $0x180] sm:$0xff]
    %v3698 = vld [vmem:[#allocation10 + $0x188] sm:$0xff]
    %v3699 = vld [vmem:[#allocation10 + $0x190] sm:$0xff]
    %v3700 = vld [vmem:[#allocation10 + $0x198] sm:$0xff]
    %v3701 = vld [vmem:[#allocation10 + $0x1a0] sm:$0xff]
    %v3702 = vld [vmem:[#allocation10 + $0x1a8] sm:$0xff]
    %v3703 = vld [vmem:[#allocation10 + $0x1b0] sm:$0xff]
    %v3704 = vld [vmem:[#allocation10 + $0x1b8] sm:$0xff]
    %v3705 = vld [vmem:[#allocation10 + $0x1c0] sm:$0xff]
    %v3706 = vld [vmem:[#allocation10 + $0x1c8] sm:$0xff]
    %v3707 = vld [vmem:[#allocation10 + $0x1d0] sm:$0xff]
    %v3708 = vld [vmem:[#allocation10 + $0x1d8] sm:$0xff]
    %v3709 = vld [vmem:[#allocation10 + $0x1e0] sm:$0xff]
    %v3710 = vld [vmem:[#allocation10 + $0x1e8] sm:$0xff]
    %v3711 = vld [vmem:[#allocation10 + $0x1f0] sm:$0xff]
    %v3712 = vld [vmem:[#allocation10 + $0x1f8] sm:$0xff]
    %v3715 = vcombine.low %v3643, %v3644
    %v3717 = vunpack.c.l.s4 1966171168
    %v3718 = vunpack.c.0.s8 %v3717
    %v3719 = vlaneseq
    %v3720 = vshrl.u32 %v3719, 7
    %v3721 = vsub.s32 %v3718, %v3720
    %v3722 = vrot.slane %v3715, %v3721
    %v3724 = vunpack.c.l.s4 1966171168
    %v3725 = vunpack.c.0.s8 %v3724
    %v3726 = vlaneseq
    %v3727 = vshrl.u32 %v3726, 7
    %v3728 = vsub.s32 %v3725, %v3727
    %v3729 = vrot.slane %v3722, %v3728
    %3731 = vmatprep.subr.mxu0 %v3710
    %3732 = vmatpush1.msra.mxu0 %v3709
    %3733 = vmatprep.subr.mxu0 %v3706
    %3734 = vmatpush1.msra.mxu0 %v3705
    %3735 = vmatprep.subr.mxu0 %v3702
    %3736 = vmatpush1.msra.mxu0 %v3701
    %3737 = vmatprep.subr.mxu0 %v3698
    %3738 = vmatpush1.msra.mxu0 %v3697
    %3739 = vmatprep.subr.mxu0 %v3694
    %3740 = vmatpush1.msra.mxu0 %v3693
    %3741 = vmatprep.subr.mxu0 %v3690
    %3742 = vmatpush1.msra.mxu0 %v3689
    %3743 = vmatprep.subr.mxu0 %v3686
    %3744 = vmatpush1.msra.mxu0 %v3685
    %3745 = vmatprep.subr.mxu0 %v3682
    %3746 = vmatpush1.msra.mxu0 %v3681
    %3747 = vmatprep.subr.mxu0 %v3678
    %3748 = vmatpush1.msra.mxu0 %v3677
    %3749 = vmatprep.subr.mxu0 %v3674
    %3750 = vmatpush1.msra.mxu0 %v3673
    %3751 = vmatprep.subr.mxu0 %v3670
    %3752 = vmatpush1.msra.mxu0 %v3669
    %3753 = vmatprep.subr.mxu0 %v3666
    %3754 = vmatpush1.msra.mxu0 %v3665
    %3755 = vmatprep.subr.mxu0 %v3662
    %3756 = vmatpush1.msra.mxu0 %v3661
    %3757 = vmatprep.subr.mxu0 %v3658
    %3758 = vmatpush1.msra.mxu0 %v3657
    %3759 = vmatprep.subr.mxu0 %v3654
    %3760 = vmatpush1.msra.mxu0 %v3653
    %3761 = vmatprep.subr.mxu0 %v3650
    %3762 = vmatpush1.msra.mxu0 %v3649
    %3763 = vmatprep.subr.mxu0 0.0
    %3764 = vmatpush2.msra.mxu0 0.0
    %3765 = vmatprep.subr.mxu0 0.0
    %3766 = vmatpush2.msra.mxu0 0.0
    %3767 = vmatprep.subr.mxu0 0.0
    %3768 = vmatpush2.msra.mxu0 0.0
    %3769 = vmatprep.subr.mxu0 0.0
    %3770 = vmatpush2.msra.mxu0 0.0
    %3771 = vmatprep.subr.mxu0 0.0
    %3772 = vmatpush2.msra.mxu0 0.0
    %3773 = vmatprep.subr.mxu0 0.0
    %3774 = vmatpush2.msra.mxu0 0.0
    %3775 = vmatprep.subr.mxu0 0.0
    %3776 = vmatpush2.msra.mxu0 0.0
    %3777 = vmatprep.subr.mxu0 0.0
    %3778 = vmatpush2.msra.mxu0 0.0
    %3779 = vmatprep.subr.mxu0 0.0
    %3780 = vmatpush2.msra.mxu0 0.0
    %3781 = vmatprep.subr.mxu0 0.0
    %3782 = vmatpush2.msra.mxu0 0.0
    %3783 = vmatprep.subr.mxu0 0.0
    %3784 = vmatpush2.msra.mxu0 0.0
    %3785 = vmatprep.subr.mxu0 0.0
    %3786 = vmatpush2.msra.mxu0 0.0
    %3787 = vmatprep.subr.mxu0 0.0
    %3788 = vmatpush2.msra.mxu0 0.0
    %3789 = vmatprep.subr.mxu0 0.0
    %3790 = vmatpush2.msra.mxu0 0.0
    %3791 = vmatprep.subr.mxu0 0.0
    %3792 = vmatpush2.msra.mxu0 0.0
    %3793 = vmatprep.subr.mxu0 0.0
    %3794 = vmatpush2.msra.mxu0 0.0
    %3795 = vmatprep.mubr.f32.mxu0 0.0
    %3796 = vmatmul.mubr.f32.gmra.mxu0 %v3729
    %v3797 = vpop.f32.mrf.mxu0
    %v3798 = vadd.f32 0.0, %v3797
    %v3799 = vpop.f32.mrf.mxu0
    %v3800 = vadd.f32 0.0, %v3799
    %3801 = vdwg.mxu0
    %3802 = vmatprep.subr.mxu0 %v3712
    %3803 = vmatpush1.msra.mxu0 %v3711
    %3804 = vmatprep.subr.mxu0 %v3708
    %3805 = vmatpush1.msra.mxu0 %v3707
    %3806 = vmatprep.subr.mxu0 %v3704
    %3807 = vmatpush1.msra.mxu0 %v3703
    %3808 = vmatprep.subr.mxu0 %v3700
    %3809 = vmatpush1.msra.mxu0 %v3699
    %3810 = vmatprep.subr.mxu0 %v3696
    %3811 = vmatpush1.msra.mxu0 %v3695
    %3812 = vmatprep.subr.mxu0 %v3692
    %3813 = vmatpush1.msra.mxu0 %v3691
    %3814 = vmatprep.subr.mxu0 %v3688
    %3815 = vmatpush1.msra.mxu0 %v3687
    %3816 = vmatprep.subr.mxu0 %v3684
    %3817 = vmatpush1.msra.mxu0 %v3683
    %3818 = vmatprep.subr.mxu0 %v3680
    %3819 = vmatpush1.msra.mxu0 %v3679
    %3820 = vmatprep.subr.mxu0 %v3676
    %3821 = vmatpush1.msra.mxu0 %v3675
    %3822 = vmatprep.subr.mxu0 %v3672
    %3823 = vmatpush1.msra.mxu0 %v3671
    %3824 = vmatprep.subr.mxu0 %v3668
    %3825 = vmatpush1.msra.mxu0 %v3667
    %3826 = vmatprep.subr.mxu0 %v3664
    %3827 = vmatpush1.msra.mxu0 %v3663
    %3828 = vmatprep.subr.mxu0 %v3660
    %3829 = vmatpush1.msra.mxu0 %v3659
    %3830 = vmatprep.subr.mxu0 %v3656
    %3831 = vmatpush1.msra.mxu0 %v3655
    %3832 = vmatprep.subr.mxu0 %v3652
    %3833 = vmatpush1.msra.mxu0 %v3651
    %3834 = vmatprep.subr.mxu0 0.0
    %3835 = vmatpush2.msra.mxu0 0.0
    %3836 = vmatprep.subr.mxu0 0.0
    %3837 = vmatpush2.msra.mxu0 0.0
    %3838 = vmatprep.subr.mxu0 0.0
    %3839 = vmatpush2.msra.mxu0 0.0
    %3840 = vmatprep.subr.mxu0 0.0
    %3841 = vmatpush2.msra.mxu0 0.0
    %3842 = vmatprep.subr.mxu0 0.0
    %3843 = vmatpush2.msra.mxu0 0.0
    %3844 = vmatprep.subr.mxu0 0.0
    %3845 = vmatpush2.msra.mxu0 0.0
    %3846 = vmatprep.subr.mxu0 0.0
    %3847 = vmatpush2.msra.mxu0 0.0
    %3848 = vmatprep.subr.mxu0 0.0
    %3849 = vmatpush2.msra.mxu0 0.0
    %3850 = vmatprep.subr.mxu0 0.0
    %3851 = vmatpush2.msra.mxu0 0.0
    %3852 = vmatprep.subr.mxu0 0.0
    %3853 = vmatpush2.msra.mxu0 0.0
    %3854 = vmatprep.subr.mxu0 0.0
    %3855 = vmatpush2.msra.mxu0 0.0
    %3856 = vmatprep.subr.mxu0 0.0
    %3857 = vmatpush2.msra.mxu0 0.0
    %3858 = vmatprep.subr.mxu0 0.0
    %3859 = vmatpush2.msra.mxu0 0.0
    %3860 = vmatprep.subr.mxu0 0.0
    %3861 = vmatpush2.msra.mxu0 0.0
    %3862 = vmatprep.subr.mxu0 0.0
    %3863 = vmatpush2.msra.mxu0 0.0
    %3864 = vmatprep.subr.mxu0 0.0
    %3865 = vmatpush2.msra.mxu0 0.0
    %3866 = vmatprep.mubr.f32.mxu0 0.0
    %3867 = vmatmul.mubr.f32.gmra.mxu0 %v3729
    %v3868 = vpop.f32.mrf.mxu0
    %v3869 = vadd.f32 0.0, %v3868
    %v3870 = vpop.f32.mrf.mxu0
    %v3871 = vadd.f32 0.0, %v3870
    %3872 = vdwg.mxu0
    %v3877 = vcombine.low %v3798, %v3800
    %v3878 = vcombine.low %v3869, %v3871
    %v3880 = vunpack.c.l.s4 1966171168
    %v3881 = vunpack.c.0.s8 %v3880
    %v3882 = vlaneseq
    %v3883 = vshrl.u32 %v3882, 7
    %v3884 = vsub.s32 %v3881, %v3883
    %v3885 = vrot.slane %v3877, %v3884
    %v3887 = vunpack.c.l.s4 1966171168
    %v3888 = vunpack.c.0.s8 %v3887
    %v3889 = vlaneseq
    %v3890 = vshrl.u32 %v3889, 7
    %v3891 = vsub.s32 %v3888, %v3890
    %v3892 = vrot.slane %v3878, %v3891
    %v3893 = vcombine.low %v3885, %v3892
    %v3894 = vcombine.high %v3885, %v3892
    %v3896 = vunpack.c.l.s4 1966171168
    %v3897 = vunpack.c.0.s8 %v3896
    %v3898 = vlaneseq
    %v3899 = vshrl.u32 %v3898, 7
    %v3900 = vsub.s32 %v3897, %v3899
    %v3901 = vrot.slane %v3893, %v3900
    %v3903 = vunpack.c.l.s4 1966171168
    %v3904 = vunpack.c.0.s8 %v3903
    %v3905 = vlaneseq
    %v3906 = vshrl.u32 %v3905, 7
    %v3907 = vsub.s32 %v3904, %v3906
    %v3908 = vrot.slane %v3894, %v3907
    %v3911 = vadd.f32 %v3647, %v3901
    %v3912 = vadd.f32 %v3648, %v3908
    %v3913 = vxor.u32 %v3911, 2147483648
    %v3914 = vxor.u32 %v3912, 2147483648
    %v3915 = vmul.f32 %v3913, 1.442695
    %v3916 = vpow.pop %v3915
    %v3917 = vmul.f32 %v3914, 1.442695
    %v3918 = vpow.pop %v3917
    %v3919 = vadd.f32 %v3916, 1.0
    %v3920 = vadd.f32 %v3918, 1.0
    %v3921 = vrcp.pop %v3919
    %v3922 = vmul.f32 1.0, %v3921
    %v3923 = vrcp.pop %v3920
    %v3924 = vmul.f32 1.0, %v3923
    %v3927 = vrot.slane %v3911, 3
    %v3928 = vrot.slane %v3912, 3
    %v3931 = vtanh.pop %v3927
    %v3932 = vtanh.pop %v3928
    %v3935 = vrot.slane %v3922, 1
    %v3936 = vrot.slane %v3924, 1
    %v3939 = vmul.f32 %v3935, %v3635
    %v3940 = vmul.f32 %v3936, %v3636
    %v3941 = vmul.f32 %v3922, %v3931
    %v3942 = vmul.f32 %v3924, %v3932
    %v3943 = vadd.f32 %v3939, %v3941
    %v3944 = vadd.f32 %v3940, %v3942
    %v3945 = vtanh.pop %v3943
    %v3946 = vtanh.pop %v3944
    %v3947 = vrot.slane %v3922, 2
    %v3948 = vrot.slane %v3924, 2
    %v3951 = vmul.f32 %v3947, %v3945
    %v3952 = vmul.f32 %v3948, %v3946
    %3953 = vst [vmem:[#allocation3 + $0x2] sm:$0x1] %v3951
    %3954 = vst [vmem:[#allocation3 + $0xa] sm:$0x1] %v3952
    %v3955 = vld [vmem:[%s1249] ss:$8 sm:$0xf]
    %v3956 = vld [vmem:[%s1251] ss:$8 sm:$0xf]
    %v3957 = vld [vmem:[#allocation10] sm:$0xff]
    %v3958 = vld [vmem:[#allocation10 + $0x8] sm:$0xff]
    %v3959 = vld [vmem:[#allocation10 + $0x10] sm:$0xff]
    %v3960 = vld [vmem:[#allocation10 + $0x18] sm:$0xff]
    %v3961 = vld [vmem:[#allocation10 + $0x20] sm:$0xff]
    %v3962 = vld [vmem:[#allocation10 + $0x28] sm:$0xff]
    %v3963 = vld [vmem:[#allocation10 + $0x30] sm:$0xff]
    %v3964 = vld [vmem:[#allocation10 + $0x38] sm:$0xff]
    %v3965 = vld [vmem:[#allocation10 + $0x40] sm:$0xff]
    %v3966 = vld [vmem:[#allocation10 + $0x48] sm:$0xff]
    %v3967 = vld [vmem:[#allocation10 + $0x50] sm:$0xff]
    %v3968 = vld [vmem:[#allocation10 + $0x58] sm:$0xff]
    %v3969 = vld [vmem:[#allocation10 + $0x60] sm:$0xff]
    %v3970 = vld [vmem:[#allocation10 + $0x68] sm:$0xff]
    %v3971 = vld [vmem:[#allocation10 + $0x70] sm:$0xff]
    %v3972 = vld [vmem:[#allocation10 + $0x78] sm:$0xff]
    %v3973 = vld [vmem:[#allocation10 + $0x80] sm:$0xff]
    %v3974 = vld [vmem:[#allocation10 + $0x88] sm:$0xff]
    %v3975 = vld [vmem:[#allocation10 + $0x90] sm:$0xff]
    %v3976 = vld [vmem:[#allocation10 + $0x98] sm:$0xff]
    %v3977 = vld [vmem:[#allocation10 + $0xa0] sm:$0xff]
    %v3978 = vld [vmem:[#allocation10 + $0xa8] sm:$0xff]
    %v3979 = vld [vmem:[#allocation10 + $0xb0] sm:$0xff]
    %v3980 = vld [vmem:[#allocation10 + $0xb8] sm:$0xff]
    %v3981 = vld [vmem:[#allocation10 + $0xc0] sm:$0xff]
    %v3982 = vld [vmem:[#allocation10 + $0xc8] sm:$0xff]
    %v3983 = vld [vmem:[#allocation10 + $0xd0] sm:$0xff]
    %v3984 = vld [vmem:[#allocation10 + $0xd8] sm:$0xff]
    %v3985 = vld [vmem:[#allocation10 + $0xe0] sm:$0xff]
    %v3986 = vld [vmem:[#allocation10 + $0xe8] sm:$0xff]
    %v3987 = vld [vmem:[#allocation10 + $0xf0] sm:$0xff]
    %v3988 = vld [vmem:[#allocation10 + $0xf8] sm:$0xff]
    %v3989 = vld [vmem:[#allocation10 + $0x100] sm:$0xff]
    %v3990 = vld [vmem:[#allocation10 + $0x108] sm:$0xff]
    %v3991 = vld [vmem:[#allocation10 + $0x110] sm:$0xff]
    %v3992 = vld [vmem:[#allocation10 + $0x118] sm:$0xff]
    %v3993 = vld [vmem:[#allocation10 + $0x120] sm:$0xff]
    %v3994 = vld [vmem:[#allocation10 + $0x128] sm:$0xff]
    %v3995 = vld [vmem:[#allocation10 + $0x130] sm:$0xff]
    %v3996 = vld [vmem:[#allocation10 + $0x138] sm:$0xff]
    %v3997 = vld [vmem:[#allocation10 + $0x140] sm:$0xff]
    %v3998 = vld [vmem:[#allocation10 + $0x148] sm:$0xff]
    %v3999 = vld [vmem:[#allocation10 + $0x150] sm:$0xff]
    %v4000 = vld [vmem:[#allocation10 + $0x158] sm:$0xff]
    %v4001 = vld [vmem:[#allocation10 + $0x160] sm:$0xff]
    %v4002 = vld [vmem:[#allocation10 + $0x168] sm:$0xff]
    %v4003 = vld [vmem:[#allocation10 + $0x170] sm:$0xff]
    %v4004 = vld [vmem:[#allocation10 + $0x178] sm:$0xff]
    %v4005 = vld [vmem:[#allocation10 + $0x180] sm:$0xff]
    %v4006 = vld [vmem:[#allocation10 + $0x188] sm:$0xff]
    %v4007 = vld [vmem:[#allocation10 + $0x190] sm:$0xff]
    %v4008 = vld [vmem:[#allocation10 + $0x198] sm:$0xff]
    %v4009 = vld [vmem:[#allocation10 + $0x1a0] sm:$0xff]
    %v4010 = vld [vmem:[#allocation10 + $0x1a8] sm:$0xff]
    %v4011 = vld [vmem:[#allocation10 + $0x1b0] sm:$0xff]
    %v4012 = vld [vmem:[#allocation10 + $0x1b8] sm:$0xff]
    %v4013 = vld [vmem:[#allocation10 + $0x1c0] sm:$0xff]
    %v4014 = vld [vmem:[#allocation10 + $0x1c8] sm:$0xff]
    %v4015 = vld [vmem:[#allocation10 + $0x1d0] sm:$0xff]
    %v4016 = vld [vmem:[#allocation10 + $0x1d8] sm:$0xff]
    %v4017 = vld [vmem:[#allocation10 + $0x1e0] sm:$0xff]
    %v4018 = vld [vmem:[#allocation10 + $0x1e8] sm:$0xff]
    %v4019 = vld [vmem:[#allocation10 + $0x1f0] sm:$0xff]
    %v4020 = vld [vmem:[#allocation10 + $0x1f8] sm:$0xff]
    %v4023 = vcombine.low %v3951, %v3952
    %v4025 = vunpack.c.l.s4 1966171168
    %v4026 = vunpack.c.0.s8 %v4025
    %v4027 = vlaneseq
    %v4028 = vshrl.u32 %v4027, 7
    %v4029 = vsub.s32 %v4026, %v4028
    %v4030 = vrot.slane %v4023, %v4029
    %v4032 = vunpack.c.l.s4 1966171168
    %v4033 = vunpack.c.0.s8 %v4032
    %v4034 = vlaneseq
    %v4035 = vshrl.u32 %v4034, 7
    %v4036 = vsub.s32 %v4033, %v4035
    %v4037 = vrot.slane %v4030, %v4036
    %4039 = vmatprep.subr.mxu0 %v4018
    %4040 = vmatpush1.msra.mxu0 %v4017
    %4041 = vmatprep.subr.mxu0 %v4014
    %4042 = vmatpush1.msra.mxu0 %v4013
    %4043 = vmatprep.subr.mxu0 %v4010
    %4044 = vmatpush1.msra.mxu0 %v4009
    %4045 = vmatprep.subr.mxu0 %v4006
    %4046 = vmatpush1.msra.mxu0 %v4005
    %4047 = vmatprep.subr.mxu0 %v4002
    %4048 = vmatpush1.msra.mxu0 %v4001
    %4049 = vmatprep.subr.mxu0 %v3998
    %4050 = vmatpush1.msra.mxu0 %v3997
    %4051 = vmatprep.subr.mxu0 %v3994
    %4052 = vmatpush1.msra.mxu0 %v3993
    %4053 = vmatprep.subr.mxu0 %v3990
    %4054 = vmatpush1.msra.mxu0 %v3989
    %4055 = vmatprep.subr.mxu0 %v3986
    %4056 = vmatpush1.msra.mxu0 %v3985
    %4057 = vmatprep.subr.mxu0 %v3982
    %4058 = vmatpush1.msra.mxu0 %v3981
    %4059 = vmatprep.subr.mxu0 %v3978
    %4060 = vmatpush1.msra.mxu0 %v3977
    %4061 = vmatprep.subr.mxu0 %v3974
    %4062 = vmatpush1.msra.mxu0 %v3973
    %4063 = vmatprep.subr.mxu0 %v3970
    %4064 = vmatpush1.msra.mxu0 %v3969
    %4065 = vmatprep.subr.mxu0 %v3966
    %4066 = vmatpush1.msra.mxu0 %v3965
    %4067 = vmatprep.subr.mxu0 %v3962
    %4068 = vmatpush1.msra.mxu0 %v3961
    %4069 = vmatprep.subr.mxu0 %v3958
    %4070 = vmatpush1.msra.mxu0 %v3957
    %4071 = vmatprep.subr.mxu0 0.0
    %4072 = vmatpush2.msra.mxu0 0.0
    %4073 = vmatprep.subr.mxu0 0.0
    %4074 = vmatpush2.msra.mxu0 0.0
    %4075 = vmatprep.subr.mxu0 0.0
    %4076 = vmatpush2.msra.mxu0 0.0
    %4077 = vmatprep.subr.mxu0 0.0
    %4078 = vmatpush2.msra.mxu0 0.0
    %4079 = vmatprep.subr.mxu0 0.0
    %4080 = vmatpush2.msra.mxu0 0.0
    %4081 = vmatprep.subr.mxu0 0.0
    %4082 = vmatpush2.msra.mxu0 0.0
    %4083 = vmatprep.subr.mxu0 0.0
    %4084 = vmatpush2.msra.mxu0 0.0
    %4085 = vmatprep.subr.mxu0 0.0
    %4086 = vmatpush2.msra.mxu0 0.0
    %4087 = vmatprep.subr.mxu0 0.0
    %4088 = vmatpush2.msra.mxu0 0.0
    %4089 = vmatprep.subr.mxu0 0.0
    %4090 = vmatpush2.msra.mxu0 0.0
    %4091 = vmatprep.subr.mxu0 0.0
    %4092 = vmatpush2.msra.mxu0 0.0
    %4093 = vmatprep.subr.mxu0 0.0
    %4094 = vmatpush2.msra.mxu0 0.0
    %4095 = vmatprep.subr.mxu0 0.0
    %4096 = vmatpush2.msra.mxu0 0.0
    %4097 = vmatprep.subr.mxu0 0.0
    %4098 = vmatpush2.msra.mxu0 0.0
    %4099 = vmatprep.subr.mxu0 0.0
    %4100 = vmatpush2.msra.mxu0 0.0
    %4101 = vmatprep.subr.mxu0 0.0
    %4102 = vmatpush2.msra.mxu0 0.0
    %4103 = vmatprep.mubr.f32.mxu0 0.0
    %4104 = vmatmul.mubr.f32.gmra.mxu0 %v4037
    %v4105 = vpop.f32.mrf.mxu0
    %v4106 = vadd.f32 0.0, %v4105
    %v4107 = vpop.f32.mrf.mxu0
    %v4108 = vadd.f32 0.0, %v4107
    %4109 = vdwg.mxu0
    %4110 = vmatprep.subr.mxu0 %v4020
    %4111 = vmatpush1.msra.mxu0 %v4019
    %4112 = vmatprep.subr.mxu0 %v4016
    %4113 = vmatpush1.msra.mxu0 %v4015
    %4114 = vmatprep.subr.mxu0 %v4012
    %4115 = vmatpush1.msra.mxu0 %v4011
    %4116 = vmatprep.subr.mxu0 %v4008
    %4117 = vmatpush1.msra.mxu0 %v4007
    %4118 = vmatprep.subr.mxu0 %v4004
    %4119 = vmatpush1.msra.mxu0 %v4003
    %4120 = vmatprep.subr.mxu0 %v4000
    %4121 = vmatpush1.msra.mxu0 %v3999
    %4122 = vmatprep.subr.mxu0 %v3996
    %4123 = vmatpush1.msra.mxu0 %v3995
    %4124 = vmatprep.subr.mxu0 %v3992
    %4125 = vmatpush1.msra.mxu0 %v3991
    %4126 = vmatprep.subr.mxu0 %v3988
    %4127 = vmatpush1.msra.mxu0 %v3987
    %4128 = vmatprep.subr.mxu0 %v3984
    %4129 = vmatpush1.msra.mxu0 %v3983
    %4130 = vmatprep.subr.mxu0 %v3980
    %4131 = vmatpush1.msra.mxu0 %v3979
    %4132 = vmatprep.subr.mxu0 %v3976
    %4133 = vmatpush1.msra.mxu0 %v3975
    %4134 = vmatprep.subr.mxu0 %v3972
    %4135 = vmatpush1.msra.mxu0 %v3971
    %4136 = vmatprep.subr.mxu0 %v3968
    %4137 = vmatpush1.msra.mxu0 %v3967
    %4138 = vmatprep.subr.mxu0 %v3964
    %4139 = vmatpush1.msra.mxu0 %v3963
    %4140 = vmatprep.subr.mxu0 %v3960
    %4141 = vmatpush1.msra.mxu0 %v3959
    %4142 = vmatprep.subr.mxu0 0.0
    %4143 = vmatpush2.msra.mxu0 0.0
    %4144 = vmatprep.subr.mxu0 0.0
    %4145 = vmatpush2.msra.mxu0 0.0
    %4146 = vmatprep.subr.mxu0 0.0
    %4147 = vmatpush2.msra.mxu0 0.0
    %4148 = vmatprep.subr.mxu0 0.0
    %4149 = vmatpush2.msra.mxu0 0.0
    %4150 = vmatprep.subr.mxu0 0.0
    %4151 = vmatpush2.msra.mxu0 0.0
    %4152 = vmatprep.subr.mxu0 0.0
    %4153 = vmatpush2.msra.mxu0 0.0
    %4154 = vmatprep.subr.mxu0 0.0
    %4155 = vmatpush2.msra.mxu0 0.0
    %4156 = vmatprep.subr.mxu0 0.0
    %4157 = vmatpush2.msra.mxu0 0.0
    %4158 = vmatprep.subr.mxu0 0.0
    %4159 = vmatpush2.msra.mxu0 0.0
    %4160 = vmatprep.subr.mxu0 0.0
    %4161 = vmatpush2.msra.mxu0 0.0
    %4162 = vmatprep.subr.mxu0 0.0
    %4163 = vmatpush2.msra.mxu0 0.0
    %4164 = vmatprep.subr.mxu0 0.0
    %4165 = vmatpush2.msra.mxu0 0.0
    %4166 = vmatprep.subr.mxu0 0.0
    %4167 = vmatpush2.msra.mxu0 0.0
    %4168 = vmatprep.subr.mxu0 0.0
    %4169 = vmatpush2.msra.mxu0 0.0
    %4170 = vmatprep.subr.mxu0 0.0
    %4171 = vmatpush2.msra.mxu0 0.0
    %4172 = vmatprep.subr.mxu0 0.0
    %4173 = vmatpush2.msra.mxu0 0.0
    %4174 = vmatprep.mubr.f32.mxu0 0.0
    %4175 = vmatmul.mubr.f32.gmra.mxu0 %v4037
    %v4176 = vpop.f32.mrf.mxu0
    %v4177 = vadd.f32 0.0, %v4176
    %v4178 = vpop.f32.mrf.mxu0
    %v4179 = vadd.f32 0.0, %v4178
    %4180 = vdwg.mxu0
    %v4185 = vcombine.low %v4106, %v4108
    %v4186 = vcombine.low %v4177, %v4179
    %v4188 = vunpack.c.l.s4 1966171168
    %v4189 = vunpack.c.0.s8 %v4188
    %v4190 = vlaneseq
    %v4191 = vshrl.u32 %v4190, 7
    %v4192 = vsub.s32 %v4189, %v4191
    %v4193 = vrot.slane %v4185, %v4192
    %v4195 = vunpack.c.l.s4 1966171168
    %v4196 = vunpack.c.0.s8 %v4195
    %v4197 = vlaneseq
    %v4198 = vshrl.u32 %v4197, 7
    %v4199 = vsub.s32 %v4196, %v4198
    %v4200 = vrot.slane %v4186, %v4199
    %v4201 = vcombine.low %v4193, %v4200
    %v4202 = vcombine.high %v4193, %v4200
    %v4204 = vunpack.c.l.s4 1966171168
    %v4205 = vunpack.c.0.s8 %v4204
    %v4206 = vlaneseq
    %v4207 = vshrl.u32 %v4206, 7
    %v4208 = vsub.s32 %v4205, %v4207
    %v4209 = vrot.slane %v4201, %v4208
    %v4211 = vunpack.c.l.s4 1966171168
    %v4212 = vunpack.c.0.s8 %v4211
    %v4213 = vlaneseq
    %v4214 = vshrl.u32 %v4213, 7
    %v4215 = vsub.s32 %v4212, %v4214
    %v4216 = vrot.slane %v4202, %v4215
    %v4219 = vadd.f32 %v3955, %v4209
    %v4220 = vadd.f32 %v3956, %v4216
    %v4221 = vxor.u32 %v4219, 2147483648
    %v4222 = vxor.u32 %v4220, 2147483648
    %v4223 = vmul.f32 %v4221, 1.442695
    %v4224 = vpow.pop %v4223
    %v4225 = vmul.f32 %v4222, 1.442695
    %v4226 = vpow.pop %v4225
    %v4227 = vadd.f32 %v4224, 1.0
    %v4228 = vadd.f32 %v4226, 1.0
    %v4229 = vrcp.pop %v4227
    %v4230 = vmul.f32 1.0, %v4229
    %v4231 = vrcp.pop %v4228
    %v4232 = vmul.f32 1.0, %v4231
    %v4235 = vrot.slane %v4219, 3
    %v4236 = vrot.slane %v4220, 3
    %v4239 = vtanh.pop %v4235
    %v4240 = vtanh.pop %v4236
    %v4243 = vrot.slane %v4230, 1
    %v4244 = vrot.slane %v4232, 1
    %v4247 = vmul.f32 %v4243, %v3943
    %v4248 = vmul.f32 %v4244, %v3944
    %v4249 = vmul.f32 %v4230, %v4239
    %v4250 = vmul.f32 %v4232, %v4240
    %v4251 = vadd.f32 %v4247, %v4249
    %v4252 = vadd.f32 %v4248, %v4250
    %v4253 = vtanh.pop %v4251
    %v4254 = vtanh.pop %v4252
    %v4255 = vrot.slane %v4230, 2
    %v4256 = vrot.slane %v4232, 2
    %v4259 = vmul.f32 %v4255, %v4253
    %v4260 = vmul.f32 %v4256, %v4254
    %4261 = vst [vmem:[#allocation3 + $0x3] sm:$0x1] %v4259
    %4262 = vst [vmem:[#allocation3 + $0xb] sm:$0x1] %v4260
    %v4263 = vld [vmem:[%s1559] ss:$8 sm:$0xf]
    %v4264 = vld [vmem:[%s1561] ss:$8 sm:$0xf]
    %v4265 = vld [vmem:[#allocation10] sm:$0xff]
    %v4266 = vld [vmem:[#allocation10 + $0x8] sm:$0xff]
    %v4267 = vld [vmem:[#allocation10 + $0x10] sm:$0xff]
    %v4268 = vld [vmem:[#allocation10 + $0x18] sm:$0xff]
    %v4269 = vld [vmem:[#allocation10 + $0x20] sm:$0xff]
    %v4270 = vld [vmem:[#allocation10 + $0x28] sm:$0xff]
    %v4271 = vld [vmem:[#allocation10 + $0x30] sm:$0xff]
    %v4272 = vld [vmem:[#allocation10 + $0x38] sm:$0xff]
    %v4273 = vld [vmem:[#allocation10 + $0x40] sm:$0xff]
    %v4274 = vld [vmem:[#allocation10 + $0x48] sm:$0xff]
    %v4275 = vld [vmem:[#allocation10 + $0x50] sm:$0xff]
    %v4276 = vld [vmem:[#allocation10 + $0x58] sm:$0xff]
    %v4277 = vld [vmem:[#allocation10 + $0x60] sm:$0xff]
    %v4278 = vld [vmem:[#allocation10 + $0x68] sm:$0xff]
    %v4279 = vld [vmem:[#allocation10 + $0x70] sm:$0xff]
    %v4280 = vld [vmem:[#allocation10 + $0x78] sm:$0xff]
    %v4281 = vld [vmem:[#allocation10 + $0x80] sm:$0xff]
    %v4282 = vld [vmem:[#allocation10 + $0x88] sm:$0xff]
    %v4283 = vld [vmem:[#allocation10 + $0x90] sm:$0xff]
    %v4284 = vld [vmem:[#allocation10 + $0x98] sm:$0xff]
    %v4285 = vld [vmem:[#allocation10 + $0xa0] sm:$0xff]
    %v4286 = vld [vmem:[#allocation10 + $0xa8] sm:$0xff]
    %v4287 = vld [vmem:[#allocation10 + $0xb0] sm:$0xff]
    %v4288 = vld [vmem:[#allocation10 + $0xb8] sm:$0xff]
    %v4289 = vld [vmem:[#allocation10 + $0xc0] sm:$0xff]
    %v4290 = vld [vmem:[#allocation10 + $0xc8] sm:$0xff]
    %v4291 = vld [vmem:[#allocation10 + $0xd0] sm:$0xff]
    %v4292 = vld [vmem:[#allocation10 + $0xd8] sm:$0xff]
    %v4293 = vld [vmem:[#allocation10 + $0xe0] sm:$0xff]
    %v4294 = vld [vmem:[#allocation10 + $0xe8] sm:$0xff]
    %v4295 = vld [vmem:[#allocation10 + $0xf0] sm:$0xff]
    %v4296 = vld [vmem:[#allocation10 + $0xf8] sm:$0xff]
    %v4297 = vld [vmem:[#allocation10 + $0x100] sm:$0xff]
    %v4298 = vld [vmem:[#allocation10 + $0x108] sm:$0xff]
    %v4299 = vld [vmem:[#allocation10 + $0x110] sm:$0xff]
    %v4300 = vld [vmem:[#allocation10 + $0x118] sm:$0xff]
    %v4301 = vld [vmem:[#allocation10 + $0x120] sm:$0xff]
    %v4302 = vld [vmem:[#allocation10 + $0x128] sm:$0xff]
    %v4303 = vld [vmem:[#allocation10 + $0x130] sm:$0xff]
    %v4304 = vld [vmem:[#allocation10 + $0x138] sm:$0xff]
    %v4305 = vld [vmem:[#allocation10 + $0x140] sm:$0xff]
    %v4306 = vld [vmem:[#allocation10 + $0x148] sm:$0xff]
    %v4307 = vld [vmem:[#allocation10 + $0x150] sm:$0xff]
    %v4308 = vld [vmem:[#allocation10 + $0x158] sm:$0xff]
    %v4309 = vld [vmem:[#allocation10 + $0x160] sm:$0xff]
    %v4310 = vld [vmem:[#allocation10 + $0x168] sm:$0xff]
    %v4311 = vld [vmem:[#allocation10 + $0x170] sm:$0xff]
    %v4312 = vld [vmem:[#allocation10 + $0x178] sm:$0xff]
    %v4313 = vld [vmem:[#allocation10 + $0x180] sm:$0xff]
    %v4314 = vld [vmem:[#allocation10 + $0x188] sm:$0xff]
    %v4315 = vld [vmem:[#allocation10 + $0x190] sm:$0xff]
    %v4316 = vld [vmem:[#allocation10 + $0x198] sm:$0xff]
    %v4317 = vld [vmem:[#allocation10 + $0x1a0] sm:$0xff]
    %v4318 = vld [vmem:[#allocation10 + $0x1a8] sm:$0xff]
    %v4319 = vld [vmem:[#allocation10 + $0x1b0] sm:$0xff]
    %v4320 = vld [vmem:[#allocation10 + $0x1b8] sm:$0xff]
    %v4321 = vld [vmem:[#allocation10 + $0x1c0] sm:$0xff]
    %v4322 = vld [vmem:[#allocation10 + $0x1c8] sm:$0xff]
    %v4323 = vld [vmem:[#allocation10 + $0x1d0] sm:$0xff]
    %v4324 = vld [vmem:[#allocation10 + $0x1d8] sm:$0xff]
    %v4325 = vld [vmem:[#allocation10 + $0x1e0] sm:$0xff]
    %v4326 = vld [vmem:[#allocation10 + $0x1e8] sm:$0xff]
    %v4327 = vld [vmem:[#allocation10 + $0x1f0] sm:$0xff]
    %v4328 = vld [vmem:[#allocation10 + $0x1f8] sm:$0xff]
    %v4331 = vcombine.low %v4259, %v4260
    %v4333 = vunpack.c.l.s4 1966171168
    %v4334 = vunpack.c.0.s8 %v4333
    %v4335 = vlaneseq
    %v4336 = vshrl.u32 %v4335, 7
    %v4337 = vsub.s32 %v4334, %v4336
    %v4338 = vrot.slane %v4331, %v4337
    %v4340 = vunpack.c.l.s4 1966171168
    %v4341 = vunpack.c.0.s8 %v4340
    %v4342 = vlaneseq
    %v4343 = vshrl.u32 %v4342, 7
    %v4344 = vsub.s32 %v4341, %v4343
    %v4345 = vrot.slane %v4338, %v4344
    %4347 = vmatprep.subr.mxu0 %v4326
    %4348 = vmatpush1.msra.mxu0 %v4325
    %4349 = vmatprep.subr.mxu0 %v4322
    %4350 = vmatpush1.msra.mxu0 %v4321
    %4351 = vmatprep.subr.mxu0 %v4318
    %4352 = vmatpush1.msra.mxu0 %v4317
    %4353 = vmatprep.subr.mxu0 %v4314
    %4354 = vmatpush1.msra.mxu0 %v4313
    %4355 = vmatprep.subr.mxu0 %v4310
    %4356 = vmatpush1.msra.mxu0 %v4309
    %4357 = vmatprep.subr.mxu0 %v4306
    %4358 = vmatpush1.msra.mxu0 %v4305
    %4359 = vmatprep.subr.mxu0 %v4302
    %4360 = vmatpush1.msra.mxu0 %v4301
    %4361 = vmatprep.subr.mxu0 %v4298
    %4362 = vmatpush1.msra.mxu0 %v4297
    %4363 = vmatprep.subr.mxu0 %v4294
    %4364 = vmatpush1.msra.mxu0 %v4293
    %4365 = vmatprep.subr.mxu0 %v4290
    %4366 = vmatpush1.msra.mxu0 %v4289
    %4367 = vmatprep.subr.mxu0 %v4286
    %4368 = vmatpush1.msra.mxu0 %v4285
    %4369 = vmatprep.subr.mxu0 %v4282
    %4370 = vmatpush1.msra.mxu0 %v4281
    %4371 = vmatprep.subr.mxu0 %v4278
    %4372 = vmatpush1.msra.mxu0 %v4277
    %4373 = vmatprep.subr.mxu0 %v4274
    %4374 = vmatpush1.msra.mxu0 %v4273
    %4375 = vmatprep.subr.mxu0 %v4270
    %4376 = vmatpush1.msra.mxu0 %v4269
    %4377 = vmatprep.subr.mxu0 %v4266
    %4378 = vmatpush1.msra.mxu0 %v4265
    %4379 = vmatprep.subr.mxu0 0.0
    %4380 = vmatpush2.msra.mxu0 0.0
    %4381 = vmatprep.subr.mxu0 0.0
    %4382 = vmatpush2.msra.mxu0 0.0
    %4383 = vmatprep.subr.mxu0 0.0
    %4384 = vmatpush2.msra.mxu0 0.0
    %4385 = vmatprep.subr.mxu0 0.0
    %4386 = vmatpush2.msra.mxu0 0.0
    %4387 = vmatprep.subr.mxu0 0.0
    %4388 = vmatpush2.msra.mxu0 0.0
    %4389 = vmatprep.subr.mxu0 0.0
    %4390 = vmatpush2.msra.mxu0 0.0
    %4391 = vmatprep.subr.mxu0 0.0
    %4392 = vmatpush2.msra.mxu0 0.0
    %4393 = vmatprep.subr.mxu0 0.0
    %4394 = vmatpush2.msra.mxu0 0.0
    %4395 = vmatprep.subr.mxu0 0.0
    %4396 = vmatpush2.msra.mxu0 0.0
    %4397 = vmatprep.subr.mxu0 0.0
    %4398 = vmatpush2.msra.mxu0 0.0
    %4399 = vmatprep.subr.mxu0 0.0
    %4400 = vmatpush2.msra.mxu0 0.0
    %4401 = vmatprep.subr.mxu0 0.0
    %4402 = vmatpush2.msra.mxu0 0.0
    %4403 = vmatprep.subr.mxu0 0.0
    %4404 = vmatpush2.msra.mxu0 0.0
    %4405 = vmatprep.subr.mxu0 0.0
    %4406 = vmatpush2.msra.mxu0 0.0
    %4407 = vmatprep.subr.mxu0 0.0
    %4408 = vmatpush2.msra.mxu0 0.0
    %4409 = vmatprep.subr.mxu0 0.0
    %4410 = vmatpush2.msra.mxu0 0.0
    %4411 = vmatprep.mubr.f32.mxu0 0.0
    %4412 = vmatmul.mubr.f32.gmra.mxu0 %v4345
    %v4413 = vpop.f32.mrf.mxu0
    %v4414 = vadd.f32 0.0, %v4413
    %v4415 = vpop.f32.mrf.mxu0
    %v4416 = vadd.f32 0.0, %v4415
    %4417 = vdwg.mxu0
    %4418 = vmatprep.subr.mxu0 %v4328
    %4419 = vmatpush1.msra.mxu0 %v4327
    %4420 = vmatprep.subr.mxu0 %v4324
    %4421 = vmatpush1.msra.mxu0 %v4323
    %4422 = vmatprep.subr.mxu0 %v4320
    %4423 = vmatpush1.msra.mxu0 %v4319
    %4424 = vmatprep.subr.mxu0 %v4316
    %4425 = vmatpush1.msra.mxu0 %v4315
    %4426 = vmatprep.subr.mxu0 %v4312
    %4427 = vmatpush1.msra.mxu0 %v4311
    %4428 = vmatprep.subr.mxu0 %v4308
    %4429 = vmatpush1.msra.mxu0 %v4307
    %4430 = vmatprep.subr.mxu0 %v4304
    %4431 = vmatpush1.msra.mxu0 %v4303
    %4432 = vmatprep.subr.mxu0 %v4300
    %4433 = vmatpush1.msra.mxu0 %v4299
    %4434 = vmatprep.subr.mxu0 %v4296
    %4435 = vmatpush1.msra.mxu0 %v4295
    %4436 = vmatprep.subr.mxu0 %v4292
    %4437 = vmatpush1.msra.mxu0 %v4291
    %4438 = vmatprep.subr.mxu0 %v4288
    %4439 = vmatpush1.msra.mxu0 %v4287
    %4440 = vmatprep.subr.mxu0 %v4284
    %4441 = vmatpush1.msra.mxu0 %v4283
    %4442 = vmatprep.subr.mxu0 %v4280
    %4443 = vmatpush1.msra.mxu0 %v4279
    %4444 = vmatprep.subr.mxu0 %v4276
    %4445 = vmatpush1.msra.mxu0 %v4275
    %4446 = vmatprep.subr.mxu0 %v4272
    %4447 = vmatpush1.msra.mxu0 %v4271
    %4448 = vmatprep.subr.mxu0 %v4268
    %4449 = vmatpush1.msra.mxu0 %v4267
    %4450 = vmatprep.subr.mxu0 0.0
    %4451 = vmatpush2.msra.mxu0 0.0
    %4452 = vmatprep.subr.mxu0 0.0
    %4453 = vmatpush2.msra.mxu0 0.0
    %4454 = vmatprep.subr.mxu0 0.0
    %4455 = vmatpush2.msra.mxu0 0.0
    %4456 = vmatprep.subr.mxu0 0.0
    %4457 = vmatpush2.msra.mxu0 0.0
    %4458 = vmatprep.subr.mxu0 0.0
    %4459 = vmatpush2.msra.mxu0 0.0
    %4460 = vmatprep.subr.mxu0 0.0
    %4461 = vmatpush2.msra.mxu0 0.0
    %4462 = vmatprep.subr.mxu0 0.0
    %4463 = vmatpush2.msra.mxu0 0.0
    %4464 = vmatprep.subr.mxu0 0.0
    %4465 = vmatpush2.msra.mxu0 0.0
    %4466 = vmatprep.subr.mxu0 0.0
    %4467 = vmatpush2.msra.mxu0 0.0
    %4468 = vmatprep.subr.mxu0 0.0
    %4469 = vmatpush2.msra.mxu0 0.0
    %4470 = vmatprep.subr.mxu0 0.0
    %4471 = vmatpush2.msra.mxu0 0.0
    %4472 = vmatprep.subr.mxu0 0.0
    %4473 = vmatpush2.msra.mxu0 0.0
    %4474 = vmatprep.subr.mxu0 0.0
    %4475 = vmatpush2.msra.mxu0 0.0
    %4476 = vmatprep.subr.mxu0 0.0
    %4477 = vmatpush2.msra.mxu0 0.0
    %4478 = vmatprep.subr.mxu0 0.0
    %4479 = vmatpush2.msra.mxu0 0.0
    %4480 = vmatprep.subr.mxu0 0.0
    %4481 = vmatpush2.msra.mxu0 0.0
    %4482 = vmatprep.mubr.f32.mxu0 0.0
    %4483 = vmatmul.mubr.f32.gmra.mxu0 %v4345
    %v4484 = vpop.f32.mrf.mxu0
    %v4485 = vadd.f32 0.0, %v4484
    %v4486 = vpop.f32.mrf.mxu0
    %v4487 = vadd.f32 0.0, %v4486
    %4488 = vdwg.mxu0
    %v4493 = vcombine.low %v4414, %v4416
    %v4494 = vcombine.low %v4485, %v4487
    %v4496 = vunpack.c.l.s4 1966171168
    %v4497 = vunpack.c.0.s8 %v4496
    %v4498 = vlaneseq
    %v4499 = vshrl.u32 %v4498, 7
    %v4500 = vsub.s32 %v4497, %v4499
    %v4501 = vrot.slane %v4493, %v4500
    %v4503 = vunpack.c.l.s4 1966171168
    %v4504 = vunpack.c.0.s8 %v4503
    %v4505 = vlaneseq
    %v4506 = vshrl.u32 %v4505, 7
    %v4507 = vsub.s32 %v4504, %v4506
    %v4508 = vrot.slane %v4494, %v4507
    %v4509 = vcombine.low %v4501, %v4508
    %v4510 = vcombine.high %v4501, %v4508
    %v4512 = vunpack.c.l.s4 1966171168
    %v4513 = vunpack.c.0.s8 %v4512
    %v4514 = vlaneseq
    %v4515 = vshrl.u32 %v4514, 7
    %v4516 = vsub.s32 %v4513, %v4515
    %v4517 = vrot.slane %v4509, %v4516
    %v4519 = vunpack.c.l.s4 1966171168
    %v4520 = vunpack.c.0.s8 %v4519
    %v4521 = vlaneseq
    %v4522 = vshrl.u32 %v4521, 7
    %v4523 = vsub.s32 %v4520, %v4522
    %v4524 = vrot.slane %v4510, %v4523
    %v4527 = vadd.f32 %v4263, %v4517
    %v4528 = vadd.f32 %v4264, %v4524
    %v4529 = vxor.u32 %v4527, 2147483648
    %v4530 = vxor.u32 %v4528, 2147483648
    %v4531 = vmul.f32 %v4529, 1.442695
    %v4532 = vpow.pop %v4531
    %v4533 = vmul.f32 %v4530, 1.442695
    %v4534 = vpow.pop %v4533
    %v4535 = vadd.f32 %v4532, 1.0
    %v4536 = vadd.f32 %v4534, 1.0
    %v4537 = vrcp.pop %v4535
    %v4538 = vmul.f32 1.0, %v4537
    %v4539 = vrcp.pop %v4536
    %v4540 = vmul.f32 1.0, %v4539
    %v4543 = vrot.slane %v4527, 3
    %v4544 = vrot.slane %v4528, 3
    %v4547 = vtanh.pop %v4543
    %v4548 = vtanh.pop %v4544
    %v4551 = vrot.slane %v4538, 1
    %v4552 = vrot.slane %v4540, 1
    %v4555 = vmul.f32 %v4551, %v4251
    %v4556 = vmul.f32 %v4552, %v4252
    %v4557 = vmul.f32 %v4538, %v4547
    %v4558 = vmul.f32 %v4540, %v4548
    %v4559 = vadd.f32 %v4555, %v4557
    %v4560 = vadd.f32 %v4556, %v4558
    %v4561 = vtanh.pop %v4559
    %v4562 = vtanh.pop %v4560
    %v4563 = vrot.slane %v4538, 2
    %v4564 = vrot.slane %v4540, 2
    %v4567 = vmul.f32 %v4563, %v4561
    %v4568 = vmul.f32 %v4564, %v4562
    %4569 = vst [vmem:[#allocation3 + $0x4] sm:$0x1] %v4567
    %4570 = vst [vmem:[#allocation3 + $0xc] sm:$0x1] %v4568
    %v4571 = vld [vmem:[%s1869] ss:$8 sm:$0xf]
    %v4572 = vld [vmem:[%s1871] ss:$8 sm:$0xf]
    %v4573 = vld [vmem:[#allocation10] sm:$0xff]
    %v4574 = vld [vmem:[#allocation10 + $0x8] sm:$0xff]
    %v4575 = vld [vmem:[#allocation10 + $0x10] sm:$0xff]
    %v4576 = vld [vmem:[#allocation10 + $0x18] sm:$0xff]
    %v4577 = vld [vmem:[#allocation10 + $0x20] sm:$0xff]
    %v4578 = vld [vmem:[#allocation10 + $0x28] sm:$0xff]
    %v4579 = vld [vmem:[#allocation10 + $0x30] sm:$0xff]
    %v4580 = vld [vmem:[#allocation10 + $0x38] sm:$0xff]
    %v4581 = vld [vmem:[#allocation10 + $0x40] sm:$0xff]
    %v4582 = vld [vmem:[#allocation10 + $0x48] sm:$0xff]
    %v4583 = vld [vmem:[#allocation10 + $0x50] sm:$0xff]
    %v4584 = vld [vmem:[#allocation10 + $0x58] sm:$0xff]
    %v4585 = vld [vmem:[#allocation10 + $0x60] sm:$0xff]
    %v4586 = vld [vmem:[#allocation10 + $0x68] sm:$0xff]
    %v4587 = vld [vmem:[#allocation10 + $0x70] sm:$0xff]
    %v4588 = vld [vmem:[#allocation10 + $0x78] sm:$0xff]
    %v4589 = vld [vmem:[#allocation10 + $0x80] sm:$0xff]
    %v4590 = vld [vmem:[#allocation10 + $0x88] sm:$0xff]
    %v4591 = vld [vmem:[#allocation10 + $0x90] sm:$0xff]
    %v4592 = vld [vmem:[#allocation10 + $0x98] sm:$0xff]
    %v4593 = vld [vmem:[#allocation10 + $0xa0] sm:$0xff]
    %v4594 = vld [vmem:[#allocation10 + $0xa8] sm:$0xff]
    %v4595 = vld [vmem:[#allocation10 + $0xb0] sm:$0xff]
    %v4596 = vld [vmem:[#allocation10 + $0xb8] sm:$0xff]
    %v4597 = vld [vmem:[#allocation10 + $0xc0] sm:$0xff]
    %v4598 = vld [vmem:[#allocation10 + $0xc8] sm:$0xff]
    %v4599 = vld [vmem:[#allocation10 + $0xd0] sm:$0xff]
    %v4600 = vld [vmem:[#allocation10 + $0xd8] sm:$0xff]
    %v4601 = vld [vmem:[#allocation10 + $0xe0] sm:$0xff]
    %v4602 = vld [vmem:[#allocation10 + $0xe8] sm:$0xff]
    %v4603 = vld [vmem:[#allocation10 + $0xf0] sm:$0xff]
    %v4604 = vld [vmem:[#allocation10 + $0xf8] sm:$0xff]
    %v4605 = vld [vmem:[#allocation10 + $0x100] sm:$0xff]
    %v4606 = vld [vmem:[#allocation10 + $0x108] sm:$0xff]
    %v4607 = vld [vmem:[#allocation10 + $0x110] sm:$0xff]
    %v4608 = vld [vmem:[#allocation10 + $0x118] sm:$0xff]
    %v4609 = vld [vmem:[#allocation10 + $0x120] sm:$0xff]
    %v4610 = vld [vmem:[#allocation10 + $0x128] sm:$0xff]
    %v4611 = vld [vmem:[#allocation10 + $0x130] sm:$0xff]
    %v4612 = vld [vmem:[#allocation10 + $0x138] sm:$0xff]
    %v4613 = vld [vmem:[#allocation10 + $0x140] sm:$0xff]
    %v4614 = vld [vmem:[#allocation10 + $0x148] sm:$0xff]
    %v4615 = vld [vmem:[#allocation10 + $0x150] sm:$0xff]
    %v4616 = vld [vmem:[#allocation10 + $0x158] sm:$0xff]
    %v4617 = vld [vmem:[#allocation10 + $0x160] sm:$0xff]
    %v4618 = vld [vmem:[#allocation10 + $0x168] sm:$0xff]
    %v4619 = vld [vmem:[#allocation10 + $0x170] sm:$0xff]
    %v4620 = vld [vmem:[#allocation10 + $0x178] sm:$0xff]
    %v4621 = vld [vmem:[#allocation10 + $0x180] sm:$0xff]
    %v4622 = vld [vmem:[#allocation10 + $0x188] sm:$0xff]
    %v4623 = vld [vmem:[#allocation10 + $0x190] sm:$0xff]
    %v4624 = vld [vmem:[#allocation10 + $0x198] sm:$0xff]
    %v4625 = vld [vmem:[#allocation10 + $0x1a0] sm:$0xff]
    %v4626 = vld [vmem:[#allocation10 + $0x1a8] sm:$0xff]
    %v4627 = vld [vmem:[#allocation10 + $0x1b0] sm:$0xff]
    %v4628 = vld [vmem:[#allocation10 + $0x1b8] sm:$0xff]
    %v4629 = vld [vmem:[#allocation10 + $0x1c0] sm:$0xff]
    %v4630 = vld [vmem:[#allocation10 + $0x1c8] sm:$0xff]
    %v4631 = vld [vmem:[#allocation10 + $0x1d0] sm:$0xff]
    %v4632 = vld [vmem:[#allocation10 + $0x1d8] sm:$0xff]
    %v4633 = vld [vmem:[#allocation10 + $0x1e0] sm:$0xff]
    %v4634 = vld [vmem:[#allocation10 + $0x1e8] sm:$0xff]
    %v4635 = vld [vmem:[#allocation10 + $0x1f0] sm:$0xff]
    %v4636 = vld [vmem:[#allocation10 + $0x1f8] sm:$0xff]
    %v4639 = vcombine.low %v4567, %v4568
    %v4641 = vunpack.c.l.s4 1966171168
    %v4642 = vunpack.c.0.s8 %v4641
    %v4643 = vlaneseq
    %v4644 = vshrl.u32 %v4643, 7
    %v4645 = vsub.s32 %v4642, %v4644
    %v4646 = vrot.slane %v4639, %v4645
    %v4648 = vunpack.c.l.s4 1966171168
    %v4649 = vunpack.c.0.s8 %v4648
    %v4650 = vlaneseq
    %v4651 = vshrl.u32 %v4650, 7
    %v4652 = vsub.s32 %v4649, %v4651
    %v4653 = vrot.slane %v4646, %v4652
    %4655 = vmatprep.subr.mxu0 %v4634
    %4656 = vmatpush1.msra.mxu0 %v4633
    %4657 = vmatprep.subr.mxu0 %v4630
    %4658 = vmatpush1.msra.mxu0 %v4629
    %4659 = vmatprep.subr.mxu0 %v4626
    %4660 = vmatpush1.msra.mxu0 %v4625
    %4661 = vmatprep.subr.mxu0 %v4622
    %4662 = vmatpush1.msra.mxu0 %v4621
    %4663 = vmatprep.subr.mxu0 %v4618
    %4664 = vmatpush1.msra.mxu0 %v4617
    %4665 = vmatprep.subr.mxu0 %v4614
    %4666 = vmatpush1.msra.mxu0 %v4613
    %4667 = vmatprep.subr.mxu0 %v4610
    %4668 = vmatpush1.msra.mxu0 %v4609
    %4669 = vmatprep.subr.mxu0 %v4606
    %4670 = vmatpush1.msra.mxu0 %v4605
    %4671 = vmatprep.subr.mxu0 %v4602
    %4672 = vmatpush1.msra.mxu0 %v4601
    %4673 = vmatprep.subr.mxu0 %v4598
    %4674 = vmatpush1.msra.mxu0 %v4597
    %4675 = vmatprep.subr.mxu0 %v4594
    %4676 = vmatpush1.msra.mxu0 %v4593
    %4677 = vmatprep.subr.mxu0 %v4590
    %4678 = vmatpush1.msra.mxu0 %v4589
    %4679 = vmatprep.subr.mxu0 %v4586
    %4680 = vmatpush1.msra.mxu0 %v4585
    %4681 = vmatprep.subr.mxu0 %v4582
    %4682 = vmatpush1.msra.mxu0 %v4581
    %4683 = vmatprep.subr.mxu0 %v4578
    %4684 = vmatpush1.msra.mxu0 %v4577
    %4685 = vmatprep.subr.mxu0 %v4574
    %4686 = vmatpush1.msra.mxu0 %v4573
    %4687 = vmatprep.subr.mxu0 0.0
    %4688 = vmatpush2.msra.mxu0 0.0
    %4689 = vmatprep.subr.mxu0 0.0
    %4690 = vmatpush2.msra.mxu0 0.0
    %4691 = vmatprep.subr.mxu0 0.0
    %4692 = vmatpush2.msra.mxu0 0.0
    %4693 = vmatprep.subr.mxu0 0.0
    %4694 = vmatpush2.msra.mxu0 0.0
    %4695 = vmatprep.subr.mxu0 0.0
    %4696 = vmatpush2.msra.mxu0 0.0
    %4697 = vmatprep.subr.mxu0 0.0
    %4698 = vmatpush2.msra.mxu0 0.0
    %4699 = vmatprep.subr.mxu0 0.0
    %4700 = vmatpush2.msra.mxu0 0.0
    %4701 = vmatprep.subr.mxu0 0.0
    %4702 = vmatpush2.msra.mxu0 0.0
    %4703 = vmatprep.subr.mxu0 0.0
    %4704 = vmatpush2.msra.mxu0 0.0
    %4705 = vmatprep.subr.mxu0 0.0
    %4706 = vmatpush2.msra.mxu0 0.0
    %4707 = vmatprep.subr.mxu0 0.0
    %4708 = vmatpush2.msra.mxu0 0.0
    %4709 = vmatprep.subr.mxu0 0.0
    %4710 = vmatpush2.msra.mxu0 0.0
    %4711 = vmatprep.subr.mxu0 0.0
    %4712 = vmatpush2.msra.mxu0 0.0
    %4713 = vmatprep.subr.mxu0 0.0
    %4714 = vmatpush2.msra.mxu0 0.0
    %4715 = vmatprep.subr.mxu0 0.0
    %4716 = vmatpush2.msra.mxu0 0.0
    %4717 = vmatprep.subr.mxu0 0.0
    %4718 = vmatpush2.msra.mxu0 0.0
    %4719 = vmatprep.mubr.f32.mxu0 0.0
    %4720 = vmatmul.mubr.f32.gmra.mxu0 %v4653
    %v4721 = vpop.f32.mrf.mxu0
    %v4722 = vadd.f32 0.0, %v4721
    %v4723 = vpop.f32.mrf.mxu0
    %v4724 = vadd.f32 0.0, %v4723
    %4725 = vdwg.mxu0
    %4726 = vmatprep.subr.mxu0 %v4636
    %4727 = vmatpush1.msra.mxu0 %v4635
    %4728 = vmatprep.subr.mxu0 %v4632
    %4729 = vmatpush1.msra.mxu0 %v4631
    %4730 = vmatprep.subr.mxu0 %v4628
    %4731 = vmatpush1.msra.mxu0 %v4627
    %4732 = vmatprep.subr.mxu0 %v4624
    %4733 = vmatpush1.msra.mxu0 %v4623
    %4734 = vmatprep.subr.mxu0 %v4620
    %4735 = vmatpush1.msra.mxu0 %v4619
    %4736 = vmatprep.subr.mxu0 %v4616
    %4737 = vmatpush1.msra.mxu0 %v4615
    %4738 = vmatprep.subr.mxu0 %v4612
    %4739 = vmatpush1.msra.mxu0 %v4611
    %4740 = vmatprep.subr.mxu0 %v4608
    %4741 = vmatpush1.msra.mxu0 %v4607
    %4742 = vmatprep.subr.mxu0 %v4604
    %4743 = vmatpush1.msra.mxu0 %v4603
    %4744 = vmatprep.subr.mxu0 %v4600
    %4745 = vmatpush1.msra.mxu0 %v4599
    %4746 = vmatprep.subr.mxu0 %v4596
    %4747 = vmatpush1.msra.mxu0 %v4595
    %4748 = vmatprep.subr.mxu0 %v4592
    %4749 = vmatpush1.msra.mxu0 %v4591
    %4750 = vmatprep.subr.mxu0 %v4588
    %4751 = vmatpush1.msra.mxu0 %v4587
    %4752 = vmatprep.subr.mxu0 %v4584
    %4753 = vmatpush1.msra.mxu0 %v4583
    %4754 = vmatprep.subr.mxu0 %v4580
    %4755 = vmatpush1.msra.mxu0 %v4579
    %4756 = vmatprep.subr.mxu0 %v4576
    %4757 = vmatpush1.msra.mxu0 %v4575
    %4758 = vmatprep.subr.mxu0 0.0
    %4759 = vmatpush2.msra.mxu0 0.0
    %4760 = vmatprep.subr.mxu0 0.0
    %4761 = vmatpush2.msra.mxu0 0.0
    %4762 = vmatprep.subr.mxu0 0.0
    %4763 = vmatpush2.msra.mxu0 0.0
    %4764 = vmatprep.subr.mxu0 0.0
    %4765 = vmatpush2.msra.mxu0 0.0
    %4766 = vmatprep.subr.mxu0 0.0
    %4767 = vmatpush2.msra.mxu0 0.0
    %4768 = vmatprep.subr.mxu0 0.0
    %4769 = vmatpush2.msra.mxu0 0.0
    %4770 = vmatprep.subr.mxu0 0.0
    %4771 = vmatpush2.msra.mxu0 0.0
    %4772 = vmatprep.subr.mxu0 0.0
    %4773 = vmatpush2.msra.mxu0 0.0
    %4774 = vmatprep.subr.mxu0 0.0
    %4775 = vmatpush2.msra.mxu0 0.0
    %4776 = vmatprep.subr.mxu0 0.0
    %4777 = vmatpush2.msra.mxu0 0.0
    %4778 = vmatprep.subr.mxu0 0.0
    %4779 = vmatpush2.msra.mxu0 0.0
    %4780 = vmatprep.subr.mxu0 0.0
    %4781 = vmatpush2.msra.mxu0 0.0
    %4782 = vmatprep.subr.mxu0 0.0
    %4783 = vmatpush2.msra.mxu0 0.0
    %4784 = vmatprep.subr.mxu0 0.0
    %4785 = vmatpush2.msra.mxu0 0.0
    %4786 = vmatprep.subr.mxu0 0.0
    %4787 = vmatpush2.msra.mxu0 0.0
    %4788 = vmatprep.subr.mxu0 0.0
    %4789 = vmatpush2.msra.mxu0 0.0
    %4790 = vmatprep.mubr.f32.mxu0 0.0
    %4791 = vmatmul.mubr.f32.gmra.mxu0 %v4653
    %v4792 = vpop.f32.mrf.mxu0
    %v4793 = vadd.f32 0.0, %v4792
    %v4794 = vpop.f32.mrf.mxu0
    %v4795 = vadd.f32 0.0, %v4794
    %4796 = vdwg.mxu0
    %v4801 = vcombine.low %v4722, %v4724
    %v4802 = vcombine.low %v4793, %v4795
    %v4804 = vunpack.c.l.s4 1966171168
    %v4805 = vunpack.c.0.s8 %v4804
    %v4806 = vlaneseq
    %v4807 = vshrl.u32 %v4806, 7
    %v4808 = vsub.s32 %v4805, %v4807
    %v4809 = vrot.slane %v4801, %v4808
    %v4811 = vunpack.c.l.s4 1966171168
    %v4812 = vunpack.c.0.s8 %v4811
    %v4813 = vlaneseq
    %v4814 = vshrl.u32 %v4813, 7
    %v4815 = vsub.s32 %v4812, %v4814
    %v4816 = vrot.slane %v4802, %v4815
    %v4817 = vcombine.low %v4809, %v4816
    %v4818 = vcombine.high %v4809, %v4816
    %v4820 = vunpack.c.l.s4 1966171168
    %v4821 = vunpack.c.0.s8 %v4820
    %v4822 = vlaneseq
    %v4823 = vshrl.u32 %v4822, 7
    %v4824 = vsub.s32 %v4821, %v4823
    %v4825 = vrot.slane %v4817, %v4824
    %v4827 = vunpack.c.l.s4 1966171168
    %v4828 = vunpack.c.0.s8 %v4827
    %v4829 = vlaneseq
    %v4830 = vshrl.u32 %v4829, 7
    %v4831 = vsub.s32 %v4828, %v4830
    %v4832 = vrot.slane %v4818, %v4831
    %v4835 = vadd.f32 %v4571, %v4825
    %v4836 = vadd.f32 %v4572, %v4832
    %v4837 = vxor.u32 %v4835, 2147483648
    %v4838 = vxor.u32 %v4836, 2147483648
    %v4839 = vmul.f32 %v4837, 1.442695
    %v4840 = vpow.pop %v4839
    %v4841 = vmul.f32 %v4838, 1.442695
    %v4842 = vpow.pop %v4841
    %v4843 = vadd.f32 %v4840, 1.0
    %v4844 = vadd.f32 %v4842, 1.0
    %v4845 = vrcp.pop %v4843
    %v4846 = vmul.f32 1.0, %v4845
    %v4847 = vrcp.pop %v4844
    %v4848 = vmul.f32 1.0, %v4847
    %v4851 = vrot.slane %v4835, 3
    %v4852 = vrot.slane %v4836, 3
    %v4855 = vtanh.pop %v4851
    %v4856 = vtanh.pop %v4852
    %v4859 = vrot.slane %v4846, 1
    %v4860 = vrot.slane %v4848, 1
    %v4863 = vmul.f32 %v4859, %v4559
    %v4864 = vmul.f32 %v4860, %v4560
    %v4865 = vmul.f32 %v4846, %v4855
    %v4866 = vmul.f32 %v4848, %v4856
    %v4867 = vadd.f32 %v4863, %v4865
    %v4868 = vadd.f32 %v4864, %v4866
    %v4869 = vtanh.pop %v4867
    %v4870 = vtanh.pop %v4868
    %v4871 = vrot.slane %v4846, 2
    %v4872 = vrot.slane %v4848, 2
    %v4875 = vmul.f32 %v4871, %v4869
    %v4876 = vmul.f32 %v4872, %v4870
    %4877 = vst [vmem:[#allocation3 + $0x5] sm:$0x1] %v4875
    %4878 = vst [vmem:[#allocation3 + $0xd] sm:$0x1] %v4876
    %v4879 = vld [vmem:[%s2179] ss:$8 sm:$0xf]
    %v4880 = vld [vmem:[%s2181] ss:$8 sm:$0xf]
    %v4881 = vld [vmem:[#allocation10] sm:$0xff]
    %v4882 = vld [vmem:[#allocation10 + $0x8] sm:$0xff]
    %v4883 = vld [vmem:[#allocation10 + $0x10] sm:$0xff]
    %v4884 = vld [vmem:[#allocation10 + $0x18] sm:$0xff]
    %v4885 = vld [vmem:[#allocation10 + $0x20] sm:$0xff]
    %v4886 = vld [vmem:[#allocation10 + $0x28] sm:$0xff]
    %v4887 = vld [vmem:[#allocation10 + $0x30] sm:$0xff]
    %v4888 = vld [vmem:[#allocation10 + $0x38] sm:$0xff]
    %v4889 = vld [vmem:[#allocation10 + $0x40] sm:$0xff]
    %v4890 = vld [vmem:[#allocation10 + $0x48] sm:$0xff]
    %v4891 = vld [vmem:[#allocation10 + $0x50] sm:$0xff]
    %v4892 = vld [vmem:[#allocation10 + $0x58] sm:$0xff]
    %v4893 = vld [vmem:[#allocation10 + $0x60] sm:$0xff]
    %v4894 = vld [vmem:[#allocation10 + $0x68] sm:$0xff]
    %v4895 = vld [vmem:[#allocation10 + $0x70] sm:$0xff]
    %v4896 = vld [vmem:[#allocation10 + $0x78] sm:$0xff]
    %v4897 = vld [vmem:[#allocation10 + $0x80] sm:$0xff]
    %v4898 = vld [vmem:[#allocation10 + $0x88] sm:$0xff]
    %v4899 = vld [vmem:[#allocation10 + $0x90] sm:$0xff]
    %v4900 = vld [vmem:[#allocation10 + $0x98] sm:$0xff]
    %v4901 = vld [vmem:[#allocation10 + $0xa0] sm:$0xff]
    %v4902 = vld [vmem:[#allocation10 + $0xa8] sm:$0xff]
    %v4903 = vld [vmem:[#allocation10 + $0xb0] sm:$0xff]
    %v4904 = vld [vmem:[#allocation10 + $0xb8] sm:$0xff]
    %v4905 = vld [vmem:[#allocation10 + $0xc0] sm:$0xff]
    %v4906 = vld [vmem:[#allocation10 + $0xc8] sm:$0xff]
    %v4907 = vld [vmem:[#allocation10 + $0xd0] sm:$0xff]
    %v4908 = vld [vmem:[#allocation10 + $0xd8] sm:$0xff]
    %v4909 = vld [vmem:[#allocation10 + $0xe0] sm:$0xff]
    %v4910 = vld [vmem:[#allocation10 + $0xe8] sm:$0xff]
    %v4911 = vld [vmem:[#allocation10 + $0xf0] sm:$0xff]
    %v4912 = vld [vmem:[#allocation10 + $0xf8] sm:$0xff]
    %v4913 = vld [vmem:[#allocation10 + $0x100] sm:$0xff]
    %v4914 = vld [vmem:[#allocation10 + $0x108] sm:$0xff]
    %v4915 = vld [vmem:[#allocation10 + $0x110] sm:$0xff]
    %v4916 = vld [vmem:[#allocation10 + $0x118] sm:$0xff]
    %v4917 = vld [vmem:[#allocation10 + $0x120] sm:$0xff]
    %v4918 = vld [vmem:[#allocation10 + $0x128] sm:$0xff]
    %v4919 = vld [vmem:[#allocation10 + $0x130] sm:$0xff]
    %v4920 = vld [vmem:[#allocation10 + $0x138] sm:$0xff]
    %v4921 = vld [vmem:[#allocation10 + $0x140] sm:$0xff]
    %v4922 = vld [vmem:[#allocation10 + $0x148] sm:$0xff]
    %v4923 = vld [vmem:[#allocation10 + $0x150] sm:$0xff]
    %v4924 = vld [vmem:[#allocation10 + $0x158] sm:$0xff]
    %v4925 = vld [vmem:[#allocation10 + $0x160] sm:$0xff]
    %v4926 = vld [vmem:[#allocation10 + $0x168] sm:$0xff]
    %v4927 = vld [vmem:[#allocation10 + $0x170] sm:$0xff]
    %v4928 = vld [vmem:[#allocation10 + $0x178] sm:$0xff]
    %v4929 = vld [vmem:[#allocation10 + $0x180] sm:$0xff]
    %v4930 = vld [vmem:[#allocation10 + $0x188] sm:$0xff]
    %v4931 = vld [vmem:[#allocation10 + $0x190] sm:$0xff]
    %v4932 = vld [vmem:[#allocation10 + $0x198] sm:$0xff]
    %v4933 = vld [vmem:[#allocation10 + $0x1a0] sm:$0xff]
    %v4934 = vld [vmem:[#allocation10 + $0x1a8] sm:$0xff]
    %v4935 = vld [vmem:[#allocation10 + $0x1b0] sm:$0xff]
    %v4936 = vld [vmem:[#allocation10 + $0x1b8] sm:$0xff]
    %v4937 = vld [vmem:[#allocation10 + $0x1c0] sm:$0xff]
    %v4938 = vld [vmem:[#allocation10 + $0x1c8] sm:$0xff]
    %v4939 = vld [vmem:[#allocation10 + $0x1d0] sm:$0xff]
    %v4940 = vld [vmem:[#allocation10 + $0x1d8] sm:$0xff]
    %v4941 = vld [vmem:[#allocation10 + $0x1e0] sm:$0xff]
    %v4942 = vld [vmem:[#allocation10 + $0x1e8] sm:$0xff]
    %v4943 = vld [vmem:[#allocation10 + $0x1f0] sm:$0xff]
    %v4944 = vld [vmem:[#allocation10 + $0x1f8] sm:$0xff]
    %v4947 = vcombine.low %v4875, %v4876
    %v4949 = vunpack.c.l.s4 1966171168
    %v4950 = vunpack.c.0.s8 %v4949
    %v4951 = vlaneseq
    %v4952 = vshrl.u32 %v4951, 7
    %v4953 = vsub.s32 %v4950, %v4952
    %v4954 = vrot.slane %v4947, %v4953
    %v4956 = vunpack.c.l.s4 1966171168
    %v4957 = vunpack.c.0.s8 %v4956
    %v4958 = vlaneseq
    %v4959 = vshrl.u32 %v4958, 7
    %v4960 = vsub.s32 %v4957, %v4959
    %v4961 = vrot.slane %v4954, %v4960
    %4963 = vmatprep.subr.mxu0 %v4942
    %4964 = vmatpush1.msra.mxu0 %v4941
    %4965 = vmatprep.subr.mxu0 %v4938
    %4966 = vmatpush1.msra.mxu0 %v4937
    %4967 = vmatprep.subr.mxu0 %v4934
    %4968 = vmatpush1.msra.mxu0 %v4933
    %4969 = vmatprep.subr.mxu0 %v4930
    %4970 = vmatpush1.msra.mxu0 %v4929
    %4971 = vmatprep.subr.mxu0 %v4926
    %4972 = vmatpush1.msra.mxu0 %v4925
    %4973 = vmatprep.subr.mxu0 %v4922
    %4974 = vmatpush1.msra.mxu0 %v4921
    %4975 = vmatprep.subr.mxu0 %v4918
    %4976 = vmatpush1.msra.mxu0 %v4917
    %4977 = vmatprep.subr.mxu0 %v4914
    %4978 = vmatpush1.msra.mxu0 %v4913
    %4979 = vmatprep.subr.mxu0 %v4910
    %4980 = vmatpush1.msra.mxu0 %v4909
    %4981 = vmatprep.subr.mxu0 %v4906
    %4982 = vmatpush1.msra.mxu0 %v4905
    %4983 = vmatprep.subr.mxu0 %v4902
    %4984 = vmatpush1.msra.mxu0 %v4901
    %4985 = vmatprep.subr.mxu0 %v4898
    %4986 = vmatpush1.msra.mxu0 %v4897
    %4987 = vmatprep.subr.mxu0 %v4894
    %4988 = vmatpush1.msra.mxu0 %v4893
    %4989 = vmatprep.subr.mxu0 %v4890
    %4990 = vmatpush1.msra.mxu0 %v4889
    %4991 = vmatprep.subr.mxu0 %v4886
    %4992 = vmatpush1.msra.mxu0 %v4885
    %4993 = vmatprep.subr.mxu0 %v4882
    %4994 = vmatpush1.msra.mxu0 %v4881
    %4995 = vmatprep.subr.mxu0 0.0
    %4996 = vmatpush2.msra.mxu0 0.0
    %4997 = vmatprep.subr.mxu0 0.0
    %4998 = vmatpush2.msra.mxu0 0.0
    %4999 = vmatprep.subr.mxu0 0.0
    %5000 = vmatpush2.msra.mxu0 0.0
    %5001 = vmatprep.subr.mxu0 0.0
    %5002 = vmatpush2.msra.mxu0 0.0
    %5003 = vmatprep.subr.mxu0 0.0
    %5004 = vmatpush2.msra.mxu0 0.0
    %5005 = vmatprep.subr.mxu0 0.0
    %5006 = vmatpush2.msra.mxu0 0.0
    %5007 = vmatprep.subr.mxu0 0.0
    %5008 = vmatpush2.msra.mxu0 0.0
    %5009 = vmatprep.subr.mxu0 0.0
    %5010 = vmatpush2.msra.mxu0 0.0
    %5011 = vmatprep.subr.mxu0 0.0
    %5012 = vmatpush2.msra.mxu0 0.0
    %5013 = vmatprep.subr.mxu0 0.0
    %5014 = vmatpush2.msra.mxu0 0.0
    %5015 = vmatprep.subr.mxu0 0.0
    %5016 = vmatpush2.msra.mxu0 0.0
    %5017 = vmatprep.subr.mxu0 0.0
    %5018 = vmatpush2.msra.mxu0 0.0
    %5019 = vmatprep.subr.mxu0 0.0
    %5020 = vmatpush2.msra.mxu0 0.0
    %5021 = vmatprep.subr.mxu0 0.0
    %5022 = vmatpush2.msra.mxu0 0.0
    %5023 = vmatprep.subr.mxu0 0.0
    %5024 = vmatpush2.msra.mxu0 0.0
    %5025 = vmatprep.subr.mxu0 0.0
    %5026 = vmatpush2.msra.mxu0 0.0
    %5027 = vmatprep.mubr.f32.mxu0 0.0
    %5028 = vmatmul.mubr.f32.gmra.mxu0 %v4961
    %v5029 = vpop.f32.mrf.mxu0
    %v5030 = vadd.f32 0.0, %v5029
    %v5031 = vpop.f32.mrf.mxu0
    %v5032 = vadd.f32 0.0, %v5031
    %5033 = vdwg.mxu0
    %5034 = vmatprep.subr.mxu0 %v4944
    %5035 = vmatpush1.msra.mxu0 %v4943
    %5036 = vmatprep.subr.mxu0 %v4940
    %5037 = vmatpush1.msra.mxu0 %v4939
    %5038 = vmatprep.subr.mxu0 %v4936
    %5039 = vmatpush1.msra.mxu0 %v4935
    %5040 = vmatprep.subr.mxu0 %v4932
    %5041 = vmatpush1.msra.mxu0 %v4931
    %5042 = vmatprep.subr.mxu0 %v4928
    %5043 = vmatpush1.msra.mxu0 %v4927
    %5044 = vmatprep.subr.mxu0 %v4924
    %5045 = vmatpush1.msra.mxu0 %v4923
    %5046 = vmatprep.subr.mxu0 %v4920
    %5047 = vmatpush1.msra.mxu0 %v4919
    %5048 = vmatprep.subr.mxu0 %v4916
    %5049 = vmatpush1.msra.mxu0 %v4915
    %5050 = vmatprep.subr.mxu0 %v4912
    %5051 = vmatpush1.msra.mxu0 %v4911
    %5052 = vmatprep.subr.mxu0 %v4908
    %5053 = vmatpush1.msra.mxu0 %v4907
    %5054 = vmatprep.subr.mxu0 %v4904
    %5055 = vmatpush1.msra.mxu0 %v4903
    %5056 = vmatprep.subr.mxu0 %v4900
    %5057 = vmatpush1.msra.mxu0 %v4899
    %5058 = vmatprep.subr.mxu0 %v4896
    %5059 = vmatpush1.msra.mxu0 %v4895
    %5060 = vmatprep.subr.mxu0 %v4892
    %5061 = vmatpush1.msra.mxu0 %v4891
    %5062 = vmatprep.subr.mxu0 %v4888
    %5063 = vmatpush1.msra.mxu0 %v4887
    %5064 = vmatprep.subr.mxu0 %v4884
    %5065 = vmatpush1.msra.mxu0 %v4883
    %5066 = vmatprep.subr.mxu0 0.0
    %5067 = vmatpush2.msra.mxu0 0.0
    %5068 = vmatprep.subr.mxu0 0.0
    %5069 = vmatpush2.msra.mxu0 0.0
    %5070 = vmatprep.subr.mxu0 0.0
    %5071 = vmatpush2.msra.mxu0 0.0
    %5072 = vmatprep.subr.mxu0 0.0
    %5073 = vmatpush2.msra.mxu0 0.0
    %5074 = vmatprep.subr.mxu0 0.0
    %5075 = vmatpush2.msra.mxu0 0.0
    %5076 = vmatprep.subr.mxu0 0.0
    %5077 = vmatpush2.msra.mxu0 0.0
    %5078 = vmatprep.subr.mxu0 0.0
    %5079 = vmatpush2.msra.mxu0 0.0
    %5080 = vmatprep.subr.mxu0 0.0
    %5081 = vmatpush2.msra.mxu0 0.0
    %5082 = vmatprep.subr.mxu0 0.0
    %5083 = vmatpush2.msra.mxu0 0.0
    %5084 = vmatprep.subr.mxu0 0.0
    %5085 = vmatpush2.msra.mxu0 0.0
    %5086 = vmatprep.subr.mxu0 0.0
    %5087 = vmatpush2.msra.mxu0 0.0
    %5088 = vmatprep.subr.mxu0 0.0
    %5089 = vmatpush2.msra.mxu0 0.0
    %5090 = vmatprep.subr.mxu0 0.0
    %5091 = vmatpush2.msra.mxu0 0.0
    %5092 = vmatprep.subr.mxu0 0.0
    %5093 = vmatpush2.msra.mxu0 0.0
    %5094 = vmatprep.subr.mxu0 0.0
    %5095 = vmatpush2.msra.mxu0 0.0
    %5096 = vmatprep.subr.mxu0 0.0
    %5097 = vmatpush2.msra.mxu0 0.0
    %5098 = vmatprep.mubr.f32.mxu0 0.0
    %5099 = vmatmul.mubr.f32.gmra.mxu0 %v4961
    %v5100 = vpop.f32.mrf.mxu0
    %v5101 = vadd.f32 0.0, %v5100
    %v5102 = vpop.f32.mrf.mxu0
    %v5103 = vadd.f32 0.0, %v5102
    %5104 = vdwg.mxu0
    %v5109 = vcombine.low %v5030, %v5032
    %v5110 = vcombine.low %v5101, %v5103
    %v5112 = vunpack.c.l.s4 1966171168
    %v5113 = vunpack.c.0.s8 %v5112
    %v5114 = vlaneseq
    %v5115 = vshrl.u32 %v5114, 7
    %v5116 = vsub.s32 %v5113, %v5115
    %v5117 = vrot.slane %v5109, %v5116
    %v5119 = vunpack.c.l.s4 1966171168
    %v5120 = vunpack.c.0.s8 %v5119
    %v5121 = vlaneseq
    %v5122 = vshrl.u32 %v5121, 7
    %v5123 = vsub.s32 %v5120, %v5122
    %v5124 = vrot.slane %v5110, %v5123
    %v5125 = vcombine.low %v5117, %v5124
    %v5126 = vcombine.high %v5117, %v5124
    %v5128 = vunpack.c.l.s4 1966171168
    %v5129 = vunpack.c.0.s8 %v5128
    %v5130 = vlaneseq
    %v5131 = vshrl.u32 %v5130, 7
    %v5132 = vsub.s32 %v5129, %v5131
    %v5133 = vrot.slane %v5125, %v5132
    %v5135 = vunpack.c.l.s4 1966171168
    %v5136 = vunpack.c.0.s8 %v5135
    %v5137 = vlaneseq
    %v5138 = vshrl.u32 %v5137, 7
    %v5139 = vsub.s32 %v5136, %v5138
    %v5140 = vrot.slane %v5126, %v5139
    %v5143 = vadd.f32 %v4879, %v5133
    %v5144 = vadd.f32 %v4880, %v5140
    %v5145 = vxor.u32 %v5143, 2147483648
    %v5146 = vxor.u32 %v5144, 2147483648
    %v5147 = vmul.f32 %v5145, 1.442695
    %v5148 = vpow.pop %v5147
    %v5149 = vmul.f32 %v5146, 1.442695
    %v5150 = vpow.pop %v5149
    %v5151 = vadd.f32 %v5148, 1.0
    %v5152 = vadd.f32 %v5150, 1.0
    %v5153 = vrcp.pop %v5151
    %v5154 = vmul.f32 1.0, %v5153
    %v5155 = vrcp.pop %v5152
    %v5156 = vmul.f32 1.0, %v5155
    %v5159 = vrot.slane %v5143, 3
    %v5160 = vrot.slane %v5144, 3
    %v5163 = vtanh.pop %v5159
    %v5164 = vtanh.pop %v5160
    %v5167 = vrot.slane %v5154, 1
    %v5168 = vrot.slane %v5156, 1
    %v5171 = vmul.f32 %v5167, %v4867
    %v5172 = vmul.f32 %v5168, %v4868
    %v5173 = vmul.f32 %v5154, %v5163
    %v5174 = vmul.f32 %v5156, %v5164
    %v5175 = vadd.f32 %v5171, %v5173
    %v5176 = vadd.f32 %v5172, %v5174
    %v5177 = vtanh.pop %v5175
    %v5178 = vtanh.pop %v5176
    %v5179 = vrot.slane %v5154, 2
    %v5180 = vrot.slane %v5156, 2
    %v5183 = vmul.f32 %v5179, %v5177
    %v5184 = vmul.f32 %v5180, %v5178
    %5185 = vst [vmem:[#allocation3 + $0x6] sm:$0x1] %v5183
    %5186 = vst [vmem:[#allocation3 + $0xe] sm:$0x1] %v5184
    %v5187 = vld [vmem:[%s2489] ss:$8 sm:$0xf]
    %v5188 = vld [vmem:[%s2491] ss:$8 sm:$0xf]
    %v5189 = vld [vmem:[#allocation10] sm:$0xff]
    %v5190 = vld [vmem:[#allocation10 + $0x8] sm:$0xff]
    %v5191 = vld [vmem:[#allocation10 + $0x10] sm:$0xff]
    %v5192 = vld [vmem:[#allocation10 + $0x18] sm:$0xff]
    %v5193 = vld [vmem:[#allocation10 + $0x20] sm:$0xff]
    %v5194 = vld [vmem:[#allocation10 + $0x28] sm:$0xff]
    %v5195 = vld [vmem:[#allocation10 + $0x30] sm:$0xff]
    %v5196 = vld [vmem:[#allocation10 + $0x38] sm:$0xff]
    %v5197 = vld [vmem:[#allocation10 + $0x40] sm:$0xff]
    %v5198 = vld [vmem:[#allocation10 + $0x48] sm:$0xff]
    %v5199 = vld [vmem:[#allocation10 + $0x50] sm:$0xff]
    %v5200 = vld [vmem:[#allocation10 + $0x58] sm:$0xff]
    %v5201 = vld [vmem:[#allocation10 + $0x60] sm:$0xff]
    %v5202 = vld [vmem:[#allocation10 + $0x68] sm:$0xff]
    %v5203 = vld [vmem:[#allocation10 + $0x70] sm:$0xff]
    %v5204 = vld [vmem:[#allocation10 + $0x78] sm:$0xff]
    %v5205 = vld [vmem:[#allocation10 + $0x80] sm:$0xff]
    %v5206 = vld [vmem:[#allocation10 + $0x88] sm:$0xff]
    %v5207 = vld [vmem:[#allocation10 + $0x90] sm:$0xff]
    %v5208 = vld [vmem:[#allocation10 + $0x98] sm:$0xff]
    %v5209 = vld [vmem:[#allocation10 + $0xa0] sm:$0xff]
    %v5210 = vld [vmem:[#allocation10 + $0xa8] sm:$0xff]
    %v5211 = vld [vmem:[#allocation10 + $0xb0] sm:$0xff]
    %v5212 = vld [vmem:[#allocation10 + $0xb8] sm:$0xff]
    %v5213 = vld [vmem:[#allocation10 + $0xc0] sm:$0xff]
    %v5214 = vld [vmem:[#allocation10 + $0xc8] sm:$0xff]
    %v5215 = vld [vmem:[#allocation10 + $0xd0] sm:$0xff]
    %v5216 = vld [vmem:[#allocation10 + $0xd8] sm:$0xff]
    %v5217 = vld [vmem:[#allocation10 + $0xe0] sm:$0xff]
    %v5218 = vld [vmem:[#allocation10 + $0xe8] sm:$0xff]
    %v5219 = vld [vmem:[#allocation10 + $0xf0] sm:$0xff]
    %v5220 = vld [vmem:[#allocation10 + $0xf8] sm:$0xff]
    %v5221 = vld [vmem:[#allocation10 + $0x100] sm:$0xff]
    %v5222 = vld [vmem:[#allocation10 + $0x108] sm:$0xff]
    %v5223 = vld [vmem:[#allocation10 + $0x110] sm:$0xff]
    %v5224 = vld [vmem:[#allocation10 + $0x118] sm:$0xff]
    %v5225 = vld [vmem:[#allocation10 + $0x120] sm:$0xff]
    %v5226 = vld [vmem:[#allocation10 + $0x128] sm:$0xff]
    %v5227 = vld [vmem:[#allocation10 + $0x130] sm:$0xff]
    %v5228 = vld [vmem:[#allocation10 + $0x138] sm:$0xff]
    %v5229 = vld [vmem:[#allocation10 + $0x140] sm:$0xff]
    %v5230 = vld [vmem:[#allocation10 + $0x148] sm:$0xff]
    %v5231 = vld [vmem:[#allocation10 + $0x150] sm:$0xff]
    %v5232 = vld [vmem:[#allocation10 + $0x158] sm:$0xff]
    %v5233 = vld [vmem:[#allocation10 + $0x160] sm:$0xff]
    %v5234 = vld [vmem:[#allocation10 + $0x168] sm:$0xff]
    %v5235 = vld [vmem:[#allocation10 + $0x170] sm:$0xff]
    %v5236 = vld [vmem:[#allocation10 + $0x178] sm:$0xff]
    %v5237 = vld [vmem:[#allocation10 + $0x180] sm:$0xff]
    %v5238 = vld [vmem:[#allocation10 + $0x188] sm:$0xff]
    %v5239 = vld [vmem:[#allocation10 + $0x190] sm:$0xff]
    %v5240 = vld [vmem:[#allocation10 + $0x198] sm:$0xff]
    %v5241 = vld [vmem:[#allocation10 + $0x1a0] sm:$0xff]
    %v5242 = vld [vmem:[#allocation10 + $0x1a8] sm:$0xff]
    %v5243 = vld [vmem:[#allocation10 + $0x1b0] sm:$0xff]
    %v5244 = vld [vmem:[#allocation10 + $0x1b8] sm:$0xff]
    %v5245 = vld [vmem:[#allocation10 + $0x1c0] sm:$0xff]
    %v5246 = vld [vmem:[#allocation10 + $0x1c8] sm:$0xff]
    %v5247 = vld [vmem:[#allocation10 + $0x1d0] sm:$0xff]
    %v5248 = vld [vmem:[#allocation10 + $0x1d8] sm:$0xff]
    %v5249 = vld [vmem:[#allocation10 + $0x1e0] sm:$0xff]
    %v5250 = vld [vmem:[#allocation10 + $0x1e8] sm:$0xff]
    %v5251 = vld [vmem:[#allocation10 + $0x1f0] sm:$0xff]
    %v5252 = vld [vmem:[#allocation10 + $0x1f8] sm:$0xff]
    %v5255 = vcombine.low %v5183, %v5184
    %v5257 = vunpack.c.l.s4 1966171168
    %v5258 = vunpack.c.0.s8 %v5257
    %v5259 = vlaneseq
    %v5260 = vshrl.u32 %v5259, 7
    %v5261 = vsub.s32 %v5258, %v5260
    %v5262 = vrot.slane %v5255, %v5261
    %v5264 = vunpack.c.l.s4 1966171168
    %v5265 = vunpack.c.0.s8 %v5264
    %v5266 = vlaneseq
    %v5267 = vshrl.u32 %v5266, 7
    %v5268 = vsub.s32 %v5265, %v5267
    %v5269 = vrot.slane %v5262, %v5268
    %5271 = vmatprep.subr.mxu0 %v5250
    %5272 = vmatpush1.msra.mxu0 %v5249
    %5273 = vmatprep.subr.mxu0 %v5246
    %5274 = vmatpush1.msra.mxu0 %v5245
    %5275 = vmatprep.subr.mxu0 %v5242
    %5276 = vmatpush1.msra.mxu0 %v5241
    %5277 = vmatprep.subr.mxu0 %v5238
    %5278 = vmatpush1.msra.mxu0 %v5237
    %5279 = vmatprep.subr.mxu0 %v5234
    %5280 = vmatpush1.msra.mxu0 %v5233
    %5281 = vmatprep.subr.mxu0 %v5230
    %5282 = vmatpush1.msra.mxu0 %v5229
    %5283 = vmatprep.subr.mxu0 %v5226
    %5284 = vmatpush1.msra.mxu0 %v5225
    %5285 = vmatprep.subr.mxu0 %v5222
    %5286 = vmatpush1.msra.mxu0 %v5221
    %5287 = vmatprep.subr.mxu0 %v5218
    %5288 = vmatpush1.msra.mxu0 %v5217
    %5289 = vmatprep.subr.mxu0 %v5214
    %5290 = vmatpush1.msra.mxu0 %v5213
    %5291 = vmatprep.subr.mxu0 %v5210
    %5292 = vmatpush1.msra.mxu0 %v5209
    %5293 = vmatprep.subr.mxu0 %v5206
    %5294 = vmatpush1.msra.mxu0 %v5205
    %5295 = vmatprep.subr.mxu0 %v5202
    %5296 = vmatpush1.msra.mxu0 %v5201
    %5297 = vmatprep.subr.mxu0 %v5198
    %5298 = vmatpush1.msra.mxu0 %v5197
    %5299 = vmatprep.subr.mxu0 %v5194
    %5300 = vmatpush1.msra.mxu0 %v5193
    %5301 = vmatprep.subr.mxu0 %v5190
    %5302 = vmatpush1.msra.mxu0 %v5189
    %5303 = vmatprep.subr.mxu0 0.0
    %5304 = vmatpush2.msra.mxu0 0.0
    %5305 = vmatprep.subr.mxu0 0.0
    %5306 = vmatpush2.msra.mxu0 0.0
    %5307 = vmatprep.subr.mxu0 0.0
    %5308 = vmatpush2.msra.mxu0 0.0
    %5309 = vmatprep.subr.mxu0 0.0
    %5310 = vmatpush2.msra.mxu0 0.0
    %5311 = vmatprep.subr.mxu0 0.0
    %5312 = vmatpush2.msra.mxu0 0.0
    %5313 = vmatprep.subr.mxu0 0.0
    %5314 = vmatpush2.msra.mxu0 0.0
    %5315 = vmatprep.subr.mxu0 0.0
    %5316 = vmatpush2.msra.mxu0 0.0
    %5317 = vmatprep.subr.mxu0 0.0
    %5318 = vmatpush2.msra.mxu0 0.0
    %5319 = vmatprep.subr.mxu0 0.0
    %5320 = vmatpush2.msra.mxu0 0.0
    %5321 = vmatprep.subr.mxu0 0.0
    %5322 = vmatpush2.msra.mxu0 0.0
    %5323 = vmatprep.subr.mxu0 0.0
    %5324 = vmatpush2.msra.mxu0 0.0
    %5325 = vmatprep.subr.mxu0 0.0
    %5326 = vmatpush2.msra.mxu0 0.0
    %5327 = vmatprep.subr.mxu0 0.0
    %5328 = vmatpush2.msra.mxu0 0.0
    %5329 = vmatprep.subr.mxu0 0.0
    %5330 = vmatpush2.msra.mxu0 0.0
    %5331 = vmatprep.subr.mxu0 0.0
    %5332 = vmatpush2.msra.mxu0 0.0
    %5333 = vmatprep.subr.mxu0 0.0
    %5334 = vmatpush2.msra.mxu0 0.0
    %5335 = vmatprep.mubr.f32.mxu0 0.0
    %5336 = vmatmul.mubr.f32.gmra.mxu0 %v5269
    %v5337 = vpop.f32.mrf.mxu0
    %v5338 = vadd.f32 0.0, %v5337
    %v5339 = vpop.f32.mrf.mxu0
    %v5340 = vadd.f32 0.0, %v5339
    %5341 = vdwg.mxu0
    %5342 = vmatprep.subr.mxu0 %v5252
    %5343 = vmatpush1.msra.mxu0 %v5251
    %5344 = vmatprep.subr.mxu0 %v5248
    %5345 = vmatpush1.msra.mxu0 %v5247
    %5346 = vmatprep.subr.mxu0 %v5244
    %5347 = vmatpush1.msra.mxu0 %v5243
    %5348 = vmatprep.subr.mxu0 %v5240
    %5349 = vmatpush1.msra.mxu0 %v5239
    %5350 = vmatprep.subr.mxu0 %v5236
    %5351 = vmatpush1.msra.mxu0 %v5235
    %5352 = vmatprep.subr.mxu0 %v5232
    %5353 = vmatpush1.msra.mxu0 %v5231
    %5354 = vmatprep.subr.mxu0 %v5228
    %5355 = vmatpush1.msra.mxu0 %v5227
    %5356 = vmatprep.subr.mxu0 %v5224
    %5357 = vmatpush1.msra.mxu0 %v5223
    %5358 = vmatprep.subr.mxu0 %v5220
    %5359 = vmatpush1.msra.mxu0 %v5219
    %5360 = vmatprep.subr.mxu0 %v5216
    %5361 = vmatpush1.msra.mxu0 %v5215
    %5362 = vmatprep.subr.mxu0 %v5212
    %5363 = vmatpush1.msra.mxu0 %v5211
    %5364 = vmatprep.subr.mxu0 %v5208
    %5365 = vmatpush1.msra.mxu0 %v5207
    %5366 = vmatprep.subr.mxu0 %v5204
    %5367 = vmatpush1.msra.mxu0 %v5203
    %5368 = vmatprep.subr.mxu0 %v5200
    %5369 = vmatpush1.msra.mxu0 %v5199
    %5370 = vmatprep.subr.mxu0 %v5196
    %5371 = vmatpush1.msra.mxu0 %v5195
    %5372 = vmatprep.subr.mxu0 %v5192
    %5373 = vmatpush1.msra.mxu0 %v5191
    %5374 = vmatprep.subr.mxu0 0.0
    %5375 = vmatpush2.msra.mxu0 0.0
    %5376 = vmatprep.subr.mxu0 0.0
    %5377 = vmatpush2.msra.mxu0 0.0
    %5378 = vmatprep.subr.mxu0 0.0
    %5379 = vmatpush2.msra.mxu0 0.0
    %5380 = vmatprep.subr.mxu0 0.0
    %5381 = vmatpush2.msra.mxu0 0.0
    %5382 = vmatprep.subr.mxu0 0.0
    %5383 = vmatpush2.msra.mxu0 0.0
    %5384 = vmatprep.subr.mxu0 0.0
    %5385 = vmatpush2.msra.mxu0 0.0
    %5386 = vmatprep.subr.mxu0 0.0
    %5387 = vmatpush2.msra.mxu0 0.0
    %5388 = vmatprep.subr.mxu0 0.0
    %5389 = vmatpush2.msra.mxu0 0.0
    %5390 = vmatprep.subr.mxu0 0.0
    %5391 = vmatpush2.msra.mxu0 0.0
    %5392 = vmatprep.subr.mxu0 0.0
    %5393 = vmatpush2.msra.mxu0 0.0
    %5394 = vmatprep.subr.mxu0 0.0
    %5395 = vmatpush2.msra.mxu0 0.0
    %5396 = vmatprep.subr.mxu0 0.0
    %5397 = vmatpush2.msra.mxu0 0.0
    %5398 = vmatprep.subr.mxu0 0.0
    %5399 = vmatpush2.msra.mxu0 0.0
    %5400 = vmatprep.subr.mxu0 0.0
    %5401 = vmatpush2.msra.mxu0 0.0
    %5402 = vmatprep.subr.mxu0 0.0
    %5403 = vmatpush2.msra.mxu0 0.0
    %5404 = vmatprep.subr.mxu0 0.0
    %5405 = vmatpush2.msra.mxu0 0.0
    %5406 = vmatprep.mubr.f32.mxu0 0.0
    %5407 = vmatmul.mubr.f32.gmra.mxu0 %v5269
    %v5408 = vpop.f32.mrf.mxu0
    %v5409 = vadd.f32 0.0, %v5408
    %v5410 = vpop.f32.mrf.mxu0
    %v5411 = vadd.f32 0.0, %v5410
    %5412 = vdwg.mxu0
    %v5417 = vcombine.low %v5338, %v5340
    %v5418 = vcombine.low %v5409, %v5411
    %v5420 = vunpack.c.l.s4 1966171168
    %v5421 = vunpack.c.0.s8 %v5420
    %v5422 = vlaneseq
    %v5423 = vshrl.u32 %v5422, 7
    %v5424 = vsub.s32 %v5421, %v5423
    %v5425 = vrot.slane %v5417, %v5424
    %v5427 = vunpack.c.l.s4 1966171168
    %v5428 = vunpack.c.0.s8 %v5427
    %v5429 = vlaneseq
    %v5430 = vshrl.u32 %v5429, 7
    %v5431 = vsub.s32 %v5428, %v5430
    %v5432 = vrot.slane %v5418, %v5431
    %v5433 = vcombine.low %v5425, %v5432
    %v5434 = vcombine.high %v5425, %v5432
    %v5436 = vunpack.c.l.s4 1966171168
    %v5437 = vunpack.c.0.s8 %v5436
    %v5438 = vlaneseq
    %v5439 = vshrl.u32 %v5438, 7
    %v5440 = vsub.s32 %v5437, %v5439
    %v5441 = vrot.slane %v5433, %v5440
    %v5443 = vunpack.c.l.s4 1966171168
    %v5444 = vunpack.c.0.s8 %v5443
    %v5445 = vlaneseq
    %v5446 = vshrl.u32 %v5445, 7
    %v5447 = vsub.s32 %v5444, %v5446
    %v5448 = vrot.slane %v5434, %v5447
    %v5451 = vadd.f32 %v5187, %v5441
    %v5452 = vadd.f32 %v5188, %v5448
    %v5453 = vxor.u32 %v5451, 2147483648
    %v5454 = vxor.u32 %v5452, 2147483648
    %v5455 = vmul.f32 %v5453, 1.442695
    %v5456 = vpow.pop %v5455
    %v5457 = vmul.f32 %v5454, 1.442695
    %v5458 = vpow.pop %v5457
    %v5459 = vadd.f32 %v5456, 1.0
    %v5460 = vadd.f32 %v5458, 1.0
    %v5461 = vrcp.pop %v5459
    %v5462 = vmul.f32 1.0, %v5461
    %v5463 = vrcp.pop %v5460
    %v5464 = vmul.f32 1.0, %v5463
    %v5467 = vrot.slane %v5451, 3
    %v5468 = vrot.slane %v5452, 3
    %v5471 = vtanh.pop %v5467
    %v5472 = vtanh.pop %v5468
    %v5475 = vrot.slane %v5462, 1
    %v5476 = vrot.slane %v5464, 1
    %v5479 = vmul.f32 %v5475, %v5175
    %v5480 = vmul.f32 %v5476, %v5176
    %v5481 = vmul.f32 %v5462, %v5471
    %v5482 = vmul.f32 %v5464, %v5472
    %v5483 = vadd.f32 %v5479, %v5481
    %v5484 = vadd.f32 %v5480, %v5482
    %v5485 = vtanh.pop %v5483
    %v5486 = vtanh.pop %v5484
    %v5487 = vrot.slane %v5462, 2
    %v5488 = vrot.slane %v5464, 2
    %v5491 = vmul.f32 %v5487, %v5485
    %v5492 = vmul.f32 %v5488, %v5486
    %5493 = vst [vmem:[#allocation3 + $0x7] sm:$0x1] %v5491
    %5494 = vst [vmem:[#allocation3 + $0xf] sm:$0x1] %v5492
    %v5495 = vld [vmem:[#allocation3] sm:$0xff]
    %v5496 = vld [vmem:[#allocation3 + $0x8] sm:$0xff]
    %v5497 = vld [vmem:[%s7] sm:$0xff]
    %v5498 = vld [vmem:[%s7 + $0x8] sm:$0xff]
    %v5499 = vld [vmem:[%s7 + $0x10] sm:$0xff]
    %v5500 = vld [vmem:[%s7 + $0x18] sm:$0xff]
    %v5501 = vld [vmem:[%s7 + $0x20] sm:$0xff]
    %v5502 = vld [vmem:[%s7 + $0x28] sm:$0xff]
    %v5503 = vld [vmem:[%s7 + $0x30] sm:$0xff]
    %v5504 = vld [vmem:[%s7 + $0x38] sm:$0xff]
    %v5505 = vld [vmem:[%s7 + $0x40] sm:$0xff]
    %v5506 = vld [vmem:[%s7 + $0x48] sm:$0xff]
    %v5507 = vld [vmem:[%s7 + $0x50] sm:$0xff]
    %v5508 = vld [vmem:[%s7 + $0x58] sm:$0xff]
    %v5509 = vld [vmem:[%s7 + $0x60] sm:$0xff]
    %v5510 = vld [vmem:[%s7 + $0x68] sm:$0xff]
    %v5511 = vld [vmem:[%s7 + $0x70] sm:$0xff]
    %v5512 = vld [vmem:[%s7 + $0x78] sm:$0xff]
    %v5513 = vld [vmem:[%s8] sm:$0x1]
    %v5515 = vlaneseq
    %v5516 = vshrl.u32 %v5515, 7
    %v5517 = vsub.s32 0, %v5516
    %v5518 = vrot.slane %v5513, %v5517
    %5520 = vmatprep.subr.mxu0 0.0
    %5521 = vmatpush1.msra.mxu0 %v5512
    %5522 = vmatprep.subr.mxu0 0.0
    %5523 = vmatpush1.msra.mxu0 %v5511
    %5524 = vmatprep.subr.mxu0 0.0
    %5525 = vmatpush1.msra.mxu0 %v5510
    %5526 = vmatprep.subr.mxu0 0.0
    %5527 = vmatpush1.msra.mxu0 %v5509
    %5528 = vmatprep.subr.mxu0 0.0
    %5529 = vmatpush1.msra.mxu0 %v5508
    %5530 = vmatprep.subr.mxu0 0.0
    %5531 = vmatpush1.msra.mxu0 %v5507
    %5532 = vmatprep.subr.mxu0 0.0
    %5533 = vmatpush1.msra.mxu0 %v5506
    %5534 = vmatprep.subr.mxu0 0.0
    %5535 = vmatpush1.msra.mxu0 %v5505
    %5536 = vmatprep.subr.mxu0 0.0
    %5537 = vmatpush1.msra.mxu0 %v5504
    %5538 = vmatprep.subr.mxu0 0.0
    %5539 = vmatpush1.msra.mxu0 %v5503
    %5540 = vmatprep.subr.mxu0 0.0
    %5541 = vmatpush1.msra.mxu0 %v5502
    %5542 = vmatprep.subr.mxu0 0.0
    %5543 = vmatpush1.msra.mxu0 %v5501
    %5544 = vmatprep.subr.mxu0 0.0
    %5545 = vmatpush1.msra.mxu0 %v5500
    %5546 = vmatprep.subr.mxu0 0.0
    %5547 = vmatpush1.msra.mxu0 %v5499
    %5548 = vmatprep.subr.mxu0 0.0
    %5549 = vmatpush1.msra.mxu0 %v5498
    %5550 = vmatprep.subr.mxu0 0.0
    %5551 = vmatpush1.msra.mxu0 %v5497
    %5552 = vmatprep.subr.mxu0 0.0
    %5553 = vmatpush2.msra.mxu0 0.0
    %5554 = vmatprep.subr.mxu0 0.0
    %5555 = vmatpush2.msra.mxu0 0.0
    %5556 = vmatprep.subr.mxu0 0.0
    %5557 = vmatpush2.msra.mxu0 0.0
    %5558 = vmatprep.subr.mxu0 0.0
    %5559 = vmatpush2.msra.mxu0 0.0
    %5560 = vmatprep.subr.mxu0 0.0
    %5561 = vmatpush2.msra.mxu0 0.0
    %5562 = vmatprep.subr.mxu0 0.0
    %5563 = vmatpush2.msra.mxu0 0.0
    %5564 = vmatprep.subr.mxu0 0.0
    %5565 = vmatpush2.msra.mxu0 0.0
    %5566 = vmatprep.subr.mxu0 0.0
    %5567 = vmatpush2.msra.mxu0 0.0
    %5568 = vmatprep.subr.mxu0 0.0
    %5569 = vmatpush2.msra.mxu0 0.0
    %5570 = vmatprep.subr.mxu0 0.0
    %5571 = vmatpush2.msra.mxu0 0.0
    %5572 = vmatprep.subr.mxu0 0.0
    %5573 = vmatpush2.msra.mxu0 0.0
    %5574 = vmatprep.subr.mxu0 0.0
    %5575 = vmatpush2.msra.mxu0 0.0
    %5576 = vmatprep.subr.mxu0 0.0
    %5577 = vmatpush2.msra.mxu0 0.0
    %5578 = vmatprep.subr.mxu0 0.0
    %5579 = vmatpush2.msra.mxu0 0.0
    %5580 = vmatprep.subr.mxu0 0.0
    %5581 = vmatpush2.msra.mxu0 0.0
    %5582 = vmatprep.subr.mxu0 0.0
    %5583 = vmatpush2.msra.mxu0 0.0
    %5584 = vmatprep.mubr.f32.mxu0 0.0
    %5585 = vmatmul.mubr.f32.gmra.mxu0 %v5495
    %v5586 = vpop.f32.mrf.mxu0
    %v5587 = vadd.f32 %v5518, %v5586
    %v5588 = vpop.f32.mrf.mxu0
    %5589 = vmatprep.mubr.f32.mxu0 0.0
    %5590 = vmatmul.mubr.f32.gmra.mxu0 %v5496
    %v5591 = vpop.f32.mrf.mxu0
    %v5592 = vadd.f32 %v5518, %v5591
    %v5593 = vpop.f32.mrf.mxu0
    %5594 = vdwg.mxu0
    %v5595 = vxor.u32 %v5587, 2147483648
    %v5596 = vxor.u32 %v5592, 2147483648
    %v5597 = vmul.f32 %v5595, 1.442695
    %v5598 = vpow.pop %v5597
    %v5599 = vmul.f32 %v5596, 1.442695
    %v5600 = vpow.pop %v5599
    %v5601 = vadd.f32 %v5598, 1.0
    %v5602 = vadd.f32 %v5600, 1.0
    %v5603 = vrcp.pop %v5601
    %v5604 = vmul.f32 1.0, %v5603
    %v5605 = vrcp.pop %v5602
    %v5606 = vmul.f32 1.0, %v5605
    %vm5607 = vcmask 64512
    %5608 = vst.msk [vmem:[#allocation12] sm:$0xff] %vm5607, %v5604
    %5609 = vst.msk [vmem:[#allocation12 + $0x8] sm:$0xff] %vm5607, %v5606
    // Predicated region
    $region54: #{lstm_model_forward.1} parent=1 // pred_check
      _
    $region55: #{lstm_model_forward.1} parent=1 // pred_check_branch
      %5611 = sbr.rel (0) target = $region57
    $region56: #{lstm_model_forward.1} parent=1 // pred_region
      %s5613 = ssub.s32 256, 256
      %5614 = vsyncadd [#allocation6], %s5613
      %s5615 = sshll.u32 [#allocation12], 4
      %s5616 = int_to_ptr.vmem [resolvable:$true] %s5615
      %5621 = dma.vmem_to_hbm [thread:$0]  %s5616, 256, %s9, [#allocation6], 128, 128, 8
    $region57: #{lstm_model_forward.1} parent=1 // pred_fallthru
      _
    // Predicated region
    $region58: #{lstm_model_forward.1} parent=1 // pred_check
      _
    $region59: #{lstm_model_forward.1} parent=1 // pred_check_branch
      %5623 = sbr.rel (0) target = $region61
    $region60: #{lstm_model_forward.1} parent=1 // pred_region
      %5624 = dma.done [#allocation6], 256
    $region61: #{lstm_model_forward.1} parent=1 // pred_fallthru
      _
    %5625 = vsyncpa [#allocation5], 1
    %5626 = vsyncpa [#allocation8], 1
    %5627 = vsyncpa [#allocation11], 1
    %5628 = vsyncpa [#allocation6], 1

</llo_original>
